<compile_context>
chip_gen: v5e
topology: v5e:2x2
jax: 0.10.0
libtpu: 0.0.40
codegen_flags: <defaults>
</compile_context>

<pallas_src>
import jax
import jax.numpy as jnp
from jax import lax
from jax.experimental import pallas as pl
from jax.experimental.pallas import tpu as pltpu

NEG_SLOPE = 0.01
B = 2

# Geometry (input 24x24 so the flatten hits 128*4*4, as the fc layer requires).
H1, HP1, C0, C1 = 24, 26, 3, 32
H2, HP2, C2 = 12, 14, 64
H3, HP3, C3 = 6, 8, 128
HO1, HO2, HO3 = 12, 6, 4
M1, M2, M3 = B * HP1 * HP1, B * HP2 * HP2, B * HP3 * HP3      # 1352, 392, 128
MARG1, MARG2, MARG3 = HP1 + 1, HP2 + 1, HP3 + 1                # 27, 15, 9
CH1, CH2, CH3 = 104, 56, 64                                    # conv row chunks


def _fused_cnn_kernel(xf_ref, w1_ref, b1_ref, w2_ref, b2_ref, w3_ref, b3_ref,
                      wf1_hbm, bf1_ref, wf2_ref, bf2_ref,
                      out_ref,
                      conv1_ref, pbuf2_ref, conv2_ref, pbuf3_ref, conv3_ref,
                      fcin_ref, wf1_vmem, wf1_sem):
    # Start streaming the big FC1 weight (4 MB) HBM->VMEM now; it is only
    # needed after the three conv stages, so the DMA hides behind compute.
    wf1_copy = pltpu.make_async_copy(wf1_hbm, wf1_vmem, wf1_sem)
    wf1_copy.start()

    def conv3x3(src_ref, w_ref, dst_ref, hp, marg, m, cout, chunk):
        # dst[r] = sum_{ky,kx} src[marg + r + (ky-1)*hp + (kx-1)] @ w[ky*3+kx]
        # r indexes flattened zero-padded images; halo rows hold garbage that
        # the pooling stage never reads.
        offs = [(ky - 1) * hp + (kx - 1) for ky in range(3) for kx in range(3)]

        def body(step, carry):
            base = pl.multiple_of(step * chunk, 8)
            acc = jnp.zeros((chunk, cout), jnp.float32)
            for t, d in enumerate(offs):
                a = src_ref[pl.ds(marg + d + base, chunk), :]
                acc = acc + jnp.dot(a, w_ref[t],
                                    preferred_element_type=jnp.float32)
            dst_ref[pl.ds(base, chunk), :] = acc
            return carry

        lax.fori_loop(0, m // chunk, body, 0)

    def pool2x2_leaky_into_padded(conv_ref, bias_ref, dst_ref, hp_in, n_out,
                                  hp_out, marg_out):
        # LeakyReLU(maxpool2x2(conv) + bias) on the valid region of conv_ref,
        # written into the (zeroed) padded+margined input buffer of the next
        # conv at offset (+1, +1).  Bias commutes with max; LeakyReLU is
        # monotone, so it commutes with the pooling max.
        for b in range(B):
            for r in range(n_out):
                taps = []
                for py in range(2):
                    rowbase = b * hp_in * hp_in + (2 * r + 1 + py) * hp_in
                    for px in range(2):
                        taps.append(
                            conv_ref[pl.ds(rowbase + 1 + px, n_out, stride=2), :])
                m = jnp.maximum(jnp.maximum(taps[0], taps[1]),
                                jnp.maximum(taps[2], taps[3]))
                m = m + bias_ref[...]
                y = jnp.maximum(m, NEG_SLOPE * m)         # LeakyReLU
                dst = marg_out + b * hp_out * hp_out + (r + 1) * hp_out + 1
                dst_ref[pl.ds(dst, n_out), :] = y

    # ---- layer 1: conv(3->32) ; pool 2x2 ; leaky ----
    conv3x3(xf_ref, w1_ref, conv1_ref, HP1, MARG1, M1, C1, CH1)
    pbuf2_ref[...] = jnp.zeros_like(pbuf2_ref)
    pool2x2_leaky_into_padded(conv1_ref, b1_ref, pbuf2_ref, HP1, HO1, HP2, MARG2)

    # ---- layer 2: conv(32->64) ; pool 2x2 ; leaky ----
    conv3x3(pbuf2_ref, w2_ref, conv2_ref, HP2, MARG2, M2, C2, CH2)
    pbuf3_ref[...] = jnp.zeros_like(pbuf3_ref)
    pool2x2_leaky_into_padded(conv2_ref, b2_ref, pbuf3_ref, HP2, HO2, HP3, MARG3)

    # ---- layer 3: conv(64->128) ; leaky ; pool(2,2,padding=1) ----
    conv3x3(pbuf3_ref, w3_ref, conv3_ref, HP3, MARG3, M3, C3, CH3)

    neg = jnp.float32(-1e30)                  # stand-in for the -inf pool pad
    wo_ids = lax.broadcasted_iota(jnp.int32, (HO3, C3), 0)
    for b in range(B):
        for r in range(HO3):
            taps = []
            for i in (2 * r, 2 * r + 1):      # conv rows in padded coordinates
                if not (1 <= i <= H3):        # pool padding row -> skip
                    continue
                rowbase = b * HP3 * HP3 + i * HP3
                t0 = conv3_ref[pl.ds(rowbase + 0, HO3, stride=2), :]  # cols 0,2,4,6
                t0 = jnp.where(wo_ids == 0, neg, t0)                  # col 0 = pad
                t1 = conv3_ref[pl.ds(rowbase + 1, HO3, stride=2), :]  # cols 1,3,5,7
                t1 = jnp.where(wo_ids == HO3 - 1, neg, t1)            # col 7 = pad
                taps.append(jnp.maximum(t0, t1))
            m = taps[0] if len(taps) == 1 else jnp.maximum(taps[0], taps[1])
            m = m + b3_ref[...]
            y = jnp.maximum(m, NEG_SLOPE * m)
            for wo in range(HO3):
                row = (r * HO3 + wo) * B + b          # fcin row = hw*B + b
                fcin_ref[row:row + 1, :] = y[wo:wo + 1, :]

    # ---- fc: 2048 -> 512 -> 10 (wf1 pre-permuted to NHWC flatten order) ----
    wf1_copy.wait()
    acc = jnp.zeros((B, 512), jnp.float32)
    for hw in range(16):
        a = fcin_ref[B * hw:B * hw + B, :]            # (B, 128) slab hw
        acc = acc + jnp.dot(a, wf1_vmem[hw],
                            preferred_element_type=jnp.float32)
    h = acc + bf1_ref[...]
    h = jnp.maximum(h, NEG_SLOPE * h)
    out = jnp.dot(h, wf2_ref[...],
                  preferred_element_type=jnp.float32) + bf2_ref[...]
    out_ref[...] = out


_VMEM_SPEC = pl.BlockSpec(memory_space=pltpu.MemorySpace.VMEM)

_fused_forward = pl.pallas_call(
    _fused_cnn_kernel,
    out_shape=jax.ShapeDtypeStruct((B, 10), jnp.float32),
    in_specs=[
        _VMEM_SPEC,                               # xf  (padded, flattened input)
        _VMEM_SPEC, _VMEM_SPEC,                   # w1, b1
        _VMEM_SPEC, _VMEM_SPEC,                   # w2, b2
        _VMEM_SPEC, _VMEM_SPEC,                   # w3, b3
        pl.BlockSpec(memory_space=pl.ANY),        # wf1 stays in HBM (manual DMA)
        _VMEM_SPEC,                               # bf1
        _VMEM_SPEC, _VMEM_SPEC,                   # wf2, bf2
    ],
    out_specs=_VMEM_SPEC,
    scratch_shapes=[
        pltpu.VMEM((M1, C1), jnp.float32),              # conv1 out (padded coords)
        pltpu.VMEM((M2 + 2 * MARG2, C1), jnp.float32),  # padded+margined L2 input
        pltpu.VMEM((M2, C2), jnp.float32),              # conv2 out
        pltpu.VMEM((M3 + 2 * MARG3, C2), jnp.float32),  # padded+margined L3 input
        pltpu.VMEM((M3, C3), jnp.float32),              # conv3 out
        pltpu.VMEM((16 * B, C3), jnp.float32),          # fc-input slabs (hw-major)
        pltpu.VMEM((16, C3, 512), jnp.float32),         # wf1 landing buffer
        pltpu.SemaphoreType.DMA(()),                    # wf1 DMA completion
    ],
    compiler_params=pltpu.CompilerParams(vmem_limit_bytes=32 * 1024 * 1024),
)


@jax.jit
def model_forward(params, x_nchw):
    # NCHW -> NHWC, zero-pad for conv1, flatten rows and add the shift margin.
    x = jnp.transpose(x_nchw, (0, 2, 3, 1)).astype(jnp.float32)
    xp = jnp.pad(x, ((0, 0), (1, 1), (1, 1), (0, 0)))
    xf = jnp.pad(xp.reshape(B * HP1 * HP1, C0), ((MARG1, MARG1), (0, 0)))
    return _fused_forward(xf, params["w1"], params["b1"], params["w2"],
                          params["b2"], params["w3"], params["b3"],
                          params["wf1"], params["bf1"], params["wf2"],
                          params["bf2"])


def init_params(key):
    def uniform(k, shape, bound):
        return jax.random.uniform(k, shape, jnp.float32, -bound, bound)

    ks = jax.random.split(key, 10)
    p = {}
    # conv weights in tap-major layout: w[ky*3+kx, cin, cout]
    p["w1"] = uniform(ks[0], (9, C0, C1), (C0 * 9) ** -0.5)
    p["b1"] = uniform(ks[1], (1, C1), (C0 * 9) ** -0.5)
    p["w2"] = uniform(ks[2], (9, C1, C2), (C1 * 9) ** -0.5)
    p["b2"] = uniform(ks[3], (1, C2), (C1 * 9) ** -0.5)
    p["w3"] = uniform(ks[4], (9, C2, C3), (C2 * 9) ** -0.5)
    p["b3"] = uniform(ks[5], (1, C3), (C2 * 9) ** -0.5)
    # fc1 weight pre-permuted to the kernel's NHWC flatten order:
    #   wf1[h*4+w, c, n] == torch_fc1_weight[n, c*16 + h*4 + w]
    p["wf1"] = uniform(ks[6], (16, C3, 512), (6.0 / 2048.0) ** 0.5)  # kaiming a=0
    p["bf1"] = uniform(ks[7], (1, 512), 2048.0 ** -0.5)
    p["wf2"] = uniform(ks[8], (512, 10), (6.0 / 512.0) ** 0.5)       # kaiming a=0
    p["bf2"] = uniform(ks[9], (1, 10), 512.0 ** -0.5)
    return p


def _leaky(x):
    return jnp.where(x >= 0, x, NEG_SLOPE * x)


@jax.jit
def reference_forward(params, x_nchw):
    # Pure-JAX reference with identical semantics (for correctness checking).
    x = jnp.transpose(x_nchw, (0, 2, 3, 1)).astype(jnp.float32)

    def conv(z, w9, bias):
        cin, cout = w9.shape[1], w9.shape[2]
        w = w9.reshape(3, 3, cin, cout)
        y = lax.conv_general_dilated(
            z, w, window_strides=(1, 1), padding="SAME",
            dimension_numbers=("NHWC", "HWIO", "NHWC"),
            precision=lax.Precision.HIGHEST)
        return y + bias.reshape(1, 1, 1, cout)

    def maxpool(z, pad):
        return lax.reduce_window(
            z, -jnp.inf, lax.max, (1, 2, 2, 1), (1, 2, 2, 1),
            ((0, 0), (pad, pad), (pad, pad), (0, 0)))

    y = _leaky(maxpool(conv(x, params["w1"], params["b1"]), 0))
    y = _leaky(maxpool(conv(y, params["w2"], params["b2"]), 0))
    y = maxpool(_leaky(conv(y, params["w3"], params["b3"])), 1)

    flat = jnp.transpose(y, (0, 3, 1, 2)).reshape(y.shape[0], -1)  # torch view
    wf1_mat = jnp.transpose(params["wf1"], (1, 0, 2)).reshape(16 * C3, 512)
    h = _leaky(jnp.dot(flat, wf1_mat, precision=lax.Precision.HIGHEST)
               + params["bf1"])
    return (jnp.dot(h, params["wf2"], precision=lax.Precision.HIGHEST)
            + params["bf2"])


if __name__ == "__main__":
    key = jax.random.PRNGKey(0)
    k_x, k_p = jax.random.split(key)
    # 24x24 input so the three stages end at 4x4x128, matching fc's 128*4*4.
    x = jax.random.normal(k_x, (B, 3, 24, 24), dtype=jnp.float32)
    params = init_params(k_p)

    out = jax.block_until_ready(model_forward(params, x))
    assert out.shape == (B, 10), out.shape
    assert bool(jnp.all(jnp.isfinite(out)))

    ref = jax.block_until_ready(reference_forward(params, x))
    max_err = float(jnp.max(jnp.abs(out - ref)))
    assert max_err < 2e-2, f"mismatch vs reference: max abs err {max_err}"

    print("KERNEL_OK")
</pallas_src>

<mosaic_0001>
module attributes {stable_mosaic.version = 11 : i64} {
  func.func @_fused_cnn_kernel(%arg0: memref<1406x3xf32, #tpu.memory_space<vmem>>, %arg1: memref<9x3x32xf32, #tpu.memory_space<vmem>>, %arg2: memref<1x32xf32, #tpu.memory_space<vmem>>, %arg3: memref<9x32x64xf32, #tpu.memory_space<vmem>>, %arg4: memref<1x64xf32, #tpu.memory_space<vmem>>, %arg5: memref<9x64x128xf32, #tpu.memory_space<vmem>>, %arg6: memref<1x128xf32, #tpu.memory_space<vmem>>, %arg7: memref<16x128x512xf32, #tpu.memory_space<any>>, %arg8: memref<1x512xf32, #tpu.memory_space<vmem>>, %arg9: memref<512x10xf32, #tpu.memory_space<vmem>>, %arg10: memref<1x10xf32, #tpu.memory_space<vmem>>, %arg11: memref<2x10xf32, #tpu.memory_space<vmem>>, %arg12: memref<1352x32xf32, #tpu.memory_space<vmem>>, %arg13: memref<422x32xf32, #tpu.memory_space<vmem>>, %arg14: memref<392x64xf32, #tpu.memory_space<vmem>>, %arg15: memref<146x64xf32, #tpu.memory_space<vmem>>, %arg16: memref<128x128xf32, #tpu.memory_space<vmem>>, %arg17: memref<32x128xf32, #tpu.memory_space<vmem>>, %arg18: memref<16x128x512xf32, #tpu.memory_space<vmem>>, %arg19: memref<!tpu.dma_semaphore, #tpu.memory_space<semaphore_mem>>) attributes {dimension_semantics = [], scalar_prefetch = 0 : i64, scratch_operands = 8 : i64, tpu.core_type = #tpu.core_type<tc>} {
    tpu.enqueue_dma source(%arg7 : memref<16x128x512xf32, #tpu.memory_space<any>>) target(%arg18 : memref<16x128x512xf32, #tpu.memory_space<vmem>>) target_semaphore(%arg19 : memref<!tpu.dma_semaphore, #tpu.memory_space<semaphore_mem>>)
    %c0_i32 = arith.constant 0 : i32
    %c13_i32 = arith.constant 13 : i32
    %0 = arith.addi %c0_i32, %c13_i32 : i32
    %c1_i32 = arith.constant 1 : i32
    scf.for %arg20 = %c0_i32 to %0 step %c1_i32  : i32 {
      %c104_i32 = arith.constant 104 : i32
      %853 = arith.muli %arg20, %c104_i32 : i32
      %854 = tpu.assume_multiple %853, 8 : i32
      %cst_580 = arith.constant 0.000000e+00 : f32
      %855 = vector.broadcast %cst_580 : f32 to vector<104x32xf32>
      %c0_i32_581 = arith.constant 0 : i32
      %856 = arith.addi %c0_i32_581, %854 : i32
      %857 = arith.index_cast %856 : i32 to index
      %c0_582 = arith.constant 0 : index
      %858 = vector.load %arg0[%857, %c0_582] : memref<1406x3xf32, #tpu.memory_space<vmem>>, vector<104x3xf32>
      %c0_583 = arith.constant 0 : index
      %c0_584 = arith.constant 0 : index
      %c0_585 = arith.constant 0 : index
      %859 = vector.load %arg1[%c0_583, %c0_584, %c0_585] : memref<9x3x32xf32, #tpu.memory_space<vmem>>, vector<1x3x32xf32>
      %860 = vector.shape_cast %859 : vector<1x3x32xf32> to vector<3x32xf32>
      %cst_586 = arith.constant dense<0.000000e+00> : vector<104x32xf32>
      %861 = tpu.matmul %858, %860, %cst_586 {dimension_numbers = #tpu.dot_dimension_numbers<[1], [0], [0], [1], [0, 0, 1, 1], [], []>} : vector<104x3xf32>, vector<3x32xf32>, vector<104x32xf32> -> vector<104x32xf32>
      %862 = arith.addf %855, %861 : vector<104x32xf32>
      %c1_i32_587 = arith.constant 1 : i32
      %863 = arith.addi %c1_i32_587, %854 : i32
      %864 = arith.index_cast %863 : i32 to index
      %c0_588 = arith.constant 0 : index
      %865 = vector.load %arg0[%864, %c0_588] : memref<1406x3xf32, #tpu.memory_space<vmem>>, vector<104x3xf32>
      %c1_589 = arith.constant 1 : index
      %c0_590 = arith.constant 0 : index
      %c0_591 = arith.constant 0 : index
      %866 = vector.load %arg1[%c1_589, %c0_590, %c0_591] : memref<9x3x32xf32, #tpu.memory_space<vmem>>, vector<1x3x32xf32>
      %867 = vector.shape_cast %866 : vector<1x3x32xf32> to vector<3x32xf32>
      %cst_592 = arith.constant dense<0.000000e+00> : vector<104x32xf32>
      %868 = tpu.matmul %865, %867, %cst_592 {dimension_numbers = #tpu.dot_dimension_numbers<[1], [0], [0], [1], [0, 0, 1, 1], [], []>} : vector<104x3xf32>, vector<3x32xf32>, vector<104x32xf32> -> vector<104x32xf32>
      %869 = arith.addf %862, %868 : vector<104x32xf32>
      %c2_i32_593 = arith.constant 2 : i32
      %870 = arith.addi %c2_i32_593, %854 : i32
      %871 = arith.index_cast %870 : i32 to index
      %c0_594 = arith.constant 0 : index
      %872 = vector.load %arg0[%871, %c0_594] : memref<1406x3xf32, #tpu.memory_space<vmem>>, vector<104x3xf32>
      %c2_595 = arith.constant 2 : index
      %c0_596 = arith.constant 0 : index
      %c0_597 = arith.constant 0 : index
      %873 = vector.load %arg1[%c2_595, %c0_596, %c0_597] : memref<9x3x32xf32, #tpu.memory_space<vmem>>, vector<1x3x32xf32>
      %874 = vector.shape_cast %873 : vector<1x3x32xf32> to vector<3x32xf32>
      %cst_598 = arith.constant dense<0.000000e+00> : vector<104x32xf32>
      %875 = tpu.matmul %872, %874, %cst_598 {dimension_numbers = #tpu.dot_dimension_numbers<[1], [0], [0], [1], [0, 0, 1, 1], [], []>} : vector<104x3xf32>, vector<3x32xf32>, vector<104x32xf32> -> vector<104x32xf32>
      %876 = arith.addf %869, %875 : vector<104x32xf32>
      %c26_i32 = arith.constant 26 : i32
      %877 = arith.addi %c26_i32, %854 : i32
      %878 = arith.index_cast %877 : i32 to index
      %c0_599 = arith.constant 0 : index
      %879 = vector.load %arg0[%878, %c0_599] : memref<1406x3xf32, #tpu.memory_space<vmem>>, vector<104x3xf32>
      %c3_600 = arith.constant 3 : index
      %c0_601 = arith.constant 0 : index
      %c0_602 = arith.constant 0 : index
      %880 = vector.load %arg1[%c3_600, %c0_601, %c0_602] : memref<9x3x32xf32, #tpu.memory_space<vmem>>, vector<1x3x32xf32>
      %881 = vector.shape_cast %880 : vector<1x3x32xf32> to vector<3x32xf32>
      %cst_603 = arith.constant dense<0.000000e+00> : vector<104x32xf32>
      %882 = tpu.matmul %879, %881, %cst_603 {dimension_numbers = #tpu.dot_dimension_numbers<[1], [0], [0], [1], [0, 0, 1, 1], [], []>} : vector<104x3xf32>, vector<3x32xf32>, vector<104x32xf32> -> vector<104x32xf32>
      %883 = arith.addf %876, %882 : vector<104x32xf32>
      %c27_i32 = arith.constant 27 : i32
      %884 = arith.addi %c27_i32, %854 : i32
      %885 = arith.index_cast %884 : i32 to index
      %c0_604 = arith.constant 0 : index
      %886 = vector.load %arg0[%885, %c0_604] : memref<1406x3xf32, #tpu.memory_space<vmem>>, vector<104x3xf32>
      %c4_605 = arith.constant 4 : index
      %c0_606 = arith.constant 0 : index
      %c0_607 = arith.constant 0 : index
      %887 = vector.load %arg1[%c4_605, %c0_606, %c0_607] : memref<9x3x32xf32, #tpu.memory_space<vmem>>, vector<1x3x32xf32>
      %888 = vector.shape_cast %887 : vector<1x3x32xf32> to vector<3x32xf32>
      %cst_608 = arith.constant dense<0.000000e+00> : vector<104x32xf32>
      %889 = tpu.matmul %886, %888, %cst_608 {dimension_numbers = #tpu.dot_dimension_numbers<[1], [0], [0], [1], [0, 0, 1, 1], [], []>} : vector<104x3xf32>, vector<3x32xf32>, vector<104x32xf32> -> vector<104x32xf32>
      %890 = arith.addf %883, %889 : vector<104x32xf32>
      %c28_i32 = arith.constant 28 : i32
      %891 = arith.addi %c28_i32, %854 : i32
      %892 = arith.index_cast %891 : i32 to index
      %c0_609 = arith.constant 0 : index
      %893 = vector.load %arg0[%892, %c0_609] : memref<1406x3xf32, #tpu.memory_space<vmem>>, vector<104x3xf32>
      %c5_610 = arith.constant 5 : index
      %c0_611 = arith.constant 0 : index
      %c0_612 = arith.constant 0 : index
      %894 = vector.load %arg1[%c5_610, %c0_611, %c0_612] : memref<9x3x32xf32, #tpu.memory_space<vmem>>, vector<1x3x32xf32>
      %895 = vector.shape_cast %894 : vector<1x3x32xf32> to vector<3x32xf32>
      %cst_613 = arith.constant dense<0.000000e+00> : vector<104x32xf32>
      %896 = tpu.matmul %893, %895, %cst_613 {dimension_numbers = #tpu.dot_dimension_numbers<[1], [0], [0], [1], [0, 0, 1, 1], [], []>} : vector<104x3xf32>, vector<3x32xf32>, vector<104x32xf32> -> vector<104x32xf32>
      %897 = arith.addf %890, %896 : vector<104x32xf32>
      %c52_i32 = arith.constant 52 : i32
      %898 = arith.addi %c52_i32, %854 : i32
      %899 = arith.index_cast %898 : i32 to index
      %c0_614 = arith.constant 0 : index
      %900 = vector.load %arg0[%899, %c0_614] : memref<1406x3xf32, #tpu.memory_space<vmem>>, vector<104x3xf32>
      %c6_615 = arith.constant 6 : index
      %c0_616 = arith.constant 0 : index
      %c0_617 = arith.constant 0 : index
      %901 = vector.load %arg1[%c6_615, %c0_616, %c0_617] : memref<9x3x32xf32, #tpu.memory_space<vmem>>, vector<1x3x32xf32>
      %902 = vector.shape_cast %901 : vector<1x3x32xf32> to vector<3x32xf32>
      %cst_618 = arith.constant dense<0.000000e+00> : vector<104x32xf32>
      %903 = tpu.matmul %900, %902, %cst_618 {dimension_numbers = #tpu.dot_dimension_numbers<[1], [0], [0], [1], [0, 0, 1, 1], [], []>} : vector<104x3xf32>, vector<3x32xf32>, vector<104x32xf32> -> vector<104x32xf32>
      %904 = arith.addf %897, %903 : vector<104x32xf32>
      %c53_i32 = arith.constant 53 : i32
      %905 = arith.addi %c53_i32, %854 : i32
      %906 = arith.index_cast %905 : i32 to index
      %c0_619 = arith.constant 0 : index
      %907 = vector.load %arg0[%906, %c0_619] : memref<1406x3xf32, #tpu.memory_space<vmem>>, vector<104x3xf32>
      %c7_620 = arith.constant 7 : index
      %c0_621 = arith.constant 0 : index
      %c0_622 = arith.constant 0 : index
      %908 = vector.load %arg1[%c7_620, %c0_621, %c0_622] : memref<9x3x32xf32, #tpu.memory_space<vmem>>, vector<1x3x32xf32>
      %909 = vector.shape_cast %908 : vector<1x3x32xf32> to vector<3x32xf32>
      %cst_623 = arith.constant dense<0.000000e+00> : vector<104x32xf32>
      %910 = tpu.matmul %907, %909, %cst_623 {dimension_numbers = #tpu.dot_dimension_numbers<[1], [0], [0], [1], [0, 0, 1, 1], [], []>} : vector<104x3xf32>, vector<3x32xf32>, vector<104x32xf32> -> vector<104x32xf32>
      %911 = arith.addf %904, %910 : vector<104x32xf32>
      %c54_i32 = arith.constant 54 : i32
      %912 = arith.addi %c54_i32, %854 : i32
      %913 = arith.index_cast %912 : i32 to index
      %c0_624 = arith.constant 0 : index
      %914 = vector.load %arg0[%913, %c0_624] : memref<1406x3xf32, #tpu.memory_space<vmem>>, vector<104x3xf32>
      %c8_625 = arith.constant 8 : index
      %c0_626 = arith.constant 0 : index
      %c0_627 = arith.constant 0 : index
      %915 = vector.load %arg1[%c8_625, %c0_626, %c0_627] : memref<9x3x32xf32, #tpu.memory_space<vmem>>, vector<1x3x32xf32>
      %916 = vector.shape_cast %915 : vector<1x3x32xf32> to vector<3x32xf32>
      %cst_628 = arith.constant dense<0.000000e+00> : vector<104x32xf32>
      %917 = tpu.matmul %914, %916, %cst_628 {dimension_numbers = #tpu.dot_dimension_numbers<[1], [0], [0], [1], [0, 0, 1, 1], [], []>} : vector<104x3xf32>, vector<3x32xf32>, vector<104x32xf32> -> vector<104x32xf32>
      %918 = arith.addf %911, %917 : vector<104x32xf32>
      %919 = arith.index_cast %854 : i32 to index
      %c0_629 = arith.constant 0 : index
      %920 = vector.load %arg12[%919, %c0_629] : memref<1352x32xf32, #tpu.memory_space<vmem>>, vector<104x32xf32>
      tpu.vector_store %arg12[%919, %c0_629], %918 {strides = array<i32>} : memref<1352x32xf32, #tpu.memory_space<vmem>>, vector<104x32xf32>,
    }
    %c13_i32_0 = arith.constant 13 : i32
    %cst = arith.constant 0.000000e+00 : f32
    %1 = vector.broadcast %cst : f32 to vector<422x32xf32>
    %c0 = arith.constant 0 : index
    %c0_1 = arith.constant 0 : index
    %2 = vector.load %arg13[%c0, %c0_1] : memref<422x32xf32, #tpu.memory_space<vmem>>, vector<422x32xf32>
    tpu.vector_store %arg13[%c0, %c0_1], %1 {strides = array<i32>} : memref<422x32xf32, #tpu.memory_space<vmem>>, vector<422x32xf32>,
    %c27 = arith.constant 27 : index
    %c0_2 = arith.constant 0 : index
    %3 = tpu.strided_load %arg12[%c27, %c0_2] {strides = array<i32: 2, 1>} : memref<1352x32xf32, #tpu.memory_space<vmem>>, vector<12x32xf32>
    %c28 = arith.constant 28 : index
    %c0_3 = arith.constant 0 : index
    %4 = tpu.strided_load %arg12[%c28, %c0_3] {strides = array<i32: 2, 1>} : memref<1352x32xf32, #tpu.memory_space<vmem>>, vector<12x32xf32>
    %c53 = arith.constant 53 : index
    %c0_4 = arith.constant 0 : index
    %5 = tpu.strided_load %arg12[%c53, %c0_4] {strides = array<i32: 2, 1>} : memref<1352x32xf32, #tpu.memory_space<vmem>>, vector<12x32xf32>
    %c54 = arith.constant 54 : index
    %c0_5 = arith.constant 0 : index
    %6 = tpu.strided_load %arg12[%c54, %c0_5] {strides = array<i32: 2, 1>} : memref<1352x32xf32, #tpu.memory_space<vmem>>, vector<12x32xf32>
    %7 = arith.maximumf %3, %4 : vector<12x32xf32>
    %8 = arith.maximumf %5, %6 : vector<12x32xf32>
    %9 = arith.maximumf %7, %8 : vector<12x32xf32>
    %c0_6 = arith.constant 0 : index
    %c0_7 = arith.constant 0 : index
    %10 = vector.load %arg2[%c0_6, %c0_7] : memref<1x32xf32, #tpu.memory_space<vmem>>, vector<1x32xf32>
    %11 = vector.broadcast %10 : vector<1x32xf32> to vector<12x32xf32>
    %12 = arith.addf %9, %11 : vector<12x32xf32>
    %cst_8 = arith.constant 0.00999999977 : f32
    %13 = vector.broadcast %cst_8 : f32 to vector<12x32xf32>
    %14 = arith.mulf %13, %12 : vector<12x32xf32>
    %15 = arith.maximumf %12, %14 : vector<12x32xf32>
    %c30 = arith.constant 30 : index
    %c0_9 = arith.constant 0 : index
    %16 = vector.load %arg13[%c30, %c0_9] : memref<422x32xf32, #tpu.memory_space<vmem>>, vector<12x32xf32>
    tpu.vector_store %arg13[%c30, %c0_9], %15 {strides = array<i32>} : memref<422x32xf32, #tpu.memory_space<vmem>>, vector<12x32xf32>,
    %c79 = arith.constant 79 : index
    %c0_10 = arith.constant 0 : index
    %17 = tpu.strided_load %arg12[%c79, %c0_10] {strides = array<i32: 2, 1>} : memref<1352x32xf32, #tpu.memory_space<vmem>>, vector<12x32xf32>
    %c80 = arith.constant 80 : index
    %c0_11 = arith.constant 0 : index
    %18 = tpu.strided_load %arg12[%c80, %c0_11] {strides = array<i32: 2, 1>} : memref<1352x32xf32, #tpu.memory_space<vmem>>, vector<12x32xf32>
    %c105 = arith.constant 105 : index
    %c0_12 = arith.constant 0 : index
    %19 = tpu.strided_load %arg12[%c105, %c0_12] {strides = array<i32: 2, 1>} : memref<1352x32xf32, #tpu.memory_space<vmem>>, vector<12x32xf32>
    %c106 = arith.constant 106 : index
    %c0_13 = arith.constant 0 : index
    %20 = tpu.strided_load %arg12[%c106, %c0_13] {strides = array<i32: 2, 1>} : memref<1352x32xf32, #tpu.memory_space<vmem>>, vector<12x32xf32>
    %21 = arith.maximumf %17, %18 : vector<12x32xf32>
    %22 = arith.maximumf %19, %20 : vector<12x32xf32>
    %23 = arith.maximumf %21, %22 : vector<12x32xf32>
    %c0_14 = arith.constant 0 : index
    %c0_15 = arith.constant 0 : index
    %24 = vector.load %arg2[%c0_14, %c0_15] : memref<1x32xf32, #tpu.memory_space<vmem>>, vector<1x32xf32>
    %25 = vector.broadcast %24 : vector<1x32xf32> to vector<12x32xf32>
    %26 = arith.addf %23, %25 : vector<12x32xf32>
    %cst_16 = arith.constant 0.00999999977 : f32
    %27 = vector.broadcast %cst_16 : f32 to vector<12x32xf32>
    %28 = arith.mulf %27, %26 : vector<12x32xf32>
    %29 = arith.maximumf %26, %28 : vector<12x32xf32>
    %c44 = arith.constant 44 : index
    %c0_17 = arith.constant 0 : index
    %30 = vector.load %arg13[%c44, %c0_17] : memref<422x32xf32, #tpu.memory_space<vmem>>, vector<12x32xf32>
    tpu.vector_store %arg13[%c44, %c0_17], %29 {strides = array<i32>} : memref<422x32xf32, #tpu.memory_space<vmem>>, vector<12x32xf32>,
    %c131 = arith.constant 131 : index
    %c0_18 = arith.constant 0 : index
    %31 = tpu.strided_load %arg12[%c131, %c0_18] {strides = array<i32: 2, 1>} : memref<1352x32xf32, #tpu.memory_space<vmem>>, vector<12x32xf32>
    %c132 = arith.constant 132 : index
    %c0_19 = arith.constant 0 : index
    %32 = tpu.strided_load %arg12[%c132, %c0_19] {strides = array<i32: 2, 1>} : memref<1352x32xf32, #tpu.memory_space<vmem>>, vector<12x32xf32>
    %c157 = arith.constant 157 : index
    %c0_20 = arith.constant 0 : index
    %33 = tpu.strided_load %arg12[%c157, %c0_20] {strides = array<i32: 2, 1>} : memref<1352x32xf32, #tpu.memory_space<vmem>>, vector<12x32xf32>
    %c158 = arith.constant 158 : index
    %c0_21 = arith.constant 0 : index
    %34 = tpu.strided_load %arg12[%c158, %c0_21] {strides = array<i32: 2, 1>} : memref<1352x32xf32, #tpu.memory_space<vmem>>, vector<12x32xf32>
    %35 = arith.maximumf %31, %32 : vector<12x32xf32>
    %36 = arith.maximumf %33, %34 : vector<12x32xf32>
    %37 = arith.maximumf %35, %36 : vector<12x32xf32>
    %c0_22 = arith.constant 0 : index
    %c0_23 = arith.constant 0 : index
    %38 = vector.load %arg2[%c0_22, %c0_23] : memref<1x32xf32, #tpu.memory_space<vmem>>, vector<1x32xf32>
    %39 = vector.broadcast %38 : vector<1x32xf32> to vector<12x32xf32>
    %40 = arith.addf %37, %39 : vector<12x32xf32>
    %cst_24 = arith.constant 0.00999999977 : f32
    %41 = vector.broadcast %cst_24 : f32 to vector<12x32xf32>
    %42 = arith.mulf %41, %40 : vector<12x32xf32>
    %43 = arith.maximumf %40, %42 : vector<12x32xf32>
    %c58 = arith.constant 58 : index
    %c0_25 = arith.constant 0 : index
    %44 = vector.load %arg13[%c58, %c0_25] : memref<422x32xf32, #tpu.memory_space<vmem>>, vector<12x32xf32>
    tpu.vector_store %arg13[%c58, %c0_25], %43 {strides = array<i32>} : memref<422x32xf32, #tpu.memory_space<vmem>>, vector<12x32xf32>,
    %c183 = arith.constant 183 : index
    %c0_26 = arith.constant 0 : index
    %45 = tpu.strided_load %arg12[%c183, %c0_26] {strides = array<i32: 2, 1>} : memref<1352x32xf32, #tpu.memory_space<vmem>>, vector<12x32xf32>
    %c184 = arith.constant 184 : index
    %c0_27 = arith.constant 0 : index
    %46 = tpu.strided_load %arg12[%c184, %c0_27] {strides = array<i32: 2, 1>} : memref<1352x32xf32, #tpu.memory_space<vmem>>, vector<12x32xf32>
    %c209 = arith.constant 209 : index
    %c0_28 = arith.constant 0 : index
    %47 = tpu.strided_load %arg12[%c209, %c0_28] {strides = array<i32: 2, 1>} : memref<1352x32xf32, #tpu.memory_space<vmem>>, vector<12x32xf32>
    %c210 = arith.constant 210 : index
    %c0_29 = arith.constant 0 : index
    %48 = tpu.strided_load %arg12[%c210, %c0_29] {strides = array<i32: 2, 1>} : memref<1352x32xf32, #tpu.memory_space<vmem>>, vector<12x32xf32>
    %49 = arith.maximumf %45, %46 : vector<12x32xf32>
    %50 = arith.maximumf %47, %48 : vector<12x32xf32>
    %51 = arith.maximumf %49, %50 : vector<12x32xf32>
    %c0_30 = arith.constant 0 : index
    %c0_31 = arith.constant 0 : index
    %52 = vector.load %arg2[%c0_30, %c0_31] : memref<1x32xf32, #tpu.memory_space<vmem>>, vector<1x32xf32>
    %53 = vector.broadcast %52 : vector<1x32xf32> to vector<12x32xf32>
    %54 = arith.addf %51, %53 : vector<12x32xf32>
    %cst_32 = arith.constant 0.00999999977 : f32
    %55 = vector.broadcast %cst_32 : f32 to vector<12x32xf32>
    %56 = arith.mulf %55, %54 : vector<12x32xf32>
    %57 = arith.maximumf %54, %56 : vector<12x32xf32>
    %c72 = arith.constant 72 : index
    %c0_33 = arith.constant 0 : index
    %58 = vector.load %arg13[%c72, %c0_33] : memref<422x32xf32, #tpu.memory_space<vmem>>, vector<12x32xf32>
    tpu.vector_store %arg13[%c72, %c0_33], %57 {strides = array<i32>} : memref<422x32xf32, #tpu.memory_space<vmem>>, vector<12x32xf32>,
    %c235 = arith.constant 235 : index
    %c0_34 = arith.constant 0 : index
    %59 = tpu.strided_load %arg12[%c235, %c0_34] {strides = array<i32: 2, 1>} : memref<1352x32xf32, #tpu.memory_space<vmem>>, vector<12x32xf32>
    %c236 = arith.constant 236 : index
    %c0_35 = arith.constant 0 : index
    %60 = tpu.strided_load %arg12[%c236, %c0_35] {strides = array<i32: 2, 1>} : memref<1352x32xf32, #tpu.memory_space<vmem>>, vector<12x32xf32>
    %c261 = arith.constant 261 : index
    %c0_36 = arith.constant 0 : index
    %61 = tpu.strided_load %arg12[%c261, %c0_36] {strides = array<i32: 2, 1>} : memref<1352x32xf32, #tpu.memory_space<vmem>>, vector<12x32xf32>
    %c262 = arith.constant 262 : index
    %c0_37 = arith.constant 0 : index
    %62 = tpu.strided_load %arg12[%c262, %c0_37] {strides = array<i32: 2, 1>} : memref<1352x32xf32, #tpu.memory_space<vmem>>, vector<12x32xf32>
    %63 = arith.maximumf %59, %60 : vector<12x32xf32>
    %64 = arith.maximumf %61, %62 : vector<12x32xf32>
    %65 = arith.maximumf %63, %64 : vector<12x32xf32>
    %c0_38 = arith.constant 0 : index
    %c0_39 = arith.constant 0 : index
    %66 = vector.load %arg2[%c0_38, %c0_39] : memref<1x32xf32, #tpu.memory_space<vmem>>, vector<1x32xf32>
    %67 = vector.broadcast %66 : vector<1x32xf32> to vector<12x32xf32>
    %68 = arith.addf %65, %67 : vector<12x32xf32>
    %cst_40 = arith.constant 0.00999999977 : f32
    %69 = vector.broadcast %cst_40 : f32 to vector<12x32xf32>
    %70 = arith.mulf %69, %68 : vector<12x32xf32>
    %71 = arith.maximumf %68, %70 : vector<12x32xf32>
    %c86 = arith.constant 86 : index
    %c0_41 = arith.constant 0 : index
    %72 = vector.load %arg13[%c86, %c0_41] : memref<422x32xf32, #tpu.memory_space<vmem>>, vector<12x32xf32>
    tpu.vector_store %arg13[%c86, %c0_41], %71 {strides = array<i32>} : memref<422x32xf32, #tpu.memory_space<vmem>>, vector<12x32xf32>,
    %c287 = arith.constant 287 : index
    %c0_42 = arith.constant 0 : index
    %73 = tpu.strided_load %arg12[%c287, %c0_42] {strides = array<i32: 2, 1>} : memref<1352x32xf32, #tpu.memory_space<vmem>>, vector<12x32xf32>
    %c288 = arith.constant 288 : index
    %c0_43 = arith.constant 0 : index
    %74 = tpu.strided_load %arg12[%c288, %c0_43] {strides = array<i32: 2, 1>} : memref<1352x32xf32, #tpu.memory_space<vmem>>, vector<12x32xf32>
    %c313 = arith.constant 313 : index
    %c0_44 = arith.constant 0 : index
    %75 = tpu.strided_load %arg12[%c313, %c0_44] {strides = array<i32: 2, 1>} : memref<1352x32xf32, #tpu.memory_space<vmem>>, vector<12x32xf32>
    %c314 = arith.constant 314 : index
    %c0_45 = arith.constant 0 : index
    %76 = tpu.strided_load %arg12[%c314, %c0_45] {strides = array<i32: 2, 1>} : memref<1352x32xf32, #tpu.memory_space<vmem>>, vector<12x32xf32>
    %77 = arith.maximumf %73, %74 : vector<12x32xf32>
    %78 = arith.maximumf %75, %76 : vector<12x32xf32>
    %79 = arith.maximumf %77, %78 : vector<12x32xf32>
    %c0_46 = arith.constant 0 : index
    %c0_47 = arith.constant 0 : index
    %80 = vector.load %arg2[%c0_46, %c0_47] : memref<1x32xf32, #tpu.memory_space<vmem>>, vector<1x32xf32>
    %81 = vector.broadcast %80 : vector<1x32xf32> to vector<12x32xf32>
    %82 = arith.addf %79, %81 : vector<12x32xf32>
    %cst_48 = arith.constant 0.00999999977 : f32
    %83 = vector.broadcast %cst_48 : f32 to vector<12x32xf32>
    %84 = arith.mulf %83, %82 : vector<12x32xf32>
    %85 = arith.maximumf %82, %84 : vector<12x32xf32>
    %c100 = arith.constant 100 : index
    %c0_49 = arith.constant 0 : index
    %86 = vector.load %arg13[%c100, %c0_49] : memref<422x32xf32, #tpu.memory_space<vmem>>, vector<12x32xf32>
    tpu.vector_store %arg13[%c100, %c0_49], %85 {strides = array<i32>} : memref<422x32xf32, #tpu.memory_space<vmem>>, vector<12x32xf32>,
    %c339 = arith.constant 339 : index
    %c0_50 = arith.constant 0 : index
    %87 = tpu.strided_load %arg12[%c339, %c0_50] {strides = array<i32: 2, 1>} : memref<1352x32xf32, #tpu.memory_space<vmem>>, vector<12x32xf32>
    %c340 = arith.constant 340 : index
    %c0_51 = arith.constant 0 : index
    %88 = tpu.strided_load %arg12[%c340, %c0_51] {strides = array<i32: 2, 1>} : memref<1352x32xf32, #tpu.memory_space<vmem>>, vector<12x32xf32>
    %c365 = arith.constant 365 : index
    %c0_52 = arith.constant 0 : index
    %89 = tpu.strided_load %arg12[%c365, %c0_52] {strides = array<i32: 2, 1>} : memref<1352x32xf32, #tpu.memory_space<vmem>>, vector<12x32xf32>
    %c366 = arith.constant 366 : index
    %c0_53 = arith.constant 0 : index
    %90 = tpu.strided_load %arg12[%c366, %c0_53] {strides = array<i32: 2, 1>} : memref<1352x32xf32, #tpu.memory_space<vmem>>, vector<12x32xf32>
    %91 = arith.maximumf %87, %88 : vector<12x32xf32>
    %92 = arith.maximumf %89, %90 : vector<12x32xf32>
    %93 = arith.maximumf %91, %92 : vector<12x32xf32>
    %c0_54 = arith.constant 0 : index
    %c0_55 = arith.constant 0 : index
    %94 = vector.load %arg2[%c0_54, %c0_55] : memref<1x32xf32, #tpu.memory_space<vmem>>, vector<1x32xf32>
    %95 = vector.broadcast %94 : vector<1x32xf32> to vector<12x32xf32>
    %96 = arith.addf %93, %95 : vector<12x32xf32>
    %cst_56 = arith.constant 0.00999999977 : f32
    %97 = vector.broadcast %cst_56 : f32 to vector<12x32xf32>
    %98 = arith.mulf %97, %96 : vector<12x32xf32>
    %99 = arith.maximumf %96, %98 : vector<12x32xf32>
    %c114 = arith.constant 114 : index
    %c0_57 = arith.constant 0 : index
    %100 = vector.load %arg13[%c114, %c0_57] : memref<422x32xf32, #tpu.memory_space<vmem>>, vector<12x32xf32>
    tpu.vector_store %arg13[%c114, %c0_57], %99 {strides = array<i32>} : memref<422x32xf32, #tpu.memory_space<vmem>>, vector<12x32xf32>,
    %c391 = arith.constant 391 : index
    %c0_58 = arith.constant 0 : index
    %101 = tpu.strided_load %arg12[%c391, %c0_58] {strides = array<i32: 2, 1>} : memref<1352x32xf32, #tpu.memory_space<vmem>>, vector<12x32xf32>
    %c392 = arith.constant 392 : index
    %c0_59 = arith.constant 0 : index
    %102 = tpu.strided_load %arg12[%c392, %c0_59] {strides = array<i32: 2, 1>} : memref<1352x32xf32, #tpu.memory_space<vmem>>, vector<12x32xf32>
    %c417 = arith.constant 417 : index
    %c0_60 = arith.constant 0 : index
    %103 = tpu.strided_load %arg12[%c417, %c0_60] {strides = array<i32: 2, 1>} : memref<1352x32xf32, #tpu.memory_space<vmem>>, vector<12x32xf32>
    %c418 = arith.constant 418 : index
    %c0_61 = arith.constant 0 : index
    %104 = tpu.strided_load %arg12[%c418, %c0_61] {strides = array<i32: 2, 1>} : memref<1352x32xf32, #tpu.memory_space<vmem>>, vector<12x32xf32>
    %105 = arith.maximumf %101, %102 : vector<12x32xf32>
    %106 = arith.maximumf %103, %104 : vector<12x32xf32>
    %107 = arith.maximumf %105, %106 : vector<12x32xf32>
    %c0_62 = arith.constant 0 : index
    %c0_63 = arith.constant 0 : index
    %108 = vector.load %arg2[%c0_62, %c0_63] : memref<1x32xf32, #tpu.memory_space<vmem>>, vector<1x32xf32>
    %109 = vector.broadcast %108 : vector<1x32xf32> to vector<12x32xf32>
    %110 = arith.addf %107, %109 : vector<12x32xf32>
    %cst_64 = arith.constant 0.00999999977 : f32
    %111 = vector.broadcast %cst_64 : f32 to vector<12x32xf32>
    %112 = arith.mulf %111, %110 : vector<12x32xf32>
    %113 = arith.maximumf %110, %112 : vector<12x32xf32>
    %c128 = arith.constant 128 : index
    %c0_65 = arith.constant 0 : index
    %114 = vector.load %arg13[%c128, %c0_65] : memref<422x32xf32, #tpu.memory_space<vmem>>, vector<12x32xf32>
    tpu.vector_store %arg13[%c128, %c0_65], %113 {strides = array<i32>} : memref<422x32xf32, #tpu.memory_space<vmem>>, vector<12x32xf32>,
    %c443 = arith.constant 443 : index
    %c0_66 = arith.constant 0 : index
    %115 = tpu.strided_load %arg12[%c443, %c0_66] {strides = array<i32: 2, 1>} : memref<1352x32xf32, #tpu.memory_space<vmem>>, vector<12x32xf32>
    %c444 = arith.constant 444 : index
    %c0_67 = arith.constant 0 : index
    %116 = tpu.strided_load %arg12[%c444, %c0_67] {strides = array<i32: 2, 1>} : memref<1352x32xf32, #tpu.memory_space<vmem>>, vector<12x32xf32>
    %c469 = arith.constant 469 : index
    %c0_68 = arith.constant 0 : index
    %117 = tpu.strided_load %arg12[%c469, %c0_68] {strides = array<i32: 2, 1>} : memref<1352x32xf32, #tpu.memory_space<vmem>>, vector<12x32xf32>
    %c470 = arith.constant 470 : index
    %c0_69 = arith.constant 0 : index
    %118 = tpu.strided_load %arg12[%c470, %c0_69] {strides = array<i32: 2, 1>} : memref<1352x32xf32, #tpu.memory_space<vmem>>, vector<12x32xf32>
    %119 = arith.maximumf %115, %116 : vector<12x32xf32>
    %120 = arith.maximumf %117, %118 : vector<12x32xf32>
    %121 = arith.maximumf %119, %120 : vector<12x32xf32>
    %c0_70 = arith.constant 0 : index
    %c0_71 = arith.constant 0 : index
    %122 = vector.load %arg2[%c0_70, %c0_71] : memref<1x32xf32, #tpu.memory_space<vmem>>, vector<1x32xf32>
    %123 = vector.broadcast %122 : vector<1x32xf32> to vector<12x32xf32>
    %124 = arith.addf %121, %123 : vector<12x32xf32>
    %cst_72 = arith.constant 0.00999999977 : f32
    %125 = vector.broadcast %cst_72 : f32 to vector<12x32xf32>
    %126 = arith.mulf %125, %124 : vector<12x32xf32>
    %127 = arith.maximumf %124, %126 : vector<12x32xf32>
    %c142 = arith.constant 142 : index
    %c0_73 = arith.constant 0 : index
    %128 = vector.load %arg13[%c142, %c0_73] : memref<422x32xf32, #tpu.memory_space<vmem>>, vector<12x32xf32>
    tpu.vector_store %arg13[%c142, %c0_73], %127 {strides = array<i32>} : memref<422x32xf32, #tpu.memory_space<vmem>>, vector<12x32xf32>,
    %c495 = arith.constant 495 : index
    %c0_74 = arith.constant 0 : index
    %129 = tpu.strided_load %arg12[%c495, %c0_74] {strides = array<i32: 2, 1>} : memref<1352x32xf32, #tpu.memory_space<vmem>>, vector<12x32xf32>
    %c496 = arith.constant 496 : index
    %c0_75 = arith.constant 0 : index
    %130 = tpu.strided_load %arg12[%c496, %c0_75] {strides = array<i32: 2, 1>} : memref<1352x32xf32, #tpu.memory_space<vmem>>, vector<12x32xf32>
    %c521 = arith.constant 521 : index
    %c0_76 = arith.constant 0 : index
    %131 = tpu.strided_load %arg12[%c521, %c0_76] {strides = array<i32: 2, 1>} : memref<1352x32xf32, #tpu.memory_space<vmem>>, vector<12x32xf32>
    %c522 = arith.constant 522 : index
    %c0_77 = arith.constant 0 : index
    %132 = tpu.strided_load %arg12[%c522, %c0_77] {strides = array<i32: 2, 1>} : memref<1352x32xf32, #tpu.memory_space<vmem>>, vector<12x32xf32>
    %133 = arith.maximumf %129, %130 : vector<12x32xf32>
    %134 = arith.maximumf %131, %132 : vector<12x32xf32>
    %135 = arith.maximumf %133, %134 : vector<12x32xf32>
    %c0_78 = arith.constant 0 : index
    %c0_79 = arith.constant 0 : index
    %136 = vector.load %arg2[%c0_78, %c0_79] : memref<1x32xf32, #tpu.memory_space<vmem>>, vector<1x32xf32>
    %137 = vector.broadcast %136 : vector<1x32xf32> to vector<12x32xf32>
    %138 = arith.addf %135, %137 : vector<12x32xf32>
    %cst_80 = arith.constant 0.00999999977 : f32
    %139 = vector.broadcast %cst_80 : f32 to vector<12x32xf32>
    %140 = arith.mulf %139, %138 : vector<12x32xf32>
    %141 = arith.maximumf %138, %140 : vector<12x32xf32>
    %c156 = arith.constant 156 : index
    %c0_81 = arith.constant 0 : index
    %142 = vector.load %arg13[%c156, %c0_81] : memref<422x32xf32, #tpu.memory_space<vmem>>, vector<12x32xf32>
    tpu.vector_store %arg13[%c156, %c0_81], %141 {strides = array<i32>} : memref<422x32xf32, #tpu.memory_space<vmem>>, vector<12x32xf32>,
    %c547 = arith.constant 547 : index
    %c0_82 = arith.constant 0 : index
    %143 = tpu.strided_load %arg12[%c547, %c0_82] {strides = array<i32: 2, 1>} : memref<1352x32xf32, #tpu.memory_space<vmem>>, vector<12x32xf32>
    %c548 = arith.constant 548 : index
    %c0_83 = arith.constant 0 : index
    %144 = tpu.strided_load %arg12[%c548, %c0_83] {strides = array<i32: 2, 1>} : memref<1352x32xf32, #tpu.memory_space<vmem>>, vector<12x32xf32>
    %c573 = arith.constant 573 : index
    %c0_84 = arith.constant 0 : index
    %145 = tpu.strided_load %arg12[%c573, %c0_84] {strides = array<i32: 2, 1>} : memref<1352x32xf32, #tpu.memory_space<vmem>>, vector<12x32xf32>
    %c574 = arith.constant 574 : index
    %c0_85 = arith.constant 0 : index
    %146 = tpu.strided_load %arg12[%c574, %c0_85] {strides = array<i32: 2, 1>} : memref<1352x32xf32, #tpu.memory_space<vmem>>, vector<12x32xf32>
    %147 = arith.maximumf %143, %144 : vector<12x32xf32>
    %148 = arith.maximumf %145, %146 : vector<12x32xf32>
    %149 = arith.maximumf %147, %148 : vector<12x32xf32>
    %c0_86 = arith.constant 0 : index
    %c0_87 = arith.constant 0 : index
    %150 = vector.load %arg2[%c0_86, %c0_87] : memref<1x32xf32, #tpu.memory_space<vmem>>, vector<1x32xf32>
    %151 = vector.broadcast %150 : vector<1x32xf32> to vector<12x32xf32>
    %152 = arith.addf %149, %151 : vector<12x32xf32>
    %cst_88 = arith.constant 0.00999999977 : f32
    %153 = vector.broadcast %cst_88 : f32 to vector<12x32xf32>
    %154 = arith.mulf %153, %152 : vector<12x32xf32>
    %155 = arith.maximumf %152, %154 : vector<12x32xf32>
    %c170 = arith.constant 170 : index
    %c0_89 = arith.constant 0 : index
    %156 = vector.load %arg13[%c170, %c0_89] : memref<422x32xf32, #tpu.memory_space<vmem>>, vector<12x32xf32>
    tpu.vector_store %arg13[%c170, %c0_89], %155 {strides = array<i32>} : memref<422x32xf32, #tpu.memory_space<vmem>>, vector<12x32xf32>,
    %c599 = arith.constant 599 : index
    %c0_90 = arith.constant 0 : index
    %157 = tpu.strided_load %arg12[%c599, %c0_90] {strides = array<i32: 2, 1>} : memref<1352x32xf32, #tpu.memory_space<vmem>>, vector<12x32xf32>
    %c600 = arith.constant 600 : index
    %c0_91 = arith.constant 0 : index
    %158 = tpu.strided_load %arg12[%c600, %c0_91] {strides = array<i32: 2, 1>} : memref<1352x32xf32, #tpu.memory_space<vmem>>, vector<12x32xf32>
    %c625 = arith.constant 625 : index
    %c0_92 = arith.constant 0 : index
    %159 = tpu.strided_load %arg12[%c625, %c0_92] {strides = array<i32: 2, 1>} : memref<1352x32xf32, #tpu.memory_space<vmem>>, vector<12x32xf32>
    %c626 = arith.constant 626 : index
    %c0_93 = arith.constant 0 : index
    %160 = tpu.strided_load %arg12[%c626, %c0_93] {strides = array<i32: 2, 1>} : memref<1352x32xf32, #tpu.memory_space<vmem>>, vector<12x32xf32>
    %161 = arith.maximumf %157, %158 : vector<12x32xf32>
    %162 = arith.maximumf %159, %160 : vector<12x32xf32>
    %163 = arith.maximumf %161, %162 : vector<12x32xf32>
    %c0_94 = arith.constant 0 : index
    %c0_95 = arith.constant 0 : index
    %164 = vector.load %arg2[%c0_94, %c0_95] : memref<1x32xf32, #tpu.memory_space<vmem>>, vector<1x32xf32>
    %165 = vector.broadcast %164 : vector<1x32xf32> to vector<12x32xf32>
    %166 = arith.addf %163, %165 : vector<12x32xf32>
    %cst_96 = arith.constant 0.00999999977 : f32
    %167 = vector.broadcast %cst_96 : f32 to vector<12x32xf32>
    %168 = arith.mulf %167, %166 : vector<12x32xf32>
    %169 = arith.maximumf %166, %168 : vector<12x32xf32>
    %c184_97 = arith.constant 184 : index
    %c0_98 = arith.constant 0 : index
    %170 = vector.load %arg13[%c184_97, %c0_98] : memref<422x32xf32, #tpu.memory_space<vmem>>, vector<12x32xf32>
    tpu.vector_store %arg13[%c184_97, %c0_98], %169 {strides = array<i32>} : memref<422x32xf32, #tpu.memory_space<vmem>>, vector<12x32xf32>,
    %c703 = arith.constant 703 : index
    %c0_99 = arith.constant 0 : index
    %171 = tpu.strided_load %arg12[%c703, %c0_99] {strides = array<i32: 2, 1>} : memref<1352x32xf32, #tpu.memory_space<vmem>>, vector<12x32xf32>
    %c704 = arith.constant 704 : index
    %c0_100 = arith.constant 0 : index
    %172 = tpu.strided_load %arg12[%c704, %c0_100] {strides = array<i32: 2, 1>} : memref<1352x32xf32, #tpu.memory_space<vmem>>, vector<12x32xf32>
    %c729 = arith.constant 729 : index
    %c0_101 = arith.constant 0 : index
    %173 = tpu.strided_load %arg12[%c729, %c0_101] {strides = array<i32: 2, 1>} : memref<1352x32xf32, #tpu.memory_space<vmem>>, vector<12x32xf32>
    %c730 = arith.constant 730 : index
    %c0_102 = arith.constant 0 : index
    %174 = tpu.strided_load %arg12[%c730, %c0_102] {strides = array<i32: 2, 1>} : memref<1352x32xf32, #tpu.memory_space<vmem>>, vector<12x32xf32>
    %175 = arith.maximumf %171, %172 : vector<12x32xf32>
    %176 = arith.maximumf %173, %174 : vector<12x32xf32>
    %177 = arith.maximumf %175, %176 : vector<12x32xf32>
    %c0_103 = arith.constant 0 : index
    %c0_104 = arith.constant 0 : index
    %178 = vector.load %arg2[%c0_103, %c0_104] : memref<1x32xf32, #tpu.memory_space<vmem>>, vector<1x32xf32>
    %179 = vector.broadcast %178 : vector<1x32xf32> to vector<12x32xf32>
    %180 = arith.addf %177, %179 : vector<12x32xf32>
    %cst_105 = arith.constant 0.00999999977 : f32
    %181 = vector.broadcast %cst_105 : f32 to vector<12x32xf32>
    %182 = arith.mulf %181, %180 : vector<12x32xf32>
    %183 = arith.maximumf %180, %182 : vector<12x32xf32>
    %c226 = arith.constant 226 : index
    %c0_106 = arith.constant 0 : index
    %184 = vector.load %arg13[%c226, %c0_106] : memref<422x32xf32, #tpu.memory_space<vmem>>, vector<12x32xf32>
    tpu.vector_store %arg13[%c226, %c0_106], %183 {strides = array<i32>} : memref<422x32xf32, #tpu.memory_space<vmem>>, vector<12x32xf32>,
    %c755 = arith.constant 755 : index
    %c0_107 = arith.constant 0 : index
    %185 = tpu.strided_load %arg12[%c755, %c0_107] {strides = array<i32: 2, 1>} : memref<1352x32xf32, #tpu.memory_space<vmem>>, vector<12x32xf32>
    %c756 = arith.constant 756 : index
    %c0_108 = arith.constant 0 : index
    %186 = tpu.strided_load %arg12[%c756, %c0_108] {strides = array<i32: 2, 1>} : memref<1352x32xf32, #tpu.memory_space<vmem>>, vector<12x32xf32>
    %c781 = arith.constant 781 : index
    %c0_109 = arith.constant 0 : index
    %187 = tpu.strided_load %arg12[%c781, %c0_109] {strides = array<i32: 2, 1>} : memref<1352x32xf32, #tpu.memory_space<vmem>>, vector<12x32xf32>
    %c782 = arith.constant 782 : index
    %c0_110 = arith.constant 0 : index
    %188 = tpu.strided_load %arg12[%c782, %c0_110] {strides = array<i32: 2, 1>} : memref<1352x32xf32, #tpu.memory_space<vmem>>, vector<12x32xf32>
    %189 = arith.maximumf %185, %186 : vector<12x32xf32>
    %190 = arith.maximumf %187, %188 : vector<12x32xf32>
    %191 = arith.maximumf %189, %190 : vector<12x32xf32>
    %c0_111 = arith.constant 0 : index
    %c0_112 = arith.constant 0 : index
    %192 = vector.load %arg2[%c0_111, %c0_112] : memref<1x32xf32, #tpu.memory_space<vmem>>, vector<1x32xf32>
    %193 = vector.broadcast %192 : vector<1x32xf32> to vector<12x32xf32>
    %194 = arith.addf %191, %193 : vector<12x32xf32>
    %cst_113 = arith.constant 0.00999999977 : f32
    %195 = vector.broadcast %cst_113 : f32 to vector<12x32xf32>
    %196 = arith.mulf %195, %194 : vector<12x32xf32>
    %197 = arith.maximumf %194, %196 : vector<12x32xf32>
    %c240 = arith.constant 240 : index
    %c0_114 = arith.constant 0 : index
    %198 = vector.load %arg13[%c240, %c0_114] : memref<422x32xf32, #tpu.memory_space<vmem>>, vector<12x32xf32>
    tpu.vector_store %arg13[%c240, %c0_114], %197 {strides = array<i32>} : memref<422x32xf32, #tpu.memory_space<vmem>>, vector<12x32xf32>,
    %c807 = arith.constant 807 : index
    %c0_115 = arith.constant 0 : index
    %199 = tpu.strided_load %arg12[%c807, %c0_115] {strides = array<i32: 2, 1>} : memref<1352x32xf32, #tpu.memory_space<vmem>>, vector<12x32xf32>
    %c808 = arith.constant 808 : index
    %c0_116 = arith.constant 0 : index
    %200 = tpu.strided_load %arg12[%c808, %c0_116] {strides = array<i32: 2, 1>} : memref<1352x32xf32, #tpu.memory_space<vmem>>, vector<12x32xf32>
    %c833 = arith.constant 833 : index
    %c0_117 = arith.constant 0 : index
    %201 = tpu.strided_load %arg12[%c833, %c0_117] {strides = array<i32: 2, 1>} : memref<1352x32xf32, #tpu.memory_space<vmem>>, vector<12x32xf32>
    %c834 = arith.constant 834 : index
    %c0_118 = arith.constant 0 : index
    %202 = tpu.strided_load %arg12[%c834, %c0_118] {strides = array<i32: 2, 1>} : memref<1352x32xf32, #tpu.memory_space<vmem>>, vector<12x32xf32>
    %203 = arith.maximumf %199, %200 : vector<12x32xf32>
    %204 = arith.maximumf %201, %202 : vector<12x32xf32>
    %205 = arith.maximumf %203, %204 : vector<12x32xf32>
    %c0_119 = arith.constant 0 : index
    %c0_120 = arith.constant 0 : index
    %206 = vector.load %arg2[%c0_119, %c0_120] : memref<1x32xf32, #tpu.memory_space<vmem>>, vector<1x32xf32>
    %207 = vector.broadcast %206 : vector<1x32xf32> to vector<12x32xf32>
    %208 = arith.addf %205, %207 : vector<12x32xf32>
    %cst_121 = arith.constant 0.00999999977 : f32
    %209 = vector.broadcast %cst_121 : f32 to vector<12x32xf32>
    %210 = arith.mulf %209, %208 : vector<12x32xf32>
    %211 = arith.maximumf %208, %210 : vector<12x32xf32>
    %c254 = arith.constant 254 : index
    %c0_122 = arith.constant 0 : index
    %212 = vector.load %arg13[%c254, %c0_122] : memref<422x32xf32, #tpu.memory_space<vmem>>, vector<12x32xf32>
    tpu.vector_store %arg13[%c254, %c0_122], %211 {strides = array<i32>} : memref<422x32xf32, #tpu.memory_space<vmem>>, vector<12x32xf32>,
    %c859 = arith.constant 859 : index
    %c0_123 = arith.constant 0 : index
    %213 = tpu.strided_load %arg12[%c859, %c0_123] {strides = array<i32: 2, 1>} : memref<1352x32xf32, #tpu.memory_space<vmem>>, vector<12x32xf32>
    %c860 = arith.constant 860 : index
    %c0_124 = arith.constant 0 : index
    %214 = tpu.strided_load %arg12[%c860, %c0_124] {strides = array<i32: 2, 1>} : memref<1352x32xf32, #tpu.memory_space<vmem>>, vector<12x32xf32>
    %c885 = arith.constant 885 : index
    %c0_125 = arith.constant 0 : index
    %215 = tpu.strided_load %arg12[%c885, %c0_125] {strides = array<i32: 2, 1>} : memref<1352x32xf32, #tpu.memory_space<vmem>>, vector<12x32xf32>
    %c886 = arith.constant 886 : index
    %c0_126 = arith.constant 0 : index
    %216 = tpu.strided_load %arg12[%c886, %c0_126] {strides = array<i32: 2, 1>} : memref<1352x32xf32, #tpu.memory_space<vmem>>, vector<12x32xf32>
    %217 = arith.maximumf %213, %214 : vector<12x32xf32>
    %218 = arith.maximumf %215, %216 : vector<12x32xf32>
    %219 = arith.maximumf %217, %218 : vector<12x32xf32>
    %c0_127 = arith.constant 0 : index
    %c0_128 = arith.constant 0 : index
    %220 = vector.load %arg2[%c0_127, %c0_128] : memref<1x32xf32, #tpu.memory_space<vmem>>, vector<1x32xf32>
    %221 = vector.broadcast %220 : vector<1x32xf32> to vector<12x32xf32>
    %222 = arith.addf %219, %221 : vector<12x32xf32>
    %cst_129 = arith.constant 0.00999999977 : f32
    %223 = vector.broadcast %cst_129 : f32 to vector<12x32xf32>
    %224 = arith.mulf %223, %222 : vector<12x32xf32>
    %225 = arith.maximumf %222, %224 : vector<12x32xf32>
    %c268 = arith.constant 268 : index
    %c0_130 = arith.constant 0 : index
    %226 = vector.load %arg13[%c268, %c0_130] : memref<422x32xf32, #tpu.memory_space<vmem>>, vector<12x32xf32>
    tpu.vector_store %arg13[%c268, %c0_130], %225 {strides = array<i32>} : memref<422x32xf32, #tpu.memory_space<vmem>>, vector<12x32xf32>,
    %c911 = arith.constant 911 : index
    %c0_131 = arith.constant 0 : index
    %227 = tpu.strided_load %arg12[%c911, %c0_131] {strides = array<i32: 2, 1>} : memref<1352x32xf32, #tpu.memory_space<vmem>>, vector<12x32xf32>
    %c912 = arith.constant 912 : index
    %c0_132 = arith.constant 0 : index
    %228 = tpu.strided_load %arg12[%c912, %c0_132] {strides = array<i32: 2, 1>} : memref<1352x32xf32, #tpu.memory_space<vmem>>, vector<12x32xf32>
    %c937 = arith.constant 937 : index
    %c0_133 = arith.constant 0 : index
    %229 = tpu.strided_load %arg12[%c937, %c0_133] {strides = array<i32: 2, 1>} : memref<1352x32xf32, #tpu.memory_space<vmem>>, vector<12x32xf32>
    %c938 = arith.constant 938 : index
    %c0_134 = arith.constant 0 : index
    %230 = tpu.strided_load %arg12[%c938, %c0_134] {strides = array<i32: 2, 1>} : memref<1352x32xf32, #tpu.memory_space<vmem>>, vector<12x32xf32>
    %231 = arith.maximumf %227, %228 : vector<12x32xf32>
    %232 = arith.maximumf %229, %230 : vector<12x32xf32>
    %233 = arith.maximumf %231, %232 : vector<12x32xf32>
    %c0_135 = arith.constant 0 : index
    %c0_136 = arith.constant 0 : index
    %234 = vector.load %arg2[%c0_135, %c0_136] : memref<1x32xf32, #tpu.memory_space<vmem>>, vector<1x32xf32>
    %235 = vector.broadcast %234 : vector<1x32xf32> to vector<12x32xf32>
    %236 = arith.addf %233, %235 : vector<12x32xf32>
    %cst_137 = arith.constant 0.00999999977 : f32
    %237 = vector.broadcast %cst_137 : f32 to vector<12x32xf32>
    %238 = arith.mulf %237, %236 : vector<12x32xf32>
    %239 = arith.maximumf %236, %238 : vector<12x32xf32>
    %c282 = arith.constant 282 : index
    %c0_138 = arith.constant 0 : index
    %240 = vector.load %arg13[%c282, %c0_138] : memref<422x32xf32, #tpu.memory_space<vmem>>, vector<12x32xf32>
    tpu.vector_store %arg13[%c282, %c0_138], %239 {strides = array<i32>} : memref<422x32xf32, #tpu.memory_space<vmem>>, vector<12x32xf32>,
    %c963 = arith.constant 963 : index
    %c0_139 = arith.constant 0 : index
    %241 = tpu.strided_load %arg12[%c963, %c0_139] {strides = array<i32: 2, 1>} : memref<1352x32xf32, #tpu.memory_space<vmem>>, vector<12x32xf32>
    %c964 = arith.constant 964 : index
    %c0_140 = arith.constant 0 : index
    %242 = tpu.strided_load %arg12[%c964, %c0_140] {strides = array<i32: 2, 1>} : memref<1352x32xf32, #tpu.memory_space<vmem>>, vector<12x32xf32>
    %c989 = arith.constant 989 : index
    %c0_141 = arith.constant 0 : index
    %243 = tpu.strided_load %arg12[%c989, %c0_141] {strides = array<i32: 2, 1>} : memref<1352x32xf32, #tpu.memory_space<vmem>>, vector<12x32xf32>
    %c990 = arith.constant 990 : index
    %c0_142 = arith.constant 0 : index
    %244 = tpu.strided_load %arg12[%c990, %c0_142] {strides = array<i32: 2, 1>} : memref<1352x32xf32, #tpu.memory_space<vmem>>, vector<12x32xf32>
    %245 = arith.maximumf %241, %242 : vector<12x32xf32>
    %246 = arith.maximumf %243, %244 : vector<12x32xf32>
    %247 = arith.maximumf %245, %246 : vector<12x32xf32>
    %c0_143 = arith.constant 0 : index
    %c0_144 = arith.constant 0 : index
    %248 = vector.load %arg2[%c0_143, %c0_144] : memref<1x32xf32, #tpu.memory_space<vmem>>, vector<1x32xf32>
    %249 = vector.broadcast %248 : vector<1x32xf32> to vector<12x32xf32>
    %250 = arith.addf %247, %249 : vector<12x32xf32>
    %cst_145 = arith.constant 0.00999999977 : f32
    %251 = vector.broadcast %cst_145 : f32 to vector<12x32xf32>
    %252 = arith.mulf %251, %250 : vector<12x32xf32>
    %253 = arith.maximumf %250, %252 : vector<12x32xf32>
    %c296 = arith.constant 296 : index
    %c0_146 = arith.constant 0 : index
    %254 = vector.load %arg13[%c296, %c0_146] : memref<422x32xf32, #tpu.memory_space<vmem>>, vector<12x32xf32>
    tpu.vector_store %arg13[%c296, %c0_146], %253 {strides = array<i32>} : memref<422x32xf32, #tpu.memory_space<vmem>>, vector<12x32xf32>,
    %c1015 = arith.constant 1015 : index
    %c0_147 = arith.constant 0 : index
    %255 = tpu.strided_load %arg12[%c1015, %c0_147] {strides = array<i32: 2, 1>} : memref<1352x32xf32, #tpu.memory_space<vmem>>, vector<12x32xf32>
    %c1016 = arith.constant 1016 : index
    %c0_148 = arith.constant 0 : index
    %256 = tpu.strided_load %arg12[%c1016, %c0_148] {strides = array<i32: 2, 1>} : memref<1352x32xf32, #tpu.memory_space<vmem>>, vector<12x32xf32>
    %c1041 = arith.constant 1041 : index
    %c0_149 = arith.constant 0 : index
    %257 = tpu.strided_load %arg12[%c1041, %c0_149] {strides = array<i32: 2, 1>} : memref<1352x32xf32, #tpu.memory_space<vmem>>, vector<12x32xf32>
    %c1042 = arith.constant 1042 : index
    %c0_150 = arith.constant 0 : index
    %258 = tpu.strided_load %arg12[%c1042, %c0_150] {strides = array<i32: 2, 1>} : memref<1352x32xf32, #tpu.memory_space<vmem>>, vector<12x32xf32>
    %259 = arith.maximumf %255, %256 : vector<12x32xf32>
    %260 = arith.maximumf %257, %258 : vector<12x32xf32>
    %261 = arith.maximumf %259, %260 : vector<12x32xf32>
    %c0_151 = arith.constant 0 : index
    %c0_152 = arith.constant 0 : index
    %262 = vector.load %arg2[%c0_151, %c0_152] : memref<1x32xf32, #tpu.memory_space<vmem>>, vector<1x32xf32>
    %263 = vector.broadcast %262 : vector<1x32xf32> to vector<12x32xf32>
    %264 = arith.addf %261, %263 : vector<12x32xf32>
    %cst_153 = arith.constant 0.00999999977 : f32
    %265 = vector.broadcast %cst_153 : f32 to vector<12x32xf32>
    %266 = arith.mulf %265, %264 : vector<12x32xf32>
    %267 = arith.maximumf %264, %266 : vector<12x32xf32>
    %c310 = arith.constant 310 : index
    %c0_154 = arith.constant 0 : index
    %268 = vector.load %arg13[%c310, %c0_154] : memref<422x32xf32, #tpu.memory_space<vmem>>, vector<12x32xf32>
    tpu.vector_store %arg13[%c310, %c0_154], %267 {strides = array<i32>} : memref<422x32xf32, #tpu.memory_space<vmem>>, vector<12x32xf32>,
    %c1067 = arith.constant 1067 : index
    %c0_155 = arith.constant 0 : index
    %269 = tpu.strided_load %arg12[%c1067, %c0_155] {strides = array<i32: 2, 1>} : memref<1352x32xf32, #tpu.memory_space<vmem>>, vector<12x32xf32>
    %c1068 = arith.constant 1068 : index
    %c0_156 = arith.constant 0 : index
    %270 = tpu.strided_load %arg12[%c1068, %c0_156] {strides = array<i32: 2, 1>} : memref<1352x32xf32, #tpu.memory_space<vmem>>, vector<12x32xf32>
    %c1093 = arith.constant 1093 : index
    %c0_157 = arith.constant 0 : index
    %271 = tpu.strided_load %arg12[%c1093, %c0_157] {strides = array<i32: 2, 1>} : memref<1352x32xf32, #tpu.memory_space<vmem>>, vector<12x32xf32>
    %c1094 = arith.constant 1094 : index
    %c0_158 = arith.constant 0 : index
    %272 = tpu.strided_load %arg12[%c1094, %c0_158] {strides = array<i32: 2, 1>} : memref<1352x32xf32, #tpu.memory_space<vmem>>, vector<12x32xf32>
    %273 = arith.maximumf %269, %270 : vector<12x32xf32>
    %274 = arith.maximumf %271, %272 : vector<12x32xf32>
    %275 = arith.maximumf %273, %274 : vector<12x32xf32>
    %c0_159 = arith.constant 0 : index
    %c0_160 = arith.constant 0 : index
    %276 = vector.load %arg2[%c0_159, %c0_160] : memref<1x32xf32, #tpu.memory_space<vmem>>, vector<1x32xf32>
    %277 = vector.broadcast %276 : vector<1x32xf32> to vector<12x32xf32>
    %278 = arith.addf %275, %277 : vector<12x32xf32>
    %cst_161 = arith.constant 0.00999999977 : f32
    %279 = vector.broadcast %cst_161 : f32 to vector<12x32xf32>
    %280 = arith.mulf %279, %278 : vector<12x32xf32>
    %281 = arith.maximumf %278, %280 : vector<12x32xf32>
    %c324 = arith.constant 324 : index
    %c0_162 = arith.constant 0 : index
    %282 = vector.load %arg13[%c324, %c0_162] : memref<422x32xf32, #tpu.memory_space<vmem>>, vector<12x32xf32>
    tpu.vector_store %arg13[%c324, %c0_162], %281 {strides = array<i32>} : memref<422x32xf32, #tpu.memory_space<vmem>>, vector<12x32xf32>,
    %c1119 = arith.constant 1119 : index
    %c0_163 = arith.constant 0 : index
    %283 = tpu.strided_load %arg12[%c1119, %c0_163] {strides = array<i32: 2, 1>} : memref<1352x32xf32, #tpu.memory_space<vmem>>, vector<12x32xf32>
    %c1120 = arith.constant 1120 : index
    %c0_164 = arith.constant 0 : index
    %284 = tpu.strided_load %arg12[%c1120, %c0_164] {strides = array<i32: 2, 1>} : memref<1352x32xf32, #tpu.memory_space<vmem>>, vector<12x32xf32>
    %c1145 = arith.constant 1145 : index
    %c0_165 = arith.constant 0 : index
    %285 = tpu.strided_load %arg12[%c1145, %c0_165] {strides = array<i32: 2, 1>} : memref<1352x32xf32, #tpu.memory_space<vmem>>, vector<12x32xf32>
    %c1146 = arith.constant 1146 : index
    %c0_166 = arith.constant 0 : index
    %286 = tpu.strided_load %arg12[%c1146, %c0_166] {strides = array<i32: 2, 1>} : memref<1352x32xf32, #tpu.memory_space<vmem>>, vector<12x32xf32>
    %287 = arith.maximumf %283, %284 : vector<12x32xf32>
    %288 = arith.maximumf %285, %286 : vector<12x32xf32>
    %289 = arith.maximumf %287, %288 : vector<12x32xf32>
    %c0_167 = arith.constant 0 : index
    %c0_168 = arith.constant 0 : index
    %290 = vector.load %arg2[%c0_167, %c0_168] : memref<1x32xf32, #tpu.memory_space<vmem>>, vector<1x32xf32>
    %291 = vector.broadcast %290 : vector<1x32xf32> to vector<12x32xf32>
    %292 = arith.addf %289, %291 : vector<12x32xf32>
    %cst_169 = arith.constant 0.00999999977 : f32
    %293 = vector.broadcast %cst_169 : f32 to vector<12x32xf32>
    %294 = arith.mulf %293, %292 : vector<12x32xf32>
    %295 = arith.maximumf %292, %294 : vector<12x32xf32>
    %c338 = arith.constant 338 : index
    %c0_170 = arith.constant 0 : index
    %296 = vector.load %arg13[%c338, %c0_170] : memref<422x32xf32, #tpu.memory_space<vmem>>, vector<12x32xf32>
    tpu.vector_store %arg13[%c338, %c0_170], %295 {strides = array<i32>} : memref<422x32xf32, #tpu.memory_space<vmem>>, vector<12x32xf32>,
    %c1171 = arith.constant 1171 : index
    %c0_171 = arith.constant 0 : index
    %297 = tpu.strided_load %arg12[%c1171, %c0_171] {strides = array<i32: 2, 1>} : memref<1352x32xf32, #tpu.memory_space<vmem>>, vector<12x32xf32>
    %c1172 = arith.constant 1172 : index
    %c0_172 = arith.constant 0 : index
    %298 = tpu.strided_load %arg12[%c1172, %c0_172] {strides = array<i32: 2, 1>} : memref<1352x32xf32, #tpu.memory_space<vmem>>, vector<12x32xf32>
    %c1197 = arith.constant 1197 : index
    %c0_173 = arith.constant 0 : index
    %299 = tpu.strided_load %arg12[%c1197, %c0_173] {strides = array<i32: 2, 1>} : memref<1352x32xf32, #tpu.memory_space<vmem>>, vector<12x32xf32>
    %c1198 = arith.constant 1198 : index
    %c0_174 = arith.constant 0 : index
    %300 = tpu.strided_load %arg12[%c1198, %c0_174] {strides = array<i32: 2, 1>} : memref<1352x32xf32, #tpu.memory_space<vmem>>, vector<12x32xf32>
    %301 = arith.maximumf %297, %298 : vector<12x32xf32>
    %302 = arith.maximumf %299, %300 : vector<12x32xf32>
    %303 = arith.maximumf %301, %302 : vector<12x32xf32>
    %c0_175 = arith.constant 0 : index
    %c0_176 = arith.constant 0 : index
    %304 = vector.load %arg2[%c0_175, %c0_176] : memref<1x32xf32, #tpu.memory_space<vmem>>, vector<1x32xf32>
    %305 = vector.broadcast %304 : vector<1x32xf32> to vector<12x32xf32>
    %306 = arith.addf %303, %305 : vector<12x32xf32>
    %cst_177 = arith.constant 0.00999999977 : f32
    %307 = vector.broadcast %cst_177 : f32 to vector<12x32xf32>
    %308 = arith.mulf %307, %306 : vector<12x32xf32>
    %309 = arith.maximumf %306, %308 : vector<12x32xf32>
    %c352 = arith.constant 352 : index
    %c0_178 = arith.constant 0 : index
    %310 = vector.load %arg13[%c352, %c0_178] : memref<422x32xf32, #tpu.memory_space<vmem>>, vector<12x32xf32>
    tpu.vector_store %arg13[%c352, %c0_178], %309 {strides = array<i32>} : memref<422x32xf32, #tpu.memory_space<vmem>>, vector<12x32xf32>,
    %c1223 = arith.constant 1223 : index
    %c0_179 = arith.constant 0 : index
    %311 = tpu.strided_load %arg12[%c1223, %c0_179] {strides = array<i32: 2, 1>} : memref<1352x32xf32, #tpu.memory_space<vmem>>, vector<12x32xf32>
    %c1224 = arith.constant 1224 : index
    %c0_180 = arith.constant 0 : index
    %312 = tpu.strided_load %arg12[%c1224, %c0_180] {strides = array<i32: 2, 1>} : memref<1352x32xf32, #tpu.memory_space<vmem>>, vector<12x32xf32>
    %c1249 = arith.constant 1249 : index
    %c0_181 = arith.constant 0 : index
    %313 = tpu.strided_load %arg12[%c1249, %c0_181] {strides = array<i32: 2, 1>} : memref<1352x32xf32, #tpu.memory_space<vmem>>, vector<12x32xf32>
    %c1250 = arith.constant 1250 : index
    %c0_182 = arith.constant 0 : index
    %314 = tpu.strided_load %arg12[%c1250, %c0_182] {strides = array<i32: 2, 1>} : memref<1352x32xf32, #tpu.memory_space<vmem>>, vector<12x32xf32>
    %315 = arith.maximumf %311, %312 : vector<12x32xf32>
    %316 = arith.maximumf %313, %314 : vector<12x32xf32>
    %317 = arith.maximumf %315, %316 : vector<12x32xf32>
    %c0_183 = arith.constant 0 : index
    %c0_184 = arith.constant 0 : index
    %318 = vector.load %arg2[%c0_183, %c0_184] : memref<1x32xf32, #tpu.memory_space<vmem>>, vector<1x32xf32>
    %319 = vector.broadcast %318 : vector<1x32xf32> to vector<12x32xf32>
    %320 = arith.addf %317, %319 : vector<12x32xf32>
    %cst_185 = arith.constant 0.00999999977 : f32
    %321 = vector.broadcast %cst_185 : f32 to vector<12x32xf32>
    %322 = arith.mulf %321, %320 : vector<12x32xf32>
    %323 = arith.maximumf %320, %322 : vector<12x32xf32>
    %c366_186 = arith.constant 366 : index
    %c0_187 = arith.constant 0 : index
    %324 = vector.load %arg13[%c366_186, %c0_187] : memref<422x32xf32, #tpu.memory_space<vmem>>, vector<12x32xf32>
    tpu.vector_store %arg13[%c366_186, %c0_187], %323 {strides = array<i32>} : memref<422x32xf32, #tpu.memory_space<vmem>>, vector<12x32xf32>,
    %c1275 = arith.constant 1275 : index
    %c0_188 = arith.constant 0 : index
    %325 = tpu.strided_load %arg12[%c1275, %c0_188] {strides = array<i32: 2, 1>} : memref<1352x32xf32, #tpu.memory_space<vmem>>, vector<12x32xf32>
    %c1276 = arith.constant 1276 : index
    %c0_189 = arith.constant 0 : index
    %326 = tpu.strided_load %arg12[%c1276, %c0_189] {strides = array<i32: 2, 1>} : memref<1352x32xf32, #tpu.memory_space<vmem>>, vector<12x32xf32>
    %c1301 = arith.constant 1301 : index
    %c0_190 = arith.constant 0 : index
    %327 = tpu.strided_load %arg12[%c1301, %c0_190] {strides = array<i32: 2, 1>} : memref<1352x32xf32, #tpu.memory_space<vmem>>, vector<12x32xf32>
    %c1302 = arith.constant 1302 : index
    %c0_191 = arith.constant 0 : index
    %328 = tpu.strided_load %arg12[%c1302, %c0_191] {strides = array<i32: 2, 1>} : memref<1352x32xf32, #tpu.memory_space<vmem>>, vector<12x32xf32>
    %329 = arith.maximumf %325, %326 : vector<12x32xf32>
    %330 = arith.maximumf %327, %328 : vector<12x32xf32>
    %331 = arith.maximumf %329, %330 : vector<12x32xf32>
    %c0_192 = arith.constant 0 : index
    %c0_193 = arith.constant 0 : index
    %332 = vector.load %arg2[%c0_192, %c0_193] : memref<1x32xf32, #tpu.memory_space<vmem>>, vector<1x32xf32>
    %333 = vector.broadcast %332 : vector<1x32xf32> to vector<12x32xf32>
    %334 = arith.addf %331, %333 : vector<12x32xf32>
    %cst_194 = arith.constant 0.00999999977 : f32
    %335 = vector.broadcast %cst_194 : f32 to vector<12x32xf32>
    %336 = arith.mulf %335, %334 : vector<12x32xf32>
    %337 = arith.maximumf %334, %336 : vector<12x32xf32>
    %c380 = arith.constant 380 : index
    %c0_195 = arith.constant 0 : index
    %338 = vector.load %arg13[%c380, %c0_195] : memref<422x32xf32, #tpu.memory_space<vmem>>, vector<12x32xf32>
    tpu.vector_store %arg13[%c380, %c0_195], %337 {strides = array<i32>} : memref<422x32xf32, #tpu.memory_space<vmem>>, vector<12x32xf32>,
    %c0_i32_196 = arith.constant 0 : i32
    %c7_i32 = arith.constant 7 : i32
    %339 = arith.addi %c0_i32_196, %c7_i32 : i32
    %c1_i32_197 = arith.constant 1 : i32
    scf.for %arg20 = %c0_i32_196 to %339 step %c1_i32_197  : i32 {
      %c56_i32 = arith.constant 56 : i32
      %853 = arith.muli %arg20, %c56_i32 : i32
      %854 = tpu.assume_multiple %853, 8 : i32
      %cst_580 = arith.constant 0.000000e+00 : f32
      %855 = vector.broadcast %cst_580 : f32 to vector<56x64xf32>
      %c0_i32_581 = arith.constant 0 : i32
      %856 = arith.addi %c0_i32_581, %854 : i32
      %857 = arith.index_cast %856 : i32 to index
      %c0_582 = arith.constant 0 : index
      %858 = vector.load %arg13[%857, %c0_582] : memref<422x32xf32, #tpu.memory_space<vmem>>, vector<56x32xf32>
      %c0_583 = arith.constant 0 : index
      %c0_584 = arith.constant 0 : index
      %c0_585 = arith.constant 0 : index
      %859 = vector.load %arg3[%c0_583, %c0_584, %c0_585] : memref<9x32x64xf32, #tpu.memory_space<vmem>>, vector<1x32x64xf32>
      %860 = vector.shape_cast %859 : vector<1x32x64xf32> to vector<32x64xf32>
      %cst_586 = arith.constant dense<0.000000e+00> : vector<56x64xf32>
      %861 = tpu.matmul %858, %860, %cst_586 {dimension_numbers = #tpu.dot_dimension_numbers<[1], [0], [0], [1], [0, 0, 1, 1], [], []>} : vector<56x32xf32>, vector<32x64xf32>, vector<56x64xf32> -> vector<56x64xf32>
      %862 = arith.addf %855, %861 : vector<56x64xf32>
      %c1_i32_587 = arith.constant 1 : i32
      %863 = arith.addi %c1_i32_587, %854 : i32
      %864 = arith.index_cast %863 : i32 to index
      %c0_588 = arith.constant 0 : index
      %865 = vector.load %arg13[%864, %c0_588] : memref<422x32xf32, #tpu.memory_space<vmem>>, vector<56x32xf32>
      %c1_589 = arith.constant 1 : index
      %c0_590 = arith.constant 0 : index
      %c0_591 = arith.constant 0 : index
      %866 = vector.load %arg3[%c1_589, %c0_590, %c0_591] : memref<9x32x64xf32, #tpu.memory_space<vmem>>, vector<1x32x64xf32>
      %867 = vector.shape_cast %866 : vector<1x32x64xf32> to vector<32x64xf32>
      %cst_592 = arith.constant dense<0.000000e+00> : vector<56x64xf32>
      %868 = tpu.matmul %865, %867, %cst_592 {dimension_numbers = #tpu.dot_dimension_numbers<[1], [0], [0], [1], [0, 0, 1, 1], [], []>} : vector<56x32xf32>, vector<32x64xf32>, vector<56x64xf32> -> vector<56x64xf32>
      %869 = arith.addf %862, %868 : vector<56x64xf32>
      %c2_i32_593 = arith.constant 2 : i32
      %870 = arith.addi %c2_i32_593, %854 : i32
      %871 = arith.index_cast %870 : i32 to index
      %c0_594 = arith.constant 0 : index
      %872 = vector.load %arg13[%871, %c0_594] : memref<422x32xf32, #tpu.memory_space<vmem>>, vector<56x32xf32>
      %c2_595 = arith.constant 2 : index
      %c0_596 = arith.constant 0 : index
      %c0_597 = arith.constant 0 : index
      %873 = vector.load %arg3[%c2_595, %c0_596, %c0_597] : memref<9x32x64xf32, #tpu.memory_space<vmem>>, vector<1x32x64xf32>
      %874 = vector.shape_cast %873 : vector<1x32x64xf32> to vector<32x64xf32>
      %cst_598 = arith.constant dense<0.000000e+00> : vector<56x64xf32>
      %875 = tpu.matmul %872, %874, %cst_598 {dimension_numbers = #tpu.dot_dimension_numbers<[1], [0], [0], [1], [0, 0, 1, 1], [], []>} : vector<56x32xf32>, vector<32x64xf32>, vector<56x64xf32> -> vector<56x64xf32>
      %876 = arith.addf %869, %875 : vector<56x64xf32>
      %c14_i32 = arith.constant 14 : i32
      %877 = arith.addi %c14_i32, %854 : i32
      %878 = arith.index_cast %877 : i32 to index
      %c0_599 = arith.constant 0 : index
      %879 = vector.load %arg13[%878, %c0_599] : memref<422x32xf32, #tpu.memory_space<vmem>>, vector<56x32xf32>
      %c3_600 = arith.constant 3 : index
      %c0_601 = arith.constant 0 : index
      %c0_602 = arith.constant 0 : index
      %880 = vector.load %arg3[%c3_600, %c0_601, %c0_602] : memref<9x32x64xf32, #tpu.memory_space<vmem>>, vector<1x32x64xf32>
      %881 = vector.shape_cast %880 : vector<1x32x64xf32> to vector<32x64xf32>
      %cst_603 = arith.constant dense<0.000000e+00> : vector<56x64xf32>
      %882 = tpu.matmul %879, %881, %cst_603 {dimension_numbers = #tpu.dot_dimension_numbers<[1], [0], [0], [1], [0, 0, 1, 1], [], []>} : vector<56x32xf32>, vector<32x64xf32>, vector<56x64xf32> -> vector<56x64xf32>
      %883 = arith.addf %876, %882 : vector<56x64xf32>
      %c15_i32 = arith.constant 15 : i32
      %884 = arith.addi %c15_i32, %854 : i32
      %885 = arith.index_cast %884 : i32 to index
      %c0_604 = arith.constant 0 : index
      %886 = vector.load %arg13[%885, %c0_604] : memref<422x32xf32, #tpu.memory_space<vmem>>, vector<56x32xf32>
      %c4_605 = arith.constant 4 : index
      %c0_606 = arith.constant 0 : index
      %c0_607 = arith.constant 0 : index
      %887 = vector.load %arg3[%c4_605, %c0_606, %c0_607] : memref<9x32x64xf32, #tpu.memory_space<vmem>>, vector<1x32x64xf32>
      %888 = vector.shape_cast %887 : vector<1x32x64xf32> to vector<32x64xf32>
      %cst_608 = arith.constant dense<0.000000e+00> : vector<56x64xf32>
      %889 = tpu.matmul %886, %888, %cst_608 {dimension_numbers = #tpu.dot_dimension_numbers<[1], [0], [0], [1], [0, 0, 1, 1], [], []>} : vector<56x32xf32>, vector<32x64xf32>, vector<56x64xf32> -> vector<56x64xf32>
      %890 = arith.addf %883, %889 : vector<56x64xf32>
      %c16_i32 = arith.constant 16 : i32
      %891 = arith.addi %c16_i32, %854 : i32
      %892 = arith.index_cast %891 : i32 to index
      %c0_609 = arith.constant 0 : index
      %893 = vector.load %arg13[%892, %c0_609] : memref<422x32xf32, #tpu.memory_space<vmem>>, vector<56x32xf32>
      %c5_610 = arith.constant 5 : index
      %c0_611 = arith.constant 0 : index
      %c0_612 = arith.constant 0 : index
      %894 = vector.load %arg3[%c5_610, %c0_611, %c0_612] : memref<9x32x64xf32, #tpu.memory_space<vmem>>, vector<1x32x64xf32>
      %895 = vector.shape_cast %894 : vector<1x32x64xf32> to vector<32x64xf32>
      %cst_613 = arith.constant dense<0.000000e+00> : vector<56x64xf32>
      %896 = tpu.matmul %893, %895, %cst_613 {dimension_numbers = #tpu.dot_dimension_numbers<[1], [0], [0], [1], [0, 0, 1, 1], [], []>} : vector<56x32xf32>, vector<32x64xf32>, vector<56x64xf32> -> vector<56x64xf32>
      %897 = arith.addf %890, %896 : vector<56x64xf32>
      %c28_i32 = arith.constant 28 : i32
      %898 = arith.addi %c28_i32, %854 : i32
      %899 = arith.index_cast %898 : i32 to index
      %c0_614 = arith.constant 0 : index
      %900 = vector.load %arg13[%899, %c0_614] : memref<422x32xf32, #tpu.memory_space<vmem>>, vector<56x32xf32>
      %c6_615 = arith.constant 6 : index
      %c0_616 = arith.constant 0 : index
      %c0_617 = arith.constant 0 : index
      %901 = vector.load %arg3[%c6_615, %c0_616, %c0_617] : memref<9x32x64xf32, #tpu.memory_space<vmem>>, vector<1x32x64xf32>
      %902 = vector.shape_cast %901 : vector<1x32x64xf32> to vector<32x64xf32>
      %cst_618 = arith.constant dense<0.000000e+00> : vector<56x64xf32>
      %903 = tpu.matmul %900, %902, %cst_618 {dimension_numbers = #tpu.dot_dimension_numbers<[1], [0], [0], [1], [0, 0, 1, 1], [], []>} : vector<56x32xf32>, vector<32x64xf32>, vector<56x64xf32> -> vector<56x64xf32>
      %904 = arith.addf %897, %903 : vector<56x64xf32>
      %c29_i32 = arith.constant 29 : i32
      %905 = arith.addi %c29_i32, %854 : i32
      %906 = arith.index_cast %905 : i32 to index
      %c0_619 = arith.constant 0 : index
      %907 = vector.load %arg13[%906, %c0_619] : memref<422x32xf32, #tpu.memory_space<vmem>>, vector<56x32xf32>
      %c7_620 = arith.constant 7 : index
      %c0_621 = arith.constant 0 : index
      %c0_622 = arith.constant 0 : index
      %908 = vector.load %arg3[%c7_620, %c0_621, %c0_622] : memref<9x32x64xf32, #tpu.memory_space<vmem>>, vector<1x32x64xf32>
      %909 = vector.shape_cast %908 : vector<1x32x64xf32> to vector<32x64xf32>
      %cst_623 = arith.constant dense<0.000000e+00> : vector<56x64xf32>
      %910 = tpu.matmul %907, %909, %cst_623 {dimension_numbers = #tpu.dot_dimension_numbers<[1], [0], [0], [1], [0, 0, 1, 1], [], []>} : vector<56x32xf32>, vector<32x64xf32>, vector<56x64xf32> -> vector<56x64xf32>
      %911 = arith.addf %904, %910 : vector<56x64xf32>
      %c30_i32 = arith.constant 30 : i32
      %912 = arith.addi %c30_i32, %854 : i32
      %913 = arith.index_cast %912 : i32 to index
      %c0_624 = arith.constant 0 : index
      %914 = vector.load %arg13[%913, %c0_624] : memref<422x32xf32, #tpu.memory_space<vmem>>, vector<56x32xf32>
      %c8_625 = arith.constant 8 : index
      %c0_626 = arith.constant 0 : index
      %c0_627 = arith.constant 0 : index
      %915 = vector.load %arg3[%c8_625, %c0_626, %c0_627] : memref<9x32x64xf32, #tpu.memory_space<vmem>>, vector<1x32x64xf32>
      %916 = vector.shape_cast %915 : vector<1x32x64xf32> to vector<32x64xf32>
      %cst_628 = arith.constant dense<0.000000e+00> : vector<56x64xf32>
      %917 = tpu.matmul %914, %916, %cst_628 {dimension_numbers = #tpu.dot_dimension_numbers<[1], [0], [0], [1], [0, 0, 1, 1], [], []>} : vector<56x32xf32>, vector<32x64xf32>, vector<56x64xf32> -> vector<56x64xf32>
      %918 = arith.addf %911, %917 : vector<56x64xf32>
      %919 = arith.index_cast %854 : i32 to index
      %c0_629 = arith.constant 0 : index
      %920 = vector.load %arg14[%919, %c0_629] : memref<392x64xf32, #tpu.memory_space<vmem>>, vector<56x64xf32>
      tpu.vector_store %arg14[%919, %c0_629], %918 {strides = array<i32>} : memref<392x64xf32, #tpu.memory_space<vmem>>, vector<56x64xf32>,
    }
    %c7_i32_198 = arith.constant 7 : i32
    %cst_199 = arith.constant 0.000000e+00 : f32
    %340 = vector.broadcast %cst_199 : f32 to vector<146x64xf32>
    %c0_200 = arith.constant 0 : index
    %c0_201 = arith.constant 0 : index
    %341 = vector.load %arg15[%c0_200, %c0_201] : memref<146x64xf32, #tpu.memory_space<vmem>>, vector<146x64xf32>
    tpu.vector_store %arg15[%c0_200, %c0_201], %340 {strides = array<i32>} : memref<146x64xf32, #tpu.memory_space<vmem>>, vector<146x64xf32>,
    %c15 = arith.constant 15 : index
    %c0_202 = arith.constant 0 : index
    %342 = tpu.strided_load %arg14[%c15, %c0_202] {strides = array<i32: 2, 1>} : memref<392x64xf32, #tpu.memory_space<vmem>>, vector<6x64xf32>
    %c16 = arith.constant 16 : index
    %c0_203 = arith.constant 0 : index
    %343 = tpu.strided_load %arg14[%c16, %c0_203] {strides = array<i32: 2, 1>} : memref<392x64xf32, #tpu.memory_space<vmem>>, vector<6x64xf32>
    %c29 = arith.constant 29 : index
    %c0_204 = arith.constant 0 : index
    %344 = tpu.strided_load %arg14[%c29, %c0_204] {strides = array<i32: 2, 1>} : memref<392x64xf32, #tpu.memory_space<vmem>>, vector<6x64xf32>
    %c30_205 = arith.constant 30 : index
    %c0_206 = arith.constant 0 : index
    %345 = tpu.strided_load %arg14[%c30_205, %c0_206] {strides = array<i32: 2, 1>} : memref<392x64xf32, #tpu.memory_space<vmem>>, vector<6x64xf32>
    %346 = arith.maximumf %342, %343 : vector<6x64xf32>
    %347 = arith.maximumf %344, %345 : vector<6x64xf32>
    %348 = arith.maximumf %346, %347 : vector<6x64xf32>
    %c0_207 = arith.constant 0 : index
    %c0_208 = arith.constant 0 : index
    %349 = vector.load %arg4[%c0_207, %c0_208] : memref<1x64xf32, #tpu.memory_space<vmem>>, vector<1x64xf32>
    %350 = vector.broadcast %349 : vector<1x64xf32> to vector<6x64xf32>
    %351 = arith.addf %348, %350 : vector<6x64xf32>
    %cst_209 = arith.constant 0.00999999977 : f32
    %352 = vector.broadcast %cst_209 : f32 to vector<6x64xf32>
    %353 = arith.mulf %352, %351 : vector<6x64xf32>
    %354 = arith.maximumf %351, %353 : vector<6x64xf32>
    %c18 = arith.constant 18 : index
    %c0_210 = arith.constant 0 : index
    %355 = vector.load %arg15[%c18, %c0_210] : memref<146x64xf32, #tpu.memory_space<vmem>>, vector<6x64xf32>
    tpu.vector_store %arg15[%c18, %c0_210], %354 {strides = array<i32>} : memref<146x64xf32, #tpu.memory_space<vmem>>, vector<6x64xf32>,
    %c43 = arith.constant 43 : index
    %c0_211 = arith.constant 0 : index
    %356 = tpu.strided_load %arg14[%c43, %c0_211] {strides = array<i32: 2, 1>} : memref<392x64xf32, #tpu.memory_space<vmem>>, vector<6x64xf32>
    %c44_212 = arith.constant 44 : index
    %c0_213 = arith.constant 0 : index
    %357 = tpu.strided_load %arg14[%c44_212, %c0_213] {strides = array<i32: 2, 1>} : memref<392x64xf32, #tpu.memory_space<vmem>>, vector<6x64xf32>
    %c57 = arith.constant 57 : index
    %c0_214 = arith.constant 0 : index
    %358 = tpu.strided_load %arg14[%c57, %c0_214] {strides = array<i32: 2, 1>} : memref<392x64xf32, #tpu.memory_space<vmem>>, vector<6x64xf32>
    %c58_215 = arith.constant 58 : index
    %c0_216 = arith.constant 0 : index
    %359 = tpu.strided_load %arg14[%c58_215, %c0_216] {strides = array<i32: 2, 1>} : memref<392x64xf32, #tpu.memory_space<vmem>>, vector<6x64xf32>
    %360 = arith.maximumf %356, %357 : vector<6x64xf32>
    %361 = arith.maximumf %358, %359 : vector<6x64xf32>
    %362 = arith.maximumf %360, %361 : vector<6x64xf32>
    %c0_217 = arith.constant 0 : index
    %c0_218 = arith.constant 0 : index
    %363 = vector.load %arg4[%c0_217, %c0_218] : memref<1x64xf32, #tpu.memory_space<vmem>>, vector<1x64xf32>
    %364 = vector.broadcast %363 : vector<1x64xf32> to vector<6x64xf32>
    %365 = arith.addf %362, %364 : vector<6x64xf32>
    %cst_219 = arith.constant 0.00999999977 : f32
    %366 = vector.broadcast %cst_219 : f32 to vector<6x64xf32>
    %367 = arith.mulf %366, %365 : vector<6x64xf32>
    %368 = arith.maximumf %365, %367 : vector<6x64xf32>
    %c26 = arith.constant 26 : index
    %c0_220 = arith.constant 0 : index
    %369 = vector.load %arg15[%c26, %c0_220] : memref<146x64xf32, #tpu.memory_space<vmem>>, vector<6x64xf32>
    tpu.vector_store %arg15[%c26, %c0_220], %368 {strides = array<i32>} : memref<146x64xf32, #tpu.memory_space<vmem>>, vector<6x64xf32>,
    %c71 = arith.constant 71 : index
    %c0_221 = arith.constant 0 : index
    %370 = tpu.strided_load %arg14[%c71, %c0_221] {strides = array<i32: 2, 1>} : memref<392x64xf32, #tpu.memory_space<vmem>>, vector<6x64xf32>
    %c72_222 = arith.constant 72 : index
    %c0_223 = arith.constant 0 : index
    %371 = tpu.strided_load %arg14[%c72_222, %c0_223] {strides = array<i32: 2, 1>} : memref<392x64xf32, #tpu.memory_space<vmem>>, vector<6x64xf32>
    %c85 = arith.constant 85 : index
    %c0_224 = arith.constant 0 : index
    %372 = tpu.strided_load %arg14[%c85, %c0_224] {strides = array<i32: 2, 1>} : memref<392x64xf32, #tpu.memory_space<vmem>>, vector<6x64xf32>
    %c86_225 = arith.constant 86 : index
    %c0_226 = arith.constant 0 : index
    %373 = tpu.strided_load %arg14[%c86_225, %c0_226] {strides = array<i32: 2, 1>} : memref<392x64xf32, #tpu.memory_space<vmem>>, vector<6x64xf32>
    %374 = arith.maximumf %370, %371 : vector<6x64xf32>
    %375 = arith.maximumf %372, %373 : vector<6x64xf32>
    %376 = arith.maximumf %374, %375 : vector<6x64xf32>
    %c0_227 = arith.constant 0 : index
    %c0_228 = arith.constant 0 : index
    %377 = vector.load %arg4[%c0_227, %c0_228] : memref<1x64xf32, #tpu.memory_space<vmem>>, vector<1x64xf32>
    %378 = vector.broadcast %377 : vector<1x64xf32> to vector<6x64xf32>
    %379 = arith.addf %376, %378 : vector<6x64xf32>
    %cst_229 = arith.constant 0.00999999977 : f32
    %380 = vector.broadcast %cst_229 : f32 to vector<6x64xf32>
    %381 = arith.mulf %380, %379 : vector<6x64xf32>
    %382 = arith.maximumf %379, %381 : vector<6x64xf32>
    %c34 = arith.constant 34 : index
    %c0_230 = arith.constant 0 : index
    %383 = vector.load %arg15[%c34, %c0_230] : memref<146x64xf32, #tpu.memory_space<vmem>>, vector<6x64xf32>
    tpu.vector_store %arg15[%c34, %c0_230], %382 {strides = array<i32>} : memref<146x64xf32, #tpu.memory_space<vmem>>, vector<6x64xf32>,
    %c99 = arith.constant 99 : index
    %c0_231 = arith.constant 0 : index
    %384 = tpu.strided_load %arg14[%c99, %c0_231] {strides = array<i32: 2, 1>} : memref<392x64xf32, #tpu.memory_space<vmem>>, vector<6x64xf32>
    %c100_232 = arith.constant 100 : index
    %c0_233 = arith.constant 0 : index
    %385 = tpu.strided_load %arg14[%c100_232, %c0_233] {strides = array<i32: 2, 1>} : memref<392x64xf32, #tpu.memory_space<vmem>>, vector<6x64xf32>
    %c113 = arith.constant 113 : index
    %c0_234 = arith.constant 0 : index
    %386 = tpu.strided_load %arg14[%c113, %c0_234] {strides = array<i32: 2, 1>} : memref<392x64xf32, #tpu.memory_space<vmem>>, vector<6x64xf32>
    %c114_235 = arith.constant 114 : index
    %c0_236 = arith.constant 0 : index
    %387 = tpu.strided_load %arg14[%c114_235, %c0_236] {strides = array<i32: 2, 1>} : memref<392x64xf32, #tpu.memory_space<vmem>>, vector<6x64xf32>
    %388 = arith.maximumf %384, %385 : vector<6x64xf32>
    %389 = arith.maximumf %386, %387 : vector<6x64xf32>
    %390 = arith.maximumf %388, %389 : vector<6x64xf32>
    %c0_237 = arith.constant 0 : index
    %c0_238 = arith.constant 0 : index
    %391 = vector.load %arg4[%c0_237, %c0_238] : memref<1x64xf32, #tpu.memory_space<vmem>>, vector<1x64xf32>
    %392 = vector.broadcast %391 : vector<1x64xf32> to vector<6x64xf32>
    %393 = arith.addf %390, %392 : vector<6x64xf32>
    %cst_239 = arith.constant 0.00999999977 : f32
    %394 = vector.broadcast %cst_239 : f32 to vector<6x64xf32>
    %395 = arith.mulf %394, %393 : vector<6x64xf32>
    %396 = arith.maximumf %393, %395 : vector<6x64xf32>
    %c42 = arith.constant 42 : index
    %c0_240 = arith.constant 0 : index
    %397 = vector.load %arg15[%c42, %c0_240] : memref<146x64xf32, #tpu.memory_space<vmem>>, vector<6x64xf32>
    tpu.vector_store %arg15[%c42, %c0_240], %396 {strides = array<i32>} : memref<146x64xf32, #tpu.memory_space<vmem>>, vector<6x64xf32>,
    %c127 = arith.constant 127 : index
    %c0_241 = arith.constant 0 : index
    %398 = tpu.strided_load %arg14[%c127, %c0_241] {strides = array<i32: 2, 1>} : memref<392x64xf32, #tpu.memory_space<vmem>>, vector<6x64xf32>
    %c128_242 = arith.constant 128 : index
    %c0_243 = arith.constant 0 : index
    %399 = tpu.strided_load %arg14[%c128_242, %c0_243] {strides = array<i32: 2, 1>} : memref<392x64xf32, #tpu.memory_space<vmem>>, vector<6x64xf32>
    %c141 = arith.constant 141 : index
    %c0_244 = arith.constant 0 : index
    %400 = tpu.strided_load %arg14[%c141, %c0_244] {strides = array<i32: 2, 1>} : memref<392x64xf32, #tpu.memory_space<vmem>>, vector<6x64xf32>
    %c142_245 = arith.constant 142 : index
    %c0_246 = arith.constant 0 : index
    %401 = tpu.strided_load %arg14[%c142_245, %c0_246] {strides = array<i32: 2, 1>} : memref<392x64xf32, #tpu.memory_space<vmem>>, vector<6x64xf32>
    %402 = arith.maximumf %398, %399 : vector<6x64xf32>
    %403 = arith.maximumf %400, %401 : vector<6x64xf32>
    %404 = arith.maximumf %402, %403 : vector<6x64xf32>
    %c0_247 = arith.constant 0 : index
    %c0_248 = arith.constant 0 : index
    %405 = vector.load %arg4[%c0_247, %c0_248] : memref<1x64xf32, #tpu.memory_space<vmem>>, vector<1x64xf32>
    %406 = vector.broadcast %405 : vector<1x64xf32> to vector<6x64xf32>
    %407 = arith.addf %404, %406 : vector<6x64xf32>
    %cst_249 = arith.constant 0.00999999977 : f32
    %408 = vector.broadcast %cst_249 : f32 to vector<6x64xf32>
    %409 = arith.mulf %408, %407 : vector<6x64xf32>
    %410 = arith.maximumf %407, %409 : vector<6x64xf32>
    %c50 = arith.constant 50 : index
    %c0_250 = arith.constant 0 : index
    %411 = vector.load %arg15[%c50, %c0_250] : memref<146x64xf32, #tpu.memory_space<vmem>>, vector<6x64xf32>
    tpu.vector_store %arg15[%c50, %c0_250], %410 {strides = array<i32>} : memref<146x64xf32, #tpu.memory_space<vmem>>, vector<6x64xf32>,
    %c155 = arith.constant 155 : index
    %c0_251 = arith.constant 0 : index
    %412 = tpu.strided_load %arg14[%c155, %c0_251] {strides = array<i32: 2, 1>} : memref<392x64xf32, #tpu.memory_space<vmem>>, vector<6x64xf32>
    %c156_252 = arith.constant 156 : index
    %c0_253 = arith.constant 0 : index
    %413 = tpu.strided_load %arg14[%c156_252, %c0_253] {strides = array<i32: 2, 1>} : memref<392x64xf32, #tpu.memory_space<vmem>>, vector<6x64xf32>
    %c169 = arith.constant 169 : index
    %c0_254 = arith.constant 0 : index
    %414 = tpu.strided_load %arg14[%c169, %c0_254] {strides = array<i32: 2, 1>} : memref<392x64xf32, #tpu.memory_space<vmem>>, vector<6x64xf32>
    %c170_255 = arith.constant 170 : index
    %c0_256 = arith.constant 0 : index
    %415 = tpu.strided_load %arg14[%c170_255, %c0_256] {strides = array<i32: 2, 1>} : memref<392x64xf32, #tpu.memory_space<vmem>>, vector<6x64xf32>
    %416 = arith.maximumf %412, %413 : vector<6x64xf32>
    %417 = arith.maximumf %414, %415 : vector<6x64xf32>
    %418 = arith.maximumf %416, %417 : vector<6x64xf32>
    %c0_257 = arith.constant 0 : index
    %c0_258 = arith.constant 0 : index
    %419 = vector.load %arg4[%c0_257, %c0_258] : memref<1x64xf32, #tpu.memory_space<vmem>>, vector<1x64xf32>
    %420 = vector.broadcast %419 : vector<1x64xf32> to vector<6x64xf32>
    %421 = arith.addf %418, %420 : vector<6x64xf32>
    %cst_259 = arith.constant 0.00999999977 : f32
    %422 = vector.broadcast %cst_259 : f32 to vector<6x64xf32>
    %423 = arith.mulf %422, %421 : vector<6x64xf32>
    %424 = arith.maximumf %421, %423 : vector<6x64xf32>
    %c58_260 = arith.constant 58 : index
    %c0_261 = arith.constant 0 : index
    %425 = vector.load %arg15[%c58_260, %c0_261] : memref<146x64xf32, #tpu.memory_space<vmem>>, vector<6x64xf32>
    tpu.vector_store %arg15[%c58_260, %c0_261], %424 {strides = array<i32>} : memref<146x64xf32, #tpu.memory_space<vmem>>, vector<6x64xf32>,
    %c211 = arith.constant 211 : index
    %c0_262 = arith.constant 0 : index
    %426 = tpu.strided_load %arg14[%c211, %c0_262] {strides = array<i32: 2, 1>} : memref<392x64xf32, #tpu.memory_space<vmem>>, vector<6x64xf32>
    %c212 = arith.constant 212 : index
    %c0_263 = arith.constant 0 : index
    %427 = tpu.strided_load %arg14[%c212, %c0_263] {strides = array<i32: 2, 1>} : memref<392x64xf32, #tpu.memory_space<vmem>>, vector<6x64xf32>
    %c225 = arith.constant 225 : index
    %c0_264 = arith.constant 0 : index
    %428 = tpu.strided_load %arg14[%c225, %c0_264] {strides = array<i32: 2, 1>} : memref<392x64xf32, #tpu.memory_space<vmem>>, vector<6x64xf32>
    %c226_265 = arith.constant 226 : index
    %c0_266 = arith.constant 0 : index
    %429 = tpu.strided_load %arg14[%c226_265, %c0_266] {strides = array<i32: 2, 1>} : memref<392x64xf32, #tpu.memory_space<vmem>>, vector<6x64xf32>
    %430 = arith.maximumf %426, %427 : vector<6x64xf32>
    %431 = arith.maximumf %428, %429 : vector<6x64xf32>
    %432 = arith.maximumf %430, %431 : vector<6x64xf32>
    %c0_267 = arith.constant 0 : index
    %c0_268 = arith.constant 0 : index
    %433 = vector.load %arg4[%c0_267, %c0_268] : memref<1x64xf32, #tpu.memory_space<vmem>>, vector<1x64xf32>
    %434 = vector.broadcast %433 : vector<1x64xf32> to vector<6x64xf32>
    %435 = arith.addf %432, %434 : vector<6x64xf32>
    %cst_269 = arith.constant 0.00999999977 : f32
    %436 = vector.broadcast %cst_269 : f32 to vector<6x64xf32>
    %437 = arith.mulf %436, %435 : vector<6x64xf32>
    %438 = arith.maximumf %435, %437 : vector<6x64xf32>
    %c82 = arith.constant 82 : index
    %c0_270 = arith.constant 0 : index
    %439 = vector.load %arg15[%c82, %c0_270] : memref<146x64xf32, #tpu.memory_space<vmem>>, vector<6x64xf32>
    tpu.vector_store %arg15[%c82, %c0_270], %438 {strides = array<i32>} : memref<146x64xf32, #tpu.memory_space<vmem>>, vector<6x64xf32>,
    %c239 = arith.constant 239 : index
    %c0_271 = arith.constant 0 : index
    %440 = tpu.strided_load %arg14[%c239, %c0_271] {strides = array<i32: 2, 1>} : memref<392x64xf32, #tpu.memory_space<vmem>>, vector<6x64xf32>
    %c240_272 = arith.constant 240 : index
    %c0_273 = arith.constant 0 : index
    %441 = tpu.strided_load %arg14[%c240_272, %c0_273] {strides = array<i32: 2, 1>} : memref<392x64xf32, #tpu.memory_space<vmem>>, vector<6x64xf32>
    %c253 = arith.constant 253 : index
    %c0_274 = arith.constant 0 : index
    %442 = tpu.strided_load %arg14[%c253, %c0_274] {strides = array<i32: 2, 1>} : memref<392x64xf32, #tpu.memory_space<vmem>>, vector<6x64xf32>
    %c254_275 = arith.constant 254 : index
    %c0_276 = arith.constant 0 : index
    %443 = tpu.strided_load %arg14[%c254_275, %c0_276] {strides = array<i32: 2, 1>} : memref<392x64xf32, #tpu.memory_space<vmem>>, vector<6x64xf32>
    %444 = arith.maximumf %440, %441 : vector<6x64xf32>
    %445 = arith.maximumf %442, %443 : vector<6x64xf32>
    %446 = arith.maximumf %444, %445 : vector<6x64xf32>
    %c0_277 = arith.constant 0 : index
    %c0_278 = arith.constant 0 : index
    %447 = vector.load %arg4[%c0_277, %c0_278] : memref<1x64xf32, #tpu.memory_space<vmem>>, vector<1x64xf32>
    %448 = vector.broadcast %447 : vector<1x64xf32> to vector<6x64xf32>
    %449 = arith.addf %446, %448 : vector<6x64xf32>
    %cst_279 = arith.constant 0.00999999977 : f32
    %450 = vector.broadcast %cst_279 : f32 to vector<6x64xf32>
    %451 = arith.mulf %450, %449 : vector<6x64xf32>
    %452 = arith.maximumf %449, %451 : vector<6x64xf32>
    %c90 = arith.constant 90 : index
    %c0_280 = arith.constant 0 : index
    %453 = vector.load %arg15[%c90, %c0_280] : memref<146x64xf32, #tpu.memory_space<vmem>>, vector<6x64xf32>
    tpu.vector_store %arg15[%c90, %c0_280], %452 {strides = array<i32>} : memref<146x64xf32, #tpu.memory_space<vmem>>, vector<6x64xf32>,
    %c267 = arith.constant 267 : index
    %c0_281 = arith.constant 0 : index
    %454 = tpu.strided_load %arg14[%c267, %c0_281] {strides = array<i32: 2, 1>} : memref<392x64xf32, #tpu.memory_space<vmem>>, vector<6x64xf32>
    %c268_282 = arith.constant 268 : index
    %c0_283 = arith.constant 0 : index
    %455 = tpu.strided_load %arg14[%c268_282, %c0_283] {strides = array<i32: 2, 1>} : memref<392x64xf32, #tpu.memory_space<vmem>>, vector<6x64xf32>
    %c281 = arith.constant 281 : index
    %c0_284 = arith.constant 0 : index
    %456 = tpu.strided_load %arg14[%c281, %c0_284] {strides = array<i32: 2, 1>} : memref<392x64xf32, #tpu.memory_space<vmem>>, vector<6x64xf32>
    %c282_285 = arith.constant 282 : index
    %c0_286 = arith.constant 0 : index
    %457 = tpu.strided_load %arg14[%c282_285, %c0_286] {strides = array<i32: 2, 1>} : memref<392x64xf32, #tpu.memory_space<vmem>>, vector<6x64xf32>
    %458 = arith.maximumf %454, %455 : vector<6x64xf32>
    %459 = arith.maximumf %456, %457 : vector<6x64xf32>
    %460 = arith.maximumf %458, %459 : vector<6x64xf32>
    %c0_287 = arith.constant 0 : index
    %c0_288 = arith.constant 0 : index
    %461 = vector.load %arg4[%c0_287, %c0_288] : memref<1x64xf32, #tpu.memory_space<vmem>>, vector<1x64xf32>
    %462 = vector.broadcast %461 : vector<1x64xf32> to vector<6x64xf32>
    %463 = arith.addf %460, %462 : vector<6x64xf32>
    %cst_289 = arith.constant 0.00999999977 : f32
    %464 = vector.broadcast %cst_289 : f32 to vector<6x64xf32>
    %465 = arith.mulf %464, %463 : vector<6x64xf32>
    %466 = arith.maximumf %463, %465 : vector<6x64xf32>
    %c98 = arith.constant 98 : index
    %c0_290 = arith.constant 0 : index
    %467 = vector.load %arg15[%c98, %c0_290] : memref<146x64xf32, #tpu.memory_space<vmem>>, vector<6x64xf32>
    tpu.vector_store %arg15[%c98, %c0_290], %466 {strides = array<i32>} : memref<146x64xf32, #tpu.memory_space<vmem>>, vector<6x64xf32>,
    %c295 = arith.constant 295 : index
    %c0_291 = arith.constant 0 : index
    %468 = tpu.strided_load %arg14[%c295, %c0_291] {strides = array<i32: 2, 1>} : memref<392x64xf32, #tpu.memory_space<vmem>>, vector<6x64xf32>
    %c296_292 = arith.constant 296 : index
    %c0_293 = arith.constant 0 : index
    %469 = tpu.strided_load %arg14[%c296_292, %c0_293] {strides = array<i32: 2, 1>} : memref<392x64xf32, #tpu.memory_space<vmem>>, vector<6x64xf32>
    %c309 = arith.constant 309 : index
    %c0_294 = arith.constant 0 : index
    %470 = tpu.strided_load %arg14[%c309, %c0_294] {strides = array<i32: 2, 1>} : memref<392x64xf32, #tpu.memory_space<vmem>>, vector<6x64xf32>
    %c310_295 = arith.constant 310 : index
    %c0_296 = arith.constant 0 : index
    %471 = tpu.strided_load %arg14[%c310_295, %c0_296] {strides = array<i32: 2, 1>} : memref<392x64xf32, #tpu.memory_space<vmem>>, vector<6x64xf32>
    %472 = arith.maximumf %468, %469 : vector<6x64xf32>
    %473 = arith.maximumf %470, %471 : vector<6x64xf32>
    %474 = arith.maximumf %472, %473 : vector<6x64xf32>
    %c0_297 = arith.constant 0 : index
    %c0_298 = arith.constant 0 : index
    %475 = vector.load %arg4[%c0_297, %c0_298] : memref<1x64xf32, #tpu.memory_space<vmem>>, vector<1x64xf32>
    %476 = vector.broadcast %475 : vector<1x64xf32> to vector<6x64xf32>
    %477 = arith.addf %474, %476 : vector<6x64xf32>
    %cst_299 = arith.constant 0.00999999977 : f32
    %478 = vector.broadcast %cst_299 : f32 to vector<6x64xf32>
    %479 = arith.mulf %478, %477 : vector<6x64xf32>
    %480 = arith.maximumf %477, %479 : vector<6x64xf32>
    %c106_300 = arith.constant 106 : index
    %c0_301 = arith.constant 0 : index
    %481 = vector.load %arg15[%c106_300, %c0_301] : memref<146x64xf32, #tpu.memory_space<vmem>>, vector<6x64xf32>
    tpu.vector_store %arg15[%c106_300, %c0_301], %480 {strides = array<i32>} : memref<146x64xf32, #tpu.memory_space<vmem>>, vector<6x64xf32>,
    %c323 = arith.constant 323 : index
    %c0_302 = arith.constant 0 : index
    %482 = tpu.strided_load %arg14[%c323, %c0_302] {strides = array<i32: 2, 1>} : memref<392x64xf32, #tpu.memory_space<vmem>>, vector<6x64xf32>
    %c324_303 = arith.constant 324 : index
    %c0_304 = arith.constant 0 : index
    %483 = tpu.strided_load %arg14[%c324_303, %c0_304] {strides = array<i32: 2, 1>} : memref<392x64xf32, #tpu.memory_space<vmem>>, vector<6x64xf32>
    %c337 = arith.constant 337 : index
    %c0_305 = arith.constant 0 : index
    %484 = tpu.strided_load %arg14[%c337, %c0_305] {strides = array<i32: 2, 1>} : memref<392x64xf32, #tpu.memory_space<vmem>>, vector<6x64xf32>
    %c338_306 = arith.constant 338 : index
    %c0_307 = arith.constant 0 : index
    %485 = tpu.strided_load %arg14[%c338_306, %c0_307] {strides = array<i32: 2, 1>} : memref<392x64xf32, #tpu.memory_space<vmem>>, vector<6x64xf32>
    %486 = arith.maximumf %482, %483 : vector<6x64xf32>
    %487 = arith.maximumf %484, %485 : vector<6x64xf32>
    %488 = arith.maximumf %486, %487 : vector<6x64xf32>
    %c0_308 = arith.constant 0 : index
    %c0_309 = arith.constant 0 : index
    %489 = vector.load %arg4[%c0_308, %c0_309] : memref<1x64xf32, #tpu.memory_space<vmem>>, vector<1x64xf32>
    %490 = vector.broadcast %489 : vector<1x64xf32> to vector<6x64xf32>
    %491 = arith.addf %488, %490 : vector<6x64xf32>
    %cst_310 = arith.constant 0.00999999977 : f32
    %492 = vector.broadcast %cst_310 : f32 to vector<6x64xf32>
    %493 = arith.mulf %492, %491 : vector<6x64xf32>
    %494 = arith.maximumf %491, %493 : vector<6x64xf32>
    %c114_311 = arith.constant 114 : index
    %c0_312 = arith.constant 0 : index
    %495 = vector.load %arg15[%c114_311, %c0_312] : memref<146x64xf32, #tpu.memory_space<vmem>>, vector<6x64xf32>
    tpu.vector_store %arg15[%c114_311, %c0_312], %494 {strides = array<i32>} : memref<146x64xf32, #tpu.memory_space<vmem>>, vector<6x64xf32>,
    %c351 = arith.constant 351 : index
    %c0_313 = arith.constant 0 : index
    %496 = tpu.strided_load %arg14[%c351, %c0_313] {strides = array<i32: 2, 1>} : memref<392x64xf32, #tpu.memory_space<vmem>>, vector<6x64xf32>
    %c352_314 = arith.constant 352 : index
    %c0_315 = arith.constant 0 : index
    %497 = tpu.strided_load %arg14[%c352_314, %c0_315] {strides = array<i32: 2, 1>} : memref<392x64xf32, #tpu.memory_space<vmem>>, vector<6x64xf32>
    %c365_316 = arith.constant 365 : index
    %c0_317 = arith.constant 0 : index
    %498 = tpu.strided_load %arg14[%c365_316, %c0_317] {strides = array<i32: 2, 1>} : memref<392x64xf32, #tpu.memory_space<vmem>>, vector<6x64xf32>
    %c366_318 = arith.constant 366 : index
    %c0_319 = arith.constant 0 : index
    %499 = tpu.strided_load %arg14[%c366_318, %c0_319] {strides = array<i32: 2, 1>} : memref<392x64xf32, #tpu.memory_space<vmem>>, vector<6x64xf32>
    %500 = arith.maximumf %496, %497 : vector<6x64xf32>
    %501 = arith.maximumf %498, %499 : vector<6x64xf32>
    %502 = arith.maximumf %500, %501 : vector<6x64xf32>
    %c0_320 = arith.constant 0 : index
    %c0_321 = arith.constant 0 : index
    %503 = vector.load %arg4[%c0_320, %c0_321] : memref<1x64xf32, #tpu.memory_space<vmem>>, vector<1x64xf32>
    %504 = vector.broadcast %503 : vector<1x64xf32> to vector<6x64xf32>
    %505 = arith.addf %502, %504 : vector<6x64xf32>
    %cst_322 = arith.constant 0.00999999977 : f32
    %506 = vector.broadcast %cst_322 : f32 to vector<6x64xf32>
    %507 = arith.mulf %506, %505 : vector<6x64xf32>
    %508 = arith.maximumf %505, %507 : vector<6x64xf32>
    %c122 = arith.constant 122 : index
    %c0_323 = arith.constant 0 : index
    %509 = vector.load %arg15[%c122, %c0_323] : memref<146x64xf32, #tpu.memory_space<vmem>>, vector<6x64xf32>
    tpu.vector_store %arg15[%c122, %c0_323], %508 {strides = array<i32>} : memref<146x64xf32, #tpu.memory_space<vmem>>, vector<6x64xf32>,
    %c0_i32_324 = arith.constant 0 : i32
    %c2_i32 = arith.constant 2 : i32
    %510 = arith.addi %c0_i32_324, %c2_i32 : i32
    %c1_i32_325 = arith.constant 1 : i32
    scf.for %arg20 = %c0_i32_324 to %510 step %c1_i32_325  : i32 {
      %c64_i32 = arith.constant 64 : i32
      %853 = arith.muli %arg20, %c64_i32 : i32
      %854 = tpu.assume_multiple %853, 8 : i32
      %cst_580 = arith.constant 0.000000e+00 : f32
      %855 = vector.broadcast %cst_580 : f32 to vector<64x128xf32>
      %c0_i32_581 = arith.constant 0 : i32
      %856 = arith.addi %c0_i32_581, %854 : i32
      %857 = arith.index_cast %856 : i32 to index
      %c0_582 = arith.constant 0 : index
      %858 = vector.load %arg15[%857, %c0_582] : memref<146x64xf32, #tpu.memory_space<vmem>>, vector<64x64xf32>
      %c0_583 = arith.constant 0 : index
      %c0_584 = arith.constant 0 : index
      %c0_585 = arith.constant 0 : index
      %859 = vector.load %arg5[%c0_583, %c0_584, %c0_585] : memref<9x64x128xf32, #tpu.memory_space<vmem>>, vector<1x64x128xf32>
      %860 = vector.shape_cast %859 : vector<1x64x128xf32> to vector<64x128xf32>
      %cst_586 = arith.constant dense<0.000000e+00> : vector<64x128xf32>
      %861 = tpu.matmul %858, %860, %cst_586 {dimension_numbers = #tpu.dot_dimension_numbers<[1], [0], [0], [1], [0, 0, 1, 1], [], []>} : vector<64x64xf32>, vector<64x128xf32>, vector<64x128xf32> -> vector<64x128xf32>
      %862 = arith.addf %855, %861 : vector<64x128xf32>
      %c1_i32_587 = arith.constant 1 : i32
      %863 = arith.addi %c1_i32_587, %854 : i32
      %864 = arith.index_cast %863 : i32 to index
      %c0_588 = arith.constant 0 : index
      %865 = vector.load %arg15[%864, %c0_588] : memref<146x64xf32, #tpu.memory_space<vmem>>, vector<64x64xf32>
      %c1_589 = arith.constant 1 : index
      %c0_590 = arith.constant 0 : index
      %c0_591 = arith.constant 0 : index
      %866 = vector.load %arg5[%c1_589, %c0_590, %c0_591] : memref<9x64x128xf32, #tpu.memory_space<vmem>>, vector<1x64x128xf32>
      %867 = vector.shape_cast %866 : vector<1x64x128xf32> to vector<64x128xf32>
      %cst_592 = arith.constant dense<0.000000e+00> : vector<64x128xf32>
      %868 = tpu.matmul %865, %867, %cst_592 {dimension_numbers = #tpu.dot_dimension_numbers<[1], [0], [0], [1], [0, 0, 1, 1], [], []>} : vector<64x64xf32>, vector<64x128xf32>, vector<64x128xf32> -> vector<64x128xf32>
      %869 = arith.addf %862, %868 : vector<64x128xf32>
      %c2_i32_593 = arith.constant 2 : i32
      %870 = arith.addi %c2_i32_593, %854 : i32
      %871 = arith.index_cast %870 : i32 to index
      %c0_594 = arith.constant 0 : index
      %872 = vector.load %arg15[%871, %c0_594] : memref<146x64xf32, #tpu.memory_space<vmem>>, vector<64x64xf32>
      %c2_595 = arith.constant 2 : index
      %c0_596 = arith.constant 0 : index
      %c0_597 = arith.constant 0 : index
      %873 = vector.load %arg5[%c2_595, %c0_596, %c0_597] : memref<9x64x128xf32, #tpu.memory_space<vmem>>, vector<1x64x128xf32>
      %874 = vector.shape_cast %873 : vector<1x64x128xf32> to vector<64x128xf32>
      %cst_598 = arith.constant dense<0.000000e+00> : vector<64x128xf32>
      %875 = tpu.matmul %872, %874, %cst_598 {dimension_numbers = #tpu.dot_dimension_numbers<[1], [0], [0], [1], [0, 0, 1, 1], [], []>} : vector<64x64xf32>, vector<64x128xf32>, vector<64x128xf32> -> vector<64x128xf32>
      %876 = arith.addf %869, %875 : vector<64x128xf32>
      %c8_i32 = arith.constant 8 : i32
      %877 = arith.addi %c8_i32, %854 : i32
      %878 = arith.index_cast %877 : i32 to index
      %c0_599 = arith.constant 0 : index
      %879 = vector.load %arg15[%878, %c0_599] : memref<146x64xf32, #tpu.memory_space<vmem>>, vector<64x64xf32>
      %c3_600 = arith.constant 3 : index
      %c0_601 = arith.constant 0 : index
      %c0_602 = arith.constant 0 : index
      %880 = vector.load %arg5[%c3_600, %c0_601, %c0_602] : memref<9x64x128xf32, #tpu.memory_space<vmem>>, vector<1x64x128xf32>
      %881 = vector.shape_cast %880 : vector<1x64x128xf32> to vector<64x128xf32>
      %cst_603 = arith.constant dense<0.000000e+00> : vector<64x128xf32>
      %882 = tpu.matmul %879, %881, %cst_603 {dimension_numbers = #tpu.dot_dimension_numbers<[1], [0], [0], [1], [0, 0, 1, 1], [], []>} : vector<64x64xf32>, vector<64x128xf32>, vector<64x128xf32> -> vector<64x128xf32>
      %883 = arith.addf %876, %882 : vector<64x128xf32>
      %c9_i32 = arith.constant 9 : i32
      %884 = arith.addi %c9_i32, %854 : i32
      %885 = arith.index_cast %884 : i32 to index
      %c0_604 = arith.constant 0 : index
      %886 = vector.load %arg15[%885, %c0_604] : memref<146x64xf32, #tpu.memory_space<vmem>>, vector<64x64xf32>
      %c4_605 = arith.constant 4 : index
      %c0_606 = arith.constant 0 : index
      %c0_607 = arith.constant 0 : index
      %887 = vector.load %arg5[%c4_605, %c0_606, %c0_607] : memref<9x64x128xf32, #tpu.memory_space<vmem>>, vector<1x64x128xf32>
      %888 = vector.shape_cast %887 : vector<1x64x128xf32> to vector<64x128xf32>
      %cst_608 = arith.constant dense<0.000000e+00> : vector<64x128xf32>
      %889 = tpu.matmul %886, %888, %cst_608 {dimension_numbers = #tpu.dot_dimension_numbers<[1], [0], [0], [1], [0, 0, 1, 1], [], []>} : vector<64x64xf32>, vector<64x128xf32>, vector<64x128xf32> -> vector<64x128xf32>
      %890 = arith.addf %883, %889 : vector<64x128xf32>
      %c10_i32 = arith.constant 10 : i32
      %891 = arith.addi %c10_i32, %854 : i32
      %892 = arith.index_cast %891 : i32 to index
      %c0_609 = arith.constant 0 : index
      %893 = vector.load %arg15[%892, %c0_609] : memref<146x64xf32, #tpu.memory_space<vmem>>, vector<64x64xf32>
      %c5_610 = arith.constant 5 : index
      %c0_611 = arith.constant 0 : index
      %c0_612 = arith.constant 0 : index
      %894 = vector.load %arg5[%c5_610, %c0_611, %c0_612] : memref<9x64x128xf32, #tpu.memory_space<vmem>>, vector<1x64x128xf32>
      %895 = vector.shape_cast %894 : vector<1x64x128xf32> to vector<64x128xf32>
      %cst_613 = arith.constant dense<0.000000e+00> : vector<64x128xf32>
      %896 = tpu.matmul %893, %895, %cst_613 {dimension_numbers = #tpu.dot_dimension_numbers<[1], [0], [0], [1], [0, 0, 1, 1], [], []>} : vector<64x64xf32>, vector<64x128xf32>, vector<64x128xf32> -> vector<64x128xf32>
      %897 = arith.addf %890, %896 : vector<64x128xf32>
      %c16_i32 = arith.constant 16 : i32
      %898 = arith.addi %c16_i32, %854 : i32
      %899 = arith.index_cast %898 : i32 to index
      %c0_614 = arith.constant 0 : index
      %900 = vector.load %arg15[%899, %c0_614] : memref<146x64xf32, #tpu.memory_space<vmem>>, vector<64x64xf32>
      %c6_615 = arith.constant 6 : index
      %c0_616 = arith.constant 0 : index
      %c0_617 = arith.constant 0 : index
      %901 = vector.load %arg5[%c6_615, %c0_616, %c0_617] : memref<9x64x128xf32, #tpu.memory_space<vmem>>, vector<1x64x128xf32>
      %902 = vector.shape_cast %901 : vector<1x64x128xf32> to vector<64x128xf32>
      %cst_618 = arith.constant dense<0.000000e+00> : vector<64x128xf32>
      %903 = tpu.matmul %900, %902, %cst_618 {dimension_numbers = #tpu.dot_dimension_numbers<[1], [0], [0], [1], [0, 0, 1, 1], [], []>} : vector<64x64xf32>, vector<64x128xf32>, vector<64x128xf32> -> vector<64x128xf32>
      %904 = arith.addf %897, %903 : vector<64x128xf32>
      %c17_i32 = arith.constant 17 : i32
      %905 = arith.addi %c17_i32, %854 : i32
      %906 = arith.index_cast %905 : i32 to index
      %c0_619 = arith.constant 0 : index
      %907 = vector.load %arg15[%906, %c0_619] : memref<146x64xf32, #tpu.memory_space<vmem>>, vector<64x64xf32>
      %c7_620 = arith.constant 7 : index
      %c0_621 = arith.constant 0 : index
      %c0_622 = arith.constant 0 : index
      %908 = vector.load %arg5[%c7_620, %c0_621, %c0_622] : memref<9x64x128xf32, #tpu.memory_space<vmem>>, vector<1x64x128xf32>
      %909 = vector.shape_cast %908 : vector<1x64x128xf32> to vector<64x128xf32>
      %cst_623 = arith.constant dense<0.000000e+00> : vector<64x128xf32>
      %910 = tpu.matmul %907, %909, %cst_623 {dimension_numbers = #tpu.dot_dimension_numbers<[1], [0], [0], [1], [0, 0, 1, 1], [], []>} : vector<64x64xf32>, vector<64x128xf32>, vector<64x128xf32> -> vector<64x128xf32>
      %911 = arith.addf %904, %910 : vector<64x128xf32>
      %c18_i32 = arith.constant 18 : i32
      %912 = arith.addi %c18_i32, %854 : i32
      %913 = arith.index_cast %912 : i32 to index
      %c0_624 = arith.constant 0 : index
      %914 = vector.load %arg15[%913, %c0_624] : memref<146x64xf32, #tpu.memory_space<vmem>>, vector<64x64xf32>
      %c8_625 = arith.constant 8 : index
      %c0_626 = arith.constant 0 : index
      %c0_627 = arith.constant 0 : index
      %915 = vector.load %arg5[%c8_625, %c0_626, %c0_627] : memref<9x64x128xf32, #tpu.memory_space<vmem>>, vector<1x64x128xf32>
      %916 = vector.shape_cast %915 : vector<1x64x128xf32> to vector<64x128xf32>
      %cst_628 = arith.constant dense<0.000000e+00> : vector<64x128xf32>
      %917 = tpu.matmul %914, %916, %cst_628 {dimension_numbers = #tpu.dot_dimension_numbers<[1], [0], [0], [1], [0, 0, 1, 1], [], []>} : vector<64x64xf32>, vector<64x128xf32>, vector<64x128xf32> -> vector<64x128xf32>
      %918 = arith.addf %911, %917 : vector<64x128xf32>
      %919 = arith.index_cast %854 : i32 to index
      %c0_629 = arith.constant 0 : index
      %920 = vector.load %arg16[%919, %c0_629] : memref<128x128xf32, #tpu.memory_space<vmem>>, vector<64x128xf32>
      tpu.vector_store %arg16[%919, %c0_629], %918 {strides = array<i32>} : memref<128x128xf32, #tpu.memory_space<vmem>>, vector<64x128xf32>,
    }
    %c2_i32_326 = arith.constant 2 : i32
    %511 = tpu.iota {dimensions = array<i32: 0>} : vector<4x128xi32>
    %c8 = arith.constant 8 : index
    %c0_327 = arith.constant 0 : index
    %512 = tpu.strided_load %arg16[%c8, %c0_327] {strides = array<i32: 2, 1>} : memref<128x128xf32, #tpu.memory_space<vmem>>, vector<4x128xf32>
    %c0_i32_328 = arith.constant 0 : i32
    %513 = vector.broadcast %c0_i32_328 : i32 to vector<4x128xi32>
    %514 = arith.cmpi eq, %511, %513 : vector<4x128xi32>
    %cst_329 = arith.constant -1.000000e+30 : f32
    %515 = vector.broadcast %cst_329 : f32 to vector<4x128xf32>
    %516 = arith.select %514, %515, %512 : vector<4x128xi1>, vector<4x128xf32>
    %c9 = arith.constant 9 : index
    %c0_330 = arith.constant 0 : index
    %517 = tpu.strided_load %arg16[%c9, %c0_330] {strides = array<i32: 2, 1>} : memref<128x128xf32, #tpu.memory_space<vmem>>, vector<4x128xf32>
    %c3_i32 = arith.constant 3 : i32
    %518 = vector.broadcast %c3_i32 : i32 to vector<4x128xi32>
    %519 = arith.cmpi eq, %511, %518 : vector<4x128xi32>
    %cst_331 = arith.constant -1.000000e+30 : f32
    %520 = vector.broadcast %cst_331 : f32 to vector<4x128xf32>
    %521 = arith.select %519, %520, %517 : vector<4x128xi1>, vector<4x128xf32>
    %522 = arith.maximumf %516, %521 : vector<4x128xf32>
    %c0_332 = arith.constant 0 : index
    %c0_333 = arith.constant 0 : index
    %523 = vector.load %arg6[%c0_332, %c0_333] : memref<1x128xf32, #tpu.memory_space<vmem>>, vector<1x128xf32>
    %524 = vector.broadcast %523 : vector<1x128xf32> to vector<4x128xf32>
    %525 = arith.addf %522, %524 : vector<4x128xf32>
    %cst_334 = arith.constant 0.00999999977 : f32
    %526 = vector.broadcast %cst_334 : f32 to vector<4x128xf32>
    %527 = arith.mulf %526, %525 : vector<4x128xf32>
    %528 = arith.maximumf %525, %527 : vector<4x128xf32>
    %529 = vector.extract_strided_slice %528 {offsets = [0, 0], sizes = [1, 128], strides = [1, 1]} : vector<4x128xf32> to vector<1x128xf32>
    %c0_335 = arith.constant 0 : index
    %c0_336 = arith.constant 0 : index
    %530 = vector.load %arg17[%c0_335, %c0_336] : memref<32x128xf32, #tpu.memory_space<vmem>>, vector<1x128xf32>
    tpu.vector_store %arg17[%c0_335, %c0_336], %529 {strides = array<i32>} : memref<32x128xf32, #tpu.memory_space<vmem>>, vector<1x128xf32>,
    %531 = vector.extract_strided_slice %528 {offsets = [1, 0], sizes = [1, 128], strides = [1, 1]} : vector<4x128xf32> to vector<1x128xf32>
    %c2 = arith.constant 2 : index
    %c0_337 = arith.constant 0 : index
    %532 = vector.load %arg17[%c2, %c0_337] : memref<32x128xf32, #tpu.memory_space<vmem>>, vector<1x128xf32>
    tpu.vector_store %arg17[%c2, %c0_337], %531 {strides = array<i32>} : memref<32x128xf32, #tpu.memory_space<vmem>>, vector<1x128xf32>,
    %533 = vector.extract_strided_slice %528 {offsets = [2, 0], sizes = [1, 128], strides = [1, 1]} : vector<4x128xf32> to vector<1x128xf32>
    %c4 = arith.constant 4 : index
    %c0_338 = arith.constant 0 : index
    %534 = vector.load %arg17[%c4, %c0_338] : memref<32x128xf32, #tpu.memory_space<vmem>>, vector<1x128xf32>
    tpu.vector_store %arg17[%c4, %c0_338], %533 {strides = array<i32>} : memref<32x128xf32, #tpu.memory_space<vmem>>, vector<1x128xf32>,
    %535 = vector.extract_strided_slice %528 {offsets = [3, 0], sizes = [1, 128], strides = [1, 1]} : vector<4x128xf32> to vector<1x128xf32>
    %c6 = arith.constant 6 : index
    %c0_339 = arith.constant 0 : index
    %536 = vector.load %arg17[%c6, %c0_339] : memref<32x128xf32, #tpu.memory_space<vmem>>, vector<1x128xf32>
    tpu.vector_store %arg17[%c6, %c0_339], %535 {strides = array<i32>} : memref<32x128xf32, #tpu.memory_space<vmem>>, vector<1x128xf32>,
    %c16_340 = arith.constant 16 : index
    %c0_341 = arith.constant 0 : index
    %537 = tpu.strided_load %arg16[%c16_340, %c0_341] {strides = array<i32: 2, 1>} : memref<128x128xf32, #tpu.memory_space<vmem>>, vector<4x128xf32>
    %c0_i32_342 = arith.constant 0 : i32
    %538 = vector.broadcast %c0_i32_342 : i32 to vector<4x128xi32>
    %539 = arith.cmpi eq, %511, %538 : vector<4x128xi32>
    %cst_343 = arith.constant -1.000000e+30 : f32
    %540 = vector.broadcast %cst_343 : f32 to vector<4x128xf32>
    %541 = arith.select %539, %540, %537 : vector<4x128xi1>, vector<4x128xf32>
    %c17 = arith.constant 17 : index
    %c0_344 = arith.constant 0 : index
    %542 = tpu.strided_load %arg16[%c17, %c0_344] {strides = array<i32: 2, 1>} : memref<128x128xf32, #tpu.memory_space<vmem>>, vector<4x128xf32>
    %c3_i32_345 = arith.constant 3 : i32
    %543 = vector.broadcast %c3_i32_345 : i32 to vector<4x128xi32>
    %544 = arith.cmpi eq, %511, %543 : vector<4x128xi32>
    %cst_346 = arith.constant -1.000000e+30 : f32
    %545 = vector.broadcast %cst_346 : f32 to vector<4x128xf32>
    %546 = arith.select %544, %545, %542 : vector<4x128xi1>, vector<4x128xf32>
    %547 = arith.maximumf %541, %546 : vector<4x128xf32>
    %c24 = arith.constant 24 : index
    %c0_347 = arith.constant 0 : index
    %548 = tpu.strided_load %arg16[%c24, %c0_347] {strides = array<i32: 2, 1>} : memref<128x128xf32, #tpu.memory_space<vmem>>, vector<4x128xf32>
    %c0_i32_348 = arith.constant 0 : i32
    %549 = vector.broadcast %c0_i32_348 : i32 to vector<4x128xi32>
    %550 = arith.cmpi eq, %511, %549 : vector<4x128xi32>
    %cst_349 = arith.constant -1.000000e+30 : f32
    %551 = vector.broadcast %cst_349 : f32 to vector<4x128xf32>
    %552 = arith.select %550, %551, %548 : vector<4x128xi1>, vector<4x128xf32>
    %c25 = arith.constant 25 : index
    %c0_350 = arith.constant 0 : index
    %553 = tpu.strided_load %arg16[%c25, %c0_350] {strides = array<i32: 2, 1>} : memref<128x128xf32, #tpu.memory_space<vmem>>, vector<4x128xf32>
    %c3_i32_351 = arith.constant 3 : i32
    %554 = vector.broadcast %c3_i32_351 : i32 to vector<4x128xi32>
    %555 = arith.cmpi eq, %511, %554 : vector<4x128xi32>
    %cst_352 = arith.constant -1.000000e+30 : f32
    %556 = vector.broadcast %cst_352 : f32 to vector<4x128xf32>
    %557 = arith.select %555, %556, %553 : vector<4x128xi1>, vector<4x128xf32>
    %558 = arith.maximumf %552, %557 : vector<4x128xf32>
    %559 = arith.maximumf %547, %558 : vector<4x128xf32>
    %c0_353 = arith.constant 0 : index
    %c0_354 = arith.constant 0 : index
    %560 = vector.load %arg6[%c0_353, %c0_354] : memref<1x128xf32, #tpu.memory_space<vmem>>, vector<1x128xf32>
    %561 = vector.broadcast %560 : vector<1x128xf32> to vector<4x128xf32>
    %562 = arith.addf %559, %561 : vector<4x128xf32>
    %cst_355 = arith.constant 0.00999999977 : f32
    %563 = vector.broadcast %cst_355 : f32 to vector<4x128xf32>
    %564 = arith.mulf %563, %562 : vector<4x128xf32>
    %565 = arith.maximumf %562, %564 : vector<4x128xf32>
    %566 = vector.extract_strided_slice %565 {offsets = [0, 0], sizes = [1, 128], strides = [1, 1]} : vector<4x128xf32> to vector<1x128xf32>
    %c8_356 = arith.constant 8 : index
    %c0_357 = arith.constant 0 : index
    %567 = vector.load %arg17[%c8_356, %c0_357] : memref<32x128xf32, #tpu.memory_space<vmem>>, vector<1x128xf32>
    tpu.vector_store %arg17[%c8_356, %c0_357], %566 {strides = array<i32>} : memref<32x128xf32, #tpu.memory_space<vmem>>, vector<1x128xf32>,
    %568 = vector.extract_strided_slice %565 {offsets = [1, 0], sizes = [1, 128], strides = [1, 1]} : vector<4x128xf32> to vector<1x128xf32>
    %c10 = arith.constant 10 : index
    %c0_358 = arith.constant 0 : index
    %569 = vector.load %arg17[%c10, %c0_358] : memref<32x128xf32, #tpu.memory_space<vmem>>, vector<1x128xf32>
    tpu.vector_store %arg17[%c10, %c0_358], %568 {strides = array<i32>} : memref<32x128xf32, #tpu.memory_space<vmem>>, vector<1x128xf32>,
    %570 = vector.extract_strided_slice %565 {offsets = [2, 0], sizes = [1, 128], strides = [1, 1]} : vector<4x128xf32> to vector<1x128xf32>
    %c12 = arith.constant 12 : index
    %c0_359 = arith.constant 0 : index
    %571 = vector.load %arg17[%c12, %c0_359] : memref<32x128xf32, #tpu.memory_space<vmem>>, vector<1x128xf32>
    tpu.vector_store %arg17[%c12, %c0_359], %570 {strides = array<i32>} : memref<32x128xf32, #tpu.memory_space<vmem>>, vector<1x128xf32>,
    %572 = vector.extract_strided_slice %565 {offsets = [3, 0], sizes = [1, 128], strides = [1, 1]} : vector<4x128xf32> to vector<1x128xf32>
    %c14 = arith.constant 14 : index
    %c0_360 = arith.constant 0 : index
    %573 = vector.load %arg17[%c14, %c0_360] : memref<32x128xf32, #tpu.memory_space<vmem>>, vector<1x128xf32>
    tpu.vector_store %arg17[%c14, %c0_360], %572 {strides = array<i32>} : memref<32x128xf32, #tpu.memory_space<vmem>>, vector<1x128xf32>,
    %c32 = arith.constant 32 : index
    %c0_361 = arith.constant 0 : index
    %574 = tpu.strided_load %arg16[%c32, %c0_361] {strides = array<i32: 2, 1>} : memref<128x128xf32, #tpu.memory_space<vmem>>, vector<4x128xf32>
    %c0_i32_362 = arith.constant 0 : i32
    %575 = vector.broadcast %c0_i32_362 : i32 to vector<4x128xi32>
    %576 = arith.cmpi eq, %511, %575 : vector<4x128xi32>
    %cst_363 = arith.constant -1.000000e+30 : f32
    %577 = vector.broadcast %cst_363 : f32 to vector<4x128xf32>
    %578 = arith.select %576, %577, %574 : vector<4x128xi1>, vector<4x128xf32>
    %c33 = arith.constant 33 : index
    %c0_364 = arith.constant 0 : index
    %579 = tpu.strided_load %arg16[%c33, %c0_364] {strides = array<i32: 2, 1>} : memref<128x128xf32, #tpu.memory_space<vmem>>, vector<4x128xf32>
    %c3_i32_365 = arith.constant 3 : i32
    %580 = vector.broadcast %c3_i32_365 : i32 to vector<4x128xi32>
    %581 = arith.cmpi eq, %511, %580 : vector<4x128xi32>
    %cst_366 = arith.constant -1.000000e+30 : f32
    %582 = vector.broadcast %cst_366 : f32 to vector<4x128xf32>
    %583 = arith.select %581, %582, %579 : vector<4x128xi1>, vector<4x128xf32>
    %584 = arith.maximumf %578, %583 : vector<4x128xf32>
    %c40 = arith.constant 40 : index
    %c0_367 = arith.constant 0 : index
    %585 = tpu.strided_load %arg16[%c40, %c0_367] {strides = array<i32: 2, 1>} : memref<128x128xf32, #tpu.memory_space<vmem>>, vector<4x128xf32>
    %c0_i32_368 = arith.constant 0 : i32
    %586 = vector.broadcast %c0_i32_368 : i32 to vector<4x128xi32>
    %587 = arith.cmpi eq, %511, %586 : vector<4x128xi32>
    %cst_369 = arith.constant -1.000000e+30 : f32
    %588 = vector.broadcast %cst_369 : f32 to vector<4x128xf32>
    %589 = arith.select %587, %588, %585 : vector<4x128xi1>, vector<4x128xf32>
    %c41 = arith.constant 41 : index
    %c0_370 = arith.constant 0 : index
    %590 = tpu.strided_load %arg16[%c41, %c0_370] {strides = array<i32: 2, 1>} : memref<128x128xf32, #tpu.memory_space<vmem>>, vector<4x128xf32>
    %c3_i32_371 = arith.constant 3 : i32
    %591 = vector.broadcast %c3_i32_371 : i32 to vector<4x128xi32>
    %592 = arith.cmpi eq, %511, %591 : vector<4x128xi32>
    %cst_372 = arith.constant -1.000000e+30 : f32
    %593 = vector.broadcast %cst_372 : f32 to vector<4x128xf32>
    %594 = arith.select %592, %593, %590 : vector<4x128xi1>, vector<4x128xf32>
    %595 = arith.maximumf %589, %594 : vector<4x128xf32>
    %596 = arith.maximumf %584, %595 : vector<4x128xf32>
    %c0_373 = arith.constant 0 : index
    %c0_374 = arith.constant 0 : index
    %597 = vector.load %arg6[%c0_373, %c0_374] : memref<1x128xf32, #tpu.memory_space<vmem>>, vector<1x128xf32>
    %598 = vector.broadcast %597 : vector<1x128xf32> to vector<4x128xf32>
    %599 = arith.addf %596, %598 : vector<4x128xf32>
    %cst_375 = arith.constant 0.00999999977 : f32
    %600 = vector.broadcast %cst_375 : f32 to vector<4x128xf32>
    %601 = arith.mulf %600, %599 : vector<4x128xf32>
    %602 = arith.maximumf %599, %601 : vector<4x128xf32>
    %603 = vector.extract_strided_slice %602 {offsets = [0, 0], sizes = [1, 128], strides = [1, 1]} : vector<4x128xf32> to vector<1x128xf32>
    %c16_376 = arith.constant 16 : index
    %c0_377 = arith.constant 0 : index
    %604 = vector.load %arg17[%c16_376, %c0_377] : memref<32x128xf32, #tpu.memory_space<vmem>>, vector<1x128xf32>
    tpu.vector_store %arg17[%c16_376, %c0_377], %603 {strides = array<i32>} : memref<32x128xf32, #tpu.memory_space<vmem>>, vector<1x128xf32>,
    %605 = vector.extract_strided_slice %602 {offsets = [1, 0], sizes = [1, 128], strides = [1, 1]} : vector<4x128xf32> to vector<1x128xf32>
    %c18_378 = arith.constant 18 : index
    %c0_379 = arith.constant 0 : index
    %606 = vector.load %arg17[%c18_378, %c0_379] : memref<32x128xf32, #tpu.memory_space<vmem>>, vector<1x128xf32>
    tpu.vector_store %arg17[%c18_378, %c0_379], %605 {strides = array<i32>} : memref<32x128xf32, #tpu.memory_space<vmem>>, vector<1x128xf32>,
    %607 = vector.extract_strided_slice %602 {offsets = [2, 0], sizes = [1, 128], strides = [1, 1]} : vector<4x128xf32> to vector<1x128xf32>
    %c20 = arith.constant 20 : index
    %c0_380 = arith.constant 0 : index
    %608 = vector.load %arg17[%c20, %c0_380] : memref<32x128xf32, #tpu.memory_space<vmem>>, vector<1x128xf32>
    tpu.vector_store %arg17[%c20, %c0_380], %607 {strides = array<i32>} : memref<32x128xf32, #tpu.memory_space<vmem>>, vector<1x128xf32>,
    %609 = vector.extract_strided_slice %602 {offsets = [3, 0], sizes = [1, 128], strides = [1, 1]} : vector<4x128xf32> to vector<1x128xf32>
    %c22 = arith.constant 22 : index
    %c0_381 = arith.constant 0 : index
    %610 = vector.load %arg17[%c22, %c0_381] : memref<32x128xf32, #tpu.memory_space<vmem>>, vector<1x128xf32>
    tpu.vector_store %arg17[%c22, %c0_381], %609 {strides = array<i32>} : memref<32x128xf32, #tpu.memory_space<vmem>>, vector<1x128xf32>,
    %c48 = arith.constant 48 : index
    %c0_382 = arith.constant 0 : index
    %611 = tpu.strided_load %arg16[%c48, %c0_382] {strides = array<i32: 2, 1>} : memref<128x128xf32, #tpu.memory_space<vmem>>, vector<4x128xf32>
    %c0_i32_383 = arith.constant 0 : i32
    %612 = vector.broadcast %c0_i32_383 : i32 to vector<4x128xi32>
    %613 = arith.cmpi eq, %511, %612 : vector<4x128xi32>
    %cst_384 = arith.constant -1.000000e+30 : f32
    %614 = vector.broadcast %cst_384 : f32 to vector<4x128xf32>
    %615 = arith.select %613, %614, %611 : vector<4x128xi1>, vector<4x128xf32>
    %c49 = arith.constant 49 : index
    %c0_385 = arith.constant 0 : index
    %616 = tpu.strided_load %arg16[%c49, %c0_385] {strides = array<i32: 2, 1>} : memref<128x128xf32, #tpu.memory_space<vmem>>, vector<4x128xf32>
    %c3_i32_386 = arith.constant 3 : i32
    %617 = vector.broadcast %c3_i32_386 : i32 to vector<4x128xi32>
    %618 = arith.cmpi eq, %511, %617 : vector<4x128xi32>
    %cst_387 = arith.constant -1.000000e+30 : f32
    %619 = vector.broadcast %cst_387 : f32 to vector<4x128xf32>
    %620 = arith.select %618, %619, %616 : vector<4x128xi1>, vector<4x128xf32>
    %621 = arith.maximumf %615, %620 : vector<4x128xf32>
    %c0_388 = arith.constant 0 : index
    %c0_389 = arith.constant 0 : index
    %622 = vector.load %arg6[%c0_388, %c0_389] : memref<1x128xf32, #tpu.memory_space<vmem>>, vector<1x128xf32>
    %623 = vector.broadcast %622 : vector<1x128xf32> to vector<4x128xf32>
    %624 = arith.addf %621, %623 : vector<4x128xf32>
    %cst_390 = arith.constant 0.00999999977 : f32
    %625 = vector.broadcast %cst_390 : f32 to vector<4x128xf32>
    %626 = arith.mulf %625, %624 : vector<4x128xf32>
    %627 = arith.maximumf %624, %626 : vector<4x128xf32>
    %628 = vector.extract_strided_slice %627 {offsets = [0, 0], sizes = [1, 128], strides = [1, 1]} : vector<4x128xf32> to vector<1x128xf32>
    %c24_391 = arith.constant 24 : index
    %c0_392 = arith.constant 0 : index
    %629 = vector.load %arg17[%c24_391, %c0_392] : memref<32x128xf32, #tpu.memory_space<vmem>>, vector<1x128xf32>
    tpu.vector_store %arg17[%c24_391, %c0_392], %628 {strides = array<i32>} : memref<32x128xf32, #tpu.memory_space<vmem>>, vector<1x128xf32>,
    %630 = vector.extract_strided_slice %627 {offsets = [1, 0], sizes = [1, 128], strides = [1, 1]} : vector<4x128xf32> to vector<1x128xf32>
    %c26_393 = arith.constant 26 : index
    %c0_394 = arith.constant 0 : index
    %631 = vector.load %arg17[%c26_393, %c0_394] : memref<32x128xf32, #tpu.memory_space<vmem>>, vector<1x128xf32>
    tpu.vector_store %arg17[%c26_393, %c0_394], %630 {strides = array<i32>} : memref<32x128xf32, #tpu.memory_space<vmem>>, vector<1x128xf32>,
    %632 = vector.extract_strided_slice %627 {offsets = [2, 0], sizes = [1, 128], strides = [1, 1]} : vector<4x128xf32> to vector<1x128xf32>
    %c28_395 = arith.constant 28 : index
    %c0_396 = arith.constant 0 : index
    %633 = vector.load %arg17[%c28_395, %c0_396] : memref<32x128xf32, #tpu.memory_space<vmem>>, vector<1x128xf32>
    tpu.vector_store %arg17[%c28_395, %c0_396], %632 {strides = array<i32>} : memref<32x128xf32, #tpu.memory_space<vmem>>, vector<1x128xf32>,
    %634 = vector.extract_strided_slice %627 {offsets = [3, 0], sizes = [1, 128], strides = [1, 1]} : vector<4x128xf32> to vector<1x128xf32>
    %c30_397 = arith.constant 30 : index
    %c0_398 = arith.constant 0 : index
    %635 = vector.load %arg17[%c30_397, %c0_398] : memref<32x128xf32, #tpu.memory_space<vmem>>, vector<1x128xf32>
    tpu.vector_store %arg17[%c30_397, %c0_398], %634 {strides = array<i32>} : memref<32x128xf32, #tpu.memory_space<vmem>>, vector<1x128xf32>,
    %c72_399 = arith.constant 72 : index
    %c0_400 = arith.constant 0 : index
    %636 = tpu.strided_load %arg16[%c72_399, %c0_400] {strides = array<i32: 2, 1>} : memref<128x128xf32, #tpu.memory_space<vmem>>, vector<4x128xf32>
    %c0_i32_401 = arith.constant 0 : i32
    %637 = vector.broadcast %c0_i32_401 : i32 to vector<4x128xi32>
    %638 = arith.cmpi eq, %511, %637 : vector<4x128xi32>
    %cst_402 = arith.constant -1.000000e+30 : f32
    %639 = vector.broadcast %cst_402 : f32 to vector<4x128xf32>
    %640 = arith.select %638, %639, %636 : vector<4x128xi1>, vector<4x128xf32>
    %c73 = arith.constant 73 : index
    %c0_403 = arith.constant 0 : index
    %641 = tpu.strided_load %arg16[%c73, %c0_403] {strides = array<i32: 2, 1>} : memref<128x128xf32, #tpu.memory_space<vmem>>, vector<4x128xf32>
    %c3_i32_404 = arith.constant 3 : i32
    %642 = vector.broadcast %c3_i32_404 : i32 to vector<4x128xi32>
    %643 = arith.cmpi eq, %511, %642 : vector<4x128xi32>
    %cst_405 = arith.constant -1.000000e+30 : f32
    %644 = vector.broadcast %cst_405 : f32 to vector<4x128xf32>
    %645 = arith.select %643, %644, %641 : vector<4x128xi1>, vector<4x128xf32>
    %646 = arith.maximumf %640, %645 : vector<4x128xf32>
    %c0_406 = arith.constant 0 : index
    %c0_407 = arith.constant 0 : index
    %647 = vector.load %arg6[%c0_406, %c0_407] : memref<1x128xf32, #tpu.memory_space<vmem>>, vector<1x128xf32>
    %648 = vector.broadcast %647 : vector<1x128xf32> to vector<4x128xf32>
    %649 = arith.addf %646, %648 : vector<4x128xf32>
    %cst_408 = arith.constant 0.00999999977 : f32
    %650 = vector.broadcast %cst_408 : f32 to vector<4x128xf32>
    %651 = arith.mulf %650, %649 : vector<4x128xf32>
    %652 = arith.maximumf %649, %651 : vector<4x128xf32>
    %653 = vector.extract_strided_slice %652 {offsets = [0, 0], sizes = [1, 128], strides = [1, 1]} : vector<4x128xf32> to vector<1x128xf32>
    %c1 = arith.constant 1 : index
    %c0_409 = arith.constant 0 : index
    %654 = vector.load %arg17[%c1, %c0_409] : memref<32x128xf32, #tpu.memory_space<vmem>>, vector<1x128xf32>
    tpu.vector_store %arg17[%c1, %c0_409], %653 {strides = array<i32>} : memref<32x128xf32, #tpu.memory_space<vmem>>, vector<1x128xf32>,
    %655 = vector.extract_strided_slice %652 {offsets = [1, 0], sizes = [1, 128], strides = [1, 1]} : vector<4x128xf32> to vector<1x128xf32>
    %c3 = arith.constant 3 : index
    %c0_410 = arith.constant 0 : index
    %656 = vector.load %arg17[%c3, %c0_410] : memref<32x128xf32, #tpu.memory_space<vmem>>, vector<1x128xf32>
    tpu.vector_store %arg17[%c3, %c0_410], %655 {strides = array<i32>} : memref<32x128xf32, #tpu.memory_space<vmem>>, vector<1x128xf32>,
    %657 = vector.extract_strided_slice %652 {offsets = [2, 0], sizes = [1, 128], strides = [1, 1]} : vector<4x128xf32> to vector<1x128xf32>
    %c5 = arith.constant 5 : index
    %c0_411 = arith.constant 0 : index
    %658 = vector.load %arg17[%c5, %c0_411] : memref<32x128xf32, #tpu.memory_space<vmem>>, vector<1x128xf32>
    tpu.vector_store %arg17[%c5, %c0_411], %657 {strides = array<i32>} : memref<32x128xf32, #tpu.memory_space<vmem>>, vector<1x128xf32>,
    %659 = vector.extract_strided_slice %652 {offsets = [3, 0], sizes = [1, 128], strides = [1, 1]} : vector<4x128xf32> to vector<1x128xf32>
    %c7 = arith.constant 7 : index
    %c0_412 = arith.constant 0 : index
    %660 = vector.load %arg17[%c7, %c0_412] : memref<32x128xf32, #tpu.memory_space<vmem>>, vector<1x128xf32>
    tpu.vector_store %arg17[%c7, %c0_412], %659 {strides = array<i32>} : memref<32x128xf32, #tpu.memory_space<vmem>>, vector<1x128xf32>,
    %c80_413 = arith.constant 80 : index
    %c0_414 = arith.constant 0 : index
    %661 = tpu.strided_load %arg16[%c80_413, %c0_414] {strides = array<i32: 2, 1>} : memref<128x128xf32, #tpu.memory_space<vmem>>, vector<4x128xf32>
    %c0_i32_415 = arith.constant 0 : i32
    %662 = vector.broadcast %c0_i32_415 : i32 to vector<4x128xi32>
    %663 = arith.cmpi eq, %511, %662 : vector<4x128xi32>
    %cst_416 = arith.constant -1.000000e+30 : f32
    %664 = vector.broadcast %cst_416 : f32 to vector<4x128xf32>
    %665 = arith.select %663, %664, %661 : vector<4x128xi1>, vector<4x128xf32>
    %c81 = arith.constant 81 : index
    %c0_417 = arith.constant 0 : index
    %666 = tpu.strided_load %arg16[%c81, %c0_417] {strides = array<i32: 2, 1>} : memref<128x128xf32, #tpu.memory_space<vmem>>, vector<4x128xf32>
    %c3_i32_418 = arith.constant 3 : i32
    %667 = vector.broadcast %c3_i32_418 : i32 to vector<4x128xi32>
    %668 = arith.cmpi eq, %511, %667 : vector<4x128xi32>
    %cst_419 = arith.constant -1.000000e+30 : f32
    %669 = vector.broadcast %cst_419 : f32 to vector<4x128xf32>
    %670 = arith.select %668, %669, %666 : vector<4x128xi1>, vector<4x128xf32>
    %671 = arith.maximumf %665, %670 : vector<4x128xf32>
    %c88 = arith.constant 88 : index
    %c0_420 = arith.constant 0 : index
    %672 = tpu.strided_load %arg16[%c88, %c0_420] {strides = array<i32: 2, 1>} : memref<128x128xf32, #tpu.memory_space<vmem>>, vector<4x128xf32>
    %c0_i32_421 = arith.constant 0 : i32
    %673 = vector.broadcast %c0_i32_421 : i32 to vector<4x128xi32>
    %674 = arith.cmpi eq, %511, %673 : vector<4x128xi32>
    %cst_422 = arith.constant -1.000000e+30 : f32
    %675 = vector.broadcast %cst_422 : f32 to vector<4x128xf32>
    %676 = arith.select %674, %675, %672 : vector<4x128xi1>, vector<4x128xf32>
    %c89 = arith.constant 89 : index
    %c0_423 = arith.constant 0 : index
    %677 = tpu.strided_load %arg16[%c89, %c0_423] {strides = array<i32: 2, 1>} : memref<128x128xf32, #tpu.memory_space<vmem>>, vector<4x128xf32>
    %c3_i32_424 = arith.constant 3 : i32
    %678 = vector.broadcast %c3_i32_424 : i32 to vector<4x128xi32>
    %679 = arith.cmpi eq, %511, %678 : vector<4x128xi32>
    %cst_425 = arith.constant -1.000000e+30 : f32
    %680 = vector.broadcast %cst_425 : f32 to vector<4x128xf32>
    %681 = arith.select %679, %680, %677 : vector<4x128xi1>, vector<4x128xf32>
    %682 = arith.maximumf %676, %681 : vector<4x128xf32>
    %683 = arith.maximumf %671, %682 : vector<4x128xf32>
    %c0_426 = arith.constant 0 : index
    %c0_427 = arith.constant 0 : index
    %684 = vector.load %arg6[%c0_426, %c0_427] : memref<1x128xf32, #tpu.memory_space<vmem>>, vector<1x128xf32>
    %685 = vector.broadcast %684 : vector<1x128xf32> to vector<4x128xf32>
    %686 = arith.addf %683, %685 : vector<4x128xf32>
    %cst_428 = arith.constant 0.00999999977 : f32
    %687 = vector.broadcast %cst_428 : f32 to vector<4x128xf32>
    %688 = arith.mulf %687, %686 : vector<4x128xf32>
    %689 = arith.maximumf %686, %688 : vector<4x128xf32>
    %690 = vector.extract_strided_slice %689 {offsets = [0, 0], sizes = [1, 128], strides = [1, 1]} : vector<4x128xf32> to vector<1x128xf32>
    %c9_429 = arith.constant 9 : index
    %c0_430 = arith.constant 0 : index
    %691 = vector.load %arg17[%c9_429, %c0_430] : memref<32x128xf32, #tpu.memory_space<vmem>>, vector<1x128xf32>
    tpu.vector_store %arg17[%c9_429, %c0_430], %690 {strides = array<i32>} : memref<32x128xf32, #tpu.memory_space<vmem>>, vector<1x128xf32>,
    %692 = vector.extract_strided_slice %689 {offsets = [1, 0], sizes = [1, 128], strides = [1, 1]} : vector<4x128xf32> to vector<1x128xf32>
    %c11 = arith.constant 11 : index
    %c0_431 = arith.constant 0 : index
    %693 = vector.load %arg17[%c11, %c0_431] : memref<32x128xf32, #tpu.memory_space<vmem>>, vector<1x128xf32>
    tpu.vector_store %arg17[%c11, %c0_431], %692 {strides = array<i32>} : memref<32x128xf32, #tpu.memory_space<vmem>>, vector<1x128xf32>,
    %694 = vector.extract_strided_slice %689 {offsets = [2, 0], sizes = [1, 128], strides = [1, 1]} : vector<4x128xf32> to vector<1x128xf32>
    %c13 = arith.constant 13 : index
    %c0_432 = arith.constant 0 : index
    %695 = vector.load %arg17[%c13, %c0_432] : memref<32x128xf32, #tpu.memory_space<vmem>>, vector<1x128xf32>
    tpu.vector_store %arg17[%c13, %c0_432], %694 {strides = array<i32>} : memref<32x128xf32, #tpu.memory_space<vmem>>, vector<1x128xf32>,
    %696 = vector.extract_strided_slice %689 {offsets = [3, 0], sizes = [1, 128], strides = [1, 1]} : vector<4x128xf32> to vector<1x128xf32>
    %c15_433 = arith.constant 15 : index
    %c0_434 = arith.constant 0 : index
    %697 = vector.load %arg17[%c15_433, %c0_434] : memref<32x128xf32, #tpu.memory_space<vmem>>, vector<1x128xf32>
    tpu.vector_store %arg17[%c15_433, %c0_434], %696 {strides = array<i32>} : memref<32x128xf32, #tpu.memory_space<vmem>>, vector<1x128xf32>,
    %c96 = arith.constant 96 : index
    %c0_435 = arith.constant 0 : index
    %698 = tpu.strided_load %arg16[%c96, %c0_435] {strides = array<i32: 2, 1>} : memref<128x128xf32, #tpu.memory_space<vmem>>, vector<4x128xf32>
    %c0_i32_436 = arith.constant 0 : i32
    %699 = vector.broadcast %c0_i32_436 : i32 to vector<4x128xi32>
    %700 = arith.cmpi eq, %511, %699 : vector<4x128xi32>
    %cst_437 = arith.constant -1.000000e+30 : f32
    %701 = vector.broadcast %cst_437 : f32 to vector<4x128xf32>
    %702 = arith.select %700, %701, %698 : vector<4x128xi1>, vector<4x128xf32>
    %c97 = arith.constant 97 : index
    %c0_438 = arith.constant 0 : index
    %703 = tpu.strided_load %arg16[%c97, %c0_438] {strides = array<i32: 2, 1>} : memref<128x128xf32, #tpu.memory_space<vmem>>, vector<4x128xf32>
    %c3_i32_439 = arith.constant 3 : i32
    %704 = vector.broadcast %c3_i32_439 : i32 to vector<4x128xi32>
    %705 = arith.cmpi eq, %511, %704 : vector<4x128xi32>
    %cst_440 = arith.constant -1.000000e+30 : f32
    %706 = vector.broadcast %cst_440 : f32 to vector<4x128xf32>
    %707 = arith.select %705, %706, %703 : vector<4x128xi1>, vector<4x128xf32>
    %708 = arith.maximumf %702, %707 : vector<4x128xf32>
    %c104 = arith.constant 104 : index
    %c0_441 = arith.constant 0 : index
    %709 = tpu.strided_load %arg16[%c104, %c0_441] {strides = array<i32: 2, 1>} : memref<128x128xf32, #tpu.memory_space<vmem>>, vector<4x128xf32>
    %c0_i32_442 = arith.constant 0 : i32
    %710 = vector.broadcast %c0_i32_442 : i32 to vector<4x128xi32>
    %711 = arith.cmpi eq, %511, %710 : vector<4x128xi32>
    %cst_443 = arith.constant -1.000000e+30 : f32
    %712 = vector.broadcast %cst_443 : f32 to vector<4x128xf32>
    %713 = arith.select %711, %712, %709 : vector<4x128xi1>, vector<4x128xf32>
    %c105_444 = arith.constant 105 : index
    %c0_445 = arith.constant 0 : index
    %714 = tpu.strided_load %arg16[%c105_444, %c0_445] {strides = array<i32: 2, 1>} : memref<128x128xf32, #tpu.memory_space<vmem>>, vector<4x128xf32>
    %c3_i32_446 = arith.constant 3 : i32
    %715 = vector.broadcast %c3_i32_446 : i32 to vector<4x128xi32>
    %716 = arith.cmpi eq, %511, %715 : vector<4x128xi32>
    %cst_447 = arith.constant -1.000000e+30 : f32
    %717 = vector.broadcast %cst_447 : f32 to vector<4x128xf32>
    %718 = arith.select %716, %717, %714 : vector<4x128xi1>, vector<4x128xf32>
    %719 = arith.maximumf %713, %718 : vector<4x128xf32>
    %720 = arith.maximumf %708, %719 : vector<4x128xf32>
    %c0_448 = arith.constant 0 : index
    %c0_449 = arith.constant 0 : index
    %721 = vector.load %arg6[%c0_448, %c0_449] : memref<1x128xf32, #tpu.memory_space<vmem>>, vector<1x128xf32>
    %722 = vector.broadcast %721 : vector<1x128xf32> to vector<4x128xf32>
    %723 = arith.addf %720, %722 : vector<4x128xf32>
    %cst_450 = arith.constant 0.00999999977 : f32
    %724 = vector.broadcast %cst_450 : f32 to vector<4x128xf32>
    %725 = arith.mulf %724, %723 : vector<4x128xf32>
    %726 = arith.maximumf %723, %725 : vector<4x128xf32>
    %727 = vector.extract_strided_slice %726 {offsets = [0, 0], sizes = [1, 128], strides = [1, 1]} : vector<4x128xf32> to vector<1x128xf32>
    %c17_451 = arith.constant 17 : index
    %c0_452 = arith.constant 0 : index
    %728 = vector.load %arg17[%c17_451, %c0_452] : memref<32x128xf32, #tpu.memory_space<vmem>>, vector<1x128xf32>
    tpu.vector_store %arg17[%c17_451, %c0_452], %727 {strides = array<i32>} : memref<32x128xf32, #tpu.memory_space<vmem>>, vector<1x128xf32>,
    %729 = vector.extract_strided_slice %726 {offsets = [1, 0], sizes = [1, 128], strides = [1, 1]} : vector<4x128xf32> to vector<1x128xf32>
    %c19 = arith.constant 19 : index
    %c0_453 = arith.constant 0 : index
    %730 = vector.load %arg17[%c19, %c0_453] : memref<32x128xf32, #tpu.memory_space<vmem>>, vector<1x128xf32>
    tpu.vector_store %arg17[%c19, %c0_453], %729 {strides = array<i32>} : memref<32x128xf32, #tpu.memory_space<vmem>>, vector<1x128xf32>,
    %731 = vector.extract_strided_slice %726 {offsets = [2, 0], sizes = [1, 128], strides = [1, 1]} : vector<4x128xf32> to vector<1x128xf32>
    %c21 = arith.constant 21 : index
    %c0_454 = arith.constant 0 : index
    %732 = vector.load %arg17[%c21, %c0_454] : memref<32x128xf32, #tpu.memory_space<vmem>>, vector<1x128xf32>
    tpu.vector_store %arg17[%c21, %c0_454], %731 {strides = array<i32>} : memref<32x128xf32, #tpu.memory_space<vmem>>, vector<1x128xf32>,
    %733 = vector.extract_strided_slice %726 {offsets = [3, 0], sizes = [1, 128], strides = [1, 1]} : vector<4x128xf32> to vector<1x128xf32>
    %c23 = arith.constant 23 : index
    %c0_455 = arith.constant 0 : index
    %734 = vector.load %arg17[%c23, %c0_455] : memref<32x128xf32, #tpu.memory_space<vmem>>, vector<1x128xf32>
    tpu.vector_store %arg17[%c23, %c0_455], %733 {strides = array<i32>} : memref<32x128xf32, #tpu.memory_space<vmem>>, vector<1x128xf32>,
    %c112 = arith.constant 112 : index
    %c0_456 = arith.constant 0 : index
    %735 = tpu.strided_load %arg16[%c112, %c0_456] {strides = array<i32: 2, 1>} : memref<128x128xf32, #tpu.memory_space<vmem>>, vector<4x128xf32>
    %c0_i32_457 = arith.constant 0 : i32
    %736 = vector.broadcast %c0_i32_457 : i32 to vector<4x128xi32>
    %737 = arith.cmpi eq, %511, %736 : vector<4x128xi32>
    %cst_458 = arith.constant -1.000000e+30 : f32
    %738 = vector.broadcast %cst_458 : f32 to vector<4x128xf32>
    %739 = arith.select %737, %738, %735 : vector<4x128xi1>, vector<4x128xf32>
    %c113_459 = arith.constant 113 : index
    %c0_460 = arith.constant 0 : index
    %740 = tpu.strided_load %arg16[%c113_459, %c0_460] {strides = array<i32: 2, 1>} : memref<128x128xf32, #tpu.memory_space<vmem>>, vector<4x128xf32>
    %c3_i32_461 = arith.constant 3 : i32
    %741 = vector.broadcast %c3_i32_461 : i32 to vector<4x128xi32>
    %742 = arith.cmpi eq, %511, %741 : vector<4x128xi32>
    %cst_462 = arith.constant -1.000000e+30 : f32
    %743 = vector.broadcast %cst_462 : f32 to vector<4x128xf32>
    %744 = arith.select %742, %743, %740 : vector<4x128xi1>, vector<4x128xf32>
    %745 = arith.maximumf %739, %744 : vector<4x128xf32>
    %c0_463 = arith.constant 0 : index
    %c0_464 = arith.constant 0 : index
    %746 = vector.load %arg6[%c0_463, %c0_464] : memref<1x128xf32, #tpu.memory_space<vmem>>, vector<1x128xf32>
    %747 = vector.broadcast %746 : vector<1x128xf32> to vector<4x128xf32>
    %748 = arith.addf %745, %747 : vector<4x128xf32>
    %cst_465 = arith.constant 0.00999999977 : f32
    %749 = vector.broadcast %cst_465 : f32 to vector<4x128xf32>
    %750 = arith.mulf %749, %748 : vector<4x128xf32>
    %751 = arith.maximumf %748, %750 : vector<4x128xf32>
    %752 = vector.extract_strided_slice %751 {offsets = [0, 0], sizes = [1, 128], strides = [1, 1]} : vector<4x128xf32> to vector<1x128xf32>
    %c25_466 = arith.constant 25 : index
    %c0_467 = arith.constant 0 : index
    %753 = vector.load %arg17[%c25_466, %c0_467] : memref<32x128xf32, #tpu.memory_space<vmem>>, vector<1x128xf32>
    tpu.vector_store %arg17[%c25_466, %c0_467], %752 {strides = array<i32>} : memref<32x128xf32, #tpu.memory_space<vmem>>, vector<1x128xf32>,
    %754 = vector.extract_strided_slice %751 {offsets = [1, 0], sizes = [1, 128], strides = [1, 1]} : vector<4x128xf32> to vector<1x128xf32>
    %c27_468 = arith.constant 27 : index
    %c0_469 = arith.constant 0 : index
    %755 = vector.load %arg17[%c27_468, %c0_469] : memref<32x128xf32, #tpu.memory_space<vmem>>, vector<1x128xf32>
    tpu.vector_store %arg17[%c27_468, %c0_469], %754 {strides = array<i32>} : memref<32x128xf32, #tpu.memory_space<vmem>>, vector<1x128xf32>,
    %756 = vector.extract_strided_slice %751 {offsets = [2, 0], sizes = [1, 128], strides = [1, 1]} : vector<4x128xf32> to vector<1x128xf32>
    %c29_470 = arith.constant 29 : index
    %c0_471 = arith.constant 0 : index
    %757 = vector.load %arg17[%c29_470, %c0_471] : memref<32x128xf32, #tpu.memory_space<vmem>>, vector<1x128xf32>
    tpu.vector_store %arg17[%c29_470, %c0_471], %756 {strides = array<i32>} : memref<32x128xf32, #tpu.memory_space<vmem>>, vector<1x128xf32>,
    %758 = vector.extract_strided_slice %751 {offsets = [3, 0], sizes = [1, 128], strides = [1, 1]} : vector<4x128xf32> to vector<1x128xf32>
    %c31 = arith.constant 31 : index
    %c0_472 = arith.constant 0 : index
    %759 = vector.load %arg17[%c31, %c0_472] : memref<32x128xf32, #tpu.memory_space<vmem>>, vector<1x128xf32>
    tpu.vector_store %arg17[%c31, %c0_472], %758 {strides = array<i32>} : memref<32x128xf32, #tpu.memory_space<vmem>>, vector<1x128xf32>,
    tpu.wait_dma2 semaphore(%arg19 : memref<!tpu.dma_semaphore, #tpu.memory_space<semaphore_mem>>) src(%arg7 : memref<16x128x512xf32, #tpu.memory_space<any>>) dst(%arg18 : memref<16x128x512xf32, #tpu.memory_space<vmem>>)
    %cst_473 = arith.constant 0.000000e+00 : f32
    %760 = vector.broadcast %cst_473 : f32 to vector<2x512xf32>
    %c0_474 = arith.constant 0 : index
    %c0_475 = arith.constant 0 : index
    %761 = vector.load %arg17[%c0_474, %c0_475] : memref<32x128xf32, #tpu.memory_space<vmem>>, vector<2x128xf32>
    %c0_476 = arith.constant 0 : index
    %c0_477 = arith.constant 0 : index
    %c0_478 = arith.constant 0 : index
    %762 = vector.load %arg18[%c0_476, %c0_477, %c0_478] : memref<16x128x512xf32, #tpu.memory_space<vmem>>, vector<1x128x512xf32>
    %763 = vector.shape_cast %762 : vector<1x128x512xf32> to vector<128x512xf32>
    %cst_479 = arith.constant dense<0.000000e+00> : vector<2x512xf32>
    %764 = tpu.matmul %761, %763, %cst_479 {dimension_numbers = #tpu.dot_dimension_numbers<[1], [0], [0], [1], [0, 0, 1, 1], [], []>} : vector<2x128xf32>, vector<128x512xf32>, vector<2x512xf32> -> vector<2x512xf32>
    %765 = arith.addf %760, %764 : vector<2x512xf32>
    %c2_480 = arith.constant 2 : index
    %c0_481 = arith.constant 0 : index
    %766 = vector.load %arg17[%c2_480, %c0_481] : memref<32x128xf32, #tpu.memory_space<vmem>>, vector<2x128xf32>
    %c1_482 = arith.constant 1 : index
    %c0_483 = arith.constant 0 : index
    %c0_484 = arith.constant 0 : index
    %767 = vector.load %arg18[%c1_482, %c0_483, %c0_484] : memref<16x128x512xf32, #tpu.memory_space<vmem>>, vector<1x128x512xf32>
    %768 = vector.shape_cast %767 : vector<1x128x512xf32> to vector<128x512xf32>
    %cst_485 = arith.constant dense<0.000000e+00> : vector<2x512xf32>
    %769 = tpu.matmul %766, %768, %cst_485 {dimension_numbers = #tpu.dot_dimension_numbers<[1], [0], [0], [1], [0, 0, 1, 1], [], []>} : vector<2x128xf32>, vector<128x512xf32>, vector<2x512xf32> -> vector<2x512xf32>
    %770 = arith.addf %765, %769 : vector<2x512xf32>
    %c4_486 = arith.constant 4 : index
    %c0_487 = arith.constant 0 : index
    %771 = vector.load %arg17[%c4_486, %c0_487] : memref<32x128xf32, #tpu.memory_space<vmem>>, vector<2x128xf32>
    %c2_488 = arith.constant 2 : index
    %c0_489 = arith.constant 0 : index
    %c0_490 = arith.constant 0 : index
    %772 = vector.load %arg18[%c2_488, %c0_489, %c0_490] : memref<16x128x512xf32, #tpu.memory_space<vmem>>, vector<1x128x512xf32>
    %773 = vector.shape_cast %772 : vector<1x128x512xf32> to vector<128x512xf32>
    %cst_491 = arith.constant dense<0.000000e+00> : vector<2x512xf32>
    %774 = tpu.matmul %771, %773, %cst_491 {dimension_numbers = #tpu.dot_dimension_numbers<[1], [0], [0], [1], [0, 0, 1, 1], [], []>} : vector<2x128xf32>, vector<128x512xf32>, vector<2x512xf32> -> vector<2x512xf32>
    %775 = arith.addf %770, %774 : vector<2x512xf32>
    %c6_492 = arith.constant 6 : index
    %c0_493 = arith.constant 0 : index
    %776 = vector.load %arg17[%c6_492, %c0_493] : memref<32x128xf32, #tpu.memory_space<vmem>>, vector<2x128xf32>
    %c3_494 = arith.constant 3 : index
    %c0_495 = arith.constant 0 : index
    %c0_496 = arith.constant 0 : index
    %777 = vector.load %arg18[%c3_494, %c0_495, %c0_496] : memref<16x128x512xf32, #tpu.memory_space<vmem>>, vector<1x128x512xf32>
    %778 = vector.shape_cast %777 : vector<1x128x512xf32> to vector<128x512xf32>
    %cst_497 = arith.constant dense<0.000000e+00> : vector<2x512xf32>
    %779 = tpu.matmul %776, %778, %cst_497 {dimension_numbers = #tpu.dot_dimension_numbers<[1], [0], [0], [1], [0, 0, 1, 1], [], []>} : vector<2x128xf32>, vector<128x512xf32>, vector<2x512xf32> -> vector<2x512xf32>
    %780 = arith.addf %775, %779 : vector<2x512xf32>
    %c8_498 = arith.constant 8 : index
    %c0_499 = arith.constant 0 : index
    %781 = vector.load %arg17[%c8_498, %c0_499] : memref<32x128xf32, #tpu.memory_space<vmem>>, vector<2x128xf32>
    %c4_500 = arith.constant 4 : index
    %c0_501 = arith.constant 0 : index
    %c0_502 = arith.constant 0 : index
    %782 = vector.load %arg18[%c4_500, %c0_501, %c0_502] : memref<16x128x512xf32, #tpu.memory_space<vmem>>, vector<1x128x512xf32>
    %783 = vector.shape_cast %782 : vector<1x128x512xf32> to vector<128x512xf32>
    %cst_503 = arith.constant dense<0.000000e+00> : vector<2x512xf32>
    %784 = tpu.matmul %781, %783, %cst_503 {dimension_numbers = #tpu.dot_dimension_numbers<[1], [0], [0], [1], [0, 0, 1, 1], [], []>} : vector<2x128xf32>, vector<128x512xf32>, vector<2x512xf32> -> vector<2x512xf32>
    %785 = arith.addf %780, %784 : vector<2x512xf32>
    %c10_504 = arith.constant 10 : index
    %c0_505 = arith.constant 0 : index
    %786 = vector.load %arg17[%c10_504, %c0_505] : memref<32x128xf32, #tpu.memory_space<vmem>>, vector<2x128xf32>
    %c5_506 = arith.constant 5 : index
    %c0_507 = arith.constant 0 : index
    %c0_508 = arith.constant 0 : index
    %787 = vector.load %arg18[%c5_506, %c0_507, %c0_508] : memref<16x128x512xf32, #tpu.memory_space<vmem>>, vector<1x128x512xf32>
    %788 = vector.shape_cast %787 : vector<1x128x512xf32> to vector<128x512xf32>
    %cst_509 = arith.constant dense<0.000000e+00> : vector<2x512xf32>
    %789 = tpu.matmul %786, %788, %cst_509 {dimension_numbers = #tpu.dot_dimension_numbers<[1], [0], [0], [1], [0, 0, 1, 1], [], []>} : vector<2x128xf32>, vector<128x512xf32>, vector<2x512xf32> -> vector<2x512xf32>
    %790 = arith.addf %785, %789 : vector<2x512xf32>
    %c12_510 = arith.constant 12 : index
    %c0_511 = arith.constant 0 : index
    %791 = vector.load %arg17[%c12_510, %c0_511] : memref<32x128xf32, #tpu.memory_space<vmem>>, vector<2x128xf32>
    %c6_512 = arith.constant 6 : index
    %c0_513 = arith.constant 0 : index
    %c0_514 = arith.constant 0 : index
    %792 = vector.load %arg18[%c6_512, %c0_513, %c0_514] : memref<16x128x512xf32, #tpu.memory_space<vmem>>, vector<1x128x512xf32>
    %793 = vector.shape_cast %792 : vector<1x128x512xf32> to vector<128x512xf32>
    %cst_515 = arith.constant dense<0.000000e+00> : vector<2x512xf32>
    %794 = tpu.matmul %791, %793, %cst_515 {dimension_numbers = #tpu.dot_dimension_numbers<[1], [0], [0], [1], [0, 0, 1, 1], [], []>} : vector<2x128xf32>, vector<128x512xf32>, vector<2x512xf32> -> vector<2x512xf32>
    %795 = arith.addf %790, %794 : vector<2x512xf32>
    %c14_516 = arith.constant 14 : index
    %c0_517 = arith.constant 0 : index
    %796 = vector.load %arg17[%c14_516, %c0_517] : memref<32x128xf32, #tpu.memory_space<vmem>>, vector<2x128xf32>
    %c7_518 = arith.constant 7 : index
    %c0_519 = arith.constant 0 : index
    %c0_520 = arith.constant 0 : index
    %797 = vector.load %arg18[%c7_518, %c0_519, %c0_520] : memref<16x128x512xf32, #tpu.memory_space<vmem>>, vector<1x128x512xf32>
    %798 = vector.shape_cast %797 : vector<1x128x512xf32> to vector<128x512xf32>
    %cst_521 = arith.constant dense<0.000000e+00> : vector<2x512xf32>
    %799 = tpu.matmul %796, %798, %cst_521 {dimension_numbers = #tpu.dot_dimension_numbers<[1], [0], [0], [1], [0, 0, 1, 1], [], []>} : vector<2x128xf32>, vector<128x512xf32>, vector<2x512xf32> -> vector<2x512xf32>
    %800 = arith.addf %795, %799 : vector<2x512xf32>
    %c16_522 = arith.constant 16 : index
    %c0_523 = arith.constant 0 : index
    %801 = vector.load %arg17[%c16_522, %c0_523] : memref<32x128xf32, #tpu.memory_space<vmem>>, vector<2x128xf32>
    %c8_524 = arith.constant 8 : index
    %c0_525 = arith.constant 0 : index
    %c0_526 = arith.constant 0 : index
    %802 = vector.load %arg18[%c8_524, %c0_525, %c0_526] : memref<16x128x512xf32, #tpu.memory_space<vmem>>, vector<1x128x512xf32>
    %803 = vector.shape_cast %802 : vector<1x128x512xf32> to vector<128x512xf32>
    %cst_527 = arith.constant dense<0.000000e+00> : vector<2x512xf32>
    %804 = tpu.matmul %801, %803, %cst_527 {dimension_numbers = #tpu.dot_dimension_numbers<[1], [0], [0], [1], [0, 0, 1, 1], [], []>} : vector<2x128xf32>, vector<128x512xf32>, vector<2x512xf32> -> vector<2x512xf32>
    %805 = arith.addf %800, %804 : vector<2x512xf32>
    %c18_528 = arith.constant 18 : index
    %c0_529 = arith.constant 0 : index
    %806 = vector.load %arg17[%c18_528, %c0_529] : memref<32x128xf32, #tpu.memory_space<vmem>>, vector<2x128xf32>
    %c9_530 = arith.constant 9 : index
    %c0_531 = arith.constant 0 : index
    %c0_532 = arith.constant 0 : index
    %807 = vector.load %arg18[%c9_530, %c0_531, %c0_532] : memref<16x128x512xf32, #tpu.memory_space<vmem>>, vector<1x128x512xf32>
    %808 = vector.shape_cast %807 : vector<1x128x512xf32> to vector<128x512xf32>
    %cst_533 = arith.constant dense<0.000000e+00> : vector<2x512xf32>
    %809 = tpu.matmul %806, %808, %cst_533 {dimension_numbers = #tpu.dot_dimension_numbers<[1], [0], [0], [1], [0, 0, 1, 1], [], []>} : vector<2x128xf32>, vector<128x512xf32>, vector<2x512xf32> -> vector<2x512xf32>
    %810 = arith.addf %805, %809 : vector<2x512xf32>
    %c20_534 = arith.constant 20 : index
    %c0_535 = arith.constant 0 : index
    %811 = vector.load %arg17[%c20_534, %c0_535] : memref<32x128xf32, #tpu.memory_space<vmem>>, vector<2x128xf32>
    %c10_536 = arith.constant 10 : index
    %c0_537 = arith.constant 0 : index
    %c0_538 = arith.constant 0 : index
    %812 = vector.load %arg18[%c10_536, %c0_537, %c0_538] : memref<16x128x512xf32, #tpu.memory_space<vmem>>, vector<1x128x512xf32>
    %813 = vector.shape_cast %812 : vector<1x128x512xf32> to vector<128x512xf32>
    %cst_539 = arith.constant dense<0.000000e+00> : vector<2x512xf32>
    %814 = tpu.matmul %811, %813, %cst_539 {dimension_numbers = #tpu.dot_dimension_numbers<[1], [0], [0], [1], [0, 0, 1, 1], [], []>} : vector<2x128xf32>, vector<128x512xf32>, vector<2x512xf32> -> vector<2x512xf32>
    %815 = arith.addf %810, %814 : vector<2x512xf32>
    %c22_540 = arith.constant 22 : index
    %c0_541 = arith.constant 0 : index
    %816 = vector.load %arg17[%c22_540, %c0_541] : memref<32x128xf32, #tpu.memory_space<vmem>>, vector<2x128xf32>
    %c11_542 = arith.constant 11 : index
    %c0_543 = arith.constant 0 : index
    %c0_544 = arith.constant 0 : index
    %817 = vector.load %arg18[%c11_542, %c0_543, %c0_544] : memref<16x128x512xf32, #tpu.memory_space<vmem>>, vector<1x128x512xf32>
    %818 = vector.shape_cast %817 : vector<1x128x512xf32> to vector<128x512xf32>
    %cst_545 = arith.constant dense<0.000000e+00> : vector<2x512xf32>
    %819 = tpu.matmul %816, %818, %cst_545 {dimension_numbers = #tpu.dot_dimension_numbers<[1], [0], [0], [1], [0, 0, 1, 1], [], []>} : vector<2x128xf32>, vector<128x512xf32>, vector<2x512xf32> -> vector<2x512xf32>
    %820 = arith.addf %815, %819 : vector<2x512xf32>
    %c24_546 = arith.constant 24 : index
    %c0_547 = arith.constant 0 : index
    %821 = vector.load %arg17[%c24_546, %c0_547] : memref<32x128xf32, #tpu.memory_space<vmem>>, vector<2x128xf32>
    %c12_548 = arith.constant 12 : index
    %c0_549 = arith.constant 0 : index
    %c0_550 = arith.constant 0 : index
    %822 = vector.load %arg18[%c12_548, %c0_549, %c0_550] : memref<16x128x512xf32, #tpu.memory_space<vmem>>, vector<1x128x512xf32>
    %823 = vector.shape_cast %822 : vector<1x128x512xf32> to vector<128x512xf32>
    %cst_551 = arith.constant dense<0.000000e+00> : vector<2x512xf32>
    %824 = tpu.matmul %821, %823, %cst_551 {dimension_numbers = #tpu.dot_dimension_numbers<[1], [0], [0], [1], [0, 0, 1, 1], [], []>} : vector<2x128xf32>, vector<128x512xf32>, vector<2x512xf32> -> vector<2x512xf32>
    %825 = arith.addf %820, %824 : vector<2x512xf32>
    %c26_552 = arith.constant 26 : index
    %c0_553 = arith.constant 0 : index
    %826 = vector.load %arg17[%c26_552, %c0_553] : memref<32x128xf32, #tpu.memory_space<vmem>>, vector<2x128xf32>
    %c13_554 = arith.constant 13 : index
    %c0_555 = arith.constant 0 : index
    %c0_556 = arith.constant 0 : index
    %827 = vector.load %arg18[%c13_554, %c0_555, %c0_556] : memref<16x128x512xf32, #tpu.memory_space<vmem>>, vector<1x128x512xf32>
    %828 = vector.shape_cast %827 : vector<1x128x512xf32> to vector<128x512xf32>
    %cst_557 = arith.constant dense<0.000000e+00> : vector<2x512xf32>
    %829 = tpu.matmul %826, %828, %cst_557 {dimension_numbers = #tpu.dot_dimension_numbers<[1], [0], [0], [1], [0, 0, 1, 1], [], []>} : vector<2x128xf32>, vector<128x512xf32>, vector<2x512xf32> -> vector<2x512xf32>
    %830 = arith.addf %825, %829 : vector<2x512xf32>
    %c28_558 = arith.constant 28 : index
    %c0_559 = arith.constant 0 : index
    %831 = vector.load %arg17[%c28_558, %c0_559] : memref<32x128xf32, #tpu.memory_space<vmem>>, vector<2x128xf32>
    %c14_560 = arith.constant 14 : index
    %c0_561 = arith.constant 0 : index
    %c0_562 = arith.constant 0 : index
    %832 = vector.load %arg18[%c14_560, %c0_561, %c0_562] : memref<16x128x512xf32, #tpu.memory_space<vmem>>, vector<1x128x512xf32>
    %833 = vector.shape_cast %832 : vector<1x128x512xf32> to vector<128x512xf32>
    %cst_563 = arith.constant dense<0.000000e+00> : vector<2x512xf32>
    %834 = tpu.matmul %831, %833, %cst_563 {dimension_numbers = #tpu.dot_dimension_numbers<[1], [0], [0], [1], [0, 0, 1, 1], [], []>} : vector<2x128xf32>, vector<128x512xf32>, vector<2x512xf32> -> vector<2x512xf32>
    %835 = arith.addf %830, %834 : vector<2x512xf32>
    %c30_564 = arith.constant 30 : index
    %c0_565 = arith.constant 0 : index
    %836 = vector.load %arg17[%c30_564, %c0_565] : memref<32x128xf32, #tpu.memory_space<vmem>>, vector<2x128xf32>
    %c15_566 = arith.constant 15 : index
    %c0_567 = arith.constant 0 : index
    %c0_568 = arith.constant 0 : index
    %837 = vector.load %arg18[%c15_566, %c0_567, %c0_568] : memref<16x128x512xf32, #tpu.memory_space<vmem>>, vector<1x128x512xf32>
    %838 = vector.shape_cast %837 : vector<1x128x512xf32> to vector<128x512xf32>
    %cst_569 = arith.constant dense<0.000000e+00> : vector<2x512xf32>
    %839 = tpu.matmul %836, %838, %cst_569 {dimension_numbers = #tpu.dot_dimension_numbers<[1], [0], [0], [1], [0, 0, 1, 1], [], []>} : vector<2x128xf32>, vector<128x512xf32>, vector<2x512xf32> -> vector<2x512xf32>
    %840 = arith.addf %835, %839 : vector<2x512xf32>
    %c0_570 = arith.constant 0 : index
    %c0_571 = arith.constant 0 : index
    %841 = vector.load %arg8[%c0_570, %c0_571] : memref<1x512xf32, #tpu.memory_space<vmem>>, vector<1x512xf32>
    %842 = vector.broadcast %841 : vector<1x512xf32> to vector<2x512xf32>
    %843 = arith.addf %840, %842 : vector<2x512xf32>
    %cst_572 = arith.constant 0.00999999977 : f32
    %844 = vector.broadcast %cst_572 : f32 to vector<2x512xf32>
    %845 = arith.mulf %844, %843 : vector<2x512xf32>
    %846 = arith.maximumf %843, %845 : vector<2x512xf32>
    %c0_573 = arith.constant 0 : index
    %c0_574 = arith.constant 0 : index
    %847 = vector.load %arg9[%c0_573, %c0_574] : memref<512x10xf32, #tpu.memory_space<vmem>>, vector<512x10xf32>
    %cst_575 = arith.constant dense<0.000000e+00> : vector<2x10xf32>
    %848 = tpu.matmul %846, %847, %cst_575 {dimension_numbers = #tpu.dot_dimension_numbers<[1], [0], [0], [1], [0, 0, 1, 1], [], []>} : vector<2x512xf32>, vector<512x10xf32>, vector<2x10xf32> -> vector<2x10xf32>
    %c0_576 = arith.constant 0 : index
    %c0_577 = arith.constant 0 : index
    %849 = vector.load %arg10[%c0_576, %c0_577] : memref<1x10xf32, #tpu.memory_space<vmem>>, vector<1x10xf32>
    %850 = vector.broadcast %849 : vector<1x10xf32> to vector<2x10xf32>
    %851 = arith.addf %848, %850 : vector<2x10xf32>
    %c0_578 = arith.constant 0 : index
    %c0_579 = arith.constant 0 : index
    %852 = vector.load %arg11[%c0_578, %c0_579] : memref<2x10xf32, #tpu.memory_space<vmem>>, vector<2x10xf32>
    tpu.vector_store %arg11[%c0_578, %c0_579], %851 {strides = array<i32>} : memref<2x10xf32, #tpu.memory_space<vmem>>, vector<2x10xf32>,
    return
  }
}

</mosaic_0001>

<llo_original>
// kernel: model_forward.1
$region0: #{model_forward.1}
  #allocation0 [shape = 'u32[]', space=smem, size = 0x4, offset = 0x4, fixed_abs, tag = 'smem constant byte address 0x4 - core index']
  #allocation1 [shape = 'u32[72,128]{1,0:T(1,128)}', space=vmem, size = 0x9000, scoped, tag = 'internal scratch']
  #allocation2 [shape = 'f32[1352,32]{1,0:T(8,128)}', space=vmem, size = 0xa9000, scoped, tag = 'scratch operand']
  #allocation3 [shape = 'f32[422,32]{1,0:T(8,128)}', space=vmem, size = 0x35000, scoped, tag = 'scratch operand']
  #allocation4 [shape = 'f32[392,64]{1,0:T(8,128)}', space=vmem, size = 0x31000, scoped, tag = 'scratch operand']
  #allocation5 [shape = 'f32[146,64]{1,0:T(8,128)}', space=vmem, size = 0x13000, scoped, tag = 'scratch operand']
  #allocation6 [shape = 'f32[128,128]{1,0:T(8,128)}', space=vmem, size = 0x10000, scoped, tag = 'scratch operand']
  #allocation7 [shape = 'f32[32,128]{1,0:T(8,128)}', space=vmem, size = 0x4000, scoped, tag = 'scratch operand']
  #allocation8 [shape = 'f32[16,128,512]{2,1,0:T(8,128)}', space=vmem, size = 0x400000, scoped, tag = 'scratch operand']
  #allocation9 [shape = 's32[1]{0}', space=sflag, size = 0x4, scoped, tag = 'scratch operand']
  #allocation25 [shape = 's32[]', space=sflag, size = 0x4, offset = 0, fixed_abs, tag = 'sflag constant byte address 0x0 - dummy sync flag']
  #allocation26 [shape = 's32[]', space=sflag, size = 0x4, offset = 0, fixed_abs, tag = 'sflag constant byte address 0x0 - dummy sync flag']
  #allocation27 [shape = 'u32[]', space=smem, size = 0x4, offset = 0x44, fixed_abs, tag = 'smem constant byte address 0x44 - assertion arg 0']
  #allocation28 [shape = 'u32[]', space=smem, size = 0x4, offset = 0x48, fixed_abs, tag = 'smem constant byte address 0x48 - assertion arg 1']
  %s0 = inlined_call_operand.vmem [shape: f32[1406,3], index: 0, kind: input, shape index: {}]
  %s1 = inlined_call_operand.hbm [shape: f32[9,3,32], index: 1, kind: input, shape index: {}]
  %s2 = inlined_call_operand.hbm [shape: f32[1,32], index: 2, kind: input, shape index: {}]
  %s3 = inlined_call_operand.hbm [shape: f32[9,32,64], index: 3, kind: input, shape index: {}]
  %s4 = inlined_call_operand.hbm [shape: f32[1,64], index: 4, kind: input, shape index: {}]
  %s5 = inlined_call_operand.hbm [shape: f32[9,64,128], index: 5, kind: input, shape index: {}]
  %s6 = inlined_call_operand.hbm [shape: f32[1,128], index: 6, kind: input, shape index: {}]
  %s7 = inlined_call_operand.hbm [shape: f32[16,128,512], index: 7, kind: input, shape index: {}]
  %s8 = inlined_call_operand.hbm [shape: f32[1,512], index: 8, kind: input, shape index: {}]
  %s9 = inlined_call_operand.vmem [shape: f32[512,10], index: 9, kind: input, shape index: {}]
  %s10 = inlined_call_operand.hbm [shape: f32[1,10], index: 10, kind: input, shape index: {}]
  %s11 = inlined_call_operand.hbm [shape: f32[2,10], index: 11, kind: output, shape index: {}]
  %s12 = sld [smem:[#allocation0]]
  $region107: #{model_forward.1} parent=0
    _
  %s14 = ssub.s32 1, %s12
  %s15 = scalar_select 0, %s14, %s12
  $region1: #{model_forward.1} parent=0
    #allocation10 [shape = 'u8[18432]{0}', space=vmem, size = 0x4800, scoped, tag = 'input window, operand 1, single buffered']
    #allocation11 [shape = 's32[1]{0}', space=sflag, size = 0x4, scoped, tag = 'scoped memory for model_forward.1']
    #allocation12 [shape = 's32[1]{0}', space=sflag, size = 0x4, scoped, tag = 'scoped memory for model_forward.1']
    #allocation13 [shape = 'u8[512]{0}', space=vmem, size = 0x400, scoped, tag = 'input window, operand 2, single buffered']
    #allocation14 [shape = 's32[1]{0}', space=sflag, size = 0x4, scoped, tag = 'scoped memory for model_forward.1']
    #allocation15 [shape = 'u8[147456]{0}', space=vmem, size = 0x24000, scoped, tag = 'input window, operand 3, single buffered']
    #allocation16 [shape = 'u8[512]{0}', space=vmem, size = 0x400, scoped, tag = 'input window, operand 4, single buffered']
    #allocation17 [shape = 's32[1]{0}', space=sflag, size = 0x4, scoped, tag = 'scoped memory for model_forward.1']
    #allocation18 [shape = 'u8[294912]{0}', space=vmem, size = 0x48000, scoped, tag = 'input window, operand 5, single buffered']
    #allocation19 [shape = 'u8[512]{0}', space=vmem, size = 0x400, scoped, tag = 'input window, operand 6, single buffered']
    #allocation20 [shape = 's32[1]{0}', space=sflag, size = 0x4, scoped, tag = 'scoped memory for model_forward.1']
    #allocation21 [shape = 'u8[2048]{0}', space=vmem, size = 0x800, scoped, tag = 'input window, operand 8, single buffered']
    #allocation22 [shape = 'u8[512]{0}', space=vmem, size = 0x400, scoped, tag = 'input window, operand 10, single buffered']
    #allocation23 [shape = 's32[1]{0}', space=sflag, size = 0x4, scoped, tag = 'scoped memory for model_forward.1']
    #allocation24 [shape = 'u8[1024]{0}', space=vmem, size = 0x400, scoped, tag = 'output window, operand 0, single buffered']
    %16 = vsyncpa [#allocation11], 0
    %17 = vsyncpa [#allocation14], 0
    %18 = vsyncpa [#allocation17], 0
    %19 = vsyncpa [#allocation20], 0
    %20 = vsyncpa [#allocation23], 0
    %21 = vsyncpa [#allocation12], 0
    // Predicated region
    $region2: #{model_forward.1} parent=1 // pred_check
      _
    $region3: #{model_forward.1} parent=1 // pred_check_branch
      %23 = sbr.rel (0) target = $region5
    $region4: #{model_forward.1} parent=1 // pred_region
      _
    $region5: #{model_forward.1} parent=1 // pred_fallthru
      _
    // Predicated region
    $region6: #{model_forward.1} parent=1 // pred_check
      _
    $region7: #{model_forward.1} parent=1 // pred_check_branch
      %25 = sbr.rel (0) target = $region9
    $region8: #{model_forward.1} parent=1 // pred_region
      %27 = vsyncadd [#allocation11], 0
      %s28 = sshll.u32 %s1, 4
      %s29 = int_to_ptr.hbm [resolvable:$true] %s28
      %s30 = sshll.u32 [#allocation10], 4
      %s31 = int_to_ptr.vmem [resolvable:$true] %s30
      %36 = dma.hbm_to_vmem [thread:$0]  %s29, 576, %s31, [#allocation11], 64, 64, 4
    $region9: #{model_forward.1} parent=1 // pred_fallthru
      _
    // Predicated region
    $region10: #{model_forward.1} parent=1 // pred_check
      _
    $region11: #{model_forward.1} parent=1 // pred_check_branch
      %38 = sbr.rel (0) target = $region13
    $region12: #{model_forward.1} parent=1 // pred_region
      %40 = vsyncadd [#allocation14], 0
      %s42 = sshll.u32 %s2, 4
      %s43 = int_to_ptr.hbm [resolvable:$true] %s42
      %s44 = sshll.u32 [#allocation13], 4
      %s45 = int_to_ptr.vmem [resolvable:$true] %s44
      %47 = dma.hbm_to_vmem [thread:$0]  %s43, 16, %s45, [#allocation14]
    $region13: #{model_forward.1} parent=1 // pred_fallthru
      _
    // Predicated region
    $region14: #{model_forward.1} parent=1 // pred_check
      _
    $region15: #{model_forward.1} parent=1 // pred_check_branch
      %49 = sbr.rel (0) target = $region17
    $region16: #{model_forward.1} parent=1 // pred_region
      %51 = vsyncadd [#allocation14], 0
      %s52 = sshll.u32 %s3, 4
      %s53 = int_to_ptr.hbm [resolvable:$true] %s52
      %s54 = sshll.u32 [#allocation15], 4
      %s55 = int_to_ptr.vmem [resolvable:$true] %s54
      %60 = dma.hbm_to_vmem [thread:$0]  %s53, 4608, %s55, [#allocation14], 128, 128, 8
    $region17: #{model_forward.1} parent=1 // pred_fallthru
      _
    // Predicated region
    $region18: #{model_forward.1} parent=1 // pred_check
      _
    $region19: #{model_forward.1} parent=1 // pred_check_branch
      %62 = sbr.rel (0) target = $region21
    $region20: #{model_forward.1} parent=1 // pred_region
      %64 = vsyncadd [#allocation17], 0
      %s66 = sshll.u32 %s4, 4
      %s67 = int_to_ptr.hbm [resolvable:$true] %s66
      %s68 = sshll.u32 [#allocation16], 4
      %s69 = int_to_ptr.vmem [resolvable:$true] %s68
      %71 = dma.hbm_to_vmem [thread:$0]  %s67, 16, %s69, [#allocation17]
    $region21: #{model_forward.1} parent=1 // pred_fallthru
      _
    // Predicated region
    $region22: #{model_forward.1} parent=1 // pred_check
      _
    $region23: #{model_forward.1} parent=1 // pred_check_branch
      %73 = sbr.rel (0) target = $region25
    $region24: #{model_forward.1} parent=1 // pred_region
      %75 = vsyncadd [#allocation17], 0
      %s76 = sshll.u32 %s5, 4
      %s77 = int_to_ptr.hbm [resolvable:$true] %s76
      %s78 = sshll.u32 [#allocation18], 4
      %s79 = int_to_ptr.vmem [resolvable:$true] %s78
      %84 = dma.hbm_to_vmem [thread:$0]  %s77, 9216, %s79, [#allocation17], 128, 128, 8
    $region25: #{model_forward.1} parent=1 // pred_fallthru
      _
    // Predicated region
    $region26: #{model_forward.1} parent=1 // pred_check
      _
    $region27: #{model_forward.1} parent=1 // pred_check_branch
      %86 = sbr.rel (0) target = $region29
    $region28: #{model_forward.1} parent=1 // pred_region
      %88 = vsyncadd [#allocation20], 0
      %s90 = sshll.u32 %s6, 4
      %s91 = int_to_ptr.hbm [resolvable:$true] %s90
      %s92 = sshll.u32 [#allocation19], 4
      %s93 = int_to_ptr.vmem [resolvable:$true] %s92
      %95 = dma.hbm_to_vmem [thread:$0]  %s91, 16, %s93, [#allocation20]
    $region29: #{model_forward.1} parent=1 // pred_fallthru
      _
    // Predicated region
    $region30: #{model_forward.1} parent=1 // pred_check
      _
    $region31: #{model_forward.1} parent=1 // pred_check_branch
      %97 = sbr.rel (0) target = $region33
    $region32: #{model_forward.1} parent=1 // pred_region
      %99 = vsyncadd [#allocation20], 0
      %s101 = sshll.u32 %s8, 4
      %s102 = int_to_ptr.hbm [resolvable:$true] %s101
      %s103 = sshll.u32 [#allocation21], 4
      %s104 = int_to_ptr.vmem [resolvable:$true] %s103
      %106 = dma.hbm_to_vmem [thread:$0]  %s102, 64, %s104, [#allocation20]
    $region33: #{model_forward.1} parent=1 // pred_fallthru
      _
    // Predicated region
    $region34: #{model_forward.1} parent=1 // pred_check
      _
    $region35: #{model_forward.1} parent=1 // pred_check_branch
      %108 = sbr.rel (0) target = $region37
    $region36: #{model_forward.1} parent=1 // pred_region
      _
    $region37: #{model_forward.1} parent=1 // pred_fallthru
      _
    // Predicated region
    $region38: #{model_forward.1} parent=1 // pred_check
      _
    $region39: #{model_forward.1} parent=1 // pred_check_branch
      %110 = sbr.rel (0) target = $region41
    $region40: #{model_forward.1} parent=1 // pred_region
      %112 = vsyncadd [#allocation23], 0
      %s114 = sshll.u32 %s10, 4
      %s115 = int_to_ptr.hbm [resolvable:$true] %s114
      %s116 = sshll.u32 [#allocation22], 4
      %s117 = int_to_ptr.vmem [resolvable:$true] %s116
      %119 = dma.hbm_to_vmem [thread:$0]  %s115, 16, %s117, [#allocation23]
    $region41: #{model_forward.1} parent=1 // pred_fallthru
      _
    // Predicated region
    $region42: #{model_forward.1} parent=1 // pred_check
      _
    $region43: #{model_forward.1} parent=1 // pred_check_branch
      %121 = sbr.rel (0) target = $region45
    $region44: #{model_forward.1} parent=1 // pred_region
      %123 = dma.done [#allocation11], 576
    $region45: #{model_forward.1} parent=1 // pred_fallthru
      _
    // Predicated region
    $region46: #{model_forward.1} parent=1 // pred_check
      _
    $region47: #{model_forward.1} parent=1 // pred_check_branch
      %125 = sbr.rel (0) target = $region49
    $region48: #{model_forward.1} parent=1 // pred_region
      %127 = dma.done [#allocation14], 16
    $region49: #{model_forward.1} parent=1 // pred_fallthru
      _
    // Predicated region
    $region50: #{model_forward.1} parent=1 // pred_check
      _
    $region51: #{model_forward.1} parent=1 // pred_check_branch
      %129 = sbr.rel (0) target = $region53
    $region52: #{model_forward.1} parent=1 // pred_region
      %131 = dma.done [#allocation14], 4608
    $region53: #{model_forward.1} parent=1 // pred_fallthru
      _
    // Predicated region
    $region54: #{model_forward.1} parent=1 // pred_check
      _
    $region55: #{model_forward.1} parent=1 // pred_check_branch
      %133 = sbr.rel (0) target = $region57
    $region56: #{model_forward.1} parent=1 // pred_region
      %135 = dma.done [#allocation17], 16
    $region57: #{model_forward.1} parent=1 // pred_fallthru
      _
    // Predicated region
    $region58: #{model_forward.1} parent=1 // pred_check
      _
    $region59: #{model_forward.1} parent=1 // pred_check_branch
      %137 = sbr.rel (0) target = $region61
    $region60: #{model_forward.1} parent=1 // pred_region
      %139 = dma.done [#allocation17], 9216
    $region61: #{model_forward.1} parent=1 // pred_fallthru
      _
    // Predicated region
    $region62: #{model_forward.1} parent=1 // pred_check
      _
    $region63: #{model_forward.1} parent=1 // pred_check_branch
      %141 = sbr.rel (0) target = $region65
    $region64: #{model_forward.1} parent=1 // pred_region
      %143 = dma.done [#allocation20], 16
    $region65: #{model_forward.1} parent=1 // pred_fallthru
      _
    // Predicated region
    $region66: #{model_forward.1} parent=1 // pred_check
      _
    $region67: #{model_forward.1} parent=1 // pred_check_branch
      %145 = sbr.rel (0) target = $region69
    $region68: #{model_forward.1} parent=1 // pred_region
      %147 = dma.done [#allocation20], 64
    $region69: #{model_forward.1} parent=1 // pred_fallthru
      _
    // Predicated region
    $region70: #{model_forward.1} parent=1 // pred_check
      _
    $region71: #{model_forward.1} parent=1 // pred_check_branch
      %149 = sbr.rel (0) target = $region73
    $region72: #{model_forward.1} parent=1 // pred_region
      %151 = dma.done [#allocation23], 16
    $region73: #{model_forward.1} parent=1 // pred_fallthru
      _
    // Predicated region
    $region74: #{model_forward.1} parent=1 // pred_check
      _
    $region75: #{model_forward.1} parent=1 // pred_check_branch
      %153 = sbr.rel target = $region77
    $region76: #{model_forward.1} parent=1 // pred_region
      %154 = sst [smem:[#allocation27]] [#allocation26]
      %155 = sst [smem:[#allocation28]] [#allocation25]
    $region77: #{model_forward.1} parent=1 // pred_fallthru
      _
    %157 = shalt.err (0)
    %s159 = sshll.u32 %s7, 4
    %s160 = int_to_ptr.hbm [resolvable:$true] %s159
    %s161 = sshll.u32 [#allocation8], 4
    %s162 = int_to_ptr.vmem [resolvable:$true] %s161
    %164 = dma.hbm_to_vmem [thread:$0]  %s160, 131072, %s162, [#allocation9]
    loop: start=0, step=1, limit=13
    $region78: #{model_forward.1} parent=1 // loop_pre_header
      _
    $region79: #{model_forward.1} parent=1 // loop_header
      %s166 = sphi 0, %s170
      %p167 = scmp.ge.s32.totalorder %s166, 13
    $region80: #{model_forward.1} parent=1 // loop_header_branch
      %169 = sbr.rel (%p167) target = $region84
    $region81: #{model_forward.1} parent=1 // loop_body
      %s171 = smul.u32 %s166, 104
      %s172 = scalar_lea.vmem %s0, %s171
      %v173 = vld [vmem:[%s172] sm:$0xff]
      %v174 = vld [vmem:[%s172 + $0x8] sm:$0xff]
      %v175 = vld [vmem:[%s172 + $0x10] sm:$0xff]
      %v176 = vld [vmem:[%s172 + $0x18] sm:$0xff]
      %v177 = vld [vmem:[%s172 + $0x20] sm:$0xff]
      %v178 = vld [vmem:[%s172 + $0x28] sm:$0xff]
      %v179 = vld [vmem:[%s172 + $0x30] sm:$0xff]
      %v180 = vld [vmem:[%s172 + $0x38] sm:$0xff]
      %v181 = vld [vmem:[%s172 + $0x40] sm:$0xff]
      %v182 = vld [vmem:[%s172 + $0x48] sm:$0xff]
      %v183 = vld [vmem:[%s172 + $0x50] sm:$0xff]
      %v184 = vld [vmem:[%s172 + $0x58] sm:$0xff]
      %v185 = vld [vmem:[%s172 + $0x60] sm:$0xff]
      %v186 = vld [vmem:[#allocation10] sm:$0x7]
      %s187 = sadd.s32 %s171, 1
      %s188 = scalar_lea.vmem %s0, %s187
      %v189 = vld [vmem:[%s188] sm:$0xff]
      %v190 = vld [vmem:[%s188 + $0x8] sm:$0xff]
      %v191 = vld [vmem:[%s188 + $0x10] sm:$0xff]
      %v192 = vld [vmem:[%s188 + $0x18] sm:$0xff]
      %v193 = vld [vmem:[%s188 + $0x20] sm:$0xff]
      %v194 = vld [vmem:[%s188 + $0x28] sm:$0xff]
      %v195 = vld [vmem:[%s188 + $0x30] sm:$0xff]
      %v196 = vld [vmem:[%s188 + $0x38] sm:$0xff]
      %v197 = vld [vmem:[%s188 + $0x40] sm:$0xff]
      %v198 = vld [vmem:[%s188 + $0x48] sm:$0xff]
      %v199 = vld [vmem:[%s188 + $0x50] sm:$0xff]
      %v200 = vld [vmem:[%s188 + $0x58] sm:$0xff]
      %v201 = vld [vmem:[%s188 + $0x60] sm:$0xff]
      %s202 = scalar_lea.vmem [#allocation10], 4
      %v203 = vld [vmem:[%s202] sm:$0x7]
      %vm204 = vcmask 23552
      %v206 = vsel %vm204, %v189, 0
      %v209 = vsel %vm204, %v190, 0
      %v212 = vsel %vm204, %v191, 0
      %v215 = vsel %vm204, %v192, 0
      %v218 = vsel %vm204, %v193, 0
      %v221 = vsel %vm204, %v194, 0
      %v224 = vsel %vm204, %v195, 0
      %v227 = vsel %vm204, %v196, 0
      %v230 = vsel %vm204, %v197, 0
      %v233 = vsel %vm204, %v198, 0
      %v236 = vsel %vm204, %v199, 0
      %v239 = vsel %vm204, %v200, 0
      %v242 = vsel %vm204, %v201, 0
      %vm244 = vcmask 1042432
      %v246 = vsel %vm244, %v203, 0
      %248 = vmatpush.msra.mxu0 0.0
      %249 = vmatpush.msra.mxu0 0.0
      %250 = vmatpush.msra.mxu0 0.0
      %251 = vmatpush.msra.mxu0 0.0
      %252 = vmatpush.msra.mxu0 0.0
      %253 = vmatpush.msra.mxu0 0.0
      %254 = vmatpush.msra.mxu0 0.0
      %255 = vmatpush.msra.mxu0 0.0
      %256 = vmatpush.msra.mxu0 0.0
      %257 = vmatpush.msra.mxu0 0.0
      %258 = vmatpush.msra.mxu0 0.0
      %259 = vmatpush.msra.mxu0 0.0
      %260 = vmatpush.msra.mxu0 0.0
      %261 = vmatpush.msra.mxu0 0.0
      %262 = vmatpush.msra.mxu0 0.0
      %263 = vmatpush.msra.mxu0 %v246
      %264 = vmatmul.f32.gmra.mxu0 %v206
      %v265 = vpop.f32.mrf.mxu0
      %v266 = vadd.f32 0.0, %v265
      %267 = vmatmul.f32.gmra.mxu0 %v209
      %v268 = vpop.f32.mrf.mxu0
      %v269 = vadd.f32 0.0, %v268
      %270 = vmatmul.f32.gmra.mxu0 %v212
      %v271 = vpop.f32.mrf.mxu0
      %v272 = vadd.f32 0.0, %v271
      %273 = vmatmul.f32.gmra.mxu0 %v215
      %v274 = vpop.f32.mrf.mxu0
      %v275 = vadd.f32 0.0, %v274
      %276 = vmatmul.f32.gmra.mxu0 %v218
      %v277 = vpop.f32.mrf.mxu0
      %v278 = vadd.f32 0.0, %v277
      %279 = vmatmul.f32.gmra.mxu0 %v221
      %v280 = vpop.f32.mrf.mxu0
      %v281 = vadd.f32 0.0, %v280
      %282 = vmatmul.f32.gmra.mxu0 %v224
      %v283 = vpop.f32.mrf.mxu0
      %v284 = vadd.f32 0.0, %v283
      %285 = vmatmul.f32.gmra.mxu0 %v227
      %v286 = vpop.f32.mrf.mxu0
      %v287 = vadd.f32 0.0, %v286
      %288 = vmatmul.f32.gmra.mxu0 %v230
      %v289 = vpop.f32.mrf.mxu0
      %v290 = vadd.f32 0.0, %v289
      %291 = vmatmul.f32.gmra.mxu0 %v233
      %v292 = vpop.f32.mrf.mxu0
      %v293 = vadd.f32 0.0, %v292
      %294 = vmatmul.f32.gmra.mxu0 %v236
      %v295 = vpop.f32.mrf.mxu0
      %v296 = vadd.f32 0.0, %v295
      %297 = vmatmul.f32.gmra.mxu0 %v239
      %v298 = vpop.f32.mrf.mxu0
      %v299 = vadd.f32 0.0, %v298
      %300 = vmatmul.f32.gmra.mxu0 %v242
      %v301 = vpop.f32.mrf.mxu0
      %v302 = vadd.f32 0.0, %v301
      %303 = vdwg.mxu0
      %v305 = vsel %vm204, %v173, 0
      %v308 = vsel %vm204, %v174, 0
      %v311 = vsel %vm204, %v175, 0
      %v314 = vsel %vm204, %v176, 0
      %v317 = vsel %vm204, %v177, 0
      %v320 = vsel %vm204, %v178, 0
      %v323 = vsel %vm204, %v179, 0
      %v326 = vsel %vm204, %v180, 0
      %v329 = vsel %vm204, %v181, 0
      %v332 = vsel %vm204, %v182, 0
      %v335 = vsel %vm204, %v183, 0
      %v338 = vsel %vm204, %v184, 0
      %v341 = vsel %vm204, %v185, 0
      %v344 = vsel %vm244, %v186, 0
      %346 = vmatpush.msra.mxu0 0.0
      %347 = vmatpush.msra.mxu0 0.0
      %348 = vmatpush.msra.mxu0 0.0
      %349 = vmatpush.msra.mxu0 0.0
      %350 = vmatpush.msra.mxu0 0.0
      %351 = vmatpush.msra.mxu0 0.0
      %352 = vmatpush.msra.mxu0 0.0
      %353 = vmatpush.msra.mxu0 0.0
      %354 = vmatpush.msra.mxu0 0.0
      %355 = vmatpush.msra.mxu0 0.0
      %356 = vmatpush.msra.mxu0 0.0
      %357 = vmatpush.msra.mxu0 0.0
      %358 = vmatpush.msra.mxu0 0.0
      %359 = vmatpush.msra.mxu0 0.0
      %360 = vmatpush.msra.mxu0 0.0
      %361 = vmatpush.msra.mxu0 %v344
      %362 = vmatmul.f32.gmra.mxu0 %v305
      %v363 = vpop.f32.mrf.mxu0
      %v364 = vadd.f32 %v266, %v363
      %365 = vmatmul.f32.gmra.mxu0 %v308
      %v366 = vpop.f32.mrf.mxu0
      %v367 = vadd.f32 %v269, %v366
      %368 = vmatmul.f32.gmra.mxu0 %v311
      %v369 = vpop.f32.mrf.mxu0
      %v370 = vadd.f32 %v272, %v369
      %371 = vmatmul.f32.gmra.mxu0 %v314
      %v372 = vpop.f32.mrf.mxu0
      %v373 = vadd.f32 %v275, %v372
      %374 = vmatmul.f32.gmra.mxu0 %v317
      %v375 = vpop.f32.mrf.mxu0
      %v376 = vadd.f32 %v278, %v375
      %377 = vmatmul.f32.gmra.mxu0 %v320
      %v378 = vpop.f32.mrf.mxu0
      %v379 = vadd.f32 %v281, %v378
      %380 = vmatmul.f32.gmra.mxu0 %v323
      %v381 = vpop.f32.mrf.mxu0
      %v382 = vadd.f32 %v284, %v381
      %383 = vmatmul.f32.gmra.mxu0 %v326
      %v384 = vpop.f32.mrf.mxu0
      %v385 = vadd.f32 %v287, %v384
      %386 = vmatmul.f32.gmra.mxu0 %v329
      %v387 = vpop.f32.mrf.mxu0
      %v388 = vadd.f32 %v290, %v387
      %389 = vmatmul.f32.gmra.mxu0 %v332
      %v390 = vpop.f32.mrf.mxu0
      %v391 = vadd.f32 %v293, %v390
      %392 = vmatmul.f32.gmra.mxu0 %v335
      %v393 = vpop.f32.mrf.mxu0
      %v394 = vadd.f32 %v296, %v393
      %395 = vmatmul.f32.gmra.mxu0 %v338
      %v396 = vpop.f32.mrf.mxu0
      %v397 = vadd.f32 %v299, %v396
      %398 = vmatmul.f32.gmra.mxu0 %v341
      %v399 = vpop.f32.mrf.mxu0
      %v400 = vadd.f32 %v302, %v399
      %401 = vdwg.mxu0
      %s402 = sadd.s32 %s171, 2
      %s403 = scalar_lea.vmem %s0, %s402
      %v404 = vld [vmem:[%s403] sm:$0xff]
      %v405 = vld [vmem:[%s403 + $0x8] sm:$0xff]
      %v406 = vld [vmem:[%s403 + $0x10] sm:$0xff]
      %v407 = vld [vmem:[%s403 + $0x18] sm:$0xff]
      %v408 = vld [vmem:[%s403 + $0x20] sm:$0xff]
      %v409 = vld [vmem:[%s403 + $0x28] sm:$0xff]
      %v410 = vld [vmem:[%s403 + $0x30] sm:$0xff]
      %v411 = vld [vmem:[%s403 + $0x38] sm:$0xff]
      %v412 = vld [vmem:[%s403 + $0x40] sm:$0xff]
      %v413 = vld [vmem:[%s403 + $0x48] sm:$0xff]
      %v414 = vld [vmem:[%s403 + $0x50] sm:$0xff]
      %v415 = vld [vmem:[%s403 + $0x58] sm:$0xff]
      %v416 = vld [vmem:[%s403 + $0x60] sm:$0xff]
      %s417 = scalar_lea.vmem [#allocation10], 8
      %v418 = vld [vmem:[%s417] sm:$0x7]
      %v420 = vsel %vm204, %v404, 0
      %v423 = vsel %vm204, %v405, 0
      %v426 = vsel %vm204, %v406, 0
      %v429 = vsel %vm204, %v407, 0
      %v432 = vsel %vm204, %v408, 0
      %v435 = vsel %vm204, %v409, 0
      %v438 = vsel %vm204, %v410, 0
      %v441 = vsel %vm204, %v411, 0
      %v444 = vsel %vm204, %v412, 0
      %v447 = vsel %vm204, %v413, 0
      %v450 = vsel %vm204, %v414, 0
      %v453 = vsel %vm204, %v415, 0
      %v456 = vsel %vm204, %v416, 0
      %v459 = vsel %vm244, %v418, 0
      %461 = vmatpush.msra.mxu0 0.0
      %462 = vmatpush.msra.mxu0 0.0
      %463 = vmatpush.msra.mxu0 0.0
      %464 = vmatpush.msra.mxu0 0.0
      %465 = vmatpush.msra.mxu0 0.0
      %466 = vmatpush.msra.mxu0 0.0
      %467 = vmatpush.msra.mxu0 0.0
      %468 = vmatpush.msra.mxu0 0.0
      %469 = vmatpush.msra.mxu0 0.0
      %470 = vmatpush.msra.mxu0 0.0
      %471 = vmatpush.msra.mxu0 0.0
      %472 = vmatpush.msra.mxu0 0.0
      %473 = vmatpush.msra.mxu0 0.0
      %474 = vmatpush.msra.mxu0 0.0
      %475 = vmatpush.msra.mxu0 0.0
      %476 = vmatpush.msra.mxu0 %v459
      %477 = vmatmul.f32.gmra.mxu0 %v420
      %v478 = vpop.f32.mrf.mxu0
      %v479 = vadd.f32 0.0, %v478
      %480 = vmatmul.f32.gmra.mxu0 %v423
      %v481 = vpop.f32.mrf.mxu0
      %v482 = vadd.f32 0.0, %v481
      %483 = vmatmul.f32.gmra.mxu0 %v426
      %v484 = vpop.f32.mrf.mxu0
      %v485 = vadd.f32 0.0, %v484
      %486 = vmatmul.f32.gmra.mxu0 %v429
      %v487 = vpop.f32.mrf.mxu0
      %v488 = vadd.f32 0.0, %v487
      %489 = vmatmul.f32.gmra.mxu0 %v432
      %v490 = vpop.f32.mrf.mxu0
      %v491 = vadd.f32 0.0, %v490
      %492 = vmatmul.f32.gmra.mxu0 %v435
      %v493 = vpop.f32.mrf.mxu0
      %v494 = vadd.f32 0.0, %v493
      %495 = vmatmul.f32.gmra.mxu0 %v438
      %v496 = vpop.f32.mrf.mxu0
      %v497 = vadd.f32 0.0, %v496
      %498 = vmatmul.f32.gmra.mxu0 %v441
      %v499 = vpop.f32.mrf.mxu0
      %v500 = vadd.f32 0.0, %v499
      %501 = vmatmul.f32.gmra.mxu0 %v444
      %v502 = vpop.f32.mrf.mxu0
      %v503 = vadd.f32 0.0, %v502
      %504 = vmatmul.f32.gmra.mxu0 %v447
      %v505 = vpop.f32.mrf.mxu0
      %v506 = vadd.f32 0.0, %v505
      %507 = vmatmul.f32.gmra.mxu0 %v450
      %v508 = vpop.f32.mrf.mxu0
      %v509 = vadd.f32 0.0, %v508
      %510 = vmatmul.f32.gmra.mxu0 %v453
      %v511 = vpop.f32.mrf.mxu0
      %v512 = vadd.f32 0.0, %v511
      %513 = vmatmul.f32.gmra.mxu0 %v456
      %v514 = vpop.f32.mrf.mxu0
      %v515 = vadd.f32 0.0, %v514
      %516 = vdwg.mxu0
      %v517 = vadd.f32 %v364, %v479
      %v518 = vadd.f32 %v367, %v482
      %v519 = vadd.f32 %v370, %v485
      %v520 = vadd.f32 %v373, %v488
      %v521 = vadd.f32 %v376, %v491
      %v522 = vadd.f32 %v379, %v494
      %v523 = vadd.f32 %v382, %v497
      %v524 = vadd.f32 %v385, %v500
      %v525 = vadd.f32 %v388, %v503
      %v526 = vadd.f32 %v391, %v506
      %v527 = vadd.f32 %v394, %v509
      %v528 = vadd.f32 %v397, %v512
      %v529 = vadd.f32 %v400, %v515
      %s530 = sadd.s32 %s171, 26
      %s531 = scalar_lea.vmem %s0, %s530
      %v532 = vld [vmem:[%s531] sm:$0xff]
      %v533 = vld [vmem:[%s531 + $0x8] sm:$0xff]
      %v534 = vld [vmem:[%s531 + $0x10] sm:$0xff]
      %v535 = vld [vmem:[%s531 + $0x18] sm:$0xff]
      %v536 = vld [vmem:[%s531 + $0x20] sm:$0xff]
      %v537 = vld [vmem:[%s531 + $0x28] sm:$0xff]
      %v538 = vld [vmem:[%s531 + $0x30] sm:$0xff]
      %v539 = vld [vmem:[%s531 + $0x38] sm:$0xff]
      %v540 = vld [vmem:[%s531 + $0x40] sm:$0xff]
      %v541 = vld [vmem:[%s531 + $0x48] sm:$0xff]
      %v542 = vld [vmem:[%s531 + $0x50] sm:$0xff]
      %v543 = vld [vmem:[%s531 + $0x58] sm:$0xff]
      %v544 = vld [vmem:[%s531 + $0x60] sm:$0xff]
      %s545 = scalar_lea.vmem [#allocation10], 12
      %v546 = vld [vmem:[%s545] sm:$0x7]
      %v548 = vsel %vm204, %v532, 0
      %v551 = vsel %vm204, %v533, 0
      %v554 = vsel %vm204, %v534, 0
      %v557 = vsel %vm204, %v535, 0
      %v560 = vsel %vm204, %v536, 0
      %v563 = vsel %vm204, %v537, 0
      %v566 = vsel %vm204, %v538, 0
      %v569 = vsel %vm204, %v539, 0
      %v572 = vsel %vm204, %v540, 0
      %v575 = vsel %vm204, %v541, 0
      %v578 = vsel %vm204, %v542, 0
      %v581 = vsel %vm204, %v543, 0
      %v584 = vsel %vm204, %v544, 0
      %v587 = vsel %vm244, %v546, 0
      %589 = vmatpush.msra.mxu0 0.0
      %590 = vmatpush.msra.mxu0 0.0
      %591 = vmatpush.msra.mxu0 0.0
      %592 = vmatpush.msra.mxu0 0.0
      %593 = vmatpush.msra.mxu0 0.0
      %594 = vmatpush.msra.mxu0 0.0
      %595 = vmatpush.msra.mxu0 0.0
      %596 = vmatpush.msra.mxu0 0.0
      %597 = vmatpush.msra.mxu0 0.0
      %598 = vmatpush.msra.mxu0 0.0
      %599 = vmatpush.msra.mxu0 0.0
      %600 = vmatpush.msra.mxu0 0.0
      %601 = vmatpush.msra.mxu0 0.0
      %602 = vmatpush.msra.mxu0 0.0
      %603 = vmatpush.msra.mxu0 0.0
      %604 = vmatpush.msra.mxu0 %v587
      %605 = vmatmul.f32.gmra.mxu0 %v548
      %v606 = vpop.f32.mrf.mxu0
      %v607 = vadd.f32 0.0, %v606
      %608 = vmatmul.f32.gmra.mxu0 %v551
      %v609 = vpop.f32.mrf.mxu0
      %v610 = vadd.f32 0.0, %v609
      %611 = vmatmul.f32.gmra.mxu0 %v554
      %v612 = vpop.f32.mrf.mxu0
      %v613 = vadd.f32 0.0, %v612
      %614 = vmatmul.f32.gmra.mxu0 %v557
      %v615 = vpop.f32.mrf.mxu0
      %v616 = vadd.f32 0.0, %v615
      %617 = vmatmul.f32.gmra.mxu0 %v560
      %v618 = vpop.f32.mrf.mxu0
      %v619 = vadd.f32 0.0, %v618
      %620 = vmatmul.f32.gmra.mxu0 %v563
      %v621 = vpop.f32.mrf.mxu0
      %v622 = vadd.f32 0.0, %v621
      %623 = vmatmul.f32.gmra.mxu0 %v566
      %v624 = vpop.f32.mrf.mxu0
      %v625 = vadd.f32 0.0, %v624
      %626 = vmatmul.f32.gmra.mxu0 %v569
      %v627 = vpop.f32.mrf.mxu0
      %v628 = vadd.f32 0.0, %v627
      %629 = vmatmul.f32.gmra.mxu0 %v572
      %v630 = vpop.f32.mrf.mxu0
      %v631 = vadd.f32 0.0, %v630
      %632 = vmatmul.f32.gmra.mxu0 %v575
      %v633 = vpop.f32.mrf.mxu0
      %v634 = vadd.f32 0.0, %v633
      %635 = vmatmul.f32.gmra.mxu0 %v578
      %v636 = vpop.f32.mrf.mxu0
      %v637 = vadd.f32 0.0, %v636
      %638 = vmatmul.f32.gmra.mxu0 %v581
      %v639 = vpop.f32.mrf.mxu0
      %v640 = vadd.f32 0.0, %v639
      %641 = vmatmul.f32.gmra.mxu0 %v584
      %v642 = vpop.f32.mrf.mxu0
      %v643 = vadd.f32 0.0, %v642
      %644 = vdwg.mxu0
      %v645 = vadd.f32 %v517, %v607
      %v646 = vadd.f32 %v518, %v610
      %v647 = vadd.f32 %v519, %v613
      %v648 = vadd.f32 %v520, %v616
      %v649 = vadd.f32 %v521, %v619
      %v650 = vadd.f32 %v522, %v622
      %v651 = vadd.f32 %v523, %v625
      %v652 = vadd.f32 %v524, %v628
      %v653 = vadd.f32 %v525, %v631
      %v654 = vadd.f32 %v526, %v634
      %v655 = vadd.f32 %v527, %v637
      %v656 = vadd.f32 %v528, %v640
      %v657 = vadd.f32 %v529, %v643
      %s658 = sadd.s32 %s171, 27
      %s659 = scalar_lea.vmem %s0, %s658
      %v660 = vld [vmem:[%s659] sm:$0xff]
      %v661 = vld [vmem:[%s659 + $0x8] sm:$0xff]
      %v662 = vld [vmem:[%s659 + $0x10] sm:$0xff]
      %v663 = vld [vmem:[%s659 + $0x18] sm:$0xff]
      %v664 = vld [vmem:[%s659 + $0x20] sm:$0xff]
      %v665 = vld [vmem:[%s659 + $0x28] sm:$0xff]
      %v666 = vld [vmem:[%s659 + $0x30] sm:$0xff]
      %v667 = vld [vmem:[%s659 + $0x38] sm:$0xff]
      %v668 = vld [vmem:[%s659 + $0x40] sm:$0xff]
      %v669 = vld [vmem:[%s659 + $0x48] sm:$0xff]
      %v670 = vld [vmem:[%s659 + $0x50] sm:$0xff]
      %v671 = vld [vmem:[%s659 + $0x58] sm:$0xff]
      %v672 = vld [vmem:[%s659 + $0x60] sm:$0xff]
      %s673 = scalar_lea.vmem [#allocation10], 16
      %v674 = vld [vmem:[%s673] sm:$0x7]
      %v676 = vsel %vm204, %v660, 0
      %v679 = vsel %vm204, %v661, 0
      %v682 = vsel %vm204, %v662, 0
      %v685 = vsel %vm204, %v663, 0
      %v688 = vsel %vm204, %v664, 0
      %v691 = vsel %vm204, %v665, 0
      %v694 = vsel %vm204, %v666, 0
      %v697 = vsel %vm204, %v667, 0
      %v700 = vsel %vm204, %v668, 0
      %v703 = vsel %vm204, %v669, 0
      %v706 = vsel %vm204, %v670, 0
      %v709 = vsel %vm204, %v671, 0
      %v712 = vsel %vm204, %v672, 0
      %v715 = vsel %vm244, %v674, 0
      %717 = vmatpush.msra.mxu0 0.0
      %718 = vmatpush.msra.mxu0 0.0
      %719 = vmatpush.msra.mxu0 0.0
      %720 = vmatpush.msra.mxu0 0.0
      %721 = vmatpush.msra.mxu0 0.0
      %722 = vmatpush.msra.mxu0 0.0
      %723 = vmatpush.msra.mxu0 0.0
      %724 = vmatpush.msra.mxu0 0.0
      %725 = vmatpush.msra.mxu0 0.0
      %726 = vmatpush.msra.mxu0 0.0
      %727 = vmatpush.msra.mxu0 0.0
      %728 = vmatpush.msra.mxu0 0.0
      %729 = vmatpush.msra.mxu0 0.0
      %730 = vmatpush.msra.mxu0 0.0
      %731 = vmatpush.msra.mxu0 0.0
      %732 = vmatpush.msra.mxu0 %v715
      %733 = vmatmul.f32.gmra.mxu0 %v676
      %v734 = vpop.f32.mrf.mxu0
      %v735 = vadd.f32 0.0, %v734
      %736 = vmatmul.f32.gmra.mxu0 %v679
      %v737 = vpop.f32.mrf.mxu0
      %v738 = vadd.f32 0.0, %v737
      %739 = vmatmul.f32.gmra.mxu0 %v682
      %v740 = vpop.f32.mrf.mxu0
      %v741 = vadd.f32 0.0, %v740
      %742 = vmatmul.f32.gmra.mxu0 %v685
      %v743 = vpop.f32.mrf.mxu0
      %v744 = vadd.f32 0.0, %v743
      %745 = vmatmul.f32.gmra.mxu0 %v688
      %v746 = vpop.f32.mrf.mxu0
      %v747 = vadd.f32 0.0, %v746
      %748 = vmatmul.f32.gmra.mxu0 %v691
      %v749 = vpop.f32.mrf.mxu0
      %v750 = vadd.f32 0.0, %v749
      %751 = vmatmul.f32.gmra.mxu0 %v694
      %v752 = vpop.f32.mrf.mxu0
      %v753 = vadd.f32 0.0, %v752
      %754 = vmatmul.f32.gmra.mxu0 %v697
      %v755 = vpop.f32.mrf.mxu0
      %v756 = vadd.f32 0.0, %v755
      %757 = vmatmul.f32.gmra.mxu0 %v700
      %v758 = vpop.f32.mrf.mxu0
      %v759 = vadd.f32 0.0, %v758
      %760 = vmatmul.f32.gmra.mxu0 %v703
      %v761 = vpop.f32.mrf.mxu0
      %v762 = vadd.f32 0.0, %v761
      %763 = vmatmul.f32.gmra.mxu0 %v706
      %v764 = vpop.f32.mrf.mxu0
      %v765 = vadd.f32 0.0, %v764
      %766 = vmatmul.f32.gmra.mxu0 %v709
      %v767 = vpop.f32.mrf.mxu0
      %v768 = vadd.f32 0.0, %v767
      %769 = vmatmul.f32.gmra.mxu0 %v712
      %v770 = vpop.f32.mrf.mxu0
      %v771 = vadd.f32 0.0, %v770
      %772 = vdwg.mxu0
      %v773 = vadd.f32 %v645, %v735
      %v774 = vadd.f32 %v646, %v738
      %v775 = vadd.f32 %v647, %v741
      %v776 = vadd.f32 %v648, %v744
      %v777 = vadd.f32 %v649, %v747
      %v778 = vadd.f32 %v650, %v750
      %v779 = vadd.f32 %v651, %v753
      %v780 = vadd.f32 %v652, %v756
      %v781 = vadd.f32 %v653, %v759
      %v782 = vadd.f32 %v654, %v762
      %v783 = vadd.f32 %v655, %v765
      %v784 = vadd.f32 %v656, %v768
      %v785 = vadd.f32 %v657, %v771
      %s786 = sadd.s32 %s171, 28
      %s787 = scalar_lea.vmem %s0, %s786
      %v788 = vld [vmem:[%s787] sm:$0xff]
      %v789 = vld [vmem:[%s787 + $0x8] sm:$0xff]
      %v790 = vld [vmem:[%s787 + $0x10] sm:$0xff]
      %v791 = vld [vmem:[%s787 + $0x18] sm:$0xff]
      %v792 = vld [vmem:[%s787 + $0x20] sm:$0xff]
      %v793 = vld [vmem:[%s787 + $0x28] sm:$0xff]
      %v794 = vld [vmem:[%s787 + $0x30] sm:$0xff]
      %v795 = vld [vmem:[%s787 + $0x38] sm:$0xff]
      %v796 = vld [vmem:[%s787 + $0x40] sm:$0xff]
      %v797 = vld [vmem:[%s787 + $0x48] sm:$0xff]
      %v798 = vld [vmem:[%s787 + $0x50] sm:$0xff]
      %v799 = vld [vmem:[%s787 + $0x58] sm:$0xff]
      %v800 = vld [vmem:[%s787 + $0x60] sm:$0xff]
      %s801 = scalar_lea.vmem [#allocation10], 20
      %v802 = vld [vmem:[%s801] sm:$0x7]
      %v804 = vsel %vm204, %v788, 0
      %v807 = vsel %vm204, %v789, 0
      %v810 = vsel %vm204, %v790, 0
      %v813 = vsel %vm204, %v791, 0
      %v816 = vsel %vm204, %v792, 0
      %v819 = vsel %vm204, %v793, 0
      %v822 = vsel %vm204, %v794, 0
      %v825 = vsel %vm204, %v795, 0
      %v828 = vsel %vm204, %v796, 0
      %v831 = vsel %vm204, %v797, 0
      %v834 = vsel %vm204, %v798, 0
      %v837 = vsel %vm204, %v799, 0
      %v840 = vsel %vm204, %v800, 0
      %v843 = vsel %vm244, %v802, 0
      %845 = vmatpush.msra.mxu0 0.0
      %846 = vmatpush.msra.mxu0 0.0
      %847 = vmatpush.msra.mxu0 0.0
      %848 = vmatpush.msra.mxu0 0.0
      %849 = vmatpush.msra.mxu0 0.0
      %850 = vmatpush.msra.mxu0 0.0
      %851 = vmatpush.msra.mxu0 0.0
      %852 = vmatpush.msra.mxu0 0.0
      %853 = vmatpush.msra.mxu0 0.0
      %854 = vmatpush.msra.mxu0 0.0
      %855 = vmatpush.msra.mxu0 0.0
      %856 = vmatpush.msra.mxu0 0.0
      %857 = vmatpush.msra.mxu0 0.0
      %858 = vmatpush.msra.mxu0 0.0
      %859 = vmatpush.msra.mxu0 0.0
      %860 = vmatpush.msra.mxu0 %v843
      %861 = vmatmul.f32.gmra.mxu0 %v804
      %v862 = vpop.f32.mrf.mxu0
      %v863 = vadd.f32 0.0, %v862
      %864 = vmatmul.f32.gmra.mxu0 %v807
      %v865 = vpop.f32.mrf.mxu0
      %v866 = vadd.f32 0.0, %v865
      %867 = vmatmul.f32.gmra.mxu0 %v810
      %v868 = vpop.f32.mrf.mxu0
      %v869 = vadd.f32 0.0, %v868
      %870 = vmatmul.f32.gmra.mxu0 %v813
      %v871 = vpop.f32.mrf.mxu0
      %v872 = vadd.f32 0.0, %v871
      %873 = vmatmul.f32.gmra.mxu0 %v816
      %v874 = vpop.f32.mrf.mxu0
      %v875 = vadd.f32 0.0, %v874
      %876 = vmatmul.f32.gmra.mxu0 %v819
      %v877 = vpop.f32.mrf.mxu0
      %v878 = vadd.f32 0.0, %v877
      %879 = vmatmul.f32.gmra.mxu0 %v822
      %v880 = vpop.f32.mrf.mxu0
      %v881 = vadd.f32 0.0, %v880
      %882 = vmatmul.f32.gmra.mxu0 %v825
      %v883 = vpop.f32.mrf.mxu0
      %v884 = vadd.f32 0.0, %v883
      %885 = vmatmul.f32.gmra.mxu0 %v828
      %v886 = vpop.f32.mrf.mxu0
      %v887 = vadd.f32 0.0, %v886
      %888 = vmatmul.f32.gmra.mxu0 %v831
      %v889 = vpop.f32.mrf.mxu0
      %v890 = vadd.f32 0.0, %v889
      %891 = vmatmul.f32.gmra.mxu0 %v834
      %v892 = vpop.f32.mrf.mxu0
      %v893 = vadd.f32 0.0, %v892
      %894 = vmatmul.f32.gmra.mxu0 %v837
      %v895 = vpop.f32.mrf.mxu0
      %v896 = vadd.f32 0.0, %v895
      %897 = vmatmul.f32.gmra.mxu0 %v840
      %v898 = vpop.f32.mrf.mxu0
      %v899 = vadd.f32 0.0, %v898
      %900 = vdwg.mxu0
      %v901 = vadd.f32 %v773, %v863
      %v902 = vadd.f32 %v774, %v866
      %v903 = vadd.f32 %v775, %v869
      %v904 = vadd.f32 %v776, %v872
      %v905 = vadd.f32 %v777, %v875
      %v906 = vadd.f32 %v778, %v878
      %v907 = vadd.f32 %v779, %v881
      %v908 = vadd.f32 %v780, %v884
      %v909 = vadd.f32 %v781, %v887
      %v910 = vadd.f32 %v782, %v890
      %v911 = vadd.f32 %v783, %v893
      %v912 = vadd.f32 %v784, %v896
      %v913 = vadd.f32 %v785, %v899
      %s914 = sadd.s32 %s171, 52
      %s915 = scalar_lea.vmem %s0, %s914
      %v916 = vld [vmem:[%s915] sm:$0xff]
      %v917 = vld [vmem:[%s915 + $0x8] sm:$0xff]
      %v918 = vld [vmem:[%s915 + $0x10] sm:$0xff]
      %v919 = vld [vmem:[%s915 + $0x18] sm:$0xff]
      %v920 = vld [vmem:[%s915 + $0x20] sm:$0xff]
      %v921 = vld [vmem:[%s915 + $0x28] sm:$0xff]
      %v922 = vld [vmem:[%s915 + $0x30] sm:$0xff]
      %v923 = vld [vmem:[%s915 + $0x38] sm:$0xff]
      %v924 = vld [vmem:[%s915 + $0x40] sm:$0xff]
      %v925 = vld [vmem:[%s915 + $0x48] sm:$0xff]
      %v926 = vld [vmem:[%s915 + $0x50] sm:$0xff]
      %v927 = vld [vmem:[%s915 + $0x58] sm:$0xff]
      %v928 = vld [vmem:[%s915 + $0x60] sm:$0xff]
      %s929 = scalar_lea.vmem [#allocation10], 24
      %v930 = vld [vmem:[%s929] sm:$0x7]
      %v932 = vsel %vm204, %v916, 0
      %v935 = vsel %vm204, %v917, 0
      %v938 = vsel %vm204, %v918, 0
      %v941 = vsel %vm204, %v919, 0
      %v944 = vsel %vm204, %v920, 0
      %v947 = vsel %vm204, %v921, 0
      %v950 = vsel %vm204, %v922, 0
      %v953 = vsel %vm204, %v923, 0
      %v956 = vsel %vm204, %v924, 0
      %v959 = vsel %vm204, %v925, 0
      %v962 = vsel %vm204, %v926, 0
      %v965 = vsel %vm204, %v927, 0
      %v968 = vsel %vm204, %v928, 0
      %v971 = vsel %vm244, %v930, 0
      %973 = vmatpush.msra.mxu0 0.0
      %974 = vmatpush.msra.mxu0 0.0
      %975 = vmatpush.msra.mxu0 0.0
      %976 = vmatpush.msra.mxu0 0.0
      %977 = vmatpush.msra.mxu0 0.0
      %978 = vmatpush.msra.mxu0 0.0
      %979 = vmatpush.msra.mxu0 0.0
      %980 = vmatpush.msra.mxu0 0.0
      %981 = vmatpush.msra.mxu0 0.0
      %982 = vmatpush.msra.mxu0 0.0
      %983 = vmatpush.msra.mxu0 0.0
      %984 = vmatpush.msra.mxu0 0.0
      %985 = vmatpush.msra.mxu0 0.0
      %986 = vmatpush.msra.mxu0 0.0
      %987 = vmatpush.msra.mxu0 0.0
      %988 = vmatpush.msra.mxu0 %v971
      %989 = vmatmul.f32.gmra.mxu0 %v932
      %v990 = vpop.f32.mrf.mxu0
      %v991 = vadd.f32 0.0, %v990
      %992 = vmatmul.f32.gmra.mxu0 %v935
      %v993 = vpop.f32.mrf.mxu0
      %v994 = vadd.f32 0.0, %v993
      %995 = vmatmul.f32.gmra.mxu0 %v938
      %v996 = vpop.f32.mrf.mxu0
      %v997 = vadd.f32 0.0, %v996
      %998 = vmatmul.f32.gmra.mxu0 %v941
      %v999 = vpop.f32.mrf.mxu0
      %v1000 = vadd.f32 0.0, %v999
      %1001 = vmatmul.f32.gmra.mxu0 %v944
      %v1002 = vpop.f32.mrf.mxu0
      %v1003 = vadd.f32 0.0, %v1002
      %1004 = vmatmul.f32.gmra.mxu0 %v947
      %v1005 = vpop.f32.mrf.mxu0
      %v1006 = vadd.f32 0.0, %v1005
      %1007 = vmatmul.f32.gmra.mxu0 %v950
      %v1008 = vpop.f32.mrf.mxu0
      %v1009 = vadd.f32 0.0, %v1008
      %1010 = vmatmul.f32.gmra.mxu0 %v953
      %v1011 = vpop.f32.mrf.mxu0
      %v1012 = vadd.f32 0.0, %v1011
      %1013 = vmatmul.f32.gmra.mxu0 %v956
      %v1014 = vpop.f32.mrf.mxu0
      %v1015 = vadd.f32 0.0, %v1014
      %1016 = vmatmul.f32.gmra.mxu0 %v959
      %v1017 = vpop.f32.mrf.mxu0
      %v1018 = vadd.f32 0.0, %v1017
      %1019 = vmatmul.f32.gmra.mxu0 %v962
      %v1020 = vpop.f32.mrf.mxu0
      %v1021 = vadd.f32 0.0, %v1020
      %1022 = vmatmul.f32.gmra.mxu0 %v965
      %v1023 = vpop.f32.mrf.mxu0
      %v1024 = vadd.f32 0.0, %v1023
      %1025 = vmatmul.f32.gmra.mxu0 %v968
      %v1026 = vpop.f32.mrf.mxu0
      %v1027 = vadd.f32 0.0, %v1026
      %1028 = vdwg.mxu0
      %v1029 = vadd.f32 %v901, %v991
      %v1030 = vadd.f32 %v902, %v994
      %v1031 = vadd.f32 %v903, %v997
      %v1032 = vadd.f32 %v904, %v1000
      %v1033 = vadd.f32 %v905, %v1003
      %v1034 = vadd.f32 %v906, %v1006
      %v1035 = vadd.f32 %v907, %v1009
      %v1036 = vadd.f32 %v908, %v1012
      %v1037 = vadd.f32 %v909, %v1015
      %v1038 = vadd.f32 %v910, %v1018
      %v1039 = vadd.f32 %v911, %v1021
      %v1040 = vadd.f32 %v912, %v1024
      %v1041 = vadd.f32 %v913, %v1027
      %s1042 = sadd.s32 %s171, 53
      %s1043 = scalar_lea.vmem %s0, %s1042
      %v1044 = vld [vmem:[%s1043] sm:$0xff]
      %v1045 = vld [vmem:[%s1043 + $0x8] sm:$0xff]
      %v1046 = vld [vmem:[%s1043 + $0x10] sm:$0xff]
      %v1047 = vld [vmem:[%s1043 + $0x18] sm:$0xff]
      %v1048 = vld [vmem:[%s1043 + $0x20] sm:$0xff]
      %v1049 = vld [vmem:[%s1043 + $0x28] sm:$0xff]
      %v1050 = vld [vmem:[%s1043 + $0x30] sm:$0xff]
      %v1051 = vld [vmem:[%s1043 + $0x38] sm:$0xff]
      %v1052 = vld [vmem:[%s1043 + $0x40] sm:$0xff]
      %v1053 = vld [vmem:[%s1043 + $0x48] sm:$0xff]
      %v1054 = vld [vmem:[%s1043 + $0x50] sm:$0xff]
      %v1055 = vld [vmem:[%s1043 + $0x58] sm:$0xff]
      %v1056 = vld [vmem:[%s1043 + $0x60] sm:$0xff]
      %s1057 = scalar_lea.vmem [#allocation10], 28
      %v1058 = vld [vmem:[%s1057] sm:$0x7]
      %v1060 = vsel %vm204, %v1044, 0
      %v1063 = vsel %vm204, %v1045, 0
      %v1066 = vsel %vm204, %v1046, 0
      %v1069 = vsel %vm204, %v1047, 0
      %v1072 = vsel %vm204, %v1048, 0
      %v1075 = vsel %vm204, %v1049, 0
      %v1078 = vsel %vm204, %v1050, 0
      %v1081 = vsel %vm204, %v1051, 0
      %v1084 = vsel %vm204, %v1052, 0
      %v1087 = vsel %vm204, %v1053, 0
      %v1090 = vsel %vm204, %v1054, 0
      %v1093 = vsel %vm204, %v1055, 0
      %v1096 = vsel %vm204, %v1056, 0
      %v1099 = vsel %vm244, %v1058, 0
      %1101 = vmatpush.msra.mxu0 0.0
      %1102 = vmatpush.msra.mxu0 0.0
      %1103 = vmatpush.msra.mxu0 0.0
      %1104 = vmatpush.msra.mxu0 0.0
      %1105 = vmatpush.msra.mxu0 0.0
      %1106 = vmatpush.msra.mxu0 0.0
      %1107 = vmatpush.msra.mxu0 0.0
      %1108 = vmatpush.msra.mxu0 0.0
      %1109 = vmatpush.msra.mxu0 0.0
      %1110 = vmatpush.msra.mxu0 0.0
      %1111 = vmatpush.msra.mxu0 0.0
      %1112 = vmatpush.msra.mxu0 0.0
      %1113 = vmatpush.msra.mxu0 0.0
      %1114 = vmatpush.msra.mxu0 0.0
      %1115 = vmatpush.msra.mxu0 0.0
      %1116 = vmatpush.msra.mxu0 %v1099
      %1117 = vmatmul.f32.gmra.mxu0 %v1060
      %v1118 = vpop.f32.mrf.mxu0
      %v1119 = vadd.f32 0.0, %v1118
      %1120 = vmatmul.f32.gmra.mxu0 %v1063
      %v1121 = vpop.f32.mrf.mxu0
      %v1122 = vadd.f32 0.0, %v1121
      %1123 = vmatmul.f32.gmra.mxu0 %v1066
      %v1124 = vpop.f32.mrf.mxu0
      %v1125 = vadd.f32 0.0, %v1124
      %1126 = vmatmul.f32.gmra.mxu0 %v1069
      %v1127 = vpop.f32.mrf.mxu0
      %v1128 = vadd.f32 0.0, %v1127
      %1129 = vmatmul.f32.gmra.mxu0 %v1072
      %v1130 = vpop.f32.mrf.mxu0
      %v1131 = vadd.f32 0.0, %v1130
      %1132 = vmatmul.f32.gmra.mxu0 %v1075
      %v1133 = vpop.f32.mrf.mxu0
      %v1134 = vadd.f32 0.0, %v1133
      %1135 = vmatmul.f32.gmra.mxu0 %v1078
      %v1136 = vpop.f32.mrf.mxu0
      %v1137 = vadd.f32 0.0, %v1136
      %1138 = vmatmul.f32.gmra.mxu0 %v1081
      %v1139 = vpop.f32.mrf.mxu0
      %v1140 = vadd.f32 0.0, %v1139
      %1141 = vmatmul.f32.gmra.mxu0 %v1084
      %v1142 = vpop.f32.mrf.mxu0
      %v1143 = vadd.f32 0.0, %v1142
      %1144 = vmatmul.f32.gmra.mxu0 %v1087
      %v1145 = vpop.f32.mrf.mxu0
      %v1146 = vadd.f32 0.0, %v1145
      %1147 = vmatmul.f32.gmra.mxu0 %v1090
      %v1148 = vpop.f32.mrf.mxu0
      %v1149 = vadd.f32 0.0, %v1148
      %1150 = vmatmul.f32.gmra.mxu0 %v1093
      %v1151 = vpop.f32.mrf.mxu0
      %v1152 = vadd.f32 0.0, %v1151
      %1153 = vmatmul.f32.gmra.mxu0 %v1096
      %v1154 = vpop.f32.mrf.mxu0
      %v1155 = vadd.f32 0.0, %v1154
      %1156 = vdwg.mxu0
      %v1157 = vadd.f32 %v1029, %v1119
      %v1158 = vadd.f32 %v1030, %v1122
      %v1159 = vadd.f32 %v1031, %v1125
      %v1160 = vadd.f32 %v1032, %v1128
      %v1161 = vadd.f32 %v1033, %v1131
      %v1162 = vadd.f32 %v1034, %v1134
      %v1163 = vadd.f32 %v1035, %v1137
      %v1164 = vadd.f32 %v1036, %v1140
      %v1165 = vadd.f32 %v1037, %v1143
      %v1166 = vadd.f32 %v1038, %v1146
      %v1167 = vadd.f32 %v1039, %v1149
      %v1168 = vadd.f32 %v1040, %v1152
      %v1169 = vadd.f32 %v1041, %v1155
      %s1170 = sadd.s32 %s171, 54
      %s1171 = scalar_lea.vmem %s0, %s1170
      %v1172 = vld [vmem:[%s1171] sm:$0xff]
      %v1173 = vld [vmem:[%s1171 + $0x8] sm:$0xff]
      %v1174 = vld [vmem:[%s1171 + $0x10] sm:$0xff]
      %v1175 = vld [vmem:[%s1171 + $0x18] sm:$0xff]
      %v1176 = vld [vmem:[%s1171 + $0x20] sm:$0xff]
      %v1177 = vld [vmem:[%s1171 + $0x28] sm:$0xff]
      %v1178 = vld [vmem:[%s1171 + $0x30] sm:$0xff]
      %v1179 = vld [vmem:[%s1171 + $0x38] sm:$0xff]
      %v1180 = vld [vmem:[%s1171 + $0x40] sm:$0xff]
      %v1181 = vld [vmem:[%s1171 + $0x48] sm:$0xff]
      %v1182 = vld [vmem:[%s1171 + $0x50] sm:$0xff]
      %v1183 = vld [vmem:[%s1171 + $0x58] sm:$0xff]
      %v1184 = vld [vmem:[%s1171 + $0x60] sm:$0xff]
      %s1185 = scalar_lea.vmem [#allocation10], 32
      %v1186 = vld [vmem:[%s1185] sm:$0x7]
      %v1188 = vsel %vm204, %v1172, 0
      %v1191 = vsel %vm204, %v1173, 0
      %v1194 = vsel %vm204, %v1174, 0
      %v1197 = vsel %vm204, %v1175, 0
      %v1200 = vsel %vm204, %v1176, 0
      %v1203 = vsel %vm204, %v1177, 0
      %v1206 = vsel %vm204, %v1178, 0
      %v1209 = vsel %vm204, %v1179, 0
      %v1212 = vsel %vm204, %v1180, 0
      %v1215 = vsel %vm204, %v1181, 0
      %v1218 = vsel %vm204, %v1182, 0
      %v1221 = vsel %vm204, %v1183, 0
      %v1224 = vsel %vm204, %v1184, 0
      %v1227 = vsel %vm244, %v1186, 0
      %1229 = vmatpush.msra.mxu0 0.0
      %1230 = vmatpush.msra.mxu0 0.0
      %1231 = vmatpush.msra.mxu0 0.0
      %1232 = vmatpush.msra.mxu0 0.0
      %1233 = vmatpush.msra.mxu0 0.0
      %1234 = vmatpush.msra.mxu0 0.0
      %1235 = vmatpush.msra.mxu0 0.0
      %1236 = vmatpush.msra.mxu0 0.0
      %1237 = vmatpush.msra.mxu0 0.0
      %1238 = vmatpush.msra.mxu0 0.0
      %1239 = vmatpush.msra.mxu0 0.0
      %1240 = vmatpush.msra.mxu0 0.0
      %1241 = vmatpush.msra.mxu0 0.0
      %1242 = vmatpush.msra.mxu0 0.0
      %1243 = vmatpush.msra.mxu0 0.0
      %1244 = vmatpush.msra.mxu0 %v1227
      %1245 = vmatmul.f32.gmra.mxu0 %v1188
      %v1246 = vpop.f32.mrf.mxu0
      %v1247 = vadd.f32 0.0, %v1246
      %1248 = vmatmul.f32.gmra.mxu0 %v1191
      %v1249 = vpop.f32.mrf.mxu0
      %v1250 = vadd.f32 0.0, %v1249
      %1251 = vmatmul.f32.gmra.mxu0 %v1194
      %v1252 = vpop.f32.mrf.mxu0
      %v1253 = vadd.f32 0.0, %v1252
      %1254 = vmatmul.f32.gmra.mxu0 %v1197
      %v1255 = vpop.f32.mrf.mxu0
      %v1256 = vadd.f32 0.0, %v1255
      %1257 = vmatmul.f32.gmra.mxu0 %v1200
      %v1258 = vpop.f32.mrf.mxu0
      %v1259 = vadd.f32 0.0, %v1258
      %1260 = vmatmul.f32.gmra.mxu0 %v1203
      %v1261 = vpop.f32.mrf.mxu0
      %v1262 = vadd.f32 0.0, %v1261
      %1263 = vmatmul.f32.gmra.mxu0 %v1206
      %v1264 = vpop.f32.mrf.mxu0
      %v1265 = vadd.f32 0.0, %v1264
      %1266 = vmatmul.f32.gmra.mxu0 %v1209
      %v1267 = vpop.f32.mrf.mxu0
      %v1268 = vadd.f32 0.0, %v1267
      %1269 = vmatmul.f32.gmra.mxu0 %v1212
      %v1270 = vpop.f32.mrf.mxu0
      %v1271 = vadd.f32 0.0, %v1270
      %1272 = vmatmul.f32.gmra.mxu0 %v1215
      %v1273 = vpop.f32.mrf.mxu0
      %v1274 = vadd.f32 0.0, %v1273
      %1275 = vmatmul.f32.gmra.mxu0 %v1218
      %v1276 = vpop.f32.mrf.mxu0
      %v1277 = vadd.f32 0.0, %v1276
      %1278 = vmatmul.f32.gmra.mxu0 %v1221
      %v1279 = vpop.f32.mrf.mxu0
      %v1280 = vadd.f32 0.0, %v1279
      %1281 = vmatmul.f32.gmra.mxu0 %v1224
      %v1282 = vpop.f32.mrf.mxu0
      %v1283 = vadd.f32 0.0, %v1282
      %1284 = vdwg.mxu0
      %v1285 = vadd.f32 %v1157, %v1247
      %v1286 = vadd.f32 %v1158, %v1250
      %v1287 = vadd.f32 %v1159, %v1253
      %v1288 = vadd.f32 %v1160, %v1256
      %v1289 = vadd.f32 %v1161, %v1259
      %v1290 = vadd.f32 %v1162, %v1262
      %v1291 = vadd.f32 %v1163, %v1265
      %v1292 = vadd.f32 %v1164, %v1268
      %v1293 = vadd.f32 %v1165, %v1271
      %v1294 = vadd.f32 %v1166, %v1274
      %v1295 = vadd.f32 %v1167, %v1277
      %v1296 = vadd.f32 %v1168, %v1280
      %v1297 = vadd.f32 %v1169, %v1283
      %s1298 = scalar_lea.vmem [#allocation2], %s171
      %vm1299 = vcmask 261120
      %1300 = vst.msk [vmem:[%s1298] sm:$0xff] %vm1299, %v1285
      %1301 = vst.msk [vmem:[%s1298 + $0x8] sm:$0xff] %vm1299, %v1286
      %1302 = vst.msk [vmem:[%s1298 + $0x10] sm:$0xff] %vm1299, %v1287
      %1303 = vst.msk [vmem:[%s1298 + $0x18] sm:$0xff] %vm1299, %v1288
      %1304 = vst.msk [vmem:[%s1298 + $0x20] sm:$0xff] %vm1299, %v1289
      %1305 = vst.msk [vmem:[%s1298 + $0x28] sm:$0xff] %vm1299, %v1290
      %1306 = vst.msk [vmem:[%s1298 + $0x30] sm:$0xff] %vm1299, %v1291
      %1307 = vst.msk [vmem:[%s1298 + $0x38] sm:$0xff] %vm1299, %v1292
      %1308 = vst.msk [vmem:[%s1298 + $0x40] sm:$0xff] %vm1299, %v1293
      %1309 = vst.msk [vmem:[%s1298 + $0x48] sm:$0xff] %vm1299, %v1294
      %1310 = vst.msk [vmem:[%s1298 + $0x50] sm:$0xff] %vm1299, %v1295
      %1311 = vst.msk [vmem:[%s1298 + $0x58] sm:$0xff] %vm1299, %v1296
      %1312 = vst.msk [vmem:[%s1298 + $0x60] sm:$0xff] %vm1299, %v1297
    $region82: #{model_forward.1} parent=1 // loop_footer
      %s170 = sadd.s32 1, %s166
    $region83: #{model_forward.1} parent=1 // loop_footer_branch
      %165 = sbr.rel target = $region79
    $region84: #{model_forward.1} parent=1 // loop_exit
      _
    %vm1313 = vcmask 261120
    %1314 = vst.msk [vmem:[#allocation3] sm:$0xff] %vm1313, 0.0
    %1315 = vst.msk [vmem:[#allocation3 + $0x8] sm:$0xff] %vm1313, 0.0
    %1316 = vst.msk [vmem:[#allocation3 + $0x10] sm:$0xff] %vm1313, 0.0
    %1317 = vst.msk [vmem:[#allocation3 + $0x18] sm:$0xff] %vm1313, 0.0
    %1318 = vst.msk [vmem:[#allocation3 + $0x20] sm:$0xff] %vm1313, 0.0
    %1319 = vst.msk [vmem:[#allocation3 + $0x28] sm:$0xff] %vm1313, 0.0
    %1320 = vst.msk [vmem:[#allocation3 + $0x30] sm:$0xff] %vm1313, 0.0
    %1321 = vst.msk [vmem:[#allocation3 + $0x38] sm:$0xff] %vm1313, 0.0
    %1322 = vst.msk [vmem:[#allocation3 + $0x40] sm:$0xff] %vm1313, 0.0
    %1323 = vst.msk [vmem:[#allocation3 + $0x48] sm:$0xff] %vm1313, 0.0
    %1324 = vst.msk [vmem:[#allocation3 + $0x50] sm:$0xff] %vm1313, 0.0
    %1325 = vst.msk [vmem:[#allocation3 + $0x58] sm:$0xff] %vm1313, 0.0
    %1326 = vst.msk [vmem:[#allocation3 + $0x60] sm:$0xff] %vm1313, 0.0
    %1327 = vst.msk [vmem:[#allocation3 + $0x68] sm:$0xff] %vm1313, 0.0
    %1328 = vst.msk [vmem:[#allocation3 + $0x70] sm:$0xff] %vm1313, 0.0
    %1329 = vst.msk [vmem:[#allocation3 + $0x78] sm:$0xff] %vm1313, 0.0
    %1330 = vst.msk [vmem:[#allocation3 + $0x80] sm:$0xff] %vm1313, 0.0
    %1331 = vst.msk [vmem:[#allocation3 + $0x88] sm:$0xff] %vm1313, 0.0
    %1332 = vst.msk [vmem:[#allocation3 + $0x90] sm:$0xff] %vm1313, 0.0
    %1333 = vst.msk [vmem:[#allocation3 + $0x98] sm:$0xff] %vm1313, 0.0
    %1334 = vst.msk [vmem:[#allocation3 + $0xa0] sm:$0xff] %vm1313, 0.0
    %1335 = vst.msk [vmem:[#allocation3 + $0xa8] sm:$0xff] %vm1313, 0.0
    %1336 = vst.msk [vmem:[#allocation3 + $0xb0] sm:$0xff] %vm1313, 0.0
    %1337 = vst.msk [vmem:[#allocation3 + $0xb8] sm:$0xff] %vm1313, 0.0
    %1338 = vst.msk [vmem:[#allocation3 + $0xc0] sm:$0xff] %vm1313, 0.0
    %1339 = vst.msk [vmem:[#allocation3 + $0xc8] sm:$0xff] %vm1313, 0.0
    %1340 = vst.msk [vmem:[#allocation3 + $0xd0] sm:$0xff] %vm1313, 0.0
    %1341 = vst.msk [vmem:[#allocation3 + $0xd8] sm:$0xff] %vm1313, 0.0
    %1342 = vst.msk [vmem:[#allocation3 + $0xe0] sm:$0xff] %vm1313, 0.0
    %1343 = vst.msk [vmem:[#allocation3 + $0xe8] sm:$0xff] %vm1313, 0.0
    %1344 = vst.msk [vmem:[#allocation3 + $0xf0] sm:$0xff] %vm1313, 0.0
    %1345 = vst.msk [vmem:[#allocation3 + $0xf8] sm:$0xff] %vm1313, 0.0
    %1346 = vst.msk [vmem:[#allocation3 + $0x100] sm:$0xff] %vm1313, 0.0
    %1347 = vst.msk [vmem:[#allocation3 + $0x108] sm:$0xff] %vm1313, 0.0
    %1348 = vst.msk [vmem:[#allocation3 + $0x110] sm:$0xff] %vm1313, 0.0
    %1349 = vst.msk [vmem:[#allocation3 + $0x118] sm:$0xff] %vm1313, 0.0
    %1350 = vst.msk [vmem:[#allocation3 + $0x120] sm:$0xff] %vm1313, 0.0
    %1351 = vst.msk [vmem:[#allocation3 + $0x128] sm:$0xff] %vm1313, 0.0
    %1352 = vst.msk [vmem:[#allocation3 + $0x130] sm:$0xff] %vm1313, 0.0
    %1353 = vst.msk [vmem:[#allocation3 + $0x138] sm:$0xff] %vm1313, 0.0
    %1354 = vst.msk [vmem:[#allocation3 + $0x140] sm:$0xff] %vm1313, 0.0
    %1355 = vst.msk [vmem:[#allocation3 + $0x148] sm:$0xff] %vm1313, 0.0
    %1356 = vst.msk [vmem:[#allocation3 + $0x150] sm:$0xff] %vm1313, 0.0
    %1357 = vst.msk [vmem:[#allocation3 + $0x158] sm:$0xff] %vm1313, 0.0
    %1358 = vst.msk [vmem:[#allocation3 + $0x160] sm:$0xff] %vm1313, 0.0
    %1359 = vst.msk [vmem:[#allocation3 + $0x168] sm:$0xff] %vm1313, 0.0
    %1360 = vst.msk [vmem:[#allocation3 + $0x170] sm:$0xff] %vm1313, 0.0
    %1361 = vst.msk [vmem:[#allocation3 + $0x178] sm:$0xff] %vm1313, 0.0
    %1362 = vst.msk [vmem:[#allocation3 + $0x180] sm:$0xff] %vm1313, 0.0
    %1363 = vst.msk [vmem:[#allocation3 + $0x188] sm:$0xff] %vm1313, 0.0
    %1364 = vst.msk [vmem:[#allocation3 + $0x190] sm:$0xff] %vm1313, 0.0
    %1365 = vst.msk [vmem:[#allocation3 + $0x198] sm:$0xff] %vm1313, 0.0
    %vm1366 = vcmask 259072
    %1367 = vst.msk [vmem:[#allocation3 + $0x1a0] sm:$0x3f] %vm1366, 0.0
    %s1368 = scalar_lea.vmem [#allocation2], 27
    %v1369 = vld [vmem:[%s1368] ss:$2 sm:$0xff]
    %s1370 = scalar_lea.vmem [#allocation2], 43
    %v1371 = vld [vmem:[%s1370] ss:$2 sm:$0xf]
    %s1372 = scalar_lea.vmem [#allocation2], 28
    %v1373 = vld [vmem:[%s1372] ss:$2 sm:$0xff]
    %s1374 = scalar_lea.vmem [#allocation2], 44
    %v1375 = vld [vmem:[%s1374] ss:$2 sm:$0xf]
    %s1376 = scalar_lea.vmem [#allocation2], 53
    %v1377 = vld [vmem:[%s1376] ss:$2 sm:$0xff]
    %s1378 = scalar_lea.vmem [#allocation2], 69
    %v1379 = vld [vmem:[%s1378] ss:$2 sm:$0xf]
    %s1380 = scalar_lea.vmem [#allocation2], 54
    %v1381 = vld [vmem:[%s1380] ss:$2 sm:$0xff]
    %s1382 = scalar_lea.vmem [#allocation2], 70
    %v1383 = vld [vmem:[%s1382] ss:$2 sm:$0xf]
    %v1384 = vmax.f32 %v1369, %v1373
    %v1385 = vmax.f32 %v1371, %v1375
    %v1386 = vmax.f32 %v1377, %v1381
    %v1387 = vmax.f32 %v1379, %v1383
    %v1388 = vmax.f32 %v1384, %v1386
    %v1389 = vmax.f32 %v1385, %v1387
    %v1390 = vld [vmem:[#allocation13] sm:$0x1]
    %v1392 = vperm.slane %v1390, 0
    %v1394 = vadd.f32 %v1388, %v1392
    %v1395 = vadd.f32 %v1389, %v1392
    %v1396 = vmul.f32 %v1394, 0.01
    %v1397 = vmul.f32 %v1395, 0.01
    %v1398 = vmax.f32 %v1394, %v1396
    %v1399 = vmax.f32 %v1395, %v1397
    %1400 = vst.msk [vmem:[#allocation3 + $0x1e] sm:$0xff] %vm1313, %v1398
    %vm1401 = vcmask 257024
    %1402 = vst.msk [vmem:[#allocation3 + $0x26] sm:$0xf] %vm1401, %v1399
    %s1403 = scalar_lea.vmem [#allocation2], 79
    %v1404 = vld [vmem:[%s1403] ss:$2 sm:$0xff]
    %s1405 = scalar_lea.vmem [#allocation2], 95
    %v1406 = vld [vmem:[%s1405] ss:$2 sm:$0xf]
    %s1407 = scalar_lea.vmem [#allocation2], 80
    %v1408 = vld [vmem:[%s1407] ss:$2 sm:$0xff]
    %s1409 = scalar_lea.vmem [#allocation2], 96
    %v1410 = vld [vmem:[%s1409] ss:$2 sm:$0xf]
    %s1411 = scalar_lea.vmem [#allocation2], 105
    %v1412 = vld [vmem:[%s1411] ss:$2 sm:$0xff]
    %s1413 = scalar_lea.vmem [#allocation2], 121
    %v1414 = vld [vmem:[%s1413] ss:$2 sm:$0xf]
    %s1415 = scalar_lea.vmem [#allocation2], 106
    %v1416 = vld [vmem:[%s1415] ss:$2 sm:$0xff]
    %s1417 = scalar_lea.vmem [#allocation2], 122
    %v1418 = vld [vmem:[%s1417] ss:$2 sm:$0xf]
    %v1419 = vmax.f32 %v1404, %v1408
    %v1420 = vmax.f32 %v1406, %v1410
    %v1421 = vmax.f32 %v1412, %v1416
    %v1422 = vmax.f32 %v1414, %v1418
    %v1423 = vmax.f32 %v1419, %v1421
    %v1424 = vmax.f32 %v1420, %v1422
    %v1425 = vld [vmem:[#allocation13] sm:$0x1]
    %v1427 = vperm.slane %v1425, 0
    %v1429 = vadd.f32 %v1423, %v1427
    %v1430 = vadd.f32 %v1424, %v1427
    %v1431 = vmul.f32 %v1429, 0.01
    %v1432 = vmul.f32 %v1430, 0.01
    %v1433 = vmax.f32 %v1429, %v1431
    %v1434 = vmax.f32 %v1430, %v1432
    %1435 = vst.msk [vmem:[#allocation3 + $0x2c] sm:$0xff] %vm1313, %v1433
    %1436 = vst.msk [vmem:[#allocation3 + $0x34] sm:$0xf] %vm1401, %v1434
    %s1437 = scalar_lea.vmem [#allocation2], 131
    %v1438 = vld [vmem:[%s1437] ss:$2 sm:$0xff]
    %s1439 = scalar_lea.vmem [#allocation2], 147
    %v1440 = vld [vmem:[%s1439] ss:$2 sm:$0xf]
    %s1441 = scalar_lea.vmem [#allocation2], 132
    %v1442 = vld [vmem:[%s1441] ss:$2 sm:$0xff]
    %s1443 = scalar_lea.vmem [#allocation2], 148
    %v1444 = vld [vmem:[%s1443] ss:$2 sm:$0xf]
    %s1445 = scalar_lea.vmem [#allocation2], 157
    %v1446 = vld [vmem:[%s1445] ss:$2 sm:$0xff]
    %s1447 = scalar_lea.vmem [#allocation2], 173
    %v1448 = vld [vmem:[%s1447] ss:$2 sm:$0xf]
    %s1449 = scalar_lea.vmem [#allocation2], 158
    %v1450 = vld [vmem:[%s1449] ss:$2 sm:$0xff]
    %s1451 = scalar_lea.vmem [#allocation2], 174
    %v1452 = vld [vmem:[%s1451] ss:$2 sm:$0xf]
    %v1453 = vmax.f32 %v1438, %v1442
    %v1454 = vmax.f32 %v1440, %v1444
    %v1455 = vmax.f32 %v1446, %v1450
    %v1456 = vmax.f32 %v1448, %v1452
    %v1457 = vmax.f32 %v1453, %v1455
    %v1458 = vmax.f32 %v1454, %v1456
    %v1459 = vld [vmem:[#allocation13] sm:$0x1]
    %v1461 = vperm.slane %v1459, 0
    %v1463 = vadd.f32 %v1457, %v1461
    %v1464 = vadd.f32 %v1458, %v1461
    %v1465 = vmul.f32 %v1463, 0.01
    %v1466 = vmul.f32 %v1464, 0.01
    %v1467 = vmax.f32 %v1463, %v1465
    %v1468 = vmax.f32 %v1464, %v1466
    %1469 = vst.msk [vmem:[#allocation3 + $0x3a] sm:$0xff] %vm1313, %v1467
    %1470 = vst.msk [vmem:[#allocation3 + $0x42] sm:$0xf] %vm1401, %v1468
    %s1471 = scalar_lea.vmem [#allocation2], 183
    %v1472 = vld [vmem:[%s1471] ss:$2 sm:$0xff]
    %s1473 = scalar_lea.vmem [#allocation2], 199
    %v1474 = vld [vmem:[%s1473] ss:$2 sm:$0xf]
    %s1475 = scalar_lea.vmem [#allocation2], 184
    %v1476 = vld [vmem:[%s1475] ss:$2 sm:$0xff]
    %s1477 = scalar_lea.vmem [#allocation2], 200
    %v1478 = vld [vmem:[%s1477] ss:$2 sm:$0xf]
    %s1479 = scalar_lea.vmem [#allocation2], 209
    %v1480 = vld [vmem:[%s1479] ss:$2 sm:$0xff]
    %s1481 = scalar_lea.vmem [#allocation2], 225
    %v1482 = vld [vmem:[%s1481] ss:$2 sm:$0xf]
    %s1483 = scalar_lea.vmem [#allocation2], 210
    %v1484 = vld [vmem:[%s1483] ss:$2 sm:$0xff]
    %s1485 = scalar_lea.vmem [#allocation2], 226
    %v1486 = vld [vmem:[%s1485] ss:$2 sm:$0xf]
    %v1487 = vmax.f32 %v1472, %v1476
    %v1488 = vmax.f32 %v1474, %v1478
    %v1489 = vmax.f32 %v1480, %v1484
    %v1490 = vmax.f32 %v1482, %v1486
    %v1491 = vmax.f32 %v1487, %v1489
    %v1492 = vmax.f32 %v1488, %v1490
    %v1493 = vld [vmem:[#allocation13] sm:$0x1]
    %v1495 = vperm.slane %v1493, 0
    %v1497 = vadd.f32 %v1491, %v1495
    %v1498 = vadd.f32 %v1492, %v1495
    %v1499 = vmul.f32 %v1497, 0.01
    %v1500 = vmul.f32 %v1498, 0.01
    %v1501 = vmax.f32 %v1497, %v1499
    %v1502 = vmax.f32 %v1498, %v1500
    %1503 = vst.msk [vmem:[#allocation3 + $0x48] sm:$0xff] %vm1313, %v1501
    %1504 = vst.msk [vmem:[#allocation3 + $0x50] sm:$0xf] %vm1401, %v1502
    %s1505 = scalar_lea.vmem [#allocation2], 235
    %v1506 = vld [vmem:[%s1505] ss:$2 sm:$0xff]
    %s1507 = scalar_lea.vmem [#allocation2], 251
    %v1508 = vld [vmem:[%s1507] ss:$2 sm:$0xf]
    %s1509 = scalar_lea.vmem [#allocation2], 236
    %v1510 = vld [vmem:[%s1509] ss:$2 sm:$0xff]
    %s1511 = scalar_lea.vmem [#allocation2], 252
    %v1512 = vld [vmem:[%s1511] ss:$2 sm:$0xf]
    %s1513 = scalar_lea.vmem [#allocation2], 261
    %v1514 = vld [vmem:[%s1513] ss:$2 sm:$0xff]
    %s1515 = scalar_lea.vmem [#allocation2], 277
    %v1516 = vld [vmem:[%s1515] ss:$2 sm:$0xf]
    %s1517 = scalar_lea.vmem [#allocation2], 262
    %v1518 = vld [vmem:[%s1517] ss:$2 sm:$0xff]
    %s1519 = scalar_lea.vmem [#allocation2], 278
    %v1520 = vld [vmem:[%s1519] ss:$2 sm:$0xf]
    %v1521 = vmax.f32 %v1506, %v1510
    %v1522 = vmax.f32 %v1508, %v1512
    %v1523 = vmax.f32 %v1514, %v1518
    %v1524 = vmax.f32 %v1516, %v1520
    %v1525 = vmax.f32 %v1521, %v1523
    %v1526 = vmax.f32 %v1522, %v1524
    %v1527 = vld [vmem:[#allocation13] sm:$0x1]
    %v1529 = vperm.slane %v1527, 0
    %v1531 = vadd.f32 %v1525, %v1529
    %v1532 = vadd.f32 %v1526, %v1529
    %v1533 = vmul.f32 %v1531, 0.01
    %v1534 = vmul.f32 %v1532, 0.01
    %v1535 = vmax.f32 %v1531, %v1533
    %v1536 = vmax.f32 %v1532, %v1534
    %1537 = vst.msk [vmem:[#allocation3 + $0x56] sm:$0xff] %vm1313, %v1535
    %1538 = vst.msk [vmem:[#allocation3 + $0x5e] sm:$0xf] %vm1401, %v1536
    %s1539 = scalar_lea.vmem [#allocation2], 287
    %v1540 = vld [vmem:[%s1539] ss:$2 sm:$0xff]
    %s1541 = scalar_lea.vmem [#allocation2], 303
    %v1542 = vld [vmem:[%s1541] ss:$2 sm:$0xf]
    %s1543 = scalar_lea.vmem [#allocation2], 288
    %v1544 = vld [vmem:[%s1543] ss:$2 sm:$0xff]
    %s1545 = scalar_lea.vmem [#allocation2], 304
    %v1546 = vld [vmem:[%s1545] ss:$2 sm:$0xf]
    %s1547 = scalar_lea.vmem [#allocation2], 313
    %v1548 = vld [vmem:[%s1547] ss:$2 sm:$0xff]
    %s1549 = scalar_lea.vmem [#allocation2], 329
    %v1550 = vld [vmem:[%s1549] ss:$2 sm:$0xf]
    %s1551 = scalar_lea.vmem [#allocation2], 314
    %v1552 = vld [vmem:[%s1551] ss:$2 sm:$0xff]
    %s1553 = scalar_lea.vmem [#allocation2], 330
    %v1554 = vld [vmem:[%s1553] ss:$2 sm:$0xf]
    %v1555 = vmax.f32 %v1540, %v1544
    %v1556 = vmax.f32 %v1542, %v1546
    %v1557 = vmax.f32 %v1548, %v1552
    %v1558 = vmax.f32 %v1550, %v1554
    %v1559 = vmax.f32 %v1555, %v1557
    %v1560 = vmax.f32 %v1556, %v1558
    %v1561 = vld [vmem:[#allocation13] sm:$0x1]
    %v1563 = vperm.slane %v1561, 0
    %v1565 = vadd.f32 %v1559, %v1563
    %v1566 = vadd.f32 %v1560, %v1563
    %v1567 = vmul.f32 %v1565, 0.01
    %v1568 = vmul.f32 %v1566, 0.01
    %v1569 = vmax.f32 %v1565, %v1567
    %v1570 = vmax.f32 %v1566, %v1568
    %1571 = vst.msk [vmem:[#allocation3 + $0x64] sm:$0xff] %vm1313, %v1569
    %1572 = vst.msk [vmem:[#allocation3 + $0x6c] sm:$0xf] %vm1401, %v1570
    %s1573 = scalar_lea.vmem [#allocation2], 339
    %v1574 = vld [vmem:[%s1573] ss:$2 sm:$0xff]
    %s1575 = scalar_lea.vmem [#allocation2], 355
    %v1576 = vld [vmem:[%s1575] ss:$2 sm:$0xf]
    %s1577 = scalar_lea.vmem [#allocation2], 340
    %v1578 = vld [vmem:[%s1577] ss:$2 sm:$0xff]
    %s1579 = scalar_lea.vmem [#allocation2], 356
    %v1580 = vld [vmem:[%s1579] ss:$2 sm:$0xf]
    %s1581 = scalar_lea.vmem [#allocation2], 365
    %v1582 = vld [vmem:[%s1581] ss:$2 sm:$0xff]
    %s1583 = scalar_lea.vmem [#allocation2], 381
    %v1584 = vld [vmem:[%s1583] ss:$2 sm:$0xf]
    %s1585 = scalar_lea.vmem [#allocation2], 366
    %v1586 = vld [vmem:[%s1585] ss:$2 sm:$0xff]
    %s1587 = scalar_lea.vmem [#allocation2], 382
    %v1588 = vld [vmem:[%s1587] ss:$2 sm:$0xf]
    %v1589 = vmax.f32 %v1574, %v1578
    %v1590 = vmax.f32 %v1576, %v1580
    %v1591 = vmax.f32 %v1582, %v1586
    %v1592 = vmax.f32 %v1584, %v1588
    %v1593 = vmax.f32 %v1589, %v1591
    %v1594 = vmax.f32 %v1590, %v1592
    %v1595 = vld [vmem:[#allocation13] sm:$0x1]
    %v1597 = vperm.slane %v1595, 0
    %v1599 = vadd.f32 %v1593, %v1597
    %v1600 = vadd.f32 %v1594, %v1597
    %v1601 = vmul.f32 %v1599, 0.01
    %v1602 = vmul.f32 %v1600, 0.01
    %v1603 = vmax.f32 %v1599, %v1601
    %v1604 = vmax.f32 %v1600, %v1602
    %1605 = vst.msk [vmem:[#allocation3 + $0x72] sm:$0xff] %vm1313, %v1603
    %1606 = vst.msk [vmem:[#allocation3 + $0x7a] sm:$0xf] %vm1401, %v1604
    %s1607 = scalar_lea.vmem [#allocation2], 391
    %v1608 = vld [vmem:[%s1607] ss:$2 sm:$0xff]
    %s1609 = scalar_lea.vmem [#allocation2], 407
    %v1610 = vld [vmem:[%s1609] ss:$2 sm:$0xf]
    %s1611 = scalar_lea.vmem [#allocation2], 392
    %v1612 = vld [vmem:[%s1611] ss:$2 sm:$0xff]
    %s1613 = scalar_lea.vmem [#allocation2], 408
    %v1614 = vld [vmem:[%s1613] ss:$2 sm:$0xf]
    %s1615 = scalar_lea.vmem [#allocation2], 417
    %v1616 = vld [vmem:[%s1615] ss:$2 sm:$0xff]
    %s1617 = scalar_lea.vmem [#allocation2], 433
    %v1618 = vld [vmem:[%s1617] ss:$2 sm:$0xf]
    %s1619 = scalar_lea.vmem [#allocation2], 418
    %v1620 = vld [vmem:[%s1619] ss:$2 sm:$0xff]
    %s1621 = scalar_lea.vmem [#allocation2], 434
    %v1622 = vld [vmem:[%s1621] ss:$2 sm:$0xf]
    %v1623 = vmax.f32 %v1608, %v1612
    %v1624 = vmax.f32 %v1610, %v1614
    %v1625 = vmax.f32 %v1616, %v1620
    %v1626 = vmax.f32 %v1618, %v1622
    %v1627 = vmax.f32 %v1623, %v1625
    %v1628 = vmax.f32 %v1624, %v1626
    %v1629 = vld [vmem:[#allocation13] sm:$0x1]
    %v1631 = vperm.slane %v1629, 0
    %v1633 = vadd.f32 %v1627, %v1631
    %v1634 = vadd.f32 %v1628, %v1631
    %v1635 = vmul.f32 %v1633, 0.01
    %v1636 = vmul.f32 %v1634, 0.01
    %v1637 = vmax.f32 %v1633, %v1635
    %v1638 = vmax.f32 %v1634, %v1636
    %1639 = vst.msk [vmem:[#allocation3 + $0x80] sm:$0xff] %vm1313, %v1637
    %1640 = vst.msk [vmem:[#allocation3 + $0x88] sm:$0xf] %vm1401, %v1638
    %s1641 = scalar_lea.vmem [#allocation2], 443
    %v1642 = vld [vmem:[%s1641] ss:$2 sm:$0xff]
    %s1643 = scalar_lea.vmem [#allocation2], 459
    %v1644 = vld [vmem:[%s1643] ss:$2 sm:$0xf]
    %s1645 = scalar_lea.vmem [#allocation2], 444
    %v1646 = vld [vmem:[%s1645] ss:$2 sm:$0xff]
    %s1647 = scalar_lea.vmem [#allocation2], 460
    %v1648 = vld [vmem:[%s1647] ss:$2 sm:$0xf]
    %s1649 = scalar_lea.vmem [#allocation2], 469
    %v1650 = vld [vmem:[%s1649] ss:$2 sm:$0xff]
    %s1651 = scalar_lea.vmem [#allocation2], 485
    %v1652 = vld [vmem:[%s1651] ss:$2 sm:$0xf]
    %s1653 = scalar_lea.vmem [#allocation2], 470
    %v1654 = vld [vmem:[%s1653] ss:$2 sm:$0xff]
    %s1655 = scalar_lea.vmem [#allocation2], 486
    %v1656 = vld [vmem:[%s1655] ss:$2 sm:$0xf]
    %v1657 = vmax.f32 %v1642, %v1646
    %v1658 = vmax.f32 %v1644, %v1648
    %v1659 = vmax.f32 %v1650, %v1654
    %v1660 = vmax.f32 %v1652, %v1656
    %v1661 = vmax.f32 %v1657, %v1659
    %v1662 = vmax.f32 %v1658, %v1660
    %v1663 = vld [vmem:[#allocation13] sm:$0x1]
    %v1665 = vperm.slane %v1663, 0
    %v1667 = vadd.f32 %v1661, %v1665
    %v1668 = vadd.f32 %v1662, %v1665
    %v1669 = vmul.f32 %v1667, 0.01
    %v1670 = vmul.f32 %v1668, 0.01
    %v1671 = vmax.f32 %v1667, %v1669
    %v1672 = vmax.f32 %v1668, %v1670
    %1673 = vst.msk [vmem:[#allocation3 + $0x8e] sm:$0xff] %vm1313, %v1671
    %1674 = vst.msk [vmem:[#allocation3 + $0x96] sm:$0xf] %vm1401, %v1672
    %s1675 = scalar_lea.vmem [#allocation2], 495
    %v1676 = vld [vmem:[%s1675] ss:$2 sm:$0xff]
    %s1677 = scalar_lea.vmem [#allocation2], 511
    %v1678 = vld [vmem:[%s1677] ss:$2 sm:$0xf]
    %s1679 = scalar_lea.vmem [#allocation2], 496
    %v1680 = vld [vmem:[%s1679] ss:$2 sm:$0xff]
    %s1681 = scalar_lea.vmem [#allocation2], 512
    %v1682 = vld [vmem:[%s1681] ss:$2 sm:$0xf]
    %s1683 = scalar_lea.vmem [#allocation2], 521
    %v1684 = vld [vmem:[%s1683] ss:$2 sm:$0xff]
    %s1685 = scalar_lea.vmem [#allocation2], 537
    %v1686 = vld [vmem:[%s1685] ss:$2 sm:$0xf]
    %s1687 = scalar_lea.vmem [#allocation2], 522
    %v1688 = vld [vmem:[%s1687] ss:$2 sm:$0xff]
    %s1689 = scalar_lea.vmem [#allocation2], 538
    %v1690 = vld [vmem:[%s1689] ss:$2 sm:$0xf]
    %v1691 = vmax.f32 %v1676, %v1680
    %v1692 = vmax.f32 %v1678, %v1682
    %v1693 = vmax.f32 %v1684, %v1688
    %v1694 = vmax.f32 %v1686, %v1690
    %v1695 = vmax.f32 %v1691, %v1693
    %v1696 = vmax.f32 %v1692, %v1694
    %v1697 = vld [vmem:[#allocation13] sm:$0x1]
    %v1699 = vperm.slane %v1697, 0
    %v1701 = vadd.f32 %v1695, %v1699
    %v1702 = vadd.f32 %v1696, %v1699
    %v1703 = vmul.f32 %v1701, 0.01
    %v1704 = vmul.f32 %v1702, 0.01
    %v1705 = vmax.f32 %v1701, %v1703
    %v1706 = vmax.f32 %v1702, %v1704
    %1707 = vst.msk [vmem:[#allocation3 + $0x9c] sm:$0xff] %vm1313, %v1705
    %1708 = vst.msk [vmem:[#allocation3 + $0xa4] sm:$0xf] %vm1401, %v1706
    %s1709 = scalar_lea.vmem [#allocation2], 547
    %v1710 = vld [vmem:[%s1709] ss:$2 sm:$0xff]
    %s1711 = scalar_lea.vmem [#allocation2], 563
    %v1712 = vld [vmem:[%s1711] ss:$2 sm:$0xf]
    %s1713 = scalar_lea.vmem [#allocation2], 548
    %v1714 = vld [vmem:[%s1713] ss:$2 sm:$0xff]
    %s1715 = scalar_lea.vmem [#allocation2], 564
    %v1716 = vld [vmem:[%s1715] ss:$2 sm:$0xf]
    %s1717 = scalar_lea.vmem [#allocation2], 573
    %v1718 = vld [vmem:[%s1717] ss:$2 sm:$0xff]
    %s1719 = scalar_lea.vmem [#allocation2], 589
    %v1720 = vld [vmem:[%s1719] ss:$2 sm:$0xf]
    %s1721 = scalar_lea.vmem [#allocation2], 574
    %v1722 = vld [vmem:[%s1721] ss:$2 sm:$0xff]
    %s1723 = scalar_lea.vmem [#allocation2], 590
    %v1724 = vld [vmem:[%s1723] ss:$2 sm:$0xf]
    %v1725 = vmax.f32 %v1710, %v1714
    %v1726 = vmax.f32 %v1712, %v1716
    %v1727 = vmax.f32 %v1718, %v1722
    %v1728 = vmax.f32 %v1720, %v1724
    %v1729 = vmax.f32 %v1725, %v1727
    %v1730 = vmax.f32 %v1726, %v1728
    %v1731 = vld [vmem:[#allocation13] sm:$0x1]
    %v1733 = vperm.slane %v1731, 0
    %v1735 = vadd.f32 %v1729, %v1733
    %v1736 = vadd.f32 %v1730, %v1733
    %v1737 = vmul.f32 %v1735, 0.01
    %v1738 = vmul.f32 %v1736, 0.01
    %v1739 = vmax.f32 %v1735, %v1737
    %v1740 = vmax.f32 %v1736, %v1738
    %1741 = vst.msk [vmem:[#allocation3 + $0xaa] sm:$0xff] %vm1313, %v1739
    %1742 = vst.msk [vmem:[#allocation3 + $0xb2] sm:$0xf] %vm1401, %v1740
    %s1743 = scalar_lea.vmem [#allocation2], 599
    %v1744 = vld [vmem:[%s1743] ss:$2 sm:$0xff]
    %s1745 = scalar_lea.vmem [#allocation2], 615
    %v1746 = vld [vmem:[%s1745] ss:$2 sm:$0xf]
    %s1747 = scalar_lea.vmem [#allocation2], 600
    %v1748 = vld [vmem:[%s1747] ss:$2 sm:$0xff]
    %s1749 = scalar_lea.vmem [#allocation2], 616
    %v1750 = vld [vmem:[%s1749] ss:$2 sm:$0xf]
    %s1751 = scalar_lea.vmem [#allocation2], 625
    %v1752 = vld [vmem:[%s1751] ss:$2 sm:$0xff]
    %s1753 = scalar_lea.vmem [#allocation2], 641
    %v1754 = vld [vmem:[%s1753] ss:$2 sm:$0xf]
    %s1755 = scalar_lea.vmem [#allocation2], 626
    %v1756 = vld [vmem:[%s1755] ss:$2 sm:$0xff]
    %s1757 = scalar_lea.vmem [#allocation2], 642
    %v1758 = vld [vmem:[%s1757] ss:$2 sm:$0xf]
    %v1759 = vmax.f32 %v1744, %v1748
    %v1760 = vmax.f32 %v1746, %v1750
    %v1761 = vmax.f32 %v1752, %v1756
    %v1762 = vmax.f32 %v1754, %v1758
    %v1763 = vmax.f32 %v1759, %v1761
    %v1764 = vmax.f32 %v1760, %v1762
    %v1765 = vld [vmem:[#allocation13] sm:$0x1]
    %v1767 = vperm.slane %v1765, 0
    %v1769 = vadd.f32 %v1763, %v1767
    %v1770 = vadd.f32 %v1764, %v1767
    %v1771 = vmul.f32 %v1769, 0.01
    %v1772 = vmul.f32 %v1770, 0.01
    %v1773 = vmax.f32 %v1769, %v1771
    %v1774 = vmax.f32 %v1770, %v1772
    %1775 = vst.msk [vmem:[#allocation3 + $0xb8] sm:$0xff] %vm1313, %v1773
    %1776 = vst.msk [vmem:[#allocation3 + $0xc0] sm:$0xf] %vm1401, %v1774
    %s1777 = scalar_lea.vmem [#allocation2], 703
    %v1778 = vld [vmem:[%s1777] ss:$2 sm:$0xff]
    %s1779 = scalar_lea.vmem [#allocation2], 719
    %v1780 = vld [vmem:[%s1779] ss:$2 sm:$0xf]
    %s1781 = scalar_lea.vmem [#allocation2], 704
    %v1782 = vld [vmem:[%s1781] ss:$2 sm:$0xff]
    %s1783 = scalar_lea.vmem [#allocation2], 720
    %v1784 = vld [vmem:[%s1783] ss:$2 sm:$0xf]
    %s1785 = scalar_lea.vmem [#allocation2], 729
    %v1786 = vld [vmem:[%s1785] ss:$2 sm:$0xff]
    %s1787 = scalar_lea.vmem [#allocation2], 745
    %v1788 = vld [vmem:[%s1787] ss:$2 sm:$0xf]
    %s1789 = scalar_lea.vmem [#allocation2], 730
    %v1790 = vld [vmem:[%s1789] ss:$2 sm:$0xff]
    %s1791 = scalar_lea.vmem [#allocation2], 746
    %v1792 = vld [vmem:[%s1791] ss:$2 sm:$0xf]
    %v1793 = vmax.f32 %v1778, %v1782
    %v1794 = vmax.f32 %v1780, %v1784
    %v1795 = vmax.f32 %v1786, %v1790
    %v1796 = vmax.f32 %v1788, %v1792
    %v1797 = vmax.f32 %v1793, %v1795
    %v1798 = vmax.f32 %v1794, %v1796
    %v1799 = vld [vmem:[#allocation13] sm:$0x1]
    %v1801 = vperm.slane %v1799, 0
    %v1803 = vadd.f32 %v1797, %v1801
    %v1804 = vadd.f32 %v1798, %v1801
    %v1805 = vmul.f32 %v1803, 0.01
    %v1806 = vmul.f32 %v1804, 0.01
    %v1807 = vmax.f32 %v1803, %v1805
    %v1808 = vmax.f32 %v1804, %v1806
    %1809 = vst.msk [vmem:[#allocation3 + $0xe2] sm:$0xff] %vm1313, %v1807
    %1810 = vst.msk [vmem:[#allocation3 + $0xea] sm:$0xf] %vm1401, %v1808
    %s1811 = scalar_lea.vmem [#allocation2], 755
    %v1812 = vld [vmem:[%s1811] ss:$2 sm:$0xff]
    %s1813 = scalar_lea.vmem [#allocation2], 771
    %v1814 = vld [vmem:[%s1813] ss:$2 sm:$0xf]
    %s1815 = scalar_lea.vmem [#allocation2], 756
    %v1816 = vld [vmem:[%s1815] ss:$2 sm:$0xff]
    %s1817 = scalar_lea.vmem [#allocation2], 772
    %v1818 = vld [vmem:[%s1817] ss:$2 sm:$0xf]
    %s1819 = scalar_lea.vmem [#allocation2], 781
    %v1820 = vld [vmem:[%s1819] ss:$2 sm:$0xff]
    %s1821 = scalar_lea.vmem [#allocation2], 797
    %v1822 = vld [vmem:[%s1821] ss:$2 sm:$0xf]
    %s1823 = scalar_lea.vmem [#allocation2], 782
    %v1824 = vld [vmem:[%s1823] ss:$2 sm:$0xff]
    %s1825 = scalar_lea.vmem [#allocation2], 798
    %v1826 = vld [vmem:[%s1825] ss:$2 sm:$0xf]
    %v1827 = vmax.f32 %v1812, %v1816
    %v1828 = vmax.f32 %v1814, %v1818
    %v1829 = vmax.f32 %v1820, %v1824
    %v1830 = vmax.f32 %v1822, %v1826
    %v1831 = vmax.f32 %v1827, %v1829
    %v1832 = vmax.f32 %v1828, %v1830
    %v1833 = vld [vmem:[#allocation13] sm:$0x1]
    %v1835 = vperm.slane %v1833, 0
    %v1837 = vadd.f32 %v1831, %v1835
    %v1838 = vadd.f32 %v1832, %v1835
    %v1839 = vmul.f32 %v1837, 0.01
    %v1840 = vmul.f32 %v1838, 0.01
    %v1841 = vmax.f32 %v1837, %v1839
    %v1842 = vmax.f32 %v1838, %v1840
    %1843 = vst.msk [vmem:[#allocation3 + $0xf0] sm:$0xff] %vm1313, %v1841
    %1844 = vst.msk [vmem:[#allocation3 + $0xf8] sm:$0xf] %vm1401, %v1842
    %s1845 = scalar_lea.vmem [#allocation2], 807
    %v1846 = vld [vmem:[%s1845] ss:$2 sm:$0xff]
    %s1847 = scalar_lea.vmem [#allocation2], 823
    %v1848 = vld [vmem:[%s1847] ss:$2 sm:$0xf]
    %s1849 = scalar_lea.vmem [#allocation2], 808
    %v1850 = vld [vmem:[%s1849] ss:$2 sm:$0xff]
    %s1851 = scalar_lea.vmem [#allocation2], 824
    %v1852 = vld [vmem:[%s1851] ss:$2 sm:$0xf]
    %s1853 = scalar_lea.vmem [#allocation2], 833
    %v1854 = vld [vmem:[%s1853] ss:$2 sm:$0xff]
    %s1855 = scalar_lea.vmem [#allocation2], 849
    %v1856 = vld [vmem:[%s1855] ss:$2 sm:$0xf]
    %s1857 = scalar_lea.vmem [#allocation2], 834
    %v1858 = vld [vmem:[%s1857] ss:$2 sm:$0xff]
    %s1859 = scalar_lea.vmem [#allocation2], 850
    %v1860 = vld [vmem:[%s1859] ss:$2 sm:$0xf]
    %v1861 = vmax.f32 %v1846, %v1850
    %v1862 = vmax.f32 %v1848, %v1852
    %v1863 = vmax.f32 %v1854, %v1858
    %v1864 = vmax.f32 %v1856, %v1860
    %v1865 = vmax.f32 %v1861, %v1863
    %v1866 = vmax.f32 %v1862, %v1864
    %v1867 = vld [vmem:[#allocation13] sm:$0x1]
    %v1869 = vperm.slane %v1867, 0
    %v1871 = vadd.f32 %v1865, %v1869
    %v1872 = vadd.f32 %v1866, %v1869
    %v1873 = vmul.f32 %v1871, 0.01
    %v1874 = vmul.f32 %v1872, 0.01
    %v1875 = vmax.f32 %v1871, %v1873
    %v1876 = vmax.f32 %v1872, %v1874
    %1877 = vst.msk [vmem:[#allocation3 + $0xfe] sm:$0xff] %vm1313, %v1875
    %1878 = vst.msk [vmem:[#allocation3 + $0x106] sm:$0xf] %vm1401, %v1876
    %s1879 = scalar_lea.vmem [#allocation2], 859
    %v1880 = vld [vmem:[%s1879] ss:$2 sm:$0xff]
    %s1881 = scalar_lea.vmem [#allocation2], 875
    %v1882 = vld [vmem:[%s1881] ss:$2 sm:$0xf]
    %s1883 = scalar_lea.vmem [#allocation2], 860
    %v1884 = vld [vmem:[%s1883] ss:$2 sm:$0xff]
    %s1885 = scalar_lea.vmem [#allocation2], 876
    %v1886 = vld [vmem:[%s1885] ss:$2 sm:$0xf]
    %s1887 = scalar_lea.vmem [#allocation2], 885
    %v1888 = vld [vmem:[%s1887] ss:$2 sm:$0xff]
    %s1889 = scalar_lea.vmem [#allocation2], 901
    %v1890 = vld [vmem:[%s1889] ss:$2 sm:$0xf]
    %s1891 = scalar_lea.vmem [#allocation2], 886
    %v1892 = vld [vmem:[%s1891] ss:$2 sm:$0xff]
    %s1893 = scalar_lea.vmem [#allocation2], 902
    %v1894 = vld [vmem:[%s1893] ss:$2 sm:$0xf]
    %v1895 = vmax.f32 %v1880, %v1884
    %v1896 = vmax.f32 %v1882, %v1886
    %v1897 = vmax.f32 %v1888, %v1892
    %v1898 = vmax.f32 %v1890, %v1894
    %v1899 = vmax.f32 %v1895, %v1897
    %v1900 = vmax.f32 %v1896, %v1898
    %v1901 = vld [vmem:[#allocation13] sm:$0x1]
    %v1903 = vperm.slane %v1901, 0
    %v1905 = vadd.f32 %v1899, %v1903
    %v1906 = vadd.f32 %v1900, %v1903
    %v1907 = vmul.f32 %v1905, 0.01
    %v1908 = vmul.f32 %v1906, 0.01
    %v1909 = vmax.f32 %v1905, %v1907
    %v1910 = vmax.f32 %v1906, %v1908
    %1911 = vst.msk [vmem:[#allocation3 + $0x10c] sm:$0xff] %vm1313, %v1909
    %1912 = vst.msk [vmem:[#allocation3 + $0x114] sm:$0xf] %vm1401, %v1910
    %s1913 = scalar_lea.vmem [#allocation2], 911
    %v1914 = vld [vmem:[%s1913] ss:$2 sm:$0xff]
    %s1915 = scalar_lea.vmem [#allocation2], 927
    %v1916 = vld [vmem:[%s1915] ss:$2 sm:$0xf]
    %s1917 = scalar_lea.vmem [#allocation2], 912
    %v1918 = vld [vmem:[%s1917] ss:$2 sm:$0xff]
    %s1919 = scalar_lea.vmem [#allocation2], 928
    %v1920 = vld [vmem:[%s1919] ss:$2 sm:$0xf]
    %s1921 = scalar_lea.vmem [#allocation2], 937
    %v1922 = vld [vmem:[%s1921] ss:$2 sm:$0xff]
    %s1923 = scalar_lea.vmem [#allocation2], 953
    %v1924 = vld [vmem:[%s1923] ss:$2 sm:$0xf]
    %s1925 = scalar_lea.vmem [#allocation2], 938
    %v1926 = vld [vmem:[%s1925] ss:$2 sm:$0xff]
    %s1927 = scalar_lea.vmem [#allocation2], 954
    %v1928 = vld [vmem:[%s1927] ss:$2 sm:$0xf]
    %v1929 = vmax.f32 %v1914, %v1918
    %v1930 = vmax.f32 %v1916, %v1920
    %v1931 = vmax.f32 %v1922, %v1926
    %v1932 = vmax.f32 %v1924, %v1928
    %v1933 = vmax.f32 %v1929, %v1931
    %v1934 = vmax.f32 %v1930, %v1932
    %v1935 = vld [vmem:[#allocation13] sm:$0x1]
    %v1937 = vperm.slane %v1935, 0
    %v1939 = vadd.f32 %v1933, %v1937
    %v1940 = vadd.f32 %v1934, %v1937
    %v1941 = vmul.f32 %v1939, 0.01
    %v1942 = vmul.f32 %v1940, 0.01
    %v1943 = vmax.f32 %v1939, %v1941
    %v1944 = vmax.f32 %v1940, %v1942
    %1945 = vst.msk [vmem:[#allocation3 + $0x11a] sm:$0xff] %vm1313, %v1943
    %1946 = vst.msk [vmem:[#allocation3 + $0x122] sm:$0xf] %vm1401, %v1944
    %s1947 = scalar_lea.vmem [#allocation2], 963
    %v1948 = vld [vmem:[%s1947] ss:$2 sm:$0xff]
    %s1949 = scalar_lea.vmem [#allocation2], 979
    %v1950 = vld [vmem:[%s1949] ss:$2 sm:$0xf]
    %s1951 = scalar_lea.vmem [#allocation2], 964
    %v1952 = vld [vmem:[%s1951] ss:$2 sm:$0xff]
    %s1953 = scalar_lea.vmem [#allocation2], 980
    %v1954 = vld [vmem:[%s1953] ss:$2 sm:$0xf]
    %s1955 = scalar_lea.vmem [#allocation2], 989
    %v1956 = vld [vmem:[%s1955] ss:$2 sm:$0xff]
    %s1957 = scalar_lea.vmem [#allocation2], 1005
    %v1958 = vld [vmem:[%s1957] ss:$2 sm:$0xf]
    %s1959 = scalar_lea.vmem [#allocation2], 990
    %v1960 = vld [vmem:[%s1959] ss:$2 sm:$0xff]
    %s1961 = scalar_lea.vmem [#allocation2], 1006
    %v1962 = vld [vmem:[%s1961] ss:$2 sm:$0xf]
    %v1963 = vmax.f32 %v1948, %v1952
    %v1964 = vmax.f32 %v1950, %v1954
    %v1965 = vmax.f32 %v1956, %v1960
    %v1966 = vmax.f32 %v1958, %v1962
    %v1967 = vmax.f32 %v1963, %v1965
    %v1968 = vmax.f32 %v1964, %v1966
    %v1969 = vld [vmem:[#allocation13] sm:$0x1]
    %v1971 = vperm.slane %v1969, 0
    %v1973 = vadd.f32 %v1967, %v1971
    %v1974 = vadd.f32 %v1968, %v1971
    %v1975 = vmul.f32 %v1973, 0.01
    %v1976 = vmul.f32 %v1974, 0.01
    %v1977 = vmax.f32 %v1973, %v1975
    %v1978 = vmax.f32 %v1974, %v1976
    %1979 = vst.msk [vmem:[#allocation3 + $0x128] sm:$0xff] %vm1313, %v1977
    %1980 = vst.msk [vmem:[#allocation3 + $0x130] sm:$0xf] %vm1401, %v1978
    %s1981 = scalar_lea.vmem [#allocation2], 1015
    %v1982 = vld [vmem:[%s1981] ss:$2 sm:$0xff]
    %s1983 = scalar_lea.vmem [#allocation2], 1031
    %v1984 = vld [vmem:[%s1983] ss:$2 sm:$0xf]
    %s1985 = scalar_lea.vmem [#allocation2], 1016
    %v1986 = vld [vmem:[%s1985] ss:$2 sm:$0xff]
    %s1987 = scalar_lea.vmem [#allocation2], 1032
    %v1988 = vld [vmem:[%s1987] ss:$2 sm:$0xf]
    %s1989 = scalar_lea.vmem [#allocation2], 1041
    %v1990 = vld [vmem:[%s1989] ss:$2 sm:$0xff]
    %s1991 = scalar_lea.vmem [#allocation2], 1057
    %v1992 = vld [vmem:[%s1991] ss:$2 sm:$0xf]
    %s1993 = scalar_lea.vmem [#allocation2], 1042
    %v1994 = vld [vmem:[%s1993] ss:$2 sm:$0xff]
    %s1995 = scalar_lea.vmem [#allocation2], 1058
    %v1996 = vld [vmem:[%s1995] ss:$2 sm:$0xf]
    %v1997 = vmax.f32 %v1982, %v1986
    %v1998 = vmax.f32 %v1984, %v1988
    %v1999 = vmax.f32 %v1990, %v1994
    %v2000 = vmax.f32 %v1992, %v1996
    %v2001 = vmax.f32 %v1997, %v1999
    %v2002 = vmax.f32 %v1998, %v2000
    %v2003 = vld [vmem:[#allocation13] sm:$0x1]
    %v2005 = vperm.slane %v2003, 0
    %v2007 = vadd.f32 %v2001, %v2005
    %v2008 = vadd.f32 %v2002, %v2005
    %v2009 = vmul.f32 %v2007, 0.01
    %v2010 = vmul.f32 %v2008, 0.01
    %v2011 = vmax.f32 %v2007, %v2009
    %v2012 = vmax.f32 %v2008, %v2010
    %2013 = vst.msk [vmem:[#allocation3 + $0x136] sm:$0xff] %vm1313, %v2011
    %2014 = vst.msk [vmem:[#allocation3 + $0x13e] sm:$0xf] %vm1401, %v2012
    %s2015 = scalar_lea.vmem [#allocation2], 1067
    %v2016 = vld [vmem:[%s2015] ss:$2 sm:$0xff]
    %s2017 = scalar_lea.vmem [#allocation2], 1083
    %v2018 = vld [vmem:[%s2017] ss:$2 sm:$0xf]
    %s2019 = scalar_lea.vmem [#allocation2], 1068
    %v2020 = vld [vmem:[%s2019] ss:$2 sm:$0xff]
    %s2021 = scalar_lea.vmem [#allocation2], 1084
    %v2022 = vld [vmem:[%s2021] ss:$2 sm:$0xf]
    %s2023 = scalar_lea.vmem [#allocation2], 1093
    %v2024 = vld [vmem:[%s2023] ss:$2 sm:$0xff]
    %s2025 = scalar_lea.vmem [#allocation2], 1109
    %v2026 = vld [vmem:[%s2025] ss:$2 sm:$0xf]
    %s2027 = scalar_lea.vmem [#allocation2], 1094
    %v2028 = vld [vmem:[%s2027] ss:$2 sm:$0xff]
    %s2029 = scalar_lea.vmem [#allocation2], 1110
    %v2030 = vld [vmem:[%s2029] ss:$2 sm:$0xf]
    %v2031 = vmax.f32 %v2016, %v2020
    %v2032 = vmax.f32 %v2018, %v2022
    %v2033 = vmax.f32 %v2024, %v2028
    %v2034 = vmax.f32 %v2026, %v2030
    %v2035 = vmax.f32 %v2031, %v2033
    %v2036 = vmax.f32 %v2032, %v2034
    %v2037 = vld [vmem:[#allocation13] sm:$0x1]
    %v2039 = vperm.slane %v2037, 0
    %v2041 = vadd.f32 %v2035, %v2039
    %v2042 = vadd.f32 %v2036, %v2039
    %v2043 = vmul.f32 %v2041, 0.01
    %v2044 = vmul.f32 %v2042, 0.01
    %v2045 = vmax.f32 %v2041, %v2043
    %v2046 = vmax.f32 %v2042, %v2044
    %2047 = vst.msk [vmem:[#allocation3 + $0x144] sm:$0xff] %vm1313, %v2045
    %2048 = vst.msk [vmem:[#allocation3 + $0x14c] sm:$0xf] %vm1401, %v2046
    %s2049 = scalar_lea.vmem [#allocation2], 1119
    %v2050 = vld [vmem:[%s2049] ss:$2 sm:$0xff]
    %s2051 = scalar_lea.vmem [#allocation2], 1135
    %v2052 = vld [vmem:[%s2051] ss:$2 sm:$0xf]
    %s2053 = scalar_lea.vmem [#allocation2], 1120
    %v2054 = vld [vmem:[%s2053] ss:$2 sm:$0xff]
    %s2055 = scalar_lea.vmem [#allocation2], 1136
    %v2056 = vld [vmem:[%s2055] ss:$2 sm:$0xf]
    %s2057 = scalar_lea.vmem [#allocation2], 1145
    %v2058 = vld [vmem:[%s2057] ss:$2 sm:$0xff]
    %s2059 = scalar_lea.vmem [#allocation2], 1161
    %v2060 = vld [vmem:[%s2059] ss:$2 sm:$0xf]
    %s2061 = scalar_lea.vmem [#allocation2], 1146
    %v2062 = vld [vmem:[%s2061] ss:$2 sm:$0xff]
    %s2063 = scalar_lea.vmem [#allocation2], 1162
    %v2064 = vld [vmem:[%s2063] ss:$2 sm:$0xf]
    %v2065 = vmax.f32 %v2050, %v2054
    %v2066 = vmax.f32 %v2052, %v2056
    %v2067 = vmax.f32 %v2058, %v2062
    %v2068 = vmax.f32 %v2060, %v2064
    %v2069 = vmax.f32 %v2065, %v2067
    %v2070 = vmax.f32 %v2066, %v2068
    %v2071 = vld [vmem:[#allocation13] sm:$0x1]
    %v2073 = vperm.slane %v2071, 0
    %v2075 = vadd.f32 %v2069, %v2073
    %v2076 = vadd.f32 %v2070, %v2073
    %v2077 = vmul.f32 %v2075, 0.01
    %v2078 = vmul.f32 %v2076, 0.01
    %v2079 = vmax.f32 %v2075, %v2077
    %v2080 = vmax.f32 %v2076, %v2078
    %2081 = vst.msk [vmem:[#allocation3 + $0x152] sm:$0xff] %vm1313, %v2079
    %2082 = vst.msk [vmem:[#allocation3 + $0x15a] sm:$0xf] %vm1401, %v2080
    %s2083 = scalar_lea.vmem [#allocation2], 1171
    %v2084 = vld [vmem:[%s2083] ss:$2 sm:$0xff]
    %s2085 = scalar_lea.vmem [#allocation2], 1187
    %v2086 = vld [vmem:[%s2085] ss:$2 sm:$0xf]
    %s2087 = scalar_lea.vmem [#allocation2], 1172
    %v2088 = vld [vmem:[%s2087] ss:$2 sm:$0xff]
    %s2089 = scalar_lea.vmem [#allocation2], 1188
    %v2090 = vld [vmem:[%s2089] ss:$2 sm:$0xf]
    %s2091 = scalar_lea.vmem [#allocation2], 1197
    %v2092 = vld [vmem:[%s2091] ss:$2 sm:$0xff]
    %s2093 = scalar_lea.vmem [#allocation2], 1213
    %v2094 = vld [vmem:[%s2093] ss:$2 sm:$0xf]
    %s2095 = scalar_lea.vmem [#allocation2], 1198
    %v2096 = vld [vmem:[%s2095] ss:$2 sm:$0xff]
    %s2097 = scalar_lea.vmem [#allocation2], 1214
    %v2098 = vld [vmem:[%s2097] ss:$2 sm:$0xf]
    %v2099 = vmax.f32 %v2084, %v2088
    %v2100 = vmax.f32 %v2086, %v2090
    %v2101 = vmax.f32 %v2092, %v2096
    %v2102 = vmax.f32 %v2094, %v2098
    %v2103 = vmax.f32 %v2099, %v2101
    %v2104 = vmax.f32 %v2100, %v2102
    %v2105 = vld [vmem:[#allocation13] sm:$0x1]
    %v2107 = vperm.slane %v2105, 0
    %v2109 = vadd.f32 %v2103, %v2107
    %v2110 = vadd.f32 %v2104, %v2107
    %v2111 = vmul.f32 %v2109, 0.01
    %v2112 = vmul.f32 %v2110, 0.01
    %v2113 = vmax.f32 %v2109, %v2111
    %v2114 = vmax.f32 %v2110, %v2112
    %2115 = vst.msk [vmem:[#allocation3 + $0x160] sm:$0xff] %vm1313, %v2113
    %2116 = vst.msk [vmem:[#allocation3 + $0x168] sm:$0xf] %vm1401, %v2114
    %s2117 = scalar_lea.vmem [#allocation2], 1223
    %v2118 = vld [vmem:[%s2117] ss:$2 sm:$0xff]
    %s2119 = scalar_lea.vmem [#allocation2], 1239
    %v2120 = vld [vmem:[%s2119] ss:$2 sm:$0xf]
    %s2121 = scalar_lea.vmem [#allocation2], 1224
    %v2122 = vld [vmem:[%s2121] ss:$2 sm:$0xff]
    %s2123 = scalar_lea.vmem [#allocation2], 1240
    %v2124 = vld [vmem:[%s2123] ss:$2 sm:$0xf]
    %s2125 = scalar_lea.vmem [#allocation2], 1249
    %v2126 = vld [vmem:[%s2125] ss:$2 sm:$0xff]
    %s2127 = scalar_lea.vmem [#allocation2], 1265
    %v2128 = vld [vmem:[%s2127] ss:$2 sm:$0xf]
    %s2129 = scalar_lea.vmem [#allocation2], 1250
    %v2130 = vld [vmem:[%s2129] ss:$2 sm:$0xff]
    %s2131 = scalar_lea.vmem [#allocation2], 1266
    %v2132 = vld [vmem:[%s2131] ss:$2 sm:$0xf]
    %v2133 = vmax.f32 %v2118, %v2122
    %v2134 = vmax.f32 %v2120, %v2124
    %v2135 = vmax.f32 %v2126, %v2130
    %v2136 = vmax.f32 %v2128, %v2132
    %v2137 = vmax.f32 %v2133, %v2135
    %v2138 = vmax.f32 %v2134, %v2136
    %v2139 = vld [vmem:[#allocation13] sm:$0x1]
    %v2141 = vperm.slane %v2139, 0
    %v2143 = vadd.f32 %v2137, %v2141
    %v2144 = vadd.f32 %v2138, %v2141
    %v2145 = vmul.f32 %v2143, 0.01
    %v2146 = vmul.f32 %v2144, 0.01
    %v2147 = vmax.f32 %v2143, %v2145
    %v2148 = vmax.f32 %v2144, %v2146
    %2149 = vst.msk [vmem:[#allocation3 + $0x16e] sm:$0xff] %vm1313, %v2147
    %2150 = vst.msk [vmem:[#allocation3 + $0x176] sm:$0xf] %vm1401, %v2148
    %s2151 = scalar_lea.vmem [#allocation2], 1275
    %v2152 = vld [vmem:[%s2151] ss:$2 sm:$0xff]
    %s2153 = scalar_lea.vmem [#allocation2], 1291
    %v2154 = vld [vmem:[%s2153] ss:$2 sm:$0xf]
    %s2155 = scalar_lea.vmem [#allocation2], 1276
    %v2156 = vld [vmem:[%s2155] ss:$2 sm:$0xff]
    %s2157 = scalar_lea.vmem [#allocation2], 1292
    %v2158 = vld [vmem:[%s2157] ss:$2 sm:$0xf]
    %s2159 = scalar_lea.vmem [#allocation2], 1301
    %v2160 = vld [vmem:[%s2159] ss:$2 sm:$0xff]
    %s2161 = scalar_lea.vmem [#allocation2], 1317
    %v2162 = vld [vmem:[%s2161] ss:$2 sm:$0xf]
    %s2163 = scalar_lea.vmem [#allocation2], 1302
    %v2164 = vld [vmem:[%s2163] ss:$2 sm:$0xff]
    %s2165 = scalar_lea.vmem [#allocation2], 1318
    %v2166 = vld [vmem:[%s2165] ss:$2 sm:$0xf]
    %v2167 = vmax.f32 %v2152, %v2156
    %v2168 = vmax.f32 %v2154, %v2158
    %v2169 = vmax.f32 %v2160, %v2164
    %v2170 = vmax.f32 %v2162, %v2166
    %v2171 = vmax.f32 %v2167, %v2169
    %v2172 = vmax.f32 %v2168, %v2170
    %v2173 = vld [vmem:[#allocation13] sm:$0x1]
    %v2175 = vperm.slane %v2173, 0
    %v2177 = vadd.f32 %v2171, %v2175
    %v2178 = vadd.f32 %v2172, %v2175
    %v2179 = vmul.f32 %v2177, 0.01
    %v2180 = vmul.f32 %v2178, 0.01
    %v2181 = vmax.f32 %v2177, %v2179
    %v2182 = vmax.f32 %v2178, %v2180
    %2183 = vst.msk [vmem:[#allocation3 + $0x17c] sm:$0xff] %vm1313, %v2181
    %2184 = vst.msk [vmem:[#allocation3 + $0x184] sm:$0xf] %vm1401, %v2182
    loop: start=0, step=1, limit=7
    $region85: #{model_forward.1} parent=1 // loop_pre_header
      _
    $region86: #{model_forward.1} parent=1 // loop_header
      %s2186 = sphi 0, %s2190
      %p2187 = scmp.ge.s32.totalorder %s2186, 7
    $region87: #{model_forward.1} parent=1 // loop_header_branch
      %2189 = sbr.rel (%p2187) target = $region91
    $region88: #{model_forward.1} parent=1 // loop_body
      %s2191 = smul.u32 %s2186, 56
      %s2192 = scalar_lea.vmem [#allocation3], %s2191
      %v2193 = vld [vmem:[%s2192] sm:$0xff]
      %v2194 = vld [vmem:[%s2192 + $0x8] sm:$0xff]
      %v2195 = vld [vmem:[%s2192 + $0x10] sm:$0xff]
      %v2196 = vld [vmem:[%s2192 + $0x18] sm:$0xff]
      %v2197 = vld [vmem:[%s2192 + $0x20] sm:$0xff]
      %v2198 = vld [vmem:[%s2192 + $0x28] sm:$0xff]
      %v2199 = vld [vmem:[%s2192 + $0x30] sm:$0xff]
      %v2200 = vld [vmem:[#allocation15] sm:$0xff]
      %v2201 = vld [vmem:[#allocation15 + $0x8] sm:$0xff]
      %v2202 = vld [vmem:[#allocation15 + $0x10] sm:$0xff]
      %v2203 = vld [vmem:[#allocation15 + $0x18] sm:$0xff]
      %s2204 = sadd.s32 %s2191, 1
      %s2205 = scalar_lea.vmem [#allocation3], %s2204
      %v2206 = vld [vmem:[%s2205] sm:$0xff]
      %v2207 = vld [vmem:[%s2205 + $0x8] sm:$0xff]
      %v2208 = vld [vmem:[%s2205 + $0x10] sm:$0xff]
      %v2209 = vld [vmem:[%s2205 + $0x18] sm:$0xff]
      %v2210 = vld [vmem:[%s2205 + $0x20] sm:$0xff]
      %v2211 = vld [vmem:[%s2205 + $0x28] sm:$0xff]
      %v2212 = vld [vmem:[%s2205 + $0x30] sm:$0xff]
      %s2213 = scalar_lea.vmem [#allocation15], 32
      %v2214 = vld [vmem:[%s2213] sm:$0xff]
      %v2215 = vld [vmem:[%s2213 + $0x8] sm:$0xff]
      %v2216 = vld [vmem:[%s2213 + $0x10] sm:$0xff]
      %v2217 = vld [vmem:[%s2213 + $0x18] sm:$0xff]
      %v2219 = vsel %vm1313, %v2206, 0
      %v2222 = vsel %vm1313, %v2207, 0
      %v2225 = vsel %vm1313, %v2208, 0
      %v2228 = vsel %vm1313, %v2209, 0
      %v2231 = vsel %vm1313, %v2210, 0
      %v2234 = vsel %vm1313, %v2211, 0
      %v2237 = vsel %vm1313, %v2212, 0
      %2239 = vmatpush.msra.mxu0 0.0
      %2240 = vmatpush.msra.mxu0 0.0
      %2241 = vmatpush.msra.mxu0 0.0
      %2242 = vmatpush.msra.mxu0 0.0
      %2243 = vmatpush.msra.mxu0 0.0
      %2244 = vmatpush.msra.mxu0 0.0
      %2245 = vmatpush.msra.mxu0 0.0
      %2246 = vmatpush.msra.mxu0 0.0
      %2247 = vmatpush.msra.mxu0 0.0
      %2248 = vmatpush.msra.mxu0 0.0
      %2249 = vmatpush.msra.mxu0 0.0
      %2250 = vmatpush.msra.mxu0 0.0
      %2251 = vmatpush.msra.mxu0 %v2217
      %2252 = vmatpush.msra.mxu0 %v2216
      %2253 = vmatpush.msra.mxu0 %v2215
      %2254 = vmatpush.msra.mxu0 %v2214
      %2255 = vmatmul.f32.gmra.mxu0 %v2219
      %v2256 = vpop.f32.mrf.mxu0
      %v2257 = vadd.f32 0.0, %v2256
      %2258 = vmatmul.f32.gmra.mxu0 %v2222
      %v2259 = vpop.f32.mrf.mxu0
      %v2260 = vadd.f32 0.0, %v2259
      %2261 = vmatmul.f32.gmra.mxu0 %v2225
      %v2262 = vpop.f32.mrf.mxu0
      %v2263 = vadd.f32 0.0, %v2262
      %2264 = vmatmul.f32.gmra.mxu0 %v2228
      %v2265 = vpop.f32.mrf.mxu0
      %v2266 = vadd.f32 0.0, %v2265
      %2267 = vmatmul.f32.gmra.mxu0 %v2231
      %v2268 = vpop.f32.mrf.mxu0
      %v2269 = vadd.f32 0.0, %v2268
      %2270 = vmatmul.f32.gmra.mxu0 %v2234
      %v2271 = vpop.f32.mrf.mxu0
      %v2272 = vadd.f32 0.0, %v2271
      %2273 = vmatmul.f32.gmra.mxu0 %v2237
      %v2274 = vpop.f32.mrf.mxu0
      %v2275 = vadd.f32 0.0, %v2274
      %2276 = vdwg.mxu0
      %v2278 = vsel %vm1313, %v2193, 0
      %v2281 = vsel %vm1313, %v2194, 0
      %v2284 = vsel %vm1313, %v2195, 0
      %v2287 = vsel %vm1313, %v2196, 0
      %v2290 = vsel %vm1313, %v2197, 0
      %v2293 = vsel %vm1313, %v2198, 0
      %v2296 = vsel %vm1313, %v2199, 0
      %2298 = vmatpush.msra.mxu0 0.0
      %2299 = vmatpush.msra.mxu0 0.0
      %2300 = vmatpush.msra.mxu0 0.0
      %2301 = vmatpush.msra.mxu0 0.0
      %2302 = vmatpush.msra.mxu0 0.0
      %2303 = vmatpush.msra.mxu0 0.0
      %2304 = vmatpush.msra.mxu0 0.0
      %2305 = vmatpush.msra.mxu0 0.0
      %2306 = vmatpush.msra.mxu0 0.0
      %2307 = vmatpush.msra.mxu0 0.0
      %2308 = vmatpush.msra.mxu0 0.0
      %2309 = vmatpush.msra.mxu0 0.0
      %2310 = vmatpush.msra.mxu0 %v2203
      %2311 = vmatpush.msra.mxu0 %v2202
      %2312 = vmatpush.msra.mxu0 %v2201
      %2313 = vmatpush.msra.mxu0 %v2200
      %2314 = vmatmul.f32.gmra.mxu0 %v2278
      %v2315 = vpop.f32.mrf.mxu0
      %v2316 = vadd.f32 %v2257, %v2315
      %2317 = vmatmul.f32.gmra.mxu0 %v2281
      %v2318 = vpop.f32.mrf.mxu0
      %v2319 = vadd.f32 %v2260, %v2318
      %2320 = vmatmul.f32.gmra.mxu0 %v2284
      %v2321 = vpop.f32.mrf.mxu0
      %v2322 = vadd.f32 %v2263, %v2321
      %2323 = vmatmul.f32.gmra.mxu0 %v2287
      %v2324 = vpop.f32.mrf.mxu0
      %v2325 = vadd.f32 %v2266, %v2324
      %2326 = vmatmul.f32.gmra.mxu0 %v2290
      %v2327 = vpop.f32.mrf.mxu0
      %v2328 = vadd.f32 %v2269, %v2327
      %2329 = vmatmul.f32.gmra.mxu0 %v2293
      %v2330 = vpop.f32.mrf.mxu0
      %v2331 = vadd.f32 %v2272, %v2330
      %2332 = vmatmul.f32.gmra.mxu0 %v2296
      %v2333 = vpop.f32.mrf.mxu0
      %v2334 = vadd.f32 %v2275, %v2333
      %2335 = vdwg.mxu0
      %s2336 = sadd.s32 %s2191, 2
      %s2337 = scalar_lea.vmem [#allocation3], %s2336
      %v2338 = vld [vmem:[%s2337] sm:$0xff]
      %v2339 = vld [vmem:[%s2337 + $0x8] sm:$0xff]
      %v2340 = vld [vmem:[%s2337 + $0x10] sm:$0xff]
      %v2341 = vld [vmem:[%s2337 + $0x18] sm:$0xff]
      %v2342 = vld [vmem:[%s2337 + $0x20] sm:$0xff]
      %v2343 = vld [vmem:[%s2337 + $0x28] sm:$0xff]
      %v2344 = vld [vmem:[%s2337 + $0x30] sm:$0xff]
      %s2345 = scalar_lea.vmem [#allocation15], 64
      %v2346 = vld [vmem:[%s2345] sm:$0xff]
      %v2347 = vld [vmem:[%s2345 + $0x8] sm:$0xff]
      %v2348 = vld [vmem:[%s2345 + $0x10] sm:$0xff]
      %v2349 = vld [vmem:[%s2345 + $0x18] sm:$0xff]
      %v2351 = vsel %vm1313, %v2338, 0
      %v2354 = vsel %vm1313, %v2339, 0
      %v2357 = vsel %vm1313, %v2340, 0
      %v2360 = vsel %vm1313, %v2341, 0
      %v2363 = vsel %vm1313, %v2342, 0
      %v2366 = vsel %vm1313, %v2343, 0
      %v2369 = vsel %vm1313, %v2344, 0
      %2371 = vmatpush.msra.mxu0 0.0
      %2372 = vmatpush.msra.mxu0 0.0
      %2373 = vmatpush.msra.mxu0 0.0
      %2374 = vmatpush.msra.mxu0 0.0
      %2375 = vmatpush.msra.mxu0 0.0
      %2376 = vmatpush.msra.mxu0 0.0
      %2377 = vmatpush.msra.mxu0 0.0
      %2378 = vmatpush.msra.mxu0 0.0
      %2379 = vmatpush.msra.mxu0 0.0
      %2380 = vmatpush.msra.mxu0 0.0
      %2381 = vmatpush.msra.mxu0 0.0
      %2382 = vmatpush.msra.mxu0 0.0
      %2383 = vmatpush.msra.mxu0 %v2349
      %2384 = vmatpush.msra.mxu0 %v2348
      %2385 = vmatpush.msra.mxu0 %v2347
      %2386 = vmatpush.msra.mxu0 %v2346
      %2387 = vmatmul.f32.gmra.mxu0 %v2351
      %v2388 = vpop.f32.mrf.mxu0
      %v2389 = vadd.f32 0.0, %v2388
      %2390 = vmatmul.f32.gmra.mxu0 %v2354
      %v2391 = vpop.f32.mrf.mxu0
      %v2392 = vadd.f32 0.0, %v2391
      %2393 = vmatmul.f32.gmra.mxu0 %v2357
      %v2394 = vpop.f32.mrf.mxu0
      %v2395 = vadd.f32 0.0, %v2394
      %2396 = vmatmul.f32.gmra.mxu0 %v2360
      %v2397 = vpop.f32.mrf.mxu0
      %v2398 = vadd.f32 0.0, %v2397
      %2399 = vmatmul.f32.gmra.mxu0 %v2363
      %v2400 = vpop.f32.mrf.mxu0
      %v2401 = vadd.f32 0.0, %v2400
      %2402 = vmatmul.f32.gmra.mxu0 %v2366
      %v2403 = vpop.f32.mrf.mxu0
      %v2404 = vadd.f32 0.0, %v2403
      %2405 = vmatmul.f32.gmra.mxu0 %v2369
      %v2406 = vpop.f32.mrf.mxu0
      %v2407 = vadd.f32 0.0, %v2406
      %2408 = vdwg.mxu0
      %v2409 = vadd.f32 %v2316, %v2389
      %v2410 = vadd.f32 %v2319, %v2392
      %v2411 = vadd.f32 %v2322, %v2395
      %v2412 = vadd.f32 %v2325, %v2398
      %v2413 = vadd.f32 %v2328, %v2401
      %v2414 = vadd.f32 %v2331, %v2404
      %v2415 = vadd.f32 %v2334, %v2407
      %s2416 = sadd.s32 %s2191, 14
      %s2417 = scalar_lea.vmem [#allocation3], %s2416
      %v2418 = vld [vmem:[%s2417] sm:$0xff]
      %v2419 = vld [vmem:[%s2417 + $0x8] sm:$0xff]
      %v2420 = vld [vmem:[%s2417 + $0x10] sm:$0xff]
      %v2421 = vld [vmem:[%s2417 + $0x18] sm:$0xff]
      %v2422 = vld [vmem:[%s2417 + $0x20] sm:$0xff]
      %v2423 = vld [vmem:[%s2417 + $0x28] sm:$0xff]
      %v2424 = vld [vmem:[%s2417 + $0x30] sm:$0xff]
      %s2425 = scalar_lea.vmem [#allocation15], 96
      %v2426 = vld [vmem:[%s2425] sm:$0xff]
      %v2427 = vld [vmem:[%s2425 + $0x8] sm:$0xff]
      %v2428 = vld [vmem:[%s2425 + $0x10] sm:$0xff]
      %v2429 = vld [vmem:[%s2425 + $0x18] sm:$0xff]
      %v2431 = vsel %vm1313, %v2418, 0
      %v2434 = vsel %vm1313, %v2419, 0
      %v2437 = vsel %vm1313, %v2420, 0
      %v2440 = vsel %vm1313, %v2421, 0
      %v2443 = vsel %vm1313, %v2422, 0
      %v2446 = vsel %vm1313, %v2423, 0
      %v2449 = vsel %vm1313, %v2424, 0
      %2451 = vmatpush.msra.mxu0 0.0
      %2452 = vmatpush.msra.mxu0 0.0
      %2453 = vmatpush.msra.mxu0 0.0
      %2454 = vmatpush.msra.mxu0 0.0
      %2455 = vmatpush.msra.mxu0 0.0
      %2456 = vmatpush.msra.mxu0 0.0
      %2457 = vmatpush.msra.mxu0 0.0
      %2458 = vmatpush.msra.mxu0 0.0
      %2459 = vmatpush.msra.mxu0 0.0
      %2460 = vmatpush.msra.mxu0 0.0
      %2461 = vmatpush.msra.mxu0 0.0
      %2462 = vmatpush.msra.mxu0 0.0
      %2463 = vmatpush.msra.mxu0 %v2429
      %2464 = vmatpush.msra.mxu0 %v2428
      %2465 = vmatpush.msra.mxu0 %v2427
      %2466 = vmatpush.msra.mxu0 %v2426
      %2467 = vmatmul.f32.gmra.mxu0 %v2431
      %v2468 = vpop.f32.mrf.mxu0
      %v2469 = vadd.f32 0.0, %v2468
      %2470 = vmatmul.f32.gmra.mxu0 %v2434
      %v2471 = vpop.f32.mrf.mxu0
      %v2472 = vadd.f32 0.0, %v2471
      %2473 = vmatmul.f32.gmra.mxu0 %v2437
      %v2474 = vpop.f32.mrf.mxu0
      %v2475 = vadd.f32 0.0, %v2474
      %2476 = vmatmul.f32.gmra.mxu0 %v2440
      %v2477 = vpop.f32.mrf.mxu0
      %v2478 = vadd.f32 0.0, %v2477
      %2479 = vmatmul.f32.gmra.mxu0 %v2443
      %v2480 = vpop.f32.mrf.mxu0
      %v2481 = vadd.f32 0.0, %v2480
      %2482 = vmatmul.f32.gmra.mxu0 %v2446
      %v2483 = vpop.f32.mrf.mxu0
      %v2484 = vadd.f32 0.0, %v2483
      %2485 = vmatmul.f32.gmra.mxu0 %v2449
      %v2486 = vpop.f32.mrf.mxu0
      %v2487 = vadd.f32 0.0, %v2486
      %2488 = vdwg.mxu0
      %v2489 = vadd.f32 %v2409, %v2469
      %v2490 = vadd.f32 %v2410, %v2472
      %v2491 = vadd.f32 %v2411, %v2475
      %v2492 = vadd.f32 %v2412, %v2478
      %v2493 = vadd.f32 %v2413, %v2481
      %v2494 = vadd.f32 %v2414, %v2484
      %v2495 = vadd.f32 %v2415, %v2487
      %s2496 = sadd.s32 %s2191, 15
      %s2497 = scalar_lea.vmem [#allocation3], %s2496
      %v2498 = vld [vmem:[%s2497] sm:$0xff]
      %v2499 = vld [vmem:[%s2497 + $0x8] sm:$0xff]
      %v2500 = vld [vmem:[%s2497 + $0x10] sm:$0xff]
      %v2501 = vld [vmem:[%s2497 + $0x18] sm:$0xff]
      %v2502 = vld [vmem:[%s2497 + $0x20] sm:$0xff]
      %v2503 = vld [vmem:[%s2497 + $0x28] sm:$0xff]
      %v2504 = vld [vmem:[%s2497 + $0x30] sm:$0xff]
      %s2505 = scalar_lea.vmem [#allocation15], 128
      %v2506 = vld [vmem:[%s2505] sm:$0xff]
      %v2507 = vld [vmem:[%s2505 + $0x8] sm:$0xff]
      %v2508 = vld [vmem:[%s2505 + $0x10] sm:$0xff]
      %v2509 = vld [vmem:[%s2505 + $0x18] sm:$0xff]
      %v2511 = vsel %vm1313, %v2498, 0
      %v2514 = vsel %vm1313, %v2499, 0
      %v2517 = vsel %vm1313, %v2500, 0
      %v2520 = vsel %vm1313, %v2501, 0
      %v2523 = vsel %vm1313, %v2502, 0
      %v2526 = vsel %vm1313, %v2503, 0
      %v2529 = vsel %vm1313, %v2504, 0
      %2531 = vmatpush.msra.mxu0 0.0
      %2532 = vmatpush.msra.mxu0 0.0
      %2533 = vmatpush.msra.mxu0 0.0
      %2534 = vmatpush.msra.mxu0 0.0
      %2535 = vmatpush.msra.mxu0 0.0
      %2536 = vmatpush.msra.mxu0 0.0
      %2537 = vmatpush.msra.mxu0 0.0
      %2538 = vmatpush.msra.mxu0 0.0
      %2539 = vmatpush.msra.mxu0 0.0
      %2540 = vmatpush.msra.mxu0 0.0
      %2541 = vmatpush.msra.mxu0 0.0
      %2542 = vmatpush.msra.mxu0 0.0
      %2543 = vmatpush.msra.mxu0 %v2509
      %2544 = vmatpush.msra.mxu0 %v2508
      %2545 = vmatpush.msra.mxu0 %v2507
      %2546 = vmatpush.msra.mxu0 %v2506
      %2547 = vmatmul.f32.gmra.mxu0 %v2511
      %v2548 = vpop.f32.mrf.mxu0
      %v2549 = vadd.f32 0.0, %v2548
      %2550 = vmatmul.f32.gmra.mxu0 %v2514
      %v2551 = vpop.f32.mrf.mxu0
      %v2552 = vadd.f32 0.0, %v2551
      %2553 = vmatmul.f32.gmra.mxu0 %v2517
      %v2554 = vpop.f32.mrf.mxu0
      %v2555 = vadd.f32 0.0, %v2554
      %2556 = vmatmul.f32.gmra.mxu0 %v2520
      %v2557 = vpop.f32.mrf.mxu0
      %v2558 = vadd.f32 0.0, %v2557
      %2559 = vmatmul.f32.gmra.mxu0 %v2523
      %v2560 = vpop.f32.mrf.mxu0
      %v2561 = vadd.f32 0.0, %v2560
      %2562 = vmatmul.f32.gmra.mxu0 %v2526
      %v2563 = vpop.f32.mrf.mxu0
      %v2564 = vadd.f32 0.0, %v2563
      %2565 = vmatmul.f32.gmra.mxu0 %v2529
      %v2566 = vpop.f32.mrf.mxu0
      %v2567 = vadd.f32 0.0, %v2566
      %2568 = vdwg.mxu0
      %v2569 = vadd.f32 %v2489, %v2549
      %v2570 = vadd.f32 %v2490, %v2552
      %v2571 = vadd.f32 %v2491, %v2555
      %v2572 = vadd.f32 %v2492, %v2558
      %v2573 = vadd.f32 %v2493, %v2561
      %v2574 = vadd.f32 %v2494, %v2564
      %v2575 = vadd.f32 %v2495, %v2567
      %s2576 = sadd.s32 %s2191, 16
      %s2577 = scalar_lea.vmem [#allocation3], %s2576
      %v2578 = vld [vmem:[%s2577] sm:$0xff]
      %v2579 = vld [vmem:[%s2577 + $0x8] sm:$0xff]
      %v2580 = vld [vmem:[%s2577 + $0x10] sm:$0xff]
      %v2581 = vld [vmem:[%s2577 + $0x18] sm:$0xff]
      %v2582 = vld [vmem:[%s2577 + $0x20] sm:$0xff]
      %v2583 = vld [vmem:[%s2577 + $0x28] sm:$0xff]
      %v2584 = vld [vmem:[%s2577 + $0x30] sm:$0xff]
      %s2585 = scalar_lea.vmem [#allocation15], 160
      %v2586 = vld [vmem:[%s2585] sm:$0xff]
      %v2587 = vld [vmem:[%s2585 + $0x8] sm:$0xff]
      %v2588 = vld [vmem:[%s2585 + $0x10] sm:$0xff]
      %v2589 = vld [vmem:[%s2585 + $0x18] sm:$0xff]
      %v2591 = vsel %vm1313, %v2578, 0
      %v2594 = vsel %vm1313, %v2579, 0
      %v2597 = vsel %vm1313, %v2580, 0
      %v2600 = vsel %vm1313, %v2581, 0
      %v2603 = vsel %vm1313, %v2582, 0
      %v2606 = vsel %vm1313, %v2583, 0
      %v2609 = vsel %vm1313, %v2584, 0
      %2611 = vmatpush.msra.mxu0 0.0
      %2612 = vmatpush.msra.mxu0 0.0
      %2613 = vmatpush.msra.mxu0 0.0
      %2614 = vmatpush.msra.mxu0 0.0
      %2615 = vmatpush.msra.mxu0 0.0
      %2616 = vmatpush.msra.mxu0 0.0
      %2617 = vmatpush.msra.mxu0 0.0
      %2618 = vmatpush.msra.mxu0 0.0
      %2619 = vmatpush.msra.mxu0 0.0
      %2620 = vmatpush.msra.mxu0 0.0
      %2621 = vmatpush.msra.mxu0 0.0
      %2622 = vmatpush.msra.mxu0 0.0
      %2623 = vmatpush.msra.mxu0 %v2589
      %2624 = vmatpush.msra.mxu0 %v2588
      %2625 = vmatpush.msra.mxu0 %v2587
      %2626 = vmatpush.msra.mxu0 %v2586
      %2627 = vmatmul.f32.gmra.mxu0 %v2591
      %v2628 = vpop.f32.mrf.mxu0
      %v2629 = vadd.f32 0.0, %v2628
      %2630 = vmatmul.f32.gmra.mxu0 %v2594
      %v2631 = vpop.f32.mrf.mxu0
      %v2632 = vadd.f32 0.0, %v2631
      %2633 = vmatmul.f32.gmra.mxu0 %v2597
      %v2634 = vpop.f32.mrf.mxu0
      %v2635 = vadd.f32 0.0, %v2634
      %2636 = vmatmul.f32.gmra.mxu0 %v2600
      %v2637 = vpop.f32.mrf.mxu0
      %v2638 = vadd.f32 0.0, %v2637
      %2639 = vmatmul.f32.gmra.mxu0 %v2603
      %v2640 = vpop.f32.mrf.mxu0
      %v2641 = vadd.f32 0.0, %v2640
      %2642 = vmatmul.f32.gmra.mxu0 %v2606
      %v2643 = vpop.f32.mrf.mxu0
      %v2644 = vadd.f32 0.0, %v2643
      %2645 = vmatmul.f32.gmra.mxu0 %v2609
      %v2646 = vpop.f32.mrf.mxu0
      %v2647 = vadd.f32 0.0, %v2646
      %2648 = vdwg.mxu0
      %v2649 = vadd.f32 %v2569, %v2629
      %v2650 = vadd.f32 %v2570, %v2632
      %v2651 = vadd.f32 %v2571, %v2635
      %v2652 = vadd.f32 %v2572, %v2638
      %v2653 = vadd.f32 %v2573, %v2641
      %v2654 = vadd.f32 %v2574, %v2644
      %v2655 = vadd.f32 %v2575, %v2647
      %s2656 = sadd.s32 %s2191, 28
      %s2657 = scalar_lea.vmem [#allocation3], %s2656
      %v2658 = vld [vmem:[%s2657] sm:$0xff]
      %v2659 = vld [vmem:[%s2657 + $0x8] sm:$0xff]
      %v2660 = vld [vmem:[%s2657 + $0x10] sm:$0xff]
      %v2661 = vld [vmem:[%s2657 + $0x18] sm:$0xff]
      %v2662 = vld [vmem:[%s2657 + $0x20] sm:$0xff]
      %v2663 = vld [vmem:[%s2657 + $0x28] sm:$0xff]
      %v2664 = vld [vmem:[%s2657 + $0x30] sm:$0xff]
      %s2665 = scalar_lea.vmem [#allocation15], 192
      %v2666 = vld [vmem:[%s2665] sm:$0xff]
      %v2667 = vld [vmem:[%s2665 + $0x8] sm:$0xff]
      %v2668 = vld [vmem:[%s2665 + $0x10] sm:$0xff]
      %v2669 = vld [vmem:[%s2665 + $0x18] sm:$0xff]
      %v2671 = vsel %vm1313, %v2658, 0
      %v2674 = vsel %vm1313, %v2659, 0
      %v2677 = vsel %vm1313, %v2660, 0
      %v2680 = vsel %vm1313, %v2661, 0
      %v2683 = vsel %vm1313, %v2662, 0
      %v2686 = vsel %vm1313, %v2663, 0
      %v2689 = vsel %vm1313, %v2664, 0
      %2691 = vmatpush.msra.mxu0 0.0
      %2692 = vmatpush.msra.mxu0 0.0
      %2693 = vmatpush.msra.mxu0 0.0
      %2694 = vmatpush.msra.mxu0 0.0
      %2695 = vmatpush.msra.mxu0 0.0
      %2696 = vmatpush.msra.mxu0 0.0
      %2697 = vmatpush.msra.mxu0 0.0
      %2698 = vmatpush.msra.mxu0 0.0
      %2699 = vmatpush.msra.mxu0 0.0
      %2700 = vmatpush.msra.mxu0 0.0
      %2701 = vmatpush.msra.mxu0 0.0
      %2702 = vmatpush.msra.mxu0 0.0
      %2703 = vmatpush.msra.mxu0 %v2669
      %2704 = vmatpush.msra.mxu0 %v2668
      %2705 = vmatpush.msra.mxu0 %v2667
      %2706 = vmatpush.msra.mxu0 %v2666
      %2707 = vmatmul.f32.gmra.mxu0 %v2671
      %v2708 = vpop.f32.mrf.mxu0
      %v2709 = vadd.f32 0.0, %v2708
      %2710 = vmatmul.f32.gmra.mxu0 %v2674
      %v2711 = vpop.f32.mrf.mxu0
      %v2712 = vadd.f32 0.0, %v2711
      %2713 = vmatmul.f32.gmra.mxu0 %v2677
      %v2714 = vpop.f32.mrf.mxu0
      %v2715 = vadd.f32 0.0, %v2714
      %2716 = vmatmul.f32.gmra.mxu0 %v2680
      %v2717 = vpop.f32.mrf.mxu0
      %v2718 = vadd.f32 0.0, %v2717
      %2719 = vmatmul.f32.gmra.mxu0 %v2683
      %v2720 = vpop.f32.mrf.mxu0
      %v2721 = vadd.f32 0.0, %v2720
      %2722 = vmatmul.f32.gmra.mxu0 %v2686
      %v2723 = vpop.f32.mrf.mxu0
      %v2724 = vadd.f32 0.0, %v2723
      %2725 = vmatmul.f32.gmra.mxu0 %v2689
      %v2726 = vpop.f32.mrf.mxu0
      %v2727 = vadd.f32 0.0, %v2726
      %2728 = vdwg.mxu0
      %v2729 = vadd.f32 %v2649, %v2709
      %v2730 = vadd.f32 %v2650, %v2712
      %v2731 = vadd.f32 %v2651, %v2715
      %v2732 = vadd.f32 %v2652, %v2718
      %v2733 = vadd.f32 %v2653, %v2721
      %v2734 = vadd.f32 %v2654, %v2724
      %v2735 = vadd.f32 %v2655, %v2727
      %s2736 = sadd.s32 %s2191, 29
      %s2737 = scalar_lea.vmem [#allocation3], %s2736
      %v2738 = vld [vmem:[%s2737] sm:$0xff]
      %v2739 = vld [vmem:[%s2737 + $0x8] sm:$0xff]
      %v2740 = vld [vmem:[%s2737 + $0x10] sm:$0xff]
      %v2741 = vld [vmem:[%s2737 + $0x18] sm:$0xff]
      %v2742 = vld [vmem:[%s2737 + $0x20] sm:$0xff]
      %v2743 = vld [vmem:[%s2737 + $0x28] sm:$0xff]
      %v2744 = vld [vmem:[%s2737 + $0x30] sm:$0xff]
      %s2745 = scalar_lea.vmem [#allocation15], 224
      %v2746 = vld [vmem:[%s2745] sm:$0xff]
      %v2747 = vld [vmem:[%s2745 + $0x8] sm:$0xff]
      %v2748 = vld [vmem:[%s2745 + $0x10] sm:$0xff]
      %v2749 = vld [vmem:[%s2745 + $0x18] sm:$0xff]
      %v2751 = vsel %vm1313, %v2738, 0
      %v2754 = vsel %vm1313, %v2739, 0
      %v2757 = vsel %vm1313, %v2740, 0
      %v2760 = vsel %vm1313, %v2741, 0
      %v2763 = vsel %vm1313, %v2742, 0
      %v2766 = vsel %vm1313, %v2743, 0
      %v2769 = vsel %vm1313, %v2744, 0
      %2771 = vmatpush.msra.mxu0 0.0
      %2772 = vmatpush.msra.mxu0 0.0
      %2773 = vmatpush.msra.mxu0 0.0
      %2774 = vmatpush.msra.mxu0 0.0
      %2775 = vmatpush.msra.mxu0 0.0
      %2776 = vmatpush.msra.mxu0 0.0
      %2777 = vmatpush.msra.mxu0 0.0
      %2778 = vmatpush.msra.mxu0 0.0
      %2779 = vmatpush.msra.mxu0 0.0
      %2780 = vmatpush.msra.mxu0 0.0
      %2781 = vmatpush.msra.mxu0 0.0
      %2782 = vmatpush.msra.mxu0 0.0
      %2783 = vmatpush.msra.mxu0 %v2749
      %2784 = vmatpush.msra.mxu0 %v2748
      %2785 = vmatpush.msra.mxu0 %v2747
      %2786 = vmatpush.msra.mxu0 %v2746
      %2787 = vmatmul.f32.gmra.mxu0 %v2751
      %v2788 = vpop.f32.mrf.mxu0
      %v2789 = vadd.f32 0.0, %v2788
      %2790 = vmatmul.f32.gmra.mxu0 %v2754
      %v2791 = vpop.f32.mrf.mxu0
      %v2792 = vadd.f32 0.0, %v2791
      %2793 = vmatmul.f32.gmra.mxu0 %v2757
      %v2794 = vpop.f32.mrf.mxu0
      %v2795 = vadd.f32 0.0, %v2794
      %2796 = vmatmul.f32.gmra.mxu0 %v2760
      %v2797 = vpop.f32.mrf.mxu0
      %v2798 = vadd.f32 0.0, %v2797
      %2799 = vmatmul.f32.gmra.mxu0 %v2763
      %v2800 = vpop.f32.mrf.mxu0
      %v2801 = vadd.f32 0.0, %v2800
      %2802 = vmatmul.f32.gmra.mxu0 %v2766
      %v2803 = vpop.f32.mrf.mxu0
      %v2804 = vadd.f32 0.0, %v2803
      %2805 = vmatmul.f32.gmra.mxu0 %v2769
      %v2806 = vpop.f32.mrf.mxu0
      %v2807 = vadd.f32 0.0, %v2806
      %2808 = vdwg.mxu0
      %v2809 = vadd.f32 %v2729, %v2789
      %v2810 = vadd.f32 %v2730, %v2792
      %v2811 = vadd.f32 %v2731, %v2795
      %v2812 = vadd.f32 %v2732, %v2798
      %v2813 = vadd.f32 %v2733, %v2801
      %v2814 = vadd.f32 %v2734, %v2804
      %v2815 = vadd.f32 %v2735, %v2807
      %s2816 = sadd.s32 %s2191, 30
      %s2817 = scalar_lea.vmem [#allocation3], %s2816
      %v2818 = vld [vmem:[%s2817] sm:$0xff]
      %v2819 = vld [vmem:[%s2817 + $0x8] sm:$0xff]
      %v2820 = vld [vmem:[%s2817 + $0x10] sm:$0xff]
      %v2821 = vld [vmem:[%s2817 + $0x18] sm:$0xff]
      %v2822 = vld [vmem:[%s2817 + $0x20] sm:$0xff]
      %v2823 = vld [vmem:[%s2817 + $0x28] sm:$0xff]
      %v2824 = vld [vmem:[%s2817 + $0x30] sm:$0xff]
      %s2825 = scalar_lea.vmem [#allocation15], 256
      %v2826 = vld [vmem:[%s2825] sm:$0xff]
      %v2827 = vld [vmem:[%s2825 + $0x8] sm:$0xff]
      %v2828 = vld [vmem:[%s2825 + $0x10] sm:$0xff]
      %v2829 = vld [vmem:[%s2825 + $0x18] sm:$0xff]
      %v2831 = vsel %vm1313, %v2818, 0
      %v2834 = vsel %vm1313, %v2819, 0
      %v2837 = vsel %vm1313, %v2820, 0
      %v2840 = vsel %vm1313, %v2821, 0
      %v2843 = vsel %vm1313, %v2822, 0
      %v2846 = vsel %vm1313, %v2823, 0
      %v2849 = vsel %vm1313, %v2824, 0
      %2851 = vmatpush.msra.mxu0 0.0
      %2852 = vmatpush.msra.mxu0 0.0
      %2853 = vmatpush.msra.mxu0 0.0
      %2854 = vmatpush.msra.mxu0 0.0
      %2855 = vmatpush.msra.mxu0 0.0
      %2856 = vmatpush.msra.mxu0 0.0
      %2857 = vmatpush.msra.mxu0 0.0
      %2858 = vmatpush.msra.mxu0 0.0
      %2859 = vmatpush.msra.mxu0 0.0
      %2860 = vmatpush.msra.mxu0 0.0
      %2861 = vmatpush.msra.mxu0 0.0
      %2862 = vmatpush.msra.mxu0 0.0
      %2863 = vmatpush.msra.mxu0 %v2829
      %2864 = vmatpush.msra.mxu0 %v2828
      %2865 = vmatpush.msra.mxu0 %v2827
      %2866 = vmatpush.msra.mxu0 %v2826
      %2867 = vmatmul.f32.gmra.mxu0 %v2831
      %v2868 = vpop.f32.mrf.mxu0
      %v2869 = vadd.f32 0.0, %v2868
      %2870 = vmatmul.f32.gmra.mxu0 %v2834
      %v2871 = vpop.f32.mrf.mxu0
      %v2872 = vadd.f32 0.0, %v2871
      %2873 = vmatmul.f32.gmra.mxu0 %v2837
      %v2874 = vpop.f32.mrf.mxu0
      %v2875 = vadd.f32 0.0, %v2874
      %2876 = vmatmul.f32.gmra.mxu0 %v2840
      %v2877 = vpop.f32.mrf.mxu0
      %v2878 = vadd.f32 0.0, %v2877
      %2879 = vmatmul.f32.gmra.mxu0 %v2843
      %v2880 = vpop.f32.mrf.mxu0
      %v2881 = vadd.f32 0.0, %v2880
      %2882 = vmatmul.f32.gmra.mxu0 %v2846
      %v2883 = vpop.f32.mrf.mxu0
      %v2884 = vadd.f32 0.0, %v2883
      %2885 = vmatmul.f32.gmra.mxu0 %v2849
      %v2886 = vpop.f32.mrf.mxu0
      %v2887 = vadd.f32 0.0, %v2886
      %2888 = vdwg.mxu0
      %v2889 = vadd.f32 %v2809, %v2869
      %v2890 = vadd.f32 %v2810, %v2872
      %v2891 = vadd.f32 %v2811, %v2875
      %v2892 = vadd.f32 %v2812, %v2878
      %v2893 = vadd.f32 %v2813, %v2881
      %v2894 = vadd.f32 %v2814, %v2884
      %v2895 = vadd.f32 %v2815, %v2887
      %s2896 = scalar_lea.vmem [#allocation4], %s2191
      %vm2897 = vcmask 523264
      %2898 = vst.msk [vmem:[%s2896] sm:$0xff] %vm2897, %v2889
      %2899 = vst.msk [vmem:[%s2896 + $0x8] sm:$0xff] %vm2897, %v2890
      %2900 = vst.msk [vmem:[%s2896 + $0x10] sm:$0xff] %vm2897, %v2891
      %2901 = vst.msk [vmem:[%s2896 + $0x18] sm:$0xff] %vm2897, %v2892
      %2902 = vst.msk [vmem:[%s2896 + $0x20] sm:$0xff] %vm2897, %v2893
      %2903 = vst.msk [vmem:[%s2896 + $0x28] sm:$0xff] %vm2897, %v2894
      %2904 = vst.msk [vmem:[%s2896 + $0x30] sm:$0xff] %vm2897, %v2895
    $region89: #{model_forward.1} parent=1 // loop_footer
      %s2190 = sadd.s32 1, %s2186
    $region90: #{model_forward.1} parent=1 // loop_footer_branch
      %2185 = sbr.rel target = $region86
    $region91: #{model_forward.1} parent=1 // loop_exit
      _
    %vm2905 = vcmask 523264
    %2906 = vst.msk [vmem:[#allocation5] sm:$0xff] %vm2905, 0.0
    %2907 = vst.msk [vmem:[#allocation5 + $0x8] sm:$0xff] %vm2905, 0.0
    %2908 = vst.msk [vmem:[#allocation5 + $0x10] sm:$0xff] %vm2905, 0.0
    %2909 = vst.msk [vmem:[#allocation5 + $0x18] sm:$0xff] %vm2905, 0.0
    %2910 = vst.msk [vmem:[#allocation5 + $0x20] sm:$0xff] %vm2905, 0.0
    %2911 = vst.msk [vmem:[#allocation5 + $0x28] sm:$0xff] %vm2905, 0.0
    %2912 = vst.msk [vmem:[#allocation5 + $0x30] sm:$0xff] %vm2905, 0.0
    %2913 = vst.msk [vmem:[#allocation5 + $0x38] sm:$0xff] %vm2905, 0.0
    %2914 = vst.msk [vmem:[#allocation5 + $0x40] sm:$0xff] %vm2905, 0.0
    %2915 = vst.msk [vmem:[#allocation5 + $0x48] sm:$0xff] %vm2905, 0.0
    %2916 = vst.msk [vmem:[#allocation5 + $0x50] sm:$0xff] %vm2905, 0.0
    %2917 = vst.msk [vmem:[#allocation5 + $0x58] sm:$0xff] %vm2905, 0.0
    %2918 = vst.msk [vmem:[#allocation5 + $0x60] sm:$0xff] %vm2905, 0.0
    %2919 = vst.msk [vmem:[#allocation5 + $0x68] sm:$0xff] %vm2905, 0.0
    %2920 = vst.msk [vmem:[#allocation5 + $0x70] sm:$0xff] %vm2905, 0.0
    %2921 = vst.msk [vmem:[#allocation5 + $0x78] sm:$0xff] %vm2905, 0.0
    %2922 = vst.msk [vmem:[#allocation5 + $0x80] sm:$0xff] %vm2905, 0.0
    %2923 = vst.msk [vmem:[#allocation5 + $0x88] sm:$0xff] %vm2905, 0.0
    %vm2924 = vcmask 517120
    %2925 = vst.msk [vmem:[#allocation5 + $0x90] sm:$0x3] %vm2924, 0.0
    %s2926 = scalar_lea.vmem [#allocation4], 15
    %v2927 = vld [vmem:[%s2926] ss:$2 sm:$0x3f]
    %s2928 = scalar_lea.vmem [#allocation4], 16
    %v2929 = vld [vmem:[%s2928] ss:$2 sm:$0x3f]
    %s2930 = scalar_lea.vmem [#allocation4], 29
    %v2931 = vld [vmem:[%s2930] ss:$2 sm:$0x3f]
    %s2932 = scalar_lea.vmem [#allocation4], 30
    %v2933 = vld [vmem:[%s2932] ss:$2 sm:$0x3f]
    %v2934 = vmax.f32 %v2927, %v2929
    %v2935 = vmax.f32 %v2931, %v2933
    %v2936 = vmax.f32 %v2934, %v2935
    %v2937 = vld [vmem:[#allocation16] sm:$0x1]
    %v2939 = vperm.slane %v2937, 0
    %v2941 = vadd.f32 %v2936, %v2939
    %v2942 = vmul.f32 %v2941, 0.01
    %v2943 = vmax.f32 %v2941, %v2942
    %vm2944 = vcmask 521216
    %2945 = vst.msk [vmem:[#allocation5 + $0x12] sm:$0x3f] %vm2944, %v2943
    %s2946 = scalar_lea.vmem [#allocation4], 43
    %v2947 = vld [vmem:[%s2946] ss:$2 sm:$0x3f]
    %s2948 = scalar_lea.vmem [#allocation4], 44
    %v2949 = vld [vmem:[%s2948] ss:$2 sm:$0x3f]
    %s2950 = scalar_lea.vmem [#allocation4], 57
    %v2951 = vld [vmem:[%s2950] ss:$2 sm:$0x3f]
    %s2952 = scalar_lea.vmem [#allocation4], 58
    %v2953 = vld [vmem:[%s2952] ss:$2 sm:$0x3f]
    %v2954 = vmax.f32 %v2947, %v2949
    %v2955 = vmax.f32 %v2951, %v2953
    %v2956 = vmax.f32 %v2954, %v2955
    %v2957 = vld [vmem:[#allocation16] sm:$0x1]
    %v2959 = vperm.slane %v2957, 0
    %v2961 = vadd.f32 %v2956, %v2959
    %v2962 = vmul.f32 %v2961, 0.01
    %v2963 = vmax.f32 %v2961, %v2962
    %2964 = vst.msk [vmem:[#allocation5 + $0x1a] sm:$0x3f] %vm2944, %v2963
    %s2965 = scalar_lea.vmem [#allocation4], 71
    %v2966 = vld [vmem:[%s2965] ss:$2 sm:$0x3f]
    %s2967 = scalar_lea.vmem [#allocation4], 72
    %v2968 = vld [vmem:[%s2967] ss:$2 sm:$0x3f]
    %s2969 = scalar_lea.vmem [#allocation4], 85
    %v2970 = vld [vmem:[%s2969] ss:$2 sm:$0x3f]
    %s2971 = scalar_lea.vmem [#allocation4], 86
    %v2972 = vld [vmem:[%s2971] ss:$2 sm:$0x3f]
    %v2973 = vmax.f32 %v2966, %v2968
    %v2974 = vmax.f32 %v2970, %v2972
    %v2975 = vmax.f32 %v2973, %v2974
    %v2976 = vld [vmem:[#allocation16] sm:$0x1]
    %v2978 = vperm.slane %v2976, 0
    %v2980 = vadd.f32 %v2975, %v2978
    %v2981 = vmul.f32 %v2980, 0.01
    %v2982 = vmax.f32 %v2980, %v2981
    %2983 = vst.msk [vmem:[#allocation5 + $0x22] sm:$0x3f] %vm2944, %v2982
    %s2984 = scalar_lea.vmem [#allocation4], 99
    %v2985 = vld [vmem:[%s2984] ss:$2 sm:$0x3f]
    %s2986 = scalar_lea.vmem [#allocation4], 100
    %v2987 = vld [vmem:[%s2986] ss:$2 sm:$0x3f]
    %s2988 = scalar_lea.vmem [#allocation4], 113
    %v2989 = vld [vmem:[%s2988] ss:$2 sm:$0x3f]
    %s2990 = scalar_lea.vmem [#allocation4], 114
    %v2991 = vld [vmem:[%s2990] ss:$2 sm:$0x3f]
    %v2992 = vmax.f32 %v2985, %v2987
    %v2993 = vmax.f32 %v2989, %v2991
    %v2994 = vmax.f32 %v2992, %v2993
    %v2995 = vld [vmem:[#allocation16] sm:$0x1]
    %v2997 = vperm.slane %v2995, 0
    %v2999 = vadd.f32 %v2994, %v2997
    %v3000 = vmul.f32 %v2999, 0.01
    %v3001 = vmax.f32 %v2999, %v3000
    %3002 = vst.msk [vmem:[#allocation5 + $0x2a] sm:$0x3f] %vm2944, %v3001
    %s3003 = scalar_lea.vmem [#allocation4], 127
    %v3004 = vld [vmem:[%s3003] ss:$2 sm:$0x3f]
    %s3005 = scalar_lea.vmem [#allocation4], 128
    %v3006 = vld [vmem:[%s3005] ss:$2 sm:$0x3f]
    %s3007 = scalar_lea.vmem [#allocation4], 141
    %v3008 = vld [vmem:[%s3007] ss:$2 sm:$0x3f]
    %s3009 = scalar_lea.vmem [#allocation4], 142
    %v3010 = vld [vmem:[%s3009] ss:$2 sm:$0x3f]
    %v3011 = vmax.f32 %v3004, %v3006
    %v3012 = vmax.f32 %v3008, %v3010
    %v3013 = vmax.f32 %v3011, %v3012
    %v3014 = vld [vmem:[#allocation16] sm:$0x1]
    %v3016 = vperm.slane %v3014, 0
    %v3018 = vadd.f32 %v3013, %v3016
    %v3019 = vmul.f32 %v3018, 0.01
    %v3020 = vmax.f32 %v3018, %v3019
    %3021 = vst.msk [vmem:[#allocation5 + $0x32] sm:$0x3f] %vm2944, %v3020
    %s3022 = scalar_lea.vmem [#allocation4], 155
    %v3023 = vld [vmem:[%s3022] ss:$2 sm:$0x3f]
    %s3024 = scalar_lea.vmem [#allocation4], 156
    %v3025 = vld [vmem:[%s3024] ss:$2 sm:$0x3f]
    %s3026 = scalar_lea.vmem [#allocation4], 169
    %v3027 = vld [vmem:[%s3026] ss:$2 sm:$0x3f]
    %s3028 = scalar_lea.vmem [#allocation4], 170
    %v3029 = vld [vmem:[%s3028] ss:$2 sm:$0x3f]
    %v3030 = vmax.f32 %v3023, %v3025
    %v3031 = vmax.f32 %v3027, %v3029
    %v3032 = vmax.f32 %v3030, %v3031
    %v3033 = vld [vmem:[#allocation16] sm:$0x1]
    %v3035 = vperm.slane %v3033, 0
    %v3037 = vadd.f32 %v3032, %v3035
    %v3038 = vmul.f32 %v3037, 0.01
    %v3039 = vmax.f32 %v3037, %v3038
    %3040 = vst.msk [vmem:[#allocation5 + $0x3a] sm:$0x3f] %vm2944, %v3039
    %s3041 = scalar_lea.vmem [#allocation4], 211
    %v3042 = vld [vmem:[%s3041] ss:$2 sm:$0x3f]
    %s3043 = scalar_lea.vmem [#allocation4], 212
    %v3044 = vld [vmem:[%s3043] ss:$2 sm:$0x3f]
    %s3045 = scalar_lea.vmem [#allocation4], 225
    %v3046 = vld [vmem:[%s3045] ss:$2 sm:$0x3f]
    %s3047 = scalar_lea.vmem [#allocation4], 226
    %v3048 = vld [vmem:[%s3047] ss:$2 sm:$0x3f]
    %v3049 = vmax.f32 %v3042, %v3044
    %v3050 = vmax.f32 %v3046, %v3048
    %v3051 = vmax.f32 %v3049, %v3050
    %v3052 = vld [vmem:[#allocation16] sm:$0x1]
    %v3054 = vperm.slane %v3052, 0
    %v3056 = vadd.f32 %v3051, %v3054
    %v3057 = vmul.f32 %v3056, 0.01
    %v3058 = vmax.f32 %v3056, %v3057
    %3059 = vst.msk [vmem:[#allocation5 + $0x52] sm:$0x3f] %vm2944, %v3058
    %s3060 = scalar_lea.vmem [#allocation4], 239
    %v3061 = vld [vmem:[%s3060] ss:$2 sm:$0x3f]
    %s3062 = scalar_lea.vmem [#allocation4], 240
    %v3063 = vld [vmem:[%s3062] ss:$2 sm:$0x3f]
    %s3064 = scalar_lea.vmem [#allocation4], 253
    %v3065 = vld [vmem:[%s3064] ss:$2 sm:$0x3f]
    %s3066 = scalar_lea.vmem [#allocation4], 254
    %v3067 = vld [vmem:[%s3066] ss:$2 sm:$0x3f]
    %v3068 = vmax.f32 %v3061, %v3063
    %v3069 = vmax.f32 %v3065, %v3067
    %v3070 = vmax.f32 %v3068, %v3069
    %v3071 = vld [vmem:[#allocation16] sm:$0x1]
    %v3073 = vperm.slane %v3071, 0
    %v3075 = vadd.f32 %v3070, %v3073
    %v3076 = vmul.f32 %v3075, 0.01
    %v3077 = vmax.f32 %v3075, %v3076
    %3078 = vst.msk [vmem:[#allocation5 + $0x5a] sm:$0x3f] %vm2944, %v3077
    %s3079 = scalar_lea.vmem [#allocation4], 267
    %v3080 = vld [vmem:[%s3079] ss:$2 sm:$0x3f]
    %s3081 = scalar_lea.vmem [#allocation4], 268
    %v3082 = vld [vmem:[%s3081] ss:$2 sm:$0x3f]
    %s3083 = scalar_lea.vmem [#allocation4], 281
    %v3084 = vld [vmem:[%s3083] ss:$2 sm:$0x3f]
    %s3085 = scalar_lea.vmem [#allocation4], 282
    %v3086 = vld [vmem:[%s3085] ss:$2 sm:$0x3f]
    %v3087 = vmax.f32 %v3080, %v3082
    %v3088 = vmax.f32 %v3084, %v3086
    %v3089 = vmax.f32 %v3087, %v3088
    %v3090 = vld [vmem:[#allocation16] sm:$0x1]
    %v3092 = vperm.slane %v3090, 0
    %v3094 = vadd.f32 %v3089, %v3092
    %v3095 = vmul.f32 %v3094, 0.01
    %v3096 = vmax.f32 %v3094, %v3095
    %3097 = vst.msk [vmem:[#allocation5 + $0x62] sm:$0x3f] %vm2944, %v3096
    %s3098 = scalar_lea.vmem [#allocation4], 295
    %v3099 = vld [vmem:[%s3098] ss:$2 sm:$0x3f]
    %s3100 = scalar_lea.vmem [#allocation4], 296
    %v3101 = vld [vmem:[%s3100] ss:$2 sm:$0x3f]
    %s3102 = scalar_lea.vmem [#allocation4], 309
    %v3103 = vld [vmem:[%s3102] ss:$2 sm:$0x3f]
    %s3104 = scalar_lea.vmem [#allocation4], 310
    %v3105 = vld [vmem:[%s3104] ss:$2 sm:$0x3f]
    %v3106 = vmax.f32 %v3099, %v3101
    %v3107 = vmax.f32 %v3103, %v3105
    %v3108 = vmax.f32 %v3106, %v3107
    %v3109 = vld [vmem:[#allocation16] sm:$0x1]
    %v3111 = vperm.slane %v3109, 0
    %v3113 = vadd.f32 %v3108, %v3111
    %v3114 = vmul.f32 %v3113, 0.01
    %v3115 = vmax.f32 %v3113, %v3114
    %3116 = vst.msk [vmem:[#allocation5 + $0x6a] sm:$0x3f] %vm2944, %v3115
    %s3117 = scalar_lea.vmem [#allocation4], 323
    %v3118 = vld [vmem:[%s3117] ss:$2 sm:$0x3f]
    %s3119 = scalar_lea.vmem [#allocation4], 324
    %v3120 = vld [vmem:[%s3119] ss:$2 sm:$0x3f]
    %s3121 = scalar_lea.vmem [#allocation4], 337
    %v3122 = vld [vmem:[%s3121] ss:$2 sm:$0x3f]
    %s3123 = scalar_lea.vmem [#allocation4], 338
    %v3124 = vld [vmem:[%s3123] ss:$2 sm:$0x3f]
    %v3125 = vmax.f32 %v3118, %v3120
    %v3126 = vmax.f32 %v3122, %v3124
    %v3127 = vmax.f32 %v3125, %v3126
    %v3128 = vld [vmem:[#allocation16] sm:$0x1]
    %v3130 = vperm.slane %v3128, 0
    %v3132 = vadd.f32 %v3127, %v3130
    %v3133 = vmul.f32 %v3132, 0.01
    %v3134 = vmax.f32 %v3132, %v3133
    %3135 = vst.msk [vmem:[#allocation5 + $0x72] sm:$0x3f] %vm2944, %v3134
    %s3136 = scalar_lea.vmem [#allocation4], 351
    %v3137 = vld [vmem:[%s3136] ss:$2 sm:$0x3f]
    %s3138 = scalar_lea.vmem [#allocation4], 352
    %v3139 = vld [vmem:[%s3138] ss:$2 sm:$0x3f]
    %s3140 = scalar_lea.vmem [#allocation4], 365
    %v3141 = vld [vmem:[%s3140] ss:$2 sm:$0x3f]
    %s3142 = scalar_lea.vmem [#allocation4], 366
    %v3143 = vld [vmem:[%s3142] ss:$2 sm:$0x3f]
    %v3144 = vmax.f32 %v3137, %v3139
    %v3145 = vmax.f32 %v3141, %v3143
    %v3146 = vmax.f32 %v3144, %v3145
    %v3147 = vld [vmem:[#allocation16] sm:$0x1]
    %v3149 = vperm.slane %v3147, 0
    %v3151 = vadd.f32 %v3146, %v3149
    %v3152 = vmul.f32 %v3151, 0.01
    %v3153 = vmax.f32 %v3151, %v3152
    %3154 = vst.msk [vmem:[#allocation5 + $0x7a] sm:$0x3f] %vm2944, %v3153
    loop: start=0, step=1, limit=2
    $region92: #{model_forward.1} parent=1 // loop_pre_header
      _
    $region93: #{model_forward.1} parent=1 // loop_header
      %s3156 = sphi 0, %s3160
      %p3157 = scmp.ge.s32.totalorder %s3156, 2
    $region94: #{model_forward.1} parent=1 // loop_header_branch
      %3159 = sbr.rel (%p3157) target = $region98
    $region95: #{model_forward.1} parent=1 // loop_body
      %s3161 = smul.u32 %s3156, 64
      %s3162 = scalar_lea.vmem [#allocation5], %s3161
      %v3163 = vld [vmem:[%s3162] sm:$0xff]
      %v3164 = vld [vmem:[%s3162 + $0x8] sm:$0xff]
      %v3165 = vld [vmem:[%s3162 + $0x10] sm:$0xff]
      %v3166 = vld [vmem:[%s3162 + $0x18] sm:$0xff]
      %v3167 = vld [vmem:[%s3162 + $0x20] sm:$0xff]
      %v3168 = vld [vmem:[%s3162 + $0x28] sm:$0xff]
      %v3169 = vld [vmem:[%s3162 + $0x30] sm:$0xff]
      %v3170 = vld [vmem:[%s3162 + $0x38] sm:$0xff]
      %v3171 = vld [vmem:[#allocation18] sm:$0xff]
      %v3172 = vld [vmem:[#allocation18 + $0x8] sm:$0xff]
      %v3173 = vld [vmem:[#allocation18 + $0x10] sm:$0xff]
      %v3174 = vld [vmem:[#allocation18 + $0x18] sm:$0xff]
      %v3175 = vld [vmem:[#allocation18 + $0x20] sm:$0xff]
      %v3176 = vld [vmem:[#allocation18 + $0x28] sm:$0xff]
      %v3177 = vld [vmem:[#allocation18 + $0x30] sm:$0xff]
      %v3178 = vld [vmem:[#allocation18 + $0x38] sm:$0xff]
      %s3179 = sadd.s32 %s3161, 1
      %s3180 = scalar_lea.vmem [#allocation5], %s3179
      %v3181 = vld [vmem:[%s3180] sm:$0xff]
      %v3182 = vld [vmem:[%s3180 + $0x8] sm:$0xff]
      %v3183 = vld [vmem:[%s3180 + $0x10] sm:$0xff]
      %v3184 = vld [vmem:[%s3180 + $0x18] sm:$0xff]
      %v3185 = vld [vmem:[%s3180 + $0x20] sm:$0xff]
      %v3186 = vld [vmem:[%s3180 + $0x28] sm:$0xff]
      %v3187 = vld [vmem:[%s3180 + $0x30] sm:$0xff]
      %v3188 = vld [vmem:[%s3180 + $0x38] sm:$0xff]
      %s3189 = scalar_lea.vmem [#allocation18], 64
      %v3190 = vld [vmem:[%s3189] sm:$0xff]
      %v3191 = vld [vmem:[%s3189 + $0x8] sm:$0xff]
      %v3192 = vld [vmem:[%s3189 + $0x10] sm:$0xff]
      %v3193 = vld [vmem:[%s3189 + $0x18] sm:$0xff]
      %v3194 = vld [vmem:[%s3189 + $0x20] sm:$0xff]
      %v3195 = vld [vmem:[%s3189 + $0x28] sm:$0xff]
      %v3196 = vld [vmem:[%s3189 + $0x30] sm:$0xff]
      %v3197 = vld [vmem:[%s3189 + $0x38] sm:$0xff]
      %v3199 = vsel %vm2905, %v3181, 0
      %v3202 = vsel %vm2905, %v3182, 0
      %v3205 = vsel %vm2905, %v3183, 0
      %v3208 = vsel %vm2905, %v3184, 0
      %v3211 = vsel %vm2905, %v3185, 0
      %v3214 = vsel %vm2905, %v3186, 0
      %v3217 = vsel %vm2905, %v3187, 0
      %v3220 = vsel %vm2905, %v3188, 0
      %3222 = vmatpush.msra.mxu0 0.0
      %3223 = vmatpush.msra.mxu0 0.0
      %3224 = vmatpush.msra.mxu0 0.0
      %3225 = vmatpush.msra.mxu0 0.0
      %3226 = vmatpush.msra.mxu0 0.0
      %3227 = vmatpush.msra.mxu0 0.0
      %3228 = vmatpush.msra.mxu0 0.0
      %3229 = vmatpush.msra.mxu0 0.0
      %3230 = vmatpush.msra.mxu0 %v3197
      %3231 = vmatpush.msra.mxu0 %v3196
      %3232 = vmatpush.msra.mxu0 %v3195
      %3233 = vmatpush.msra.mxu0 %v3194
      %3234 = vmatpush.msra.mxu0 %v3193
      %3235 = vmatpush.msra.mxu0 %v3192
      %3236 = vmatpush.msra.mxu0 %v3191
      %3237 = vmatpush.msra.mxu0 %v3190
      %3238 = vmatmul.f32.gmra.mxu0 %v3199
      %v3239 = vpop.f32.mrf.mxu0
      %v3240 = vadd.f32 0.0, %v3239
      %3241 = vmatmul.f32.gmra.mxu0 %v3202
      %v3242 = vpop.f32.mrf.mxu0
      %v3243 = vadd.f32 0.0, %v3242
      %3244 = vmatmul.f32.gmra.mxu0 %v3205
      %v3245 = vpop.f32.mrf.mxu0
      %v3246 = vadd.f32 0.0, %v3245
      %3247 = vmatmul.f32.gmra.mxu0 %v3208
      %v3248 = vpop.f32.mrf.mxu0
      %v3249 = vadd.f32 0.0, %v3248
      %3250 = vmatmul.f32.gmra.mxu0 %v3211
      %v3251 = vpop.f32.mrf.mxu0
      %v3252 = vadd.f32 0.0, %v3251
      %3253 = vmatmul.f32.gmra.mxu0 %v3214
      %v3254 = vpop.f32.mrf.mxu0
      %v3255 = vadd.f32 0.0, %v3254
      %3256 = vmatmul.f32.gmra.mxu0 %v3217
      %v3257 = vpop.f32.mrf.mxu0
      %v3258 = vadd.f32 0.0, %v3257
      %3259 = vmatmul.f32.gmra.mxu0 %v3220
      %v3260 = vpop.f32.mrf.mxu0
      %v3261 = vadd.f32 0.0, %v3260
      %3262 = vdwg.mxu0
      %v3264 = vsel %vm2905, %v3163, 0
      %v3267 = vsel %vm2905, %v3164, 0
      %v3270 = vsel %vm2905, %v3165, 0
      %v3273 = vsel %vm2905, %v3166, 0
      %v3276 = vsel %vm2905, %v3167, 0
      %v3279 = vsel %vm2905, %v3168, 0
      %v3282 = vsel %vm2905, %v3169, 0
      %v3285 = vsel %vm2905, %v3170, 0
      %3287 = vmatpush.msra.mxu0 0.0
      %3288 = vmatpush.msra.mxu0 0.0
      %3289 = vmatpush.msra.mxu0 0.0
      %3290 = vmatpush.msra.mxu0 0.0
      %3291 = vmatpush.msra.mxu0 0.0
      %3292 = vmatpush.msra.mxu0 0.0
      %3293 = vmatpush.msra.mxu0 0.0
      %3294 = vmatpush.msra.mxu0 0.0
      %3295 = vmatpush.msra.mxu0 %v3178
      %3296 = vmatpush.msra.mxu0 %v3177
      %3297 = vmatpush.msra.mxu0 %v3176
      %3298 = vmatpush.msra.mxu0 %v3175
      %3299 = vmatpush.msra.mxu0 %v3174
      %3300 = vmatpush.msra.mxu0 %v3173
      %3301 = vmatpush.msra.mxu0 %v3172
      %3302 = vmatpush.msra.mxu0 %v3171
      %3303 = vmatmul.f32.gmra.mxu0 %v3264
      %v3304 = vpop.f32.mrf.mxu0
      %v3305 = vadd.f32 %v3240, %v3304
      %3306 = vmatmul.f32.gmra.mxu0 %v3267
      %v3307 = vpop.f32.mrf.mxu0
      %v3308 = vadd.f32 %v3243, %v3307
      %3309 = vmatmul.f32.gmra.mxu0 %v3270
      %v3310 = vpop.f32.mrf.mxu0
      %v3311 = vadd.f32 %v3246, %v3310
      %3312 = vmatmul.f32.gmra.mxu0 %v3273
      %v3313 = vpop.f32.mrf.mxu0
      %v3314 = vadd.f32 %v3249, %v3313
      %3315 = vmatmul.f32.gmra.mxu0 %v3276
      %v3316 = vpop.f32.mrf.mxu0
      %v3317 = vadd.f32 %v3252, %v3316
      %3318 = vmatmul.f32.gmra.mxu0 %v3279
      %v3319 = vpop.f32.mrf.mxu0
      %v3320 = vadd.f32 %v3255, %v3319
      %3321 = vmatmul.f32.gmra.mxu0 %v3282
      %v3322 = vpop.f32.mrf.mxu0
      %v3323 = vadd.f32 %v3258, %v3322
      %3324 = vmatmul.f32.gmra.mxu0 %v3285
      %v3325 = vpop.f32.mrf.mxu0
      %v3326 = vadd.f32 %v3261, %v3325
      %3327 = vdwg.mxu0
      %s3328 = sadd.s32 %s3161, 2
      %s3329 = scalar_lea.vmem [#allocation5], %s3328
      %v3330 = vld [vmem:[%s3329] sm:$0xff]
      %v3331 = vld [vmem:[%s3329 + $0x8] sm:$0xff]
      %v3332 = vld [vmem:[%s3329 + $0x10] sm:$0xff]
      %v3333 = vld [vmem:[%s3329 + $0x18] sm:$0xff]
      %v3334 = vld [vmem:[%s3329 + $0x20] sm:$0xff]
      %v3335 = vld [vmem:[%s3329 + $0x28] sm:$0xff]
      %v3336 = vld [vmem:[%s3329 + $0x30] sm:$0xff]
      %v3337 = vld [vmem:[%s3329 + $0x38] sm:$0xff]
      %s3338 = scalar_lea.vmem [#allocation18], 128
      %v3339 = vld [vmem:[%s3338] sm:$0xff]
      %v3340 = vld [vmem:[%s3338 + $0x8] sm:$0xff]
      %v3341 = vld [vmem:[%s3338 + $0x10] sm:$0xff]
      %v3342 = vld [vmem:[%s3338 + $0x18] sm:$0xff]
      %v3343 = vld [vmem:[%s3338 + $0x20] sm:$0xff]
      %v3344 = vld [vmem:[%s3338 + $0x28] sm:$0xff]
      %v3345 = vld [vmem:[%s3338 + $0x30] sm:$0xff]
      %v3346 = vld [vmem:[%s3338 + $0x38] sm:$0xff]
      %v3348 = vsel %vm2905, %v3330, 0
      %v3351 = vsel %vm2905, %v3331, 0
      %v3354 = vsel %vm2905, %v3332, 0
      %v3357 = vsel %vm2905, %v3333, 0
      %v3360 = vsel %vm2905, %v3334, 0
      %v3363 = vsel %vm2905, %v3335, 0
      %v3366 = vsel %vm2905, %v3336, 0
      %v3369 = vsel %vm2905, %v3337, 0
      %3371 = vmatpush.msra.mxu0 0.0
      %3372 = vmatpush.msra.mxu0 0.0
      %3373 = vmatpush.msra.mxu0 0.0
      %3374 = vmatpush.msra.mxu0 0.0
      %3375 = vmatpush.msra.mxu0 0.0
      %3376 = vmatpush.msra.mxu0 0.0
      %3377 = vmatpush.msra.mxu0 0.0
      %3378 = vmatpush.msra.mxu0 0.0
      %3379 = vmatpush.msra.mxu0 %v3346
      %3380 = vmatpush.msra.mxu0 %v3345
      %3381 = vmatpush.msra.mxu0 %v3344
      %3382 = vmatpush.msra.mxu0 %v3343
      %3383 = vmatpush.msra.mxu0 %v3342
      %3384 = vmatpush.msra.mxu0 %v3341
      %3385 = vmatpush.msra.mxu0 %v3340
      %3386 = vmatpush.msra.mxu0 %v3339
      %3387 = vmatmul.f32.gmra.mxu0 %v3348
      %v3388 = vpop.f32.mrf.mxu0
      %v3389 = vadd.f32 0.0, %v3388
      %3390 = vmatmul.f32.gmra.mxu0 %v3351
      %v3391 = vpop.f32.mrf.mxu0
      %v3392 = vadd.f32 0.0, %v3391
      %3393 = vmatmul.f32.gmra.mxu0 %v3354
      %v3394 = vpop.f32.mrf.mxu0
      %v3395 = vadd.f32 0.0, %v3394
      %3396 = vmatmul.f32.gmra.mxu0 %v3357
      %v3397 = vpop.f32.mrf.mxu0
      %v3398 = vadd.f32 0.0, %v3397
      %3399 = vmatmul.f32.gmra.mxu0 %v3360
      %v3400 = vpop.f32.mrf.mxu0
      %v3401 = vadd.f32 0.0, %v3400
      %3402 = vmatmul.f32.gmra.mxu0 %v3363
      %v3403 = vpop.f32.mrf.mxu0
      %v3404 = vadd.f32 0.0, %v3403
      %3405 = vmatmul.f32.gmra.mxu0 %v3366
      %v3406 = vpop.f32.mrf.mxu0
      %v3407 = vadd.f32 0.0, %v3406
      %3408 = vmatmul.f32.gmra.mxu0 %v3369
      %v3409 = vpop.f32.mrf.mxu0
      %v3410 = vadd.f32 0.0, %v3409
      %3411 = vdwg.mxu0
      %v3412 = vadd.f32 %v3305, %v3389
      %v3413 = vadd.f32 %v3308, %v3392
      %v3414 = vadd.f32 %v3311, %v3395
      %v3415 = vadd.f32 %v3314, %v3398
      %v3416 = vadd.f32 %v3317, %v3401
      %v3417 = vadd.f32 %v3320, %v3404
      %v3418 = vadd.f32 %v3323, %v3407
      %v3419 = vadd.f32 %v3326, %v3410
      %s3420 = sadd.s32 %s3161, 8
      %s3421 = scalar_lea.vmem [#allocation5], %s3420
      %v3422 = vld [vmem:[%s3421] sm:$0xff]
      %v3423 = vld [vmem:[%s3421 + $0x8] sm:$0xff]
      %v3424 = vld [vmem:[%s3421 + $0x10] sm:$0xff]
      %v3425 = vld [vmem:[%s3421 + $0x18] sm:$0xff]
      %v3426 = vld [vmem:[%s3421 + $0x20] sm:$0xff]
      %v3427 = vld [vmem:[%s3421 + $0x28] sm:$0xff]
      %v3428 = vld [vmem:[%s3421 + $0x30] sm:$0xff]
      %v3429 = vld [vmem:[%s3421 + $0x38] sm:$0xff]
      %s3430 = scalar_lea.vmem [#allocation18], 192
      %v3431 = vld [vmem:[%s3430] sm:$0xff]
      %v3432 = vld [vmem:[%s3430 + $0x8] sm:$0xff]
      %v3433 = vld [vmem:[%s3430 + $0x10] sm:$0xff]
      %v3434 = vld [vmem:[%s3430 + $0x18] sm:$0xff]
      %v3435 = vld [vmem:[%s3430 + $0x20] sm:$0xff]
      %v3436 = vld [vmem:[%s3430 + $0x28] sm:$0xff]
      %v3437 = vld [vmem:[%s3430 + $0x30] sm:$0xff]
      %v3438 = vld [vmem:[%s3430 + $0x38] sm:$0xff]
      %v3440 = vsel %vm2905, %v3422, 0
      %v3443 = vsel %vm2905, %v3423, 0
      %v3446 = vsel %vm2905, %v3424, 0
      %v3449 = vsel %vm2905, %v3425, 0
      %v3452 = vsel %vm2905, %v3426, 0
      %v3455 = vsel %vm2905, %v3427, 0
      %v3458 = vsel %vm2905, %v3428, 0
      %v3461 = vsel %vm2905, %v3429, 0
      %3463 = vmatpush.msra.mxu0 0.0
      %3464 = vmatpush.msra.mxu0 0.0
      %3465 = vmatpush.msra.mxu0 0.0
      %3466 = vmatpush.msra.mxu0 0.0
      %3467 = vmatpush.msra.mxu0 0.0
      %3468 = vmatpush.msra.mxu0 0.0
      %3469 = vmatpush.msra.mxu0 0.0
      %3470 = vmatpush.msra.mxu0 0.0
      %3471 = vmatpush.msra.mxu0 %v3438
      %3472 = vmatpush.msra.mxu0 %v3437
      %3473 = vmatpush.msra.mxu0 %v3436
      %3474 = vmatpush.msra.mxu0 %v3435
      %3475 = vmatpush.msra.mxu0 %v3434
      %3476 = vmatpush.msra.mxu0 %v3433
      %3477 = vmatpush.msra.mxu0 %v3432
      %3478 = vmatpush.msra.mxu0 %v3431
      %3479 = vmatmul.f32.gmra.mxu0 %v3440
      %v3480 = vpop.f32.mrf.mxu0
      %v3481 = vadd.f32 0.0, %v3480
      %3482 = vmatmul.f32.gmra.mxu0 %v3443
      %v3483 = vpop.f32.mrf.mxu0
      %v3484 = vadd.f32 0.0, %v3483
      %3485 = vmatmul.f32.gmra.mxu0 %v3446
      %v3486 = vpop.f32.mrf.mxu0
      %v3487 = vadd.f32 0.0, %v3486
      %3488 = vmatmul.f32.gmra.mxu0 %v3449
      %v3489 = vpop.f32.mrf.mxu0
      %v3490 = vadd.f32 0.0, %v3489
      %3491 = vmatmul.f32.gmra.mxu0 %v3452
      %v3492 = vpop.f32.mrf.mxu0
      %v3493 = vadd.f32 0.0, %v3492
      %3494 = vmatmul.f32.gmra.mxu0 %v3455
      %v3495 = vpop.f32.mrf.mxu0
      %v3496 = vadd.f32 0.0, %v3495
      %3497 = vmatmul.f32.gmra.mxu0 %v3458
      %v3498 = vpop.f32.mrf.mxu0
      %v3499 = vadd.f32 0.0, %v3498
      %3500 = vmatmul.f32.gmra.mxu0 %v3461
      %v3501 = vpop.f32.mrf.mxu0
      %v3502 = vadd.f32 0.0, %v3501
      %3503 = vdwg.mxu0
      %v3504 = vadd.f32 %v3412, %v3481
      %v3505 = vadd.f32 %v3413, %v3484
      %v3506 = vadd.f32 %v3414, %v3487
      %v3507 = vadd.f32 %v3415, %v3490
      %v3508 = vadd.f32 %v3416, %v3493
      %v3509 = vadd.f32 %v3417, %v3496
      %v3510 = vadd.f32 %v3418, %v3499
      %v3511 = vadd.f32 %v3419, %v3502
      %s3512 = sadd.s32 %s3161, 9
      %s3513 = scalar_lea.vmem [#allocation5], %s3512
      %v3514 = vld [vmem:[%s3513] sm:$0xff]
      %v3515 = vld [vmem:[%s3513 + $0x8] sm:$0xff]
      %v3516 = vld [vmem:[%s3513 + $0x10] sm:$0xff]
      %v3517 = vld [vmem:[%s3513 + $0x18] sm:$0xff]
      %v3518 = vld [vmem:[%s3513 + $0x20] sm:$0xff]
      %v3519 = vld [vmem:[%s3513 + $0x28] sm:$0xff]
      %v3520 = vld [vmem:[%s3513 + $0x30] sm:$0xff]
      %v3521 = vld [vmem:[%s3513 + $0x38] sm:$0xff]
      %s3522 = scalar_lea.vmem [#allocation18], 256
      %v3523 = vld [vmem:[%s3522] sm:$0xff]
      %v3524 = vld [vmem:[%s3522 + $0x8] sm:$0xff]
      %v3525 = vld [vmem:[%s3522 + $0x10] sm:$0xff]
      %v3526 = vld [vmem:[%s3522 + $0x18] sm:$0xff]
      %v3527 = vld [vmem:[%s3522 + $0x20] sm:$0xff]
      %v3528 = vld [vmem:[%s3522 + $0x28] sm:$0xff]
      %v3529 = vld [vmem:[%s3522 + $0x30] sm:$0xff]
      %v3530 = vld [vmem:[%s3522 + $0x38] sm:$0xff]
      %v3532 = vsel %vm2905, %v3514, 0
      %v3535 = vsel %vm2905, %v3515, 0
      %v3538 = vsel %vm2905, %v3516, 0
      %v3541 = vsel %vm2905, %v3517, 0
      %v3544 = vsel %vm2905, %v3518, 0
      %v3547 = vsel %vm2905, %v3519, 0
      %v3550 = vsel %vm2905, %v3520, 0
      %v3553 = vsel %vm2905, %v3521, 0
      %3555 = vmatpush.msra.mxu0 0.0
      %3556 = vmatpush.msra.mxu0 0.0
      %3557 = vmatpush.msra.mxu0 0.0
      %3558 = vmatpush.msra.mxu0 0.0
      %3559 = vmatpush.msra.mxu0 0.0
      %3560 = vmatpush.msra.mxu0 0.0
      %3561 = vmatpush.msra.mxu0 0.0
      %3562 = vmatpush.msra.mxu0 0.0
      %3563 = vmatpush.msra.mxu0 %v3530
      %3564 = vmatpush.msra.mxu0 %v3529
      %3565 = vmatpush.msra.mxu0 %v3528
      %3566 = vmatpush.msra.mxu0 %v3527
      %3567 = vmatpush.msra.mxu0 %v3526
      %3568 = vmatpush.msra.mxu0 %v3525
      %3569 = vmatpush.msra.mxu0 %v3524
      %3570 = vmatpush.msra.mxu0 %v3523
      %3571 = vmatmul.f32.gmra.mxu0 %v3532
      %v3572 = vpop.f32.mrf.mxu0
      %v3573 = vadd.f32 0.0, %v3572
      %3574 = vmatmul.f32.gmra.mxu0 %v3535
      %v3575 = vpop.f32.mrf.mxu0
      %v3576 = vadd.f32 0.0, %v3575
      %3577 = vmatmul.f32.gmra.mxu0 %v3538
      %v3578 = vpop.f32.mrf.mxu0
      %v3579 = vadd.f32 0.0, %v3578
      %3580 = vmatmul.f32.gmra.mxu0 %v3541
      %v3581 = vpop.f32.mrf.mxu0
      %v3582 = vadd.f32 0.0, %v3581
      %3583 = vmatmul.f32.gmra.mxu0 %v3544
      %v3584 = vpop.f32.mrf.mxu0
      %v3585 = vadd.f32 0.0, %v3584
      %3586 = vmatmul.f32.gmra.mxu0 %v3547
      %v3587 = vpop.f32.mrf.mxu0
      %v3588 = vadd.f32 0.0, %v3587
      %3589 = vmatmul.f32.gmra.mxu0 %v3550
      %v3590 = vpop.f32.mrf.mxu0
      %v3591 = vadd.f32 0.0, %v3590
      %3592 = vmatmul.f32.gmra.mxu0 %v3553
      %v3593 = vpop.f32.mrf.mxu0
      %v3594 = vadd.f32 0.0, %v3593
      %3595 = vdwg.mxu0
      %v3596 = vadd.f32 %v3504, %v3573
      %v3597 = vadd.f32 %v3505, %v3576
      %v3598 = vadd.f32 %v3506, %v3579
      %v3599 = vadd.f32 %v3507, %v3582
      %v3600 = vadd.f32 %v3508, %v3585
      %v3601 = vadd.f32 %v3509, %v3588
      %v3602 = vadd.f32 %v3510, %v3591
      %v3603 = vadd.f32 %v3511, %v3594
      %s3604 = sadd.s32 %s3161, 10
      %s3605 = scalar_lea.vmem [#allocation5], %s3604
      %v3606 = vld [vmem:[%s3605] sm:$0xff]
      %v3607 = vld [vmem:[%s3605 + $0x8] sm:$0xff]
      %v3608 = vld [vmem:[%s3605 + $0x10] sm:$0xff]
      %v3609 = vld [vmem:[%s3605 + $0x18] sm:$0xff]
      %v3610 = vld [vmem:[%s3605 + $0x20] sm:$0xff]
      %v3611 = vld [vmem:[%s3605 + $0x28] sm:$0xff]
      %v3612 = vld [vmem:[%s3605 + $0x30] sm:$0xff]
      %v3613 = vld [vmem:[%s3605 + $0x38] sm:$0xff]
      %s3614 = scalar_lea.vmem [#allocation18], 320
      %v3615 = vld [vmem:[%s3614] sm:$0xff]
      %v3616 = vld [vmem:[%s3614 + $0x8] sm:$0xff]
      %v3617 = vld [vmem:[%s3614 + $0x10] sm:$0xff]
      %v3618 = vld [vmem:[%s3614 + $0x18] sm:$0xff]
      %v3619 = vld [vmem:[%s3614 + $0x20] sm:$0xff]
      %v3620 = vld [vmem:[%s3614 + $0x28] sm:$0xff]
      %v3621 = vld [vmem:[%s3614 + $0x30] sm:$0xff]
      %v3622 = vld [vmem:[%s3614 + $0x38] sm:$0xff]
      %v3624 = vsel %vm2905, %v3606, 0
      %v3627 = vsel %vm2905, %v3607, 0
      %v3630 = vsel %vm2905, %v3608, 0
      %v3633 = vsel %vm2905, %v3609, 0
      %v3636 = vsel %vm2905, %v3610, 0
      %v3639 = vsel %vm2905, %v3611, 0
      %v3642 = vsel %vm2905, %v3612, 0
      %v3645 = vsel %vm2905, %v3613, 0
      %3647 = vmatpush.msra.mxu0 0.0
      %3648 = vmatpush.msra.mxu0 0.0
      %3649 = vmatpush.msra.mxu0 0.0
      %3650 = vmatpush.msra.mxu0 0.0
      %3651 = vmatpush.msra.mxu0 0.0
      %3652 = vmatpush.msra.mxu0 0.0
      %3653 = vmatpush.msra.mxu0 0.0
      %3654 = vmatpush.msra.mxu0 0.0
      %3655 = vmatpush.msra.mxu0 %v3622
      %3656 = vmatpush.msra.mxu0 %v3621
      %3657 = vmatpush.msra.mxu0 %v3620
      %3658 = vmatpush.msra.mxu0 %v3619
      %3659 = vmatpush.msra.mxu0 %v3618
      %3660 = vmatpush.msra.mxu0 %v3617
      %3661 = vmatpush.msra.mxu0 %v3616
      %3662 = vmatpush.msra.mxu0 %v3615
      %3663 = vmatmul.f32.gmra.mxu0 %v3624
      %v3664 = vpop.f32.mrf.mxu0
      %v3665 = vadd.f32 0.0, %v3664
      %3666 = vmatmul.f32.gmra.mxu0 %v3627
      %v3667 = vpop.f32.mrf.mxu0
      %v3668 = vadd.f32 0.0, %v3667
      %3669 = vmatmul.f32.gmra.mxu0 %v3630
      %v3670 = vpop.f32.mrf.mxu0
      %v3671 = vadd.f32 0.0, %v3670
      %3672 = vmatmul.f32.gmra.mxu0 %v3633
      %v3673 = vpop.f32.mrf.mxu0
      %v3674 = vadd.f32 0.0, %v3673
      %3675 = vmatmul.f32.gmra.mxu0 %v3636
      %v3676 = vpop.f32.mrf.mxu0
      %v3677 = vadd.f32 0.0, %v3676
      %3678 = vmatmul.f32.gmra.mxu0 %v3639
      %v3679 = vpop.f32.mrf.mxu0
      %v3680 = vadd.f32 0.0, %v3679
      %3681 = vmatmul.f32.gmra.mxu0 %v3642
      %v3682 = vpop.f32.mrf.mxu0
      %v3683 = vadd.f32 0.0, %v3682
      %3684 = vmatmul.f32.gmra.mxu0 %v3645
      %v3685 = vpop.f32.mrf.mxu0
      %v3686 = vadd.f32 0.0, %v3685
      %3687 = vdwg.mxu0
      %v3688 = vadd.f32 %v3596, %v3665
      %v3689 = vadd.f32 %v3597, %v3668
      %v3690 = vadd.f32 %v3598, %v3671
      %v3691 = vadd.f32 %v3599, %v3674
      %v3692 = vadd.f32 %v3600, %v3677
      %v3693 = vadd.f32 %v3601, %v3680
      %v3694 = vadd.f32 %v3602, %v3683
      %v3695 = vadd.f32 %v3603, %v3686
      %s3696 = sadd.s32 %s3161, 16
      %s3697 = scalar_lea.vmem [#allocation5], %s3696
      %v3698 = vld [vmem:[%s3697] sm:$0xff]
      %v3699 = vld [vmem:[%s3697 + $0x8] sm:$0xff]
      %v3700 = vld [vmem:[%s3697 + $0x10] sm:$0xff]
      %v3701 = vld [vmem:[%s3697 + $0x18] sm:$0xff]
      %v3702 = vld [vmem:[%s3697 + $0x20] sm:$0xff]
      %v3703 = vld [vmem:[%s3697 + $0x28] sm:$0xff]
      %v3704 = vld [vmem:[%s3697 + $0x30] sm:$0xff]
      %v3705 = vld [vmem:[%s3697 + $0x38] sm:$0xff]
      %s3706 = scalar_lea.vmem [#allocation18], 384
      %v3707 = vld [vmem:[%s3706] sm:$0xff]
      %v3708 = vld [vmem:[%s3706 + $0x8] sm:$0xff]
      %v3709 = vld [vmem:[%s3706 + $0x10] sm:$0xff]
      %v3710 = vld [vmem:[%s3706 + $0x18] sm:$0xff]
      %v3711 = vld [vmem:[%s3706 + $0x20] sm:$0xff]
      %v3712 = vld [vmem:[%s3706 + $0x28] sm:$0xff]
      %v3713 = vld [vmem:[%s3706 + $0x30] sm:$0xff]
      %v3714 = vld [vmem:[%s3706 + $0x38] sm:$0xff]
      %v3716 = vsel %vm2905, %v3698, 0
      %v3719 = vsel %vm2905, %v3699, 0
      %v3722 = vsel %vm2905, %v3700, 0
      %v3725 = vsel %vm2905, %v3701, 0
      %v3728 = vsel %vm2905, %v3702, 0
      %v3731 = vsel %vm2905, %v3703, 0
      %v3734 = vsel %vm2905, %v3704, 0
      %v3737 = vsel %vm2905, %v3705, 0
      %3739 = vmatpush.msra.mxu0 0.0
      %3740 = vmatpush.msra.mxu0 0.0
      %3741 = vmatpush.msra.mxu0 0.0
      %3742 = vmatpush.msra.mxu0 0.0
      %3743 = vmatpush.msra.mxu0 0.0
      %3744 = vmatpush.msra.mxu0 0.0
      %3745 = vmatpush.msra.mxu0 0.0
      %3746 = vmatpush.msra.mxu0 0.0
      %3747 = vmatpush.msra.mxu0 %v3714
      %3748 = vmatpush.msra.mxu0 %v3713
      %3749 = vmatpush.msra.mxu0 %v3712
      %3750 = vmatpush.msra.mxu0 %v3711
      %3751 = vmatpush.msra.mxu0 %v3710
      %3752 = vmatpush.msra.mxu0 %v3709
      %3753 = vmatpush.msra.mxu0 %v3708
      %3754 = vmatpush.msra.mxu0 %v3707
      %3755 = vmatmul.f32.gmra.mxu0 %v3716
      %v3756 = vpop.f32.mrf.mxu0
      %v3757 = vadd.f32 0.0, %v3756
      %3758 = vmatmul.f32.gmra.mxu0 %v3719
      %v3759 = vpop.f32.mrf.mxu0
      %v3760 = vadd.f32 0.0, %v3759
      %3761 = vmatmul.f32.gmra.mxu0 %v3722
      %v3762 = vpop.f32.mrf.mxu0
      %v3763 = vadd.f32 0.0, %v3762
      %3764 = vmatmul.f32.gmra.mxu0 %v3725
      %v3765 = vpop.f32.mrf.mxu0
      %v3766 = vadd.f32 0.0, %v3765
      %3767 = vmatmul.f32.gmra.mxu0 %v3728
      %v3768 = vpop.f32.mrf.mxu0
      %v3769 = vadd.f32 0.0, %v3768
      %3770 = vmatmul.f32.gmra.mxu0 %v3731
      %v3771 = vpop.f32.mrf.mxu0
      %v3772 = vadd.f32 0.0, %v3771
      %3773 = vmatmul.f32.gmra.mxu0 %v3734
      %v3774 = vpop.f32.mrf.mxu0
      %v3775 = vadd.f32 0.0, %v3774
      %3776 = vmatmul.f32.gmra.mxu0 %v3737
      %v3777 = vpop.f32.mrf.mxu0
      %v3778 = vadd.f32 0.0, %v3777
      %3779 = vdwg.mxu0
      %v3780 = vadd.f32 %v3688, %v3757
      %v3781 = vadd.f32 %v3689, %v3760
      %v3782 = vadd.f32 %v3690, %v3763
      %v3783 = vadd.f32 %v3691, %v3766
      %v3784 = vadd.f32 %v3692, %v3769
      %v3785 = vadd.f32 %v3693, %v3772
      %v3786 = vadd.f32 %v3694, %v3775
      %v3787 = vadd.f32 %v3695, %v3778
      %s3788 = sadd.s32 %s3161, 17
      %s3789 = scalar_lea.vmem [#allocation5], %s3788
      %v3790 = vld [vmem:[%s3789] sm:$0xff]
      %v3791 = vld [vmem:[%s3789 + $0x8] sm:$0xff]
      %v3792 = vld [vmem:[%s3789 + $0x10] sm:$0xff]
      %v3793 = vld [vmem:[%s3789 + $0x18] sm:$0xff]
      %v3794 = vld [vmem:[%s3789 + $0x20] sm:$0xff]
      %v3795 = vld [vmem:[%s3789 + $0x28] sm:$0xff]
      %v3796 = vld [vmem:[%s3789 + $0x30] sm:$0xff]
      %v3797 = vld [vmem:[%s3789 + $0x38] sm:$0xff]
      %s3798 = scalar_lea.vmem [#allocation18], 448
      %v3799 = vld [vmem:[%s3798] sm:$0xff]
      %v3800 = vld [vmem:[%s3798 + $0x8] sm:$0xff]
      %v3801 = vld [vmem:[%s3798 + $0x10] sm:$0xff]
      %v3802 = vld [vmem:[%s3798 + $0x18] sm:$0xff]
      %v3803 = vld [vmem:[%s3798 + $0x20] sm:$0xff]
      %v3804 = vld [vmem:[%s3798 + $0x28] sm:$0xff]
      %v3805 = vld [vmem:[%s3798 + $0x30] sm:$0xff]
      %v3806 = vld [vmem:[%s3798 + $0x38] sm:$0xff]
      %v3808 = vsel %vm2905, %v3790, 0
      %v3811 = vsel %vm2905, %v3791, 0
      %v3814 = vsel %vm2905, %v3792, 0
      %v3817 = vsel %vm2905, %v3793, 0
      %v3820 = vsel %vm2905, %v3794, 0
      %v3823 = vsel %vm2905, %v3795, 0
      %v3826 = vsel %vm2905, %v3796, 0
      %v3829 = vsel %vm2905, %v3797, 0
      %3831 = vmatpush.msra.mxu0 0.0
      %3832 = vmatpush.msra.mxu0 0.0
      %3833 = vmatpush.msra.mxu0 0.0
      %3834 = vmatpush.msra.mxu0 0.0
      %3835 = vmatpush.msra.mxu0 0.0
      %3836 = vmatpush.msra.mxu0 0.0
      %3837 = vmatpush.msra.mxu0 0.0
      %3838 = vmatpush.msra.mxu0 0.0
      %3839 = vmatpush.msra.mxu0 %v3806
      %3840 = vmatpush.msra.mxu0 %v3805
      %3841 = vmatpush.msra.mxu0 %v3804
      %3842 = vmatpush.msra.mxu0 %v3803
      %3843 = vmatpush.msra.mxu0 %v3802
      %3844 = vmatpush.msra.mxu0 %v3801
      %3845 = vmatpush.msra.mxu0 %v3800
      %3846 = vmatpush.msra.mxu0 %v3799
      %3847 = vmatmul.f32.gmra.mxu0 %v3808
      %v3848 = vpop.f32.mrf.mxu0
      %v3849 = vadd.f32 0.0, %v3848
      %3850 = vmatmul.f32.gmra.mxu0 %v3811
      %v3851 = vpop.f32.mrf.mxu0
      %v3852 = vadd.f32 0.0, %v3851
      %3853 = vmatmul.f32.gmra.mxu0 %v3814
      %v3854 = vpop.f32.mrf.mxu0
      %v3855 = vadd.f32 0.0, %v3854
      %3856 = vmatmul.f32.gmra.mxu0 %v3817
      %v3857 = vpop.f32.mrf.mxu0
      %v3858 = vadd.f32 0.0, %v3857
      %3859 = vmatmul.f32.gmra.mxu0 %v3820
      %v3860 = vpop.f32.mrf.mxu0
      %v3861 = vadd.f32 0.0, %v3860
      %3862 = vmatmul.f32.gmra.mxu0 %v3823
      %v3863 = vpop.f32.mrf.mxu0
      %v3864 = vadd.f32 0.0, %v3863
      %3865 = vmatmul.f32.gmra.mxu0 %v3826
      %v3866 = vpop.f32.mrf.mxu0
      %v3867 = vadd.f32 0.0, %v3866
      %3868 = vmatmul.f32.gmra.mxu0 %v3829
      %v3869 = vpop.f32.mrf.mxu0
      %v3870 = vadd.f32 0.0, %v3869
      %3871 = vdwg.mxu0
      %v3872 = vadd.f32 %v3780, %v3849
      %v3873 = vadd.f32 %v3781, %v3852
      %v3874 = vadd.f32 %v3782, %v3855
      %v3875 = vadd.f32 %v3783, %v3858
      %v3876 = vadd.f32 %v3784, %v3861
      %v3877 = vadd.f32 %v3785, %v3864
      %v3878 = vadd.f32 %v3786, %v3867
      %v3879 = vadd.f32 %v3787, %v3870
      %s3880 = sadd.s32 %s3161, 18
      %s3881 = scalar_lea.vmem [#allocation5], %s3880
      %v3882 = vld [vmem:[%s3881] sm:$0xff]
      %v3883 = vld [vmem:[%s3881 + $0x8] sm:$0xff]
      %v3884 = vld [vmem:[%s3881 + $0x10] sm:$0xff]
      %v3885 = vld [vmem:[%s3881 + $0x18] sm:$0xff]
      %v3886 = vld [vmem:[%s3881 + $0x20] sm:$0xff]
      %v3887 = vld [vmem:[%s3881 + $0x28] sm:$0xff]
      %v3888 = vld [vmem:[%s3881 + $0x30] sm:$0xff]
      %v3889 = vld [vmem:[%s3881 + $0x38] sm:$0xff]
      %s3890 = scalar_lea.vmem [#allocation18], 512
      %v3891 = vld [vmem:[%s3890] sm:$0xff]
      %v3892 = vld [vmem:[%s3890 + $0x8] sm:$0xff]
      %v3893 = vld [vmem:[%s3890 + $0x10] sm:$0xff]
      %v3894 = vld [vmem:[%s3890 + $0x18] sm:$0xff]
      %v3895 = vld [vmem:[%s3890 + $0x20] sm:$0xff]
      %v3896 = vld [vmem:[%s3890 + $0x28] sm:$0xff]
      %v3897 = vld [vmem:[%s3890 + $0x30] sm:$0xff]
      %v3898 = vld [vmem:[%s3890 + $0x38] sm:$0xff]
      %v3900 = vsel %vm2905, %v3882, 0
      %v3903 = vsel %vm2905, %v3883, 0
      %v3906 = vsel %vm2905, %v3884, 0
      %v3909 = vsel %vm2905, %v3885, 0
      %v3912 = vsel %vm2905, %v3886, 0
      %v3915 = vsel %vm2905, %v3887, 0
      %v3918 = vsel %vm2905, %v3888, 0
      %v3921 = vsel %vm2905, %v3889, 0
      %3923 = vmatpush.msra.mxu0 0.0
      %3924 = vmatpush.msra.mxu0 0.0
      %3925 = vmatpush.msra.mxu0 0.0
      %3926 = vmatpush.msra.mxu0 0.0
      %3927 = vmatpush.msra.mxu0 0.0
      %3928 = vmatpush.msra.mxu0 0.0
      %3929 = vmatpush.msra.mxu0 0.0
      %3930 = vmatpush.msra.mxu0 0.0
      %3931 = vmatpush.msra.mxu0 %v3898
      %3932 = vmatpush.msra.mxu0 %v3897
      %3933 = vmatpush.msra.mxu0 %v3896
      %3934 = vmatpush.msra.mxu0 %v3895
      %3935 = vmatpush.msra.mxu0 %v3894
      %3936 = vmatpush.msra.mxu0 %v3893
      %3937 = vmatpush.msra.mxu0 %v3892
      %3938 = vmatpush.msra.mxu0 %v3891
      %3939 = vmatmul.f32.gmra.mxu0 %v3900
      %v3940 = vpop.f32.mrf.mxu0
      %v3941 = vadd.f32 0.0, %v3940
      %3942 = vmatmul.f32.gmra.mxu0 %v3903
      %v3943 = vpop.f32.mrf.mxu0
      %v3944 = vadd.f32 0.0, %v3943
      %3945 = vmatmul.f32.gmra.mxu0 %v3906
      %v3946 = vpop.f32.mrf.mxu0
      %v3947 = vadd.f32 0.0, %v3946
      %3948 = vmatmul.f32.gmra.mxu0 %v3909
      %v3949 = vpop.f32.mrf.mxu0
      %v3950 = vadd.f32 0.0, %v3949
      %3951 = vmatmul.f32.gmra.mxu0 %v3912
      %v3952 = vpop.f32.mrf.mxu0
      %v3953 = vadd.f32 0.0, %v3952
      %3954 = vmatmul.f32.gmra.mxu0 %v3915
      %v3955 = vpop.f32.mrf.mxu0
      %v3956 = vadd.f32 0.0, %v3955
      %3957 = vmatmul.f32.gmra.mxu0 %v3918
      %v3958 = vpop.f32.mrf.mxu0
      %v3959 = vadd.f32 0.0, %v3958
      %3960 = vmatmul.f32.gmra.mxu0 %v3921
      %v3961 = vpop.f32.mrf.mxu0
      %v3962 = vadd.f32 0.0, %v3961
      %3963 = vdwg.mxu0
      %v3964 = vadd.f32 %v3872, %v3941
      %v3965 = vadd.f32 %v3873, %v3944
      %v3966 = vadd.f32 %v3874, %v3947
      %v3967 = vadd.f32 %v3875, %v3950
      %v3968 = vadd.f32 %v3876, %v3953
      %v3969 = vadd.f32 %v3877, %v3956
      %v3970 = vadd.f32 %v3878, %v3959
      %v3971 = vadd.f32 %v3879, %v3962
      %s3972 = scalar_lea.vmem [#allocation6], %s3161
      %3973 = vst [vmem:[%s3972] sm:$0xff] %v3964
      %3974 = vst [vmem:[%s3972 + $0x8] sm:$0xff] %v3965
      %3975 = vst [vmem:[%s3972 + $0x10] sm:$0xff] %v3966
      %3976 = vst [vmem:[%s3972 + $0x18] sm:$0xff] %v3967
      %3977 = vst [vmem:[%s3972 + $0x20] sm:$0xff] %v3968
      %3978 = vst [vmem:[%s3972 + $0x28] sm:$0xff] %v3969
      %3979 = vst [vmem:[%s3972 + $0x30] sm:$0xff] %v3970
      %3980 = vst [vmem:[%s3972 + $0x38] sm:$0xff] %v3971
    $region96: #{model_forward.1} parent=1 // loop_footer
      %s3160 = sadd.s32 1, %s3156
    $region97: #{model_forward.1} parent=1 // loop_footer_branch
      %3155 = sbr.rel target = $region93
    $region98: #{model_forward.1} parent=1 // loop_exit
      _
    %v3981 = vlaneseq
    %v3982 = vshrl.u32 %v3981, 7
    %s3983 = scalar_lea.vmem [#allocation6], 8
    %v3984 = vld [vmem:[%s3983] ss:$2 sm:$0xf]
    %vm3985 = vcmp.eq.s32.totalorder %v3982, 0
    %v3986 = vsel %vm3985, -1e+30, %v3984
    %s3987 = scalar_lea.vmem [#allocation6], 9
    %v3988 = vld [vmem:[%s3987] ss:$2 sm:$0xf]
    %vm3989 = vcmp.eq.s32.totalorder %v3982, 3
    %v3990 = vsel %vm3989, -1e+30, %v3988
    %v3991 = vmax.f32 %v3986, %v3990
    %v3992 = vld [vmem:[#allocation19] sm:$0x1]
    %v3994 = vperm.slane %v3992, 0
    %v3996 = vadd.f32 %v3991, %v3994
    %v3997 = vmul.f32 %v3996, 0.01
    %v3998 = vmax.f32 %v3996, %v3997
    %3999 = vst [vmem:[#allocation7] sm:$0x1] %v3998
    %4000 = vst [vmem:[#allocation7 + $0x1] sm:$0x2] %v3998
    %4001 = vst [vmem:[#allocation7 + $0x2] sm:$0x4] %v3998
    %4002 = vst [vmem:[#allocation7 + $0x3] sm:$0x8] %v3998
    %s4003 = scalar_lea.vmem [#allocation6], 16
    %v4004 = vld [vmem:[%s4003] ss:$2 sm:$0xf]
    %v4005 = vsel %vm3985, -1e+30, %v4004
    %s4006 = scalar_lea.vmem [#allocation6], 17
    %v4007 = vld [vmem:[%s4006] ss:$2 sm:$0xf]
    %v4008 = vsel %vm3989, -1e+30, %v4007
    %v4009 = vmax.f32 %v4005, %v4008
    %s4010 = scalar_lea.vmem [#allocation6], 24
    %v4011 = vld [vmem:[%s4010] ss:$2 sm:$0xf]
    %v4012 = vsel %vm3985, -1e+30, %v4011
    %s4013 = scalar_lea.vmem [#allocation6], 25
    %v4014 = vld [vmem:[%s4013] ss:$2 sm:$0xf]
    %v4015 = vsel %vm3989, -1e+30, %v4014
    %v4016 = vmax.f32 %v4012, %v4015
    %v4017 = vmax.f32 %v4009, %v4016
    %v4018 = vld [vmem:[#allocation19] sm:$0x1]
    %v4020 = vperm.slane %v4018, 0
    %v4022 = vadd.f32 %v4017, %v4020
    %v4023 = vmul.f32 %v4022, 0.01
    %v4024 = vmax.f32 %v4022, %v4023
    %4025 = vst [vmem:[#allocation7 + $0x8] sm:$0x1] %v4024
    %4026 = vst [vmem:[#allocation7 + $0x9] sm:$0x2] %v4024
    %4027 = vst [vmem:[#allocation7 + $0xa] sm:$0x4] %v4024
    %4028 = vst [vmem:[#allocation7 + $0xb] sm:$0x8] %v4024
    %s4029 = scalar_lea.vmem [#allocation6], 32
    %v4030 = vld [vmem:[%s4029] ss:$2 sm:$0xf]
    %v4031 = vsel %vm3985, -1e+30, %v4030
    %s4032 = scalar_lea.vmem [#allocation6], 33
    %v4033 = vld [vmem:[%s4032] ss:$2 sm:$0xf]
    %v4034 = vsel %vm3989, -1e+30, %v4033
    %v4035 = vmax.f32 %v4031, %v4034
    %s4036 = scalar_lea.vmem [#allocation6], 40
    %v4037 = vld [vmem:[%s4036] ss:$2 sm:$0xf]
    %v4038 = vsel %vm3985, -1e+30, %v4037
    %s4039 = scalar_lea.vmem [#allocation6], 41
    %v4040 = vld [vmem:[%s4039] ss:$2 sm:$0xf]
    %v4041 = vsel %vm3989, -1e+30, %v4040
    %v4042 = vmax.f32 %v4038, %v4041
    %v4043 = vmax.f32 %v4035, %v4042
    %v4044 = vld [vmem:[#allocation19] sm:$0x1]
    %v4046 = vperm.slane %v4044, 0
    %v4048 = vadd.f32 %v4043, %v4046
    %v4049 = vmul.f32 %v4048, 0.01
    %v4050 = vmax.f32 %v4048, %v4049
    %4051 = vst [vmem:[#allocation7 + $0x10] sm:$0x1] %v4050
    %4052 = vst [vmem:[#allocation7 + $0x11] sm:$0x2] %v4050
    %4053 = vst [vmem:[#allocation7 + $0x12] sm:$0x4] %v4050
    %4054 = vst [vmem:[#allocation7 + $0x13] sm:$0x8] %v4050
    %s4055 = scalar_lea.vmem [#allocation6], 48
    %v4056 = vld [vmem:[%s4055] ss:$2 sm:$0xf]
    %v4057 = vsel %vm3985, -1e+30, %v4056
    %s4058 = scalar_lea.vmem [#allocation6], 49
    %v4059 = vld [vmem:[%s4058] ss:$2 sm:$0xf]
    %v4060 = vsel %vm3989, -1e+30, %v4059
    %v4061 = vmax.f32 %v4057, %v4060
    %v4062 = vld [vmem:[#allocation19] sm:$0x1]
    %v4064 = vperm.slane %v4062, 0
    %v4066 = vadd.f32 %v4061, %v4064
    %v4067 = vmul.f32 %v4066, 0.01
    %v4068 = vmax.f32 %v4066, %v4067
    %4069 = vst [vmem:[#allocation7 + $0x18] sm:$0x1] %v4068
    %4070 = vst [vmem:[#allocation7 + $0x19] sm:$0x2] %v4068
    %4071 = vst [vmem:[#allocation7 + $0x1a] sm:$0x4] %v4068
    %4072 = vst [vmem:[#allocation7 + $0x1b] sm:$0x8] %v4068
    %s4073 = scalar_lea.vmem [#allocation6], 72
    %v4074 = vld [vmem:[%s4073] ss:$2 sm:$0xf]
    %v4075 = vsel %vm3985, -1e+30, %v4074
    %s4076 = scalar_lea.vmem [#allocation6], 73
    %v4077 = vld [vmem:[%s4076] ss:$2 sm:$0xf]
    %v4078 = vsel %vm3989, -1e+30, %v4077
    %v4079 = vmax.f32 %v4075, %v4078
    %v4080 = vld [vmem:[#allocation19] sm:$0x1]
    %v4082 = vperm.slane %v4080, 0
    %v4084 = vadd.f32 %v4079, %v4082
    %v4085 = vmul.f32 %v4084, 0.01
    %v4086 = vmax.f32 %v4084, %v4085
    %4087 = vst [vmem:[#allocation7 + $0x1] sm:$0x1] %v4086
    %4088 = vst [vmem:[#allocation7 + $0x2] sm:$0x2] %v4086
    %4089 = vst [vmem:[#allocation7 + $0x3] sm:$0x4] %v4086
    %4090 = vst [vmem:[#allocation7 + $0x4] sm:$0x8] %v4086
    %s4091 = scalar_lea.vmem [#allocation6], 80
    %v4092 = vld [vmem:[%s4091] ss:$2 sm:$0xf]
    %v4093 = vsel %vm3985, -1e+30, %v4092
    %s4094 = scalar_lea.vmem [#allocation6], 81
    %v4095 = vld [vmem:[%s4094] ss:$2 sm:$0xf]
    %v4096 = vsel %vm3989, -1e+30, %v4095
    %v4097 = vmax.f32 %v4093, %v4096
    %s4098 = scalar_lea.vmem [#allocation6], 88
    %v4099 = vld [vmem:[%s4098] ss:$2 sm:$0xf]
    %v4100 = vsel %vm3985, -1e+30, %v4099
    %s4101 = scalar_lea.vmem [#allocation6], 89
    %v4102 = vld [vmem:[%s4101] ss:$2 sm:$0xf]
    %v4103 = vsel %vm3989, -1e+30, %v4102
    %v4104 = vmax.f32 %v4100, %v4103
    %v4105 = vmax.f32 %v4097, %v4104
    %v4106 = vld [vmem:[#allocation19] sm:$0x1]
    %v4108 = vperm.slane %v4106, 0
    %v4110 = vadd.f32 %v4105, %v4108
    %v4111 = vmul.f32 %v4110, 0.01
    %v4112 = vmax.f32 %v4110, %v4111
    %4113 = vst [vmem:[#allocation7 + $0x9] sm:$0x1] %v4112
    %4114 = vst [vmem:[#allocation7 + $0xa] sm:$0x2] %v4112
    %4115 = vst [vmem:[#allocation7 + $0xb] sm:$0x4] %v4112
    %4116 = vst [vmem:[#allocation7 + $0xc] sm:$0x8] %v4112
    %s4117 = scalar_lea.vmem [#allocation6], 96
    %v4118 = vld [vmem:[%s4117] ss:$2 sm:$0xf]
    %v4119 = vsel %vm3985, -1e+30, %v4118
    %s4120 = scalar_lea.vmem [#allocation6], 97
    %v4121 = vld [vmem:[%s4120] ss:$2 sm:$0xf]
    %v4122 = vsel %vm3989, -1e+30, %v4121
    %v4123 = vmax.f32 %v4119, %v4122
    %s4124 = scalar_lea.vmem [#allocation6], 104
    %v4125 = vld [vmem:[%s4124] ss:$2 sm:$0xf]
    %v4126 = vsel %vm3985, -1e+30, %v4125
    %s4127 = scalar_lea.vmem [#allocation6], 105
    %v4128 = vld [vmem:[%s4127] ss:$2 sm:$0xf]
    %v4129 = vsel %vm3989, -1e+30, %v4128
    %v4130 = vmax.f32 %v4126, %v4129
    %v4131 = vmax.f32 %v4123, %v4130
    %v4132 = vld [vmem:[#allocation19] sm:$0x1]
    %v4134 = vperm.slane %v4132, 0
    %v4136 = vadd.f32 %v4131, %v4134
    %v4137 = vmul.f32 %v4136, 0.01
    %v4138 = vmax.f32 %v4136, %v4137
    %4139 = vst [vmem:[#allocation7 + $0x11] sm:$0x1] %v4138
    %4140 = vst [vmem:[#allocation7 + $0x12] sm:$0x2] %v4138
    %4141 = vst [vmem:[#allocation7 + $0x13] sm:$0x4] %v4138
    %4142 = vst [vmem:[#allocation7 + $0x14] sm:$0x8] %v4138
    %s4143 = scalar_lea.vmem [#allocation6], 112
    %v4144 = vld [vmem:[%s4143] ss:$2 sm:$0xf]
    %v4145 = vsel %vm3985, -1e+30, %v4144
    %s4146 = scalar_lea.vmem [#allocation6], 113
    %v4147 = vld [vmem:[%s4146] ss:$2 sm:$0xf]
    %v4148 = vsel %vm3989, -1e+30, %v4147
    %v4149 = vmax.f32 %v4145, %v4148
    %v4150 = vld [vmem:[#allocation19] sm:$0x1]
    %v4152 = vperm.slane %v4150, 0
    %v4154 = vadd.f32 %v4149, %v4152
    %v4155 = vmul.f32 %v4154, 0.01
    %v4156 = vmax.f32 %v4154, %v4155
    %4157 = vst [vmem:[#allocation7 + $0x19] sm:$0x1] %v4156
    %4158 = vst [vmem:[#allocation7 + $0x1a] sm:$0x2] %v4156
    %4159 = vst [vmem:[#allocation7 + $0x1b] sm:$0x4] %v4156
    %4160 = vst [vmem:[#allocation7 + $0x1c] sm:$0x8] %v4156
    %s4161 = smul.u32 8, 16
    %s4162 = smul.u32 %s4161, 16
    %s4163 = smul.u32 %s4162, 4
    %s4164 = sshll.u32 %s4163, 4
    %4165 = dma.done [#allocation9], %s4164
    %v4166 = vld [vmem:[#allocation7] sm:$0x3]
    %v4167 = vld [vmem:[#allocation8] sm:$0xff]
    %v4168 = vld [vmem:[#allocation8 + $0x8] sm:$0xff]
    %v4169 = vld [vmem:[#allocation8 + $0x10] sm:$0xff]
    %v4170 = vld [vmem:[#allocation8 + $0x18] sm:$0xff]
    %v4171 = vld [vmem:[#allocation8 + $0x20] sm:$0xff]
    %v4172 = vld [vmem:[#allocation8 + $0x28] sm:$0xff]
    %v4173 = vld [vmem:[#allocation8 + $0x30] sm:$0xff]
    %v4174 = vld [vmem:[#allocation8 + $0x38] sm:$0xff]
    %v4175 = vld [vmem:[#allocation8 + $0x40] sm:$0xff]
    %v4176 = vld [vmem:[#allocation8 + $0x48] sm:$0xff]
    %v4177 = vld [vmem:[#allocation8 + $0x50] sm:$0xff]
    %v4178 = vld [vmem:[#allocation8 + $0x58] sm:$0xff]
    %v4179 = vld [vmem:[#allocation8 + $0x60] sm:$0xff]
    %v4180 = vld [vmem:[#allocation8 + $0x68] sm:$0xff]
    %v4181 = vld [vmem:[#allocation8 + $0x70] sm:$0xff]
    %v4182 = vld [vmem:[#allocation8 + $0x78] sm:$0xff]
    %v4183 = vld [vmem:[#allocation8 + $0x80] sm:$0xff]
    %v4184 = vld [vmem:[#allocation8 + $0x88] sm:$0xff]
    %v4185 = vld [vmem:[#allocation8 + $0x90] sm:$0xff]
    %v4186 = vld [vmem:[#allocation8 + $0x98] sm:$0xff]
    %v4187 = vld [vmem:[#allocation8 + $0xa0] sm:$0xff]
    %v4188 = vld [vmem:[#allocation8 + $0xa8] sm:$0xff]
    %v4189 = vld [vmem:[#allocation8 + $0xb0] sm:$0xff]
    %v4190 = vld [vmem:[#allocation8 + $0xb8] sm:$0xff]
    %v4191 = vld [vmem:[#allocation8 + $0xc0] sm:$0xff]
    %v4192 = vld [vmem:[#allocation8 + $0xc8] sm:$0xff]
    %v4193 = vld [vmem:[#allocation8 + $0xd0] sm:$0xff]
    %v4194 = vld [vmem:[#allocation8 + $0xd8] sm:$0xff]
    %v4195 = vld [vmem:[#allocation8 + $0xe0] sm:$0xff]
    %v4196 = vld [vmem:[#allocation8 + $0xe8] sm:$0xff]
    %v4197 = vld [vmem:[#allocation8 + $0xf0] sm:$0xff]
    %v4198 = vld [vmem:[#allocation8 + $0xf8] sm:$0xff]
    %v4199 = vld [vmem:[#allocation8 + $0x100] sm:$0xff]
    %v4200 = vld [vmem:[#allocation8 + $0x108] sm:$0xff]
    %v4201 = vld [vmem:[#allocation8 + $0x110] sm:$0xff]
    %v4202 = vld [vmem:[#allocation8 + $0x118] sm:$0xff]
    %v4203 = vld [vmem:[#allocation8 + $0x120] sm:$0xff]
    %v4204 = vld [vmem:[#allocation8 + $0x128] sm:$0xff]
    %v4205 = vld [vmem:[#allocation8 + $0x130] sm:$0xff]
    %v4206 = vld [vmem:[#allocation8 + $0x138] sm:$0xff]
    %v4207 = vld [vmem:[#allocation8 + $0x140] sm:$0xff]
    %v4208 = vld [vmem:[#allocation8 + $0x148] sm:$0xff]
    %v4209 = vld [vmem:[#allocation8 + $0x150] sm:$0xff]
    %v4210 = vld [vmem:[#allocation8 + $0x158] sm:$0xff]
    %v4211 = vld [vmem:[#allocation8 + $0x160] sm:$0xff]
    %v4212 = vld [vmem:[#allocation8 + $0x168] sm:$0xff]
    %v4213 = vld [vmem:[#allocation8 + $0x170] sm:$0xff]
    %v4214 = vld [vmem:[#allocation8 + $0x178] sm:$0xff]
    %v4215 = vld [vmem:[#allocation8 + $0x180] sm:$0xff]
    %v4216 = vld [vmem:[#allocation8 + $0x188] sm:$0xff]
    %v4217 = vld [vmem:[#allocation8 + $0x190] sm:$0xff]
    %v4218 = vld [vmem:[#allocation8 + $0x198] sm:$0xff]
    %v4219 = vld [vmem:[#allocation8 + $0x1a0] sm:$0xff]
    %v4220 = vld [vmem:[#allocation8 + $0x1a8] sm:$0xff]
    %v4221 = vld [vmem:[#allocation8 + $0x1b0] sm:$0xff]
    %v4222 = vld [vmem:[#allocation8 + $0x1b8] sm:$0xff]
    %v4223 = vld [vmem:[#allocation8 + $0x1c0] sm:$0xff]
    %v4224 = vld [vmem:[#allocation8 + $0x1c8] sm:$0xff]
    %v4225 = vld [vmem:[#allocation8 + $0x1d0] sm:$0xff]
    %v4226 = vld [vmem:[#allocation8 + $0x1d8] sm:$0xff]
    %v4227 = vld [vmem:[#allocation8 + $0x1e0] sm:$0xff]
    %v4228 = vld [vmem:[#allocation8 + $0x1e8] sm:$0xff]
    %v4229 = vld [vmem:[#allocation8 + $0x1f0] sm:$0xff]
    %v4230 = vld [vmem:[#allocation8 + $0x1f8] sm:$0xff]
    %v4231 = vld [vmem:[#allocation7 + $0x2] sm:$0x3]
    %s4232 = scalar_lea.vmem [#allocation8], 512
    %v4233 = vld [vmem:[%s4232] sm:$0xff]
    %v4234 = vld [vmem:[%s4232 + $0x8] sm:$0xff]
    %v4235 = vld [vmem:[%s4232 + $0x10] sm:$0xff]
    %v4236 = vld [vmem:[%s4232 + $0x18] sm:$0xff]
    %v4237 = vld [vmem:[%s4232 + $0x20] sm:$0xff]
    %v4238 = vld [vmem:[%s4232 + $0x28] sm:$0xff]
    %v4239 = vld [vmem:[%s4232 + $0x30] sm:$0xff]
    %v4240 = vld [vmem:[%s4232 + $0x38] sm:$0xff]
    %v4241 = vld [vmem:[%s4232 + $0x40] sm:$0xff]
    %v4242 = vld [vmem:[%s4232 + $0x48] sm:$0xff]
    %v4243 = vld [vmem:[%s4232 + $0x50] sm:$0xff]
    %v4244 = vld [vmem:[%s4232 + $0x58] sm:$0xff]
    %v4245 = vld [vmem:[%s4232 + $0x60] sm:$0xff]
    %v4246 = vld [vmem:[%s4232 + $0x68] sm:$0xff]
    %v4247 = vld [vmem:[%s4232 + $0x70] sm:$0xff]
    %v4248 = vld [vmem:[%s4232 + $0x78] sm:$0xff]
    %v4249 = vld [vmem:[%s4232 + $0x80] sm:$0xff]
    %v4250 = vld [vmem:[%s4232 + $0x88] sm:$0xff]
    %v4251 = vld [vmem:[%s4232 + $0x90] sm:$0xff]
    %v4252 = vld [vmem:[%s4232 + $0x98] sm:$0xff]
    %v4253 = vld [vmem:[%s4232 + $0xa0] sm:$0xff]
    %v4254 = vld [vmem:[%s4232 + $0xa8] sm:$0xff]
    %v4255 = vld [vmem:[%s4232 + $0xb0] sm:$0xff]
    %v4256 = vld [vmem:[%s4232 + $0xb8] sm:$0xff]
    %v4257 = vld [vmem:[%s4232 + $0xc0] sm:$0xff]
    %v4258 = vld [vmem:[%s4232 + $0xc8] sm:$0xff]
    %v4259 = vld [vmem:[%s4232 + $0xd0] sm:$0xff]
    %v4260 = vld [vmem:[%s4232 + $0xd8] sm:$0xff]
    %v4261 = vld [vmem:[%s4232 + $0xe0] sm:$0xff]
    %v4262 = vld [vmem:[%s4232 + $0xe8] sm:$0xff]
    %v4263 = vld [vmem:[%s4232 + $0xf0] sm:$0xff]
    %v4264 = vld [vmem:[%s4232 + $0xf8] sm:$0xff]
    %v4265 = vld [vmem:[%s4232 + $0x100] sm:$0xff]
    %v4266 = vld [vmem:[%s4232 + $0x108] sm:$0xff]
    %v4267 = vld [vmem:[%s4232 + $0x110] sm:$0xff]
    %v4268 = vld [vmem:[%s4232 + $0x118] sm:$0xff]
    %v4269 = vld [vmem:[%s4232 + $0x120] sm:$0xff]
    %v4270 = vld [vmem:[%s4232 + $0x128] sm:$0xff]
    %v4271 = vld [vmem:[%s4232 + $0x130] sm:$0xff]
    %v4272 = vld [vmem:[%s4232 + $0x138] sm:$0xff]
    %v4273 = vld [vmem:[%s4232 + $0x140] sm:$0xff]
    %v4274 = vld [vmem:[%s4232 + $0x148] sm:$0xff]
    %v4275 = vld [vmem:[%s4232 + $0x150] sm:$0xff]
    %v4276 = vld [vmem:[%s4232 + $0x158] sm:$0xff]
    %v4277 = vld [vmem:[%s4232 + $0x160] sm:$0xff]
    %v4278 = vld [vmem:[%s4232 + $0x168] sm:$0xff]
    %v4279 = vld [vmem:[%s4232 + $0x170] sm:$0xff]
    %v4280 = vld [vmem:[%s4232 + $0x178] sm:$0xff]
    %v4281 = vld [vmem:[%s4232 + $0x180] sm:$0xff]
    %v4282 = vld [vmem:[%s4232 + $0x188] sm:$0xff]
    %v4283 = vld [vmem:[%s4232 + $0x190] sm:$0xff]
    %v4284 = vld [vmem:[%s4232 + $0x198] sm:$0xff]
    %v4285 = vld [vmem:[%s4232 + $0x1a0] sm:$0xff]
    %v4286 = vld [vmem:[%s4232 + $0x1a8] sm:$0xff]
    %v4287 = vld [vmem:[%s4232 + $0x1b0] sm:$0xff]
    %v4288 = vld [vmem:[%s4232 + $0x1b8] sm:$0xff]
    %v4289 = vld [vmem:[%s4232 + $0x1c0] sm:$0xff]
    %v4290 = vld [vmem:[%s4232 + $0x1c8] sm:$0xff]
    %v4291 = vld [vmem:[%s4232 + $0x1d0] sm:$0xff]
    %v4292 = vld [vmem:[%s4232 + $0x1d8] sm:$0xff]
    %v4293 = vld [vmem:[%s4232 + $0x1e0] sm:$0xff]
    %v4294 = vld [vmem:[%s4232 + $0x1e8] sm:$0xff]
    %v4295 = vld [vmem:[%s4232 + $0x1f0] sm:$0xff]
    %v4296 = vld [vmem:[%s4232 + $0x1f8] sm:$0xff]
    %4297 = vmatpush.msra.mxu0 %v4293
    %4298 = vmatpush.msra.mxu0 %v4289
    %4299 = vmatpush.msra.mxu0 %v4285
    %4300 = vmatpush.msra.mxu0 %v4281
    %4301 = vmatpush.msra.mxu0 %v4277
    %4302 = vmatpush.msra.mxu0 %v4273
    %4303 = vmatpush.msra.mxu0 %v4269
    %4304 = vmatpush.msra.mxu0 %v4265
    %4305 = vmatpush.msra.mxu0 %v4261
    %4306 = vmatpush.msra.mxu0 %v4257
    %4307 = vmatpush.msra.mxu0 %v4253
    %4308 = vmatpush.msra.mxu0 %v4249
    %4309 = vmatpush.msra.mxu0 %v4245
    %4310 = vmatpush.msra.mxu0 %v4241
    %4311 = vmatpush.msra.mxu0 %v4237
    %4312 = vmatpush.msra.mxu0 %v4233
    %4313 = vmatmul.f32.gmra.mxu0 %v4231
    %v4314 = vpop.f32.mrf.mxu0
    %v4315 = vadd.f32 0.0, %v4314
    %4316 = vdwg.mxu0
    %4317 = vmatpush.msra.mxu0 %v4294
    %4318 = vmatpush.msra.mxu0 %v4290
    %4319 = vmatpush.msra.mxu0 %v4286
    %4320 = vmatpush.msra.mxu0 %v4282
    %4321 = vmatpush.msra.mxu0 %v4278
    %4322 = vmatpush.msra.mxu0 %v4274
    %4323 = vmatpush.msra.mxu0 %v4270
    %4324 = vmatpush.msra.mxu0 %v4266
    %4325 = vmatpush.msra.mxu0 %v4262
    %4326 = vmatpush.msra.mxu0 %v4258
    %4327 = vmatpush.msra.mxu0 %v4254
    %4328 = vmatpush.msra.mxu0 %v4250
    %4329 = vmatpush.msra.mxu0 %v4246
    %4330 = vmatpush.msra.mxu0 %v4242
    %4331 = vmatpush.msra.mxu0 %v4238
    %4332 = vmatpush.msra.mxu0 %v4234
    %4333 = vmatmul.f32.gmra.mxu0 %v4231
    %v4334 = vpop.f32.mrf.mxu0
    %v4335 = vadd.f32 0.0, %v4334
    %4336 = vdwg.mxu0
    %4337 = vmatpush.msra.mxu0 %v4295
    %4338 = vmatpush.msra.mxu0 %v4291
    %4339 = vmatpush.msra.mxu0 %v4287
    %4340 = vmatpush.msra.mxu0 %v4283
    %4341 = vmatpush.msra.mxu0 %v4279
    %4342 = vmatpush.msra.mxu0 %v4275
    %4343 = vmatpush.msra.mxu0 %v4271
    %4344 = vmatpush.msra.mxu0 %v4267
    %4345 = vmatpush.msra.mxu0 %v4263
    %4346 = vmatpush.msra.mxu0 %v4259
    %4347 = vmatpush.msra.mxu0 %v4255
    %4348 = vmatpush.msra.mxu0 %v4251
    %4349 = vmatpush.msra.mxu0 %v4247
    %4350 = vmatpush.msra.mxu0 %v4243
    %4351 = vmatpush.msra.mxu0 %v4239
    %4352 = vmatpush.msra.mxu0 %v4235
    %4353 = vmatmul.f32.gmra.mxu0 %v4231
    %v4354 = vpop.f32.mrf.mxu0
    %v4355 = vadd.f32 0.0, %v4354
    %4356 = vdwg.mxu0
    %4357 = vmatpush.msra.mxu0 %v4296
    %4358 = vmatpush.msra.mxu0 %v4292
    %4359 = vmatpush.msra.mxu0 %v4288
    %4360 = vmatpush.msra.mxu0 %v4284
    %4361 = vmatpush.msra.mxu0 %v4280
    %4362 = vmatpush.msra.mxu0 %v4276
    %4363 = vmatpush.msra.mxu0 %v4272
    %4364 = vmatpush.msra.mxu0 %v4268
    %4365 = vmatpush.msra.mxu0 %v4264
    %4366 = vmatpush.msra.mxu0 %v4260
    %4367 = vmatpush.msra.mxu0 %v4256
    %4368 = vmatpush.msra.mxu0 %v4252
    %4369 = vmatpush.msra.mxu0 %v4248
    %4370 = vmatpush.msra.mxu0 %v4244
    %4371 = vmatpush.msra.mxu0 %v4240
    %4372 = vmatpush.msra.mxu0 %v4236
    %4373 = vmatmul.f32.gmra.mxu0 %v4231
    %v4374 = vpop.f32.mrf.mxu0
    %v4375 = vadd.f32 0.0, %v4374
    %4376 = vdwg.mxu0
    %4377 = vmatpush.msra.mxu0 %v4227
    %4378 = vmatpush.msra.mxu0 %v4223
    %4379 = vmatpush.msra.mxu0 %v4219
    %4380 = vmatpush.msra.mxu0 %v4215
    %4381 = vmatpush.msra.mxu0 %v4211
    %4382 = vmatpush.msra.mxu0 %v4207
    %4383 = vmatpush.msra.mxu0 %v4203
    %4384 = vmatpush.msra.mxu0 %v4199
    %4385 = vmatpush.msra.mxu0 %v4195
    %4386 = vmatpush.msra.mxu0 %v4191
    %4387 = vmatpush.msra.mxu0 %v4187
    %4388 = vmatpush.msra.mxu0 %v4183
    %4389 = vmatpush.msra.mxu0 %v4179
    %4390 = vmatpush.msra.mxu0 %v4175
    %4391 = vmatpush.msra.mxu0 %v4171
    %4392 = vmatpush.msra.mxu0 %v4167
    %4393 = vmatmul.f32.gmra.mxu0 %v4166
    %v4394 = vpop.f32.mrf.mxu0
    %v4395 = vadd.f32 %v4315, %v4394
    %4396 = vdwg.mxu0
    %4397 = vmatpush.msra.mxu0 %v4228
    %4398 = vmatpush.msra.mxu0 %v4224
    %4399 = vmatpush.msra.mxu0 %v4220
    %4400 = vmatpush.msra.mxu0 %v4216
    %4401 = vmatpush.msra.mxu0 %v4212
    %4402 = vmatpush.msra.mxu0 %v4208
    %4403 = vmatpush.msra.mxu0 %v4204
    %4404 = vmatpush.msra.mxu0 %v4200
    %4405 = vmatpush.msra.mxu0 %v4196
    %4406 = vmatpush.msra.mxu0 %v4192
    %4407 = vmatpush.msra.mxu0 %v4188
    %4408 = vmatpush.msra.mxu0 %v4184
    %4409 = vmatpush.msra.mxu0 %v4180
    %4410 = vmatpush.msra.mxu0 %v4176
    %4411 = vmatpush.msra.mxu0 %v4172
    %4412 = vmatpush.msra.mxu0 %v4168
    %4413 = vmatmul.f32.gmra.mxu0 %v4166
    %v4414 = vpop.f32.mrf.mxu0
    %v4415 = vadd.f32 %v4335, %v4414
    %4416 = vdwg.mxu0
    %4417 = vmatpush.msra.mxu0 %v4229
    %4418 = vmatpush.msra.mxu0 %v4225
    %4419 = vmatpush.msra.mxu0 %v4221
    %4420 = vmatpush.msra.mxu0 %v4217
    %4421 = vmatpush.msra.mxu0 %v4213
    %4422 = vmatpush.msra.mxu0 %v4209
    %4423 = vmatpush.msra.mxu0 %v4205
    %4424 = vmatpush.msra.mxu0 %v4201
    %4425 = vmatpush.msra.mxu0 %v4197
    %4426 = vmatpush.msra.mxu0 %v4193
    %4427 = vmatpush.msra.mxu0 %v4189
    %4428 = vmatpush.msra.mxu0 %v4185
    %4429 = vmatpush.msra.mxu0 %v4181
    %4430 = vmatpush.msra.mxu0 %v4177
    %4431 = vmatpush.msra.mxu0 %v4173
    %4432 = vmatpush.msra.mxu0 %v4169
    %4433 = vmatmul.f32.gmra.mxu0 %v4166
    %v4434 = vpop.f32.mrf.mxu0
    %v4435 = vadd.f32 %v4355, %v4434
    %4436 = vdwg.mxu0
    %4437 = vmatpush.msra.mxu0 %v4230
    %4438 = vmatpush.msra.mxu0 %v4226
    %4439 = vmatpush.msra.mxu0 %v4222
    %4440 = vmatpush.msra.mxu0 %v4218
    %4441 = vmatpush.msra.mxu0 %v4214
    %4442 = vmatpush.msra.mxu0 %v4210
    %4443 = vmatpush.msra.mxu0 %v4206
    %4444 = vmatpush.msra.mxu0 %v4202
    %4445 = vmatpush.msra.mxu0 %v4198
    %4446 = vmatpush.msra.mxu0 %v4194
    %4447 = vmatpush.msra.mxu0 %v4190
    %4448 = vmatpush.msra.mxu0 %v4186
    %4449 = vmatpush.msra.mxu0 %v4182
    %4450 = vmatpush.msra.mxu0 %v4178
    %4451 = vmatpush.msra.mxu0 %v4174
    %4452 = vmatpush.msra.mxu0 %v4170
    %4453 = vmatmul.f32.gmra.mxu0 %v4166
    %v4454 = vpop.f32.mrf.mxu0
    %v4455 = vadd.f32 %v4375, %v4454
    %4456 = vdwg.mxu0
    %v4457 = vld [vmem:[#allocation7 + $0x4] sm:$0x3]
    %s4458 = scalar_lea.vmem [#allocation8], 1024
    %v4459 = vld [vmem:[%s4458] sm:$0xff]
    %v4460 = vld [vmem:[%s4458 + $0x8] sm:$0xff]
    %v4461 = vld [vmem:[%s4458 + $0x10] sm:$0xff]
    %v4462 = vld [vmem:[%s4458 + $0x18] sm:$0xff]
    %v4463 = vld [vmem:[%s4458 + $0x20] sm:$0xff]
    %v4464 = vld [vmem:[%s4458 + $0x28] sm:$0xff]
    %v4465 = vld [vmem:[%s4458 + $0x30] sm:$0xff]
    %v4466 = vld [vmem:[%s4458 + $0x38] sm:$0xff]
    %v4467 = vld [vmem:[%s4458 + $0x40] sm:$0xff]
    %v4468 = vld [vmem:[%s4458 + $0x48] sm:$0xff]
    %v4469 = vld [vmem:[%s4458 + $0x50] sm:$0xff]
    %v4470 = vld [vmem:[%s4458 + $0x58] sm:$0xff]
    %v4471 = vld [vmem:[%s4458 + $0x60] sm:$0xff]
    %v4472 = vld [vmem:[%s4458 + $0x68] sm:$0xff]
    %v4473 = vld [vmem:[%s4458 + $0x70] sm:$0xff]
    %v4474 = vld [vmem:[%s4458 + $0x78] sm:$0xff]
    %v4475 = vld [vmem:[%s4458 + $0x80] sm:$0xff]
    %v4476 = vld [vmem:[%s4458 + $0x88] sm:$0xff]
    %v4477 = vld [vmem:[%s4458 + $0x90] sm:$0xff]
    %v4478 = vld [vmem:[%s4458 + $0x98] sm:$0xff]
    %v4479 = vld [vmem:[%s4458 + $0xa0] sm:$0xff]
    %v4480 = vld [vmem:[%s4458 + $0xa8] sm:$0xff]
    %v4481 = vld [vmem:[%s4458 + $0xb0] sm:$0xff]
    %v4482 = vld [vmem:[%s4458 + $0xb8] sm:$0xff]
    %v4483 = vld [vmem:[%s4458 + $0xc0] sm:$0xff]
    %v4484 = vld [vmem:[%s4458 + $0xc8] sm:$0xff]
    %v4485 = vld [vmem:[%s4458 + $0xd0] sm:$0xff]
    %v4486 = vld [vmem:[%s4458 + $0xd8] sm:$0xff]
    %v4487 = vld [vmem:[%s4458 + $0xe0] sm:$0xff]
    %v4488 = vld [vmem:[%s4458 + $0xe8] sm:$0xff]
    %v4489 = vld [vmem:[%s4458 + $0xf0] sm:$0xff]
    %v4490 = vld [vmem:[%s4458 + $0xf8] sm:$0xff]
    %v4491 = vld [vmem:[%s4458 + $0x100] sm:$0xff]
    %v4492 = vld [vmem:[%s4458 + $0x108] sm:$0xff]
    %v4493 = vld [vmem:[%s4458 + $0x110] sm:$0xff]
    %v4494 = vld [vmem:[%s4458 + $0x118] sm:$0xff]
    %v4495 = vld [vmem:[%s4458 + $0x120] sm:$0xff]
    %v4496 = vld [vmem:[%s4458 + $0x128] sm:$0xff]
    %v4497 = vld [vmem:[%s4458 + $0x130] sm:$0xff]
    %v4498 = vld [vmem:[%s4458 + $0x138] sm:$0xff]
    %v4499 = vld [vmem:[%s4458 + $0x140] sm:$0xff]
    %v4500 = vld [vmem:[%s4458 + $0x148] sm:$0xff]
    %v4501 = vld [vmem:[%s4458 + $0x150] sm:$0xff]
    %v4502 = vld [vmem:[%s4458 + $0x158] sm:$0xff]
    %v4503 = vld [vmem:[%s4458 + $0x160] sm:$0xff]
    %v4504 = vld [vmem:[%s4458 + $0x168] sm:$0xff]
    %v4505 = vld [vmem:[%s4458 + $0x170] sm:$0xff]
    %v4506 = vld [vmem:[%s4458 + $0x178] sm:$0xff]
    %v4507 = vld [vmem:[%s4458 + $0x180] sm:$0xff]
    %v4508 = vld [vmem:[%s4458 + $0x188] sm:$0xff]
    %v4509 = vld [vmem:[%s4458 + $0x190] sm:$0xff]
    %v4510 = vld [vmem:[%s4458 + $0x198] sm:$0xff]
    %v4511 = vld [vmem:[%s4458 + $0x1a0] sm:$0xff]
    %v4512 = vld [vmem:[%s4458 + $0x1a8] sm:$0xff]
    %v4513 = vld [vmem:[%s4458 + $0x1b0] sm:$0xff]
    %v4514 = vld [vmem:[%s4458 + $0x1b8] sm:$0xff]
    %v4515 = vld [vmem:[%s4458 + $0x1c0] sm:$0xff]
    %v4516 = vld [vmem:[%s4458 + $0x1c8] sm:$0xff]
    %v4517 = vld [vmem:[%s4458 + $0x1d0] sm:$0xff]
    %v4518 = vld [vmem:[%s4458 + $0x1d8] sm:$0xff]
    %v4519 = vld [vmem:[%s4458 + $0x1e0] sm:$0xff]
    %v4520 = vld [vmem:[%s4458 + $0x1e8] sm:$0xff]
    %v4521 = vld [vmem:[%s4458 + $0x1f0] sm:$0xff]
    %v4522 = vld [vmem:[%s4458 + $0x1f8] sm:$0xff]
    %4523 = vmatpush.msra.mxu0 %v4519
    %4524 = vmatpush.msra.mxu0 %v4515
    %4525 = vmatpush.msra.mxu0 %v4511
    %4526 = vmatpush.msra.mxu0 %v4507
    %4527 = vmatpush.msra.mxu0 %v4503
    %4528 = vmatpush.msra.mxu0 %v4499
    %4529 = vmatpush.msra.mxu0 %v4495
    %4530 = vmatpush.msra.mxu0 %v4491
    %4531 = vmatpush.msra.mxu0 %v4487
    %4532 = vmatpush.msra.mxu0 %v4483
    %4533 = vmatpush.msra.mxu0 %v4479
    %4534 = vmatpush.msra.mxu0 %v4475
    %4535 = vmatpush.msra.mxu0 %v4471
    %4536 = vmatpush.msra.mxu0 %v4467
    %4537 = vmatpush.msra.mxu0 %v4463
    %4538 = vmatpush.msra.mxu0 %v4459
    %4539 = vmatmul.f32.gmra.mxu0 %v4457
    %v4540 = vpop.f32.mrf.mxu0
    %v4541 = vadd.f32 0.0, %v4540
    %4542 = vdwg.mxu0
    %4543 = vmatpush.msra.mxu0 %v4520
    %4544 = vmatpush.msra.mxu0 %v4516
    %4545 = vmatpush.msra.mxu0 %v4512
    %4546 = vmatpush.msra.mxu0 %v4508
    %4547 = vmatpush.msra.mxu0 %v4504
    %4548 = vmatpush.msra.mxu0 %v4500
    %4549 = vmatpush.msra.mxu0 %v4496
    %4550 = vmatpush.msra.mxu0 %v4492
    %4551 = vmatpush.msra.mxu0 %v4488
    %4552 = vmatpush.msra.mxu0 %v4484
    %4553 = vmatpush.msra.mxu0 %v4480
    %4554 = vmatpush.msra.mxu0 %v4476
    %4555 = vmatpush.msra.mxu0 %v4472
    %4556 = vmatpush.msra.mxu0 %v4468
    %4557 = vmatpush.msra.mxu0 %v4464
    %4558 = vmatpush.msra.mxu0 %v4460
    %4559 = vmatmul.f32.gmra.mxu0 %v4457
    %v4560 = vpop.f32.mrf.mxu0
    %v4561 = vadd.f32 0.0, %v4560
    %4562 = vdwg.mxu0
    %4563 = vmatpush.msra.mxu0 %v4521
    %4564 = vmatpush.msra.mxu0 %v4517
    %4565 = vmatpush.msra.mxu0 %v4513
    %4566 = vmatpush.msra.mxu0 %v4509
    %4567 = vmatpush.msra.mxu0 %v4505
    %4568 = vmatpush.msra.mxu0 %v4501
    %4569 = vmatpush.msra.mxu0 %v4497
    %4570 = vmatpush.msra.mxu0 %v4493
    %4571 = vmatpush.msra.mxu0 %v4489
    %4572 = vmatpush.msra.mxu0 %v4485
    %4573 = vmatpush.msra.mxu0 %v4481
    %4574 = vmatpush.msra.mxu0 %v4477
    %4575 = vmatpush.msra.mxu0 %v4473
    %4576 = vmatpush.msra.mxu0 %v4469
    %4577 = vmatpush.msra.mxu0 %v4465
    %4578 = vmatpush.msra.mxu0 %v4461
    %4579 = vmatmul.f32.gmra.mxu0 %v4457
    %v4580 = vpop.f32.mrf.mxu0
    %v4581 = vadd.f32 0.0, %v4580
    %4582 = vdwg.mxu0
    %4583 = vmatpush.msra.mxu0 %v4522
    %4584 = vmatpush.msra.mxu0 %v4518
    %4585 = vmatpush.msra.mxu0 %v4514
    %4586 = vmatpush.msra.mxu0 %v4510
    %4587 = vmatpush.msra.mxu0 %v4506
    %4588 = vmatpush.msra.mxu0 %v4502
    %4589 = vmatpush.msra.mxu0 %v4498
    %4590 = vmatpush.msra.mxu0 %v4494
    %4591 = vmatpush.msra.mxu0 %v4490
    %4592 = vmatpush.msra.mxu0 %v4486
    %4593 = vmatpush.msra.mxu0 %v4482
    %4594 = vmatpush.msra.mxu0 %v4478
    %4595 = vmatpush.msra.mxu0 %v4474
    %4596 = vmatpush.msra.mxu0 %v4470
    %4597 = vmatpush.msra.mxu0 %v4466
    %4598 = vmatpush.msra.mxu0 %v4462
    %4599 = vmatmul.f32.gmra.mxu0 %v4457
    %v4600 = vpop.f32.mrf.mxu0
    %v4601 = vadd.f32 0.0, %v4600
    %4602 = vdwg.mxu0
    %v4603 = vadd.f32 %v4395, %v4541
    %v4604 = vadd.f32 %v4415, %v4561
    %v4605 = vadd.f32 %v4435, %v4581
    %v4606 = vadd.f32 %v4455, %v4601
    %v4607 = vld [vmem:[#allocation7 + $0x6] sm:$0x3]
    %s4608 = scalar_lea.vmem [#allocation8], 1536
    %v4609 = vld [vmem:[%s4608] sm:$0xff]
    %v4610 = vld [vmem:[%s4608 + $0x8] sm:$0xff]
    %v4611 = vld [vmem:[%s4608 + $0x10] sm:$0xff]
    %v4612 = vld [vmem:[%s4608 + $0x18] sm:$0xff]
    %v4613 = vld [vmem:[%s4608 + $0x20] sm:$0xff]
    %v4614 = vld [vmem:[%s4608 + $0x28] sm:$0xff]
    %v4615 = vld [vmem:[%s4608 + $0x30] sm:$0xff]
    %v4616 = vld [vmem:[%s4608 + $0x38] sm:$0xff]
    %v4617 = vld [vmem:[%s4608 + $0x40] sm:$0xff]
    %v4618 = vld [vmem:[%s4608 + $0x48] sm:$0xff]
    %v4619 = vld [vmem:[%s4608 + $0x50] sm:$0xff]
    %v4620 = vld [vmem:[%s4608 + $0x58] sm:$0xff]
    %v4621 = vld [vmem:[%s4608 + $0x60] sm:$0xff]
    %v4622 = vld [vmem:[%s4608 + $0x68] sm:$0xff]
    %v4623 = vld [vmem:[%s4608 + $0x70] sm:$0xff]
    %v4624 = vld [vmem:[%s4608 + $0x78] sm:$0xff]
    %v4625 = vld [vmem:[%s4608 + $0x80] sm:$0xff]
    %v4626 = vld [vmem:[%s4608 + $0x88] sm:$0xff]
    %v4627 = vld [vmem:[%s4608 + $0x90] sm:$0xff]
    %v4628 = vld [vmem:[%s4608 + $0x98] sm:$0xff]
    %v4629 = vld [vmem:[%s4608 + $0xa0] sm:$0xff]
    %v4630 = vld [vmem:[%s4608 + $0xa8] sm:$0xff]
    %v4631 = vld [vmem:[%s4608 + $0xb0] sm:$0xff]
    %v4632 = vld [vmem:[%s4608 + $0xb8] sm:$0xff]
    %v4633 = vld [vmem:[%s4608 + $0xc0] sm:$0xff]
    %v4634 = vld [vmem:[%s4608 + $0xc8] sm:$0xff]
    %v4635 = vld [vmem:[%s4608 + $0xd0] sm:$0xff]
    %v4636 = vld [vmem:[%s4608 + $0xd8] sm:$0xff]
    %v4637 = vld [vmem:[%s4608 + $0xe0] sm:$0xff]
    %v4638 = vld [vmem:[%s4608 + $0xe8] sm:$0xff]
    %v4639 = vld [vmem:[%s4608 + $0xf0] sm:$0xff]
    %v4640 = vld [vmem:[%s4608 + $0xf8] sm:$0xff]
    %v4641 = vld [vmem:[%s4608 + $0x100] sm:$0xff]
    %v4642 = vld [vmem:[%s4608 + $0x108] sm:$0xff]
    %v4643 = vld [vmem:[%s4608 + $0x110] sm:$0xff]
    %v4644 = vld [vmem:[%s4608 + $0x118] sm:$0xff]
    %v4645 = vld [vmem:[%s4608 + $0x120] sm:$0xff]
    %v4646 = vld [vmem:[%s4608 + $0x128] sm:$0xff]
    %v4647 = vld [vmem:[%s4608 + $0x130] sm:$0xff]
    %v4648 = vld [vmem:[%s4608 + $0x138] sm:$0xff]
    %v4649 = vld [vmem:[%s4608 + $0x140] sm:$0xff]
    %v4650 = vld [vmem:[%s4608 + $0x148] sm:$0xff]
    %v4651 = vld [vmem:[%s4608 + $0x150] sm:$0xff]
    %v4652 = vld [vmem:[%s4608 + $0x158] sm:$0xff]
    %v4653 = vld [vmem:[%s4608 + $0x160] sm:$0xff]
    %v4654 = vld [vmem:[%s4608 + $0x168] sm:$0xff]
    %v4655 = vld [vmem:[%s4608 + $0x170] sm:$0xff]
    %v4656 = vld [vmem:[%s4608 + $0x178] sm:$0xff]
    %v4657 = vld [vmem:[%s4608 + $0x180] sm:$0xff]
    %v4658 = vld [vmem:[%s4608 + $0x188] sm:$0xff]
    %v4659 = vld [vmem:[%s4608 + $0x190] sm:$0xff]
    %v4660 = vld [vmem:[%s4608 + $0x198] sm:$0xff]
    %v4661 = vld [vmem:[%s4608 + $0x1a0] sm:$0xff]
    %v4662 = vld [vmem:[%s4608 + $0x1a8] sm:$0xff]
    %v4663 = vld [vmem:[%s4608 + $0x1b0] sm:$0xff]
    %v4664 = vld [vmem:[%s4608 + $0x1b8] sm:$0xff]
    %v4665 = vld [vmem:[%s4608 + $0x1c0] sm:$0xff]
    %v4666 = vld [vmem:[%s4608 + $0x1c8] sm:$0xff]
    %v4667 = vld [vmem:[%s4608 + $0x1d0] sm:$0xff]
    %v4668 = vld [vmem:[%s4608 + $0x1d8] sm:$0xff]
    %v4669 = vld [vmem:[%s4608 + $0x1e0] sm:$0xff]
    %v4670 = vld [vmem:[%s4608 + $0x1e8] sm:$0xff]
    %v4671 = vld [vmem:[%s4608 + $0x1f0] sm:$0xff]
    %v4672 = vld [vmem:[%s4608 + $0x1f8] sm:$0xff]
    %4673 = vmatpush.msra.mxu0 %v4669
    %4674 = vmatpush.msra.mxu0 %v4665
    %4675 = vmatpush.msra.mxu0 %v4661
    %4676 = vmatpush.msra.mxu0 %v4657
    %4677 = vmatpush.msra.mxu0 %v4653
    %4678 = vmatpush.msra.mxu0 %v4649
    %4679 = vmatpush.msra.mxu0 %v4645
    %4680 = vmatpush.msra.mxu0 %v4641
    %4681 = vmatpush.msra.mxu0 %v4637
    %4682 = vmatpush.msra.mxu0 %v4633
    %4683 = vmatpush.msra.mxu0 %v4629
    %4684 = vmatpush.msra.mxu0 %v4625
    %4685 = vmatpush.msra.mxu0 %v4621
    %4686 = vmatpush.msra.mxu0 %v4617
    %4687 = vmatpush.msra.mxu0 %v4613
    %4688 = vmatpush.msra.mxu0 %v4609
    %4689 = vmatmul.f32.gmra.mxu0 %v4607
    %v4690 = vpop.f32.mrf.mxu0
    %v4691 = vadd.f32 0.0, %v4690
    %4692 = vdwg.mxu0
    %4693 = vmatpush.msra.mxu0 %v4670
    %4694 = vmatpush.msra.mxu0 %v4666
    %4695 = vmatpush.msra.mxu0 %v4662
    %4696 = vmatpush.msra.mxu0 %v4658
    %4697 = vmatpush.msra.mxu0 %v4654
    %4698 = vmatpush.msra.mxu0 %v4650
    %4699 = vmatpush.msra.mxu0 %v4646
    %4700 = vmatpush.msra.mxu0 %v4642
    %4701 = vmatpush.msra.mxu0 %v4638
    %4702 = vmatpush.msra.mxu0 %v4634
    %4703 = vmatpush.msra.mxu0 %v4630
    %4704 = vmatpush.msra.mxu0 %v4626
    %4705 = vmatpush.msra.mxu0 %v4622
    %4706 = vmatpush.msra.mxu0 %v4618
    %4707 = vmatpush.msra.mxu0 %v4614
    %4708 = vmatpush.msra.mxu0 %v4610
    %4709 = vmatmul.f32.gmra.mxu0 %v4607
    %v4710 = vpop.f32.mrf.mxu0
    %v4711 = vadd.f32 0.0, %v4710
    %4712 = vdwg.mxu0
    %4713 = vmatpush.msra.mxu0 %v4671
    %4714 = vmatpush.msra.mxu0 %v4667
    %4715 = vmatpush.msra.mxu0 %v4663
    %4716 = vmatpush.msra.mxu0 %v4659
    %4717 = vmatpush.msra.mxu0 %v4655
    %4718 = vmatpush.msra.mxu0 %v4651
    %4719 = vmatpush.msra.mxu0 %v4647
    %4720 = vmatpush.msra.mxu0 %v4643
    %4721 = vmatpush.msra.mxu0 %v4639
    %4722 = vmatpush.msra.mxu0 %v4635
    %4723 = vmatpush.msra.mxu0 %v4631
    %4724 = vmatpush.msra.mxu0 %v4627
    %4725 = vmatpush.msra.mxu0 %v4623
    %4726 = vmatpush.msra.mxu0 %v4619
    %4727 = vmatpush.msra.mxu0 %v4615
    %4728 = vmatpush.msra.mxu0 %v4611
    %4729 = vmatmul.f32.gmra.mxu0 %v4607
    %v4730 = vpop.f32.mrf.mxu0
    %v4731 = vadd.f32 0.0, %v4730
    %4732 = vdwg.mxu0
    %4733 = vmatpush.msra.mxu0 %v4672
    %4734 = vmatpush.msra.mxu0 %v4668
    %4735 = vmatpush.msra.mxu0 %v4664
    %4736 = vmatpush.msra.mxu0 %v4660
    %4737 = vmatpush.msra.mxu0 %v4656
    %4738 = vmatpush.msra.mxu0 %v4652
    %4739 = vmatpush.msra.mxu0 %v4648
    %4740 = vmatpush.msra.mxu0 %v4644
    %4741 = vmatpush.msra.mxu0 %v4640
    %4742 = vmatpush.msra.mxu0 %v4636
    %4743 = vmatpush.msra.mxu0 %v4632
    %4744 = vmatpush.msra.mxu0 %v4628
    %4745 = vmatpush.msra.mxu0 %v4624
    %4746 = vmatpush.msra.mxu0 %v4620
    %4747 = vmatpush.msra.mxu0 %v4616
    %4748 = vmatpush.msra.mxu0 %v4612
    %4749 = vmatmul.f32.gmra.mxu0 %v4607
    %v4750 = vpop.f32.mrf.mxu0
    %v4751 = vadd.f32 0.0, %v4750
    %4752 = vdwg.mxu0
    %v4753 = vadd.f32 %v4603, %v4691
    %v4754 = vadd.f32 %v4604, %v4711
    %v4755 = vadd.f32 %v4605, %v4731
    %v4756 = vadd.f32 %v4606, %v4751
    %v4757 = vld [vmem:[#allocation7 + $0x8] sm:$0x3]
    %s4758 = scalar_lea.vmem [#allocation8], 2048
    %v4759 = vld [vmem:[%s4758] sm:$0xff]
    %v4760 = vld [vmem:[%s4758 + $0x8] sm:$0xff]
    %v4761 = vld [vmem:[%s4758 + $0x10] sm:$0xff]
    %v4762 = vld [vmem:[%s4758 + $0x18] sm:$0xff]
    %v4763 = vld [vmem:[%s4758 + $0x20] sm:$0xff]
    %v4764 = vld [vmem:[%s4758 + $0x28] sm:$0xff]
    %v4765 = vld [vmem:[%s4758 + $0x30] sm:$0xff]
    %v4766 = vld [vmem:[%s4758 + $0x38] sm:$0xff]
    %v4767 = vld [vmem:[%s4758 + $0x40] sm:$0xff]
    %v4768 = vld [vmem:[%s4758 + $0x48] sm:$0xff]
    %v4769 = vld [vmem:[%s4758 + $0x50] sm:$0xff]
    %v4770 = vld [vmem:[%s4758 + $0x58] sm:$0xff]
    %v4771 = vld [vmem:[%s4758 + $0x60] sm:$0xff]
    %v4772 = vld [vmem:[%s4758 + $0x68] sm:$0xff]
    %v4773 = vld [vmem:[%s4758 + $0x70] sm:$0xff]
    %v4774 = vld [vmem:[%s4758 + $0x78] sm:$0xff]
    %v4775 = vld [vmem:[%s4758 + $0x80] sm:$0xff]
    %v4776 = vld [vmem:[%s4758 + $0x88] sm:$0xff]
    %v4777 = vld [vmem:[%s4758 + $0x90] sm:$0xff]
    %v4778 = vld [vmem:[%s4758 + $0x98] sm:$0xff]
    %v4779 = vld [vmem:[%s4758 + $0xa0] sm:$0xff]
    %v4780 = vld [vmem:[%s4758 + $0xa8] sm:$0xff]
    %v4781 = vld [vmem:[%s4758 + $0xb0] sm:$0xff]
    %v4782 = vld [vmem:[%s4758 + $0xb8] sm:$0xff]
    %v4783 = vld [vmem:[%s4758 + $0xc0] sm:$0xff]
    %v4784 = vld [vmem:[%s4758 + $0xc8] sm:$0xff]
    %v4785 = vld [vmem:[%s4758 + $0xd0] sm:$0xff]
    %v4786 = vld [vmem:[%s4758 + $0xd8] sm:$0xff]
    %v4787 = vld [vmem:[%s4758 + $0xe0] sm:$0xff]
    %v4788 = vld [vmem:[%s4758 + $0xe8] sm:$0xff]
    %v4789 = vld [vmem:[%s4758 + $0xf0] sm:$0xff]
    %v4790 = vld [vmem:[%s4758 + $0xf8] sm:$0xff]
    %v4791 = vld [vmem:[%s4758 + $0x100] sm:$0xff]
    %v4792 = vld [vmem:[%s4758 + $0x108] sm:$0xff]
    %v4793 = vld [vmem:[%s4758 + $0x110] sm:$0xff]
    %v4794 = vld [vmem:[%s4758 + $0x118] sm:$0xff]
    %v4795 = vld [vmem:[%s4758 + $0x120] sm:$0xff]
    %v4796 = vld [vmem:[%s4758 + $0x128] sm:$0xff]
    %v4797 = vld [vmem:[%s4758 + $0x130] sm:$0xff]
    %v4798 = vld [vmem:[%s4758 + $0x138] sm:$0xff]
    %v4799 = vld [vmem:[%s4758 + $0x140] sm:$0xff]
    %v4800 = vld [vmem:[%s4758 + $0x148] sm:$0xff]
    %v4801 = vld [vmem:[%s4758 + $0x150] sm:$0xff]
    %v4802 = vld [vmem:[%s4758 + $0x158] sm:$0xff]
    %v4803 = vld [vmem:[%s4758 + $0x160] sm:$0xff]
    %v4804 = vld [vmem:[%s4758 + $0x168] sm:$0xff]
    %v4805 = vld [vmem:[%s4758 + $0x170] sm:$0xff]
    %v4806 = vld [vmem:[%s4758 + $0x178] sm:$0xff]
    %v4807 = vld [vmem:[%s4758 + $0x180] sm:$0xff]
    %v4808 = vld [vmem:[%s4758 + $0x188] sm:$0xff]
    %v4809 = vld [vmem:[%s4758 + $0x190] sm:$0xff]
    %v4810 = vld [vmem:[%s4758 + $0x198] sm:$0xff]
    %v4811 = vld [vmem:[%s4758 + $0x1a0] sm:$0xff]
    %v4812 = vld [vmem:[%s4758 + $0x1a8] sm:$0xff]
    %v4813 = vld [vmem:[%s4758 + $0x1b0] sm:$0xff]
    %v4814 = vld [vmem:[%s4758 + $0x1b8] sm:$0xff]
    %v4815 = vld [vmem:[%s4758 + $0x1c0] sm:$0xff]
    %v4816 = vld [vmem:[%s4758 + $0x1c8] sm:$0xff]
    %v4817 = vld [vmem:[%s4758 + $0x1d0] sm:$0xff]
    %v4818 = vld [vmem:[%s4758 + $0x1d8] sm:$0xff]
    %v4819 = vld [vmem:[%s4758 + $0x1e0] sm:$0xff]
    %v4820 = vld [vmem:[%s4758 + $0x1e8] sm:$0xff]
    %v4821 = vld [vmem:[%s4758 + $0x1f0] sm:$0xff]
    %v4822 = vld [vmem:[%s4758 + $0x1f8] sm:$0xff]
    %4823 = vmatpush.msra.mxu0 %v4819
    %4824 = vmatpush.msra.mxu0 %v4815
    %4825 = vmatpush.msra.mxu0 %v4811
    %4826 = vmatpush.msra.mxu0 %v4807
    %4827 = vmatpush.msra.mxu0 %v4803
    %4828 = vmatpush.msra.mxu0 %v4799
    %4829 = vmatpush.msra.mxu0 %v4795
    %4830 = vmatpush.msra.mxu0 %v4791
    %4831 = vmatpush.msra.mxu0 %v4787
    %4832 = vmatpush.msra.mxu0 %v4783
    %4833 = vmatpush.msra.mxu0 %v4779
    %4834 = vmatpush.msra.mxu0 %v4775
    %4835 = vmatpush.msra.mxu0 %v4771
    %4836 = vmatpush.msra.mxu0 %v4767
    %4837 = vmatpush.msra.mxu0 %v4763
    %4838 = vmatpush.msra.mxu0 %v4759
    %4839 = vmatmul.f32.gmra.mxu0 %v4757
    %v4840 = vpop.f32.mrf.mxu0
    %v4841 = vadd.f32 0.0, %v4840
    %4842 = vdwg.mxu0
    %4843 = vmatpush.msra.mxu0 %v4820
    %4844 = vmatpush.msra.mxu0 %v4816
    %4845 = vmatpush.msra.mxu0 %v4812
    %4846 = vmatpush.msra.mxu0 %v4808
    %4847 = vmatpush.msra.mxu0 %v4804
    %4848 = vmatpush.msra.mxu0 %v4800
    %4849 = vmatpush.msra.mxu0 %v4796
    %4850 = vmatpush.msra.mxu0 %v4792
    %4851 = vmatpush.msra.mxu0 %v4788
    %4852 = vmatpush.msra.mxu0 %v4784
    %4853 = vmatpush.msra.mxu0 %v4780
    %4854 = vmatpush.msra.mxu0 %v4776
    %4855 = vmatpush.msra.mxu0 %v4772
    %4856 = vmatpush.msra.mxu0 %v4768
    %4857 = vmatpush.msra.mxu0 %v4764
    %4858 = vmatpush.msra.mxu0 %v4760
    %4859 = vmatmul.f32.gmra.mxu0 %v4757
    %v4860 = vpop.f32.mrf.mxu0
    %v4861 = vadd.f32 0.0, %v4860
    %4862 = vdwg.mxu0
    %4863 = vmatpush.msra.mxu0 %v4821
    %4864 = vmatpush.msra.mxu0 %v4817
    %4865 = vmatpush.msra.mxu0 %v4813
    %4866 = vmatpush.msra.mxu0 %v4809
    %4867 = vmatpush.msra.mxu0 %v4805
    %4868 = vmatpush.msra.mxu0 %v4801
    %4869 = vmatpush.msra.mxu0 %v4797
    %4870 = vmatpush.msra.mxu0 %v4793
    %4871 = vmatpush.msra.mxu0 %v4789
    %4872 = vmatpush.msra.mxu0 %v4785
    %4873 = vmatpush.msra.mxu0 %v4781
    %4874 = vmatpush.msra.mxu0 %v4777
    %4875 = vmatpush.msra.mxu0 %v4773
    %4876 = vmatpush.msra.mxu0 %v4769
    %4877 = vmatpush.msra.mxu0 %v4765
    %4878 = vmatpush.msra.mxu0 %v4761
    %4879 = vmatmul.f32.gmra.mxu0 %v4757
    %v4880 = vpop.f32.mrf.mxu0
    %v4881 = vadd.f32 0.0, %v4880
    %4882 = vdwg.mxu0
    %4883 = vmatpush.msra.mxu0 %v4822
    %4884 = vmatpush.msra.mxu0 %v4818
    %4885 = vmatpush.msra.mxu0 %v4814
    %4886 = vmatpush.msra.mxu0 %v4810
    %4887 = vmatpush.msra.mxu0 %v4806
    %4888 = vmatpush.msra.mxu0 %v4802
    %4889 = vmatpush.msra.mxu0 %v4798
    %4890 = vmatpush.msra.mxu0 %v4794
    %4891 = vmatpush.msra.mxu0 %v4790
    %4892 = vmatpush.msra.mxu0 %v4786
    %4893 = vmatpush.msra.mxu0 %v4782
    %4894 = vmatpush.msra.mxu0 %v4778
    %4895 = vmatpush.msra.mxu0 %v4774
    %4896 = vmatpush.msra.mxu0 %v4770
    %4897 = vmatpush.msra.mxu0 %v4766
    %4898 = vmatpush.msra.mxu0 %v4762
    %4899 = vmatmul.f32.gmra.mxu0 %v4757
    %v4900 = vpop.f32.mrf.mxu0
    %v4901 = vadd.f32 0.0, %v4900
    %4902 = vdwg.mxu0
    %v4903 = vadd.f32 %v4753, %v4841
    %v4904 = vadd.f32 %v4754, %v4861
    %v4905 = vadd.f32 %v4755, %v4881
    %v4906 = vadd.f32 %v4756, %v4901
    %v4907 = vld [vmem:[#allocation7 + $0xa] sm:$0x3]
    %s4908 = scalar_lea.vmem [#allocation8], 2560
    %v4909 = vld [vmem:[%s4908] sm:$0xff]
    %v4910 = vld [vmem:[%s4908 + $0x8] sm:$0xff]
    %v4911 = vld [vmem:[%s4908 + $0x10] sm:$0xff]
    %v4912 = vld [vmem:[%s4908 + $0x18] sm:$0xff]
    %v4913 = vld [vmem:[%s4908 + $0x20] sm:$0xff]
    %v4914 = vld [vmem:[%s4908 + $0x28] sm:$0xff]
    %v4915 = vld [vmem:[%s4908 + $0x30] sm:$0xff]
    %v4916 = vld [vmem:[%s4908 + $0x38] sm:$0xff]
    %v4917 = vld [vmem:[%s4908 + $0x40] sm:$0xff]
    %v4918 = vld [vmem:[%s4908 + $0x48] sm:$0xff]
    %v4919 = vld [vmem:[%s4908 + $0x50] sm:$0xff]
    %v4920 = vld [vmem:[%s4908 + $0x58] sm:$0xff]
    %v4921 = vld [vmem:[%s4908 + $0x60] sm:$0xff]
    %v4922 = vld [vmem:[%s4908 + $0x68] sm:$0xff]
    %v4923 = vld [vmem:[%s4908 + $0x70] sm:$0xff]
    %v4924 = vld [vmem:[%s4908 + $0x78] sm:$0xff]
    %v4925 = vld [vmem:[%s4908 + $0x80] sm:$0xff]
    %v4926 = vld [vmem:[%s4908 + $0x88] sm:$0xff]
    %v4927 = vld [vmem:[%s4908 + $0x90] sm:$0xff]
    %v4928 = vld [vmem:[%s4908 + $0x98] sm:$0xff]
    %v4929 = vld [vmem:[%s4908 + $0xa0] sm:$0xff]
    %v4930 = vld [vmem:[%s4908 + $0xa8] sm:$0xff]
    %v4931 = vld [vmem:[%s4908 + $0xb0] sm:$0xff]
    %v4932 = vld [vmem:[%s4908 + $0xb8] sm:$0xff]
    %v4933 = vld [vmem:[%s4908 + $0xc0] sm:$0xff]
    %v4934 = vld [vmem:[%s4908 + $0xc8] sm:$0xff]
    %v4935 = vld [vmem:[%s4908 + $0xd0] sm:$0xff]
    %v4936 = vld [vmem:[%s4908 + $0xd8] sm:$0xff]
    %v4937 = vld [vmem:[%s4908 + $0xe0] sm:$0xff]
    %v4938 = vld [vmem:[%s4908 + $0xe8] sm:$0xff]
    %v4939 = vld [vmem:[%s4908 + $0xf0] sm:$0xff]
    %v4940 = vld [vmem:[%s4908 + $0xf8] sm:$0xff]
    %v4941 = vld [vmem:[%s4908 + $0x100] sm:$0xff]
    %v4942 = vld [vmem:[%s4908 + $0x108] sm:$0xff]
    %v4943 = vld [vmem:[%s4908 + $0x110] sm:$0xff]
    %v4944 = vld [vmem:[%s4908 + $0x118] sm:$0xff]
    %v4945 = vld [vmem:[%s4908 + $0x120] sm:$0xff]
    %v4946 = vld [vmem:[%s4908 + $0x128] sm:$0xff]
    %v4947 = vld [vmem:[%s4908 + $0x130] sm:$0xff]
    %v4948 = vld [vmem:[%s4908 + $0x138] sm:$0xff]
    %v4949 = vld [vmem:[%s4908 + $0x140] sm:$0xff]
    %v4950 = vld [vmem:[%s4908 + $0x148] sm:$0xff]
    %v4951 = vld [vmem:[%s4908 + $0x150] sm:$0xff]
    %v4952 = vld [vmem:[%s4908 + $0x158] sm:$0xff]
    %v4953 = vld [vmem:[%s4908 + $0x160] sm:$0xff]
    %v4954 = vld [vmem:[%s4908 + $0x168] sm:$0xff]
    %v4955 = vld [vmem:[%s4908 + $0x170] sm:$0xff]
    %v4956 = vld [vmem:[%s4908 + $0x178] sm:$0xff]
    %v4957 = vld [vmem:[%s4908 + $0x180] sm:$0xff]
    %v4958 = vld [vmem:[%s4908 + $0x188] sm:$0xff]
    %v4959 = vld [vmem:[%s4908 + $0x190] sm:$0xff]
    %v4960 = vld [vmem:[%s4908 + $0x198] sm:$0xff]
    %v4961 = vld [vmem:[%s4908 + $0x1a0] sm:$0xff]
    %v4962 = vld [vmem:[%s4908 + $0x1a8] sm:$0xff]
    %v4963 = vld [vmem:[%s4908 + $0x1b0] sm:$0xff]
    %v4964 = vld [vmem:[%s4908 + $0x1b8] sm:$0xff]
    %v4965 = vld [vmem:[%s4908 + $0x1c0] sm:$0xff]
    %v4966 = vld [vmem:[%s4908 + $0x1c8] sm:$0xff]
    %v4967 = vld [vmem:[%s4908 + $0x1d0] sm:$0xff]
    %v4968 = vld [vmem:[%s4908 + $0x1d8] sm:$0xff]
    %v4969 = vld [vmem:[%s4908 + $0x1e0] sm:$0xff]
    %v4970 = vld [vmem:[%s4908 + $0x1e8] sm:$0xff]
    %v4971 = vld [vmem:[%s4908 + $0x1f0] sm:$0xff]
    %v4972 = vld [vmem:[%s4908 + $0x1f8] sm:$0xff]
    %4973 = vmatpush.msra.mxu0 %v4969
    %4974 = vmatpush.msra.mxu0 %v4965
    %4975 = vmatpush.msra.mxu0 %v4961
    %4976 = vmatpush.msra.mxu0 %v4957
    %4977 = vmatpush.msra.mxu0 %v4953
    %4978 = vmatpush.msra.mxu0 %v4949
    %4979 = vmatpush.msra.mxu0 %v4945
    %4980 = vmatpush.msra.mxu0 %v4941
    %4981 = vmatpush.msra.mxu0 %v4937
    %4982 = vmatpush.msra.mxu0 %v4933
    %4983 = vmatpush.msra.mxu0 %v4929
    %4984 = vmatpush.msra.mxu0 %v4925
    %4985 = vmatpush.msra.mxu0 %v4921
    %4986 = vmatpush.msra.mxu0 %v4917
    %4987 = vmatpush.msra.mxu0 %v4913
    %4988 = vmatpush.msra.mxu0 %v4909
    %4989 = vmatmul.f32.gmra.mxu0 %v4907
    %v4990 = vpop.f32.mrf.mxu0
    %v4991 = vadd.f32 0.0, %v4990
    %4992 = vdwg.mxu0
    %4993 = vmatpush.msra.mxu0 %v4970
    %4994 = vmatpush.msra.mxu0 %v4966
    %4995 = vmatpush.msra.mxu0 %v4962
    %4996 = vmatpush.msra.mxu0 %v4958
    %4997 = vmatpush.msra.mxu0 %v4954
    %4998 = vmatpush.msra.mxu0 %v4950
    %4999 = vmatpush.msra.mxu0 %v4946
    %5000 = vmatpush.msra.mxu0 %v4942
    %5001 = vmatpush.msra.mxu0 %v4938
    %5002 = vmatpush.msra.mxu0 %v4934
    %5003 = vmatpush.msra.mxu0 %v4930
    %5004 = vmatpush.msra.mxu0 %v4926
    %5005 = vmatpush.msra.mxu0 %v4922
    %5006 = vmatpush.msra.mxu0 %v4918
    %5007 = vmatpush.msra.mxu0 %v4914
    %5008 = vmatpush.msra.mxu0 %v4910
    %5009 = vmatmul.f32.gmra.mxu0 %v4907
    %v5010 = vpop.f32.mrf.mxu0
    %v5011 = vadd.f32 0.0, %v5010
    %5012 = vdwg.mxu0
    %5013 = vmatpush.msra.mxu0 %v4971
    %5014 = vmatpush.msra.mxu0 %v4967
    %5015 = vmatpush.msra.mxu0 %v4963
    %5016 = vmatpush.msra.mxu0 %v4959
    %5017 = vmatpush.msra.mxu0 %v4955
    %5018 = vmatpush.msra.mxu0 %v4951
    %5019 = vmatpush.msra.mxu0 %v4947
    %5020 = vmatpush.msra.mxu0 %v4943
    %5021 = vmatpush.msra.mxu0 %v4939
    %5022 = vmatpush.msra.mxu0 %v4935
    %5023 = vmatpush.msra.mxu0 %v4931
    %5024 = vmatpush.msra.mxu0 %v4927
    %5025 = vmatpush.msra.mxu0 %v4923
    %5026 = vmatpush.msra.mxu0 %v4919
    %5027 = vmatpush.msra.mxu0 %v4915
    %5028 = vmatpush.msra.mxu0 %v4911
    %5029 = vmatmul.f32.gmra.mxu0 %v4907
    %v5030 = vpop.f32.mrf.mxu0
    %v5031 = vadd.f32 0.0, %v5030
    %5032 = vdwg.mxu0
    %5033 = vmatpush.msra.mxu0 %v4972
    %5034 = vmatpush.msra.mxu0 %v4968
    %5035 = vmatpush.msra.mxu0 %v4964
    %5036 = vmatpush.msra.mxu0 %v4960
    %5037 = vmatpush.msra.mxu0 %v4956
    %5038 = vmatpush.msra.mxu0 %v4952
    %5039 = vmatpush.msra.mxu0 %v4948
    %5040 = vmatpush.msra.mxu0 %v4944
    %5041 = vmatpush.msra.mxu0 %v4940
    %5042 = vmatpush.msra.mxu0 %v4936
    %5043 = vmatpush.msra.mxu0 %v4932
    %5044 = vmatpush.msra.mxu0 %v4928
    %5045 = vmatpush.msra.mxu0 %v4924
    %5046 = vmatpush.msra.mxu0 %v4920
    %5047 = vmatpush.msra.mxu0 %v4916
    %5048 = vmatpush.msra.mxu0 %v4912
    %5049 = vmatmul.f32.gmra.mxu0 %v4907
    %v5050 = vpop.f32.mrf.mxu0
    %v5051 = vadd.f32 0.0, %v5050
    %5052 = vdwg.mxu0
    %v5053 = vadd.f32 %v4903, %v4991
    %v5054 = vadd.f32 %v4904, %v5011
    %v5055 = vadd.f32 %v4905, %v5031
    %v5056 = vadd.f32 %v4906, %v5051
    %v5057 = vld [vmem:[#allocation7 + $0xc] sm:$0x3]
    %s5058 = scalar_lea.vmem [#allocation8], 3072
    %v5059 = vld [vmem:[%s5058] sm:$0xff]
    %v5060 = vld [vmem:[%s5058 + $0x8] sm:$0xff]
    %v5061 = vld [vmem:[%s5058 + $0x10] sm:$0xff]
    %v5062 = vld [vmem:[%s5058 + $0x18] sm:$0xff]
    %v5063 = vld [vmem:[%s5058 + $0x20] sm:$0xff]
    %v5064 = vld [vmem:[%s5058 + $0x28] sm:$0xff]
    %v5065 = vld [vmem:[%s5058 + $0x30] sm:$0xff]
    %v5066 = vld [vmem:[%s5058 + $0x38] sm:$0xff]
    %v5067 = vld [vmem:[%s5058 + $0x40] sm:$0xff]
    %v5068 = vld [vmem:[%s5058 + $0x48] sm:$0xff]
    %v5069 = vld [vmem:[%s5058 + $0x50] sm:$0xff]
    %v5070 = vld [vmem:[%s5058 + $0x58] sm:$0xff]
    %v5071 = vld [vmem:[%s5058 + $0x60] sm:$0xff]
    %v5072 = vld [vmem:[%s5058 + $0x68] sm:$0xff]
    %v5073 = vld [vmem:[%s5058 + $0x70] sm:$0xff]
    %v5074 = vld [vmem:[%s5058 + $0x78] sm:$0xff]
    %v5075 = vld [vmem:[%s5058 + $0x80] sm:$0xff]
    %v5076 = vld [vmem:[%s5058 + $0x88] sm:$0xff]
    %v5077 = vld [vmem:[%s5058 + $0x90] sm:$0xff]
    %v5078 = vld [vmem:[%s5058 + $0x98] sm:$0xff]
    %v5079 = vld [vmem:[%s5058 + $0xa0] sm:$0xff]
    %v5080 = vld [vmem:[%s5058 + $0xa8] sm:$0xff]
    %v5081 = vld [vmem:[%s5058 + $0xb0] sm:$0xff]
    %v5082 = vld [vmem:[%s5058 + $0xb8] sm:$0xff]
    %v5083 = vld [vmem:[%s5058 + $0xc0] sm:$0xff]
    %v5084 = vld [vmem:[%s5058 + $0xc8] sm:$0xff]
    %v5085 = vld [vmem:[%s5058 + $0xd0] sm:$0xff]
    %v5086 = vld [vmem:[%s5058 + $0xd8] sm:$0xff]
    %v5087 = vld [vmem:[%s5058 + $0xe0] sm:$0xff]
    %v5088 = vld [vmem:[%s5058 + $0xe8] sm:$0xff]
    %v5089 = vld [vmem:[%s5058 + $0xf0] sm:$0xff]
    %v5090 = vld [vmem:[%s5058 + $0xf8] sm:$0xff]
    %v5091 = vld [vmem:[%s5058 + $0x100] sm:$0xff]
    %v5092 = vld [vmem:[%s5058 + $0x108] sm:$0xff]
    %v5093 = vld [vmem:[%s5058 + $0x110] sm:$0xff]
    %v5094 = vld [vmem:[%s5058 + $0x118] sm:$0xff]
    %v5095 = vld [vmem:[%s5058 + $0x120] sm:$0xff]
    %v5096 = vld [vmem:[%s5058 + $0x128] sm:$0xff]
    %v5097 = vld [vmem:[%s5058 + $0x130] sm:$0xff]
    %v5098 = vld [vmem:[%s5058 + $0x138] sm:$0xff]
    %v5099 = vld [vmem:[%s5058 + $0x140] sm:$0xff]
    %v5100 = vld [vmem:[%s5058 + $0x148] sm:$0xff]
    %v5101 = vld [vmem:[%s5058 + $0x150] sm:$0xff]
    %v5102 = vld [vmem:[%s5058 + $0x158] sm:$0xff]
    %v5103 = vld [vmem:[%s5058 + $0x160] sm:$0xff]
    %v5104 = vld [vmem:[%s5058 + $0x168] sm:$0xff]
    %v5105 = vld [vmem:[%s5058 + $0x170] sm:$0xff]
    %v5106 = vld [vmem:[%s5058 + $0x178] sm:$0xff]
    %v5107 = vld [vmem:[%s5058 + $0x180] sm:$0xff]
    %v5108 = vld [vmem:[%s5058 + $0x188] sm:$0xff]
    %v5109 = vld [vmem:[%s5058 + $0x190] sm:$0xff]
    %v5110 = vld [vmem:[%s5058 + $0x198] sm:$0xff]
    %v5111 = vld [vmem:[%s5058 + $0x1a0] sm:$0xff]
    %v5112 = vld [vmem:[%s5058 + $0x1a8] sm:$0xff]
    %v5113 = vld [vmem:[%s5058 + $0x1b0] sm:$0xff]
    %v5114 = vld [vmem:[%s5058 + $0x1b8] sm:$0xff]
    %v5115 = vld [vmem:[%s5058 + $0x1c0] sm:$0xff]
    %v5116 = vld [vmem:[%s5058 + $0x1c8] sm:$0xff]
    %v5117 = vld [vmem:[%s5058 + $0x1d0] sm:$0xff]
    %v5118 = vld [vmem:[%s5058 + $0x1d8] sm:$0xff]
    %v5119 = vld [vmem:[%s5058 + $0x1e0] sm:$0xff]
    %v5120 = vld [vmem:[%s5058 + $0x1e8] sm:$0xff]
    %v5121 = vld [vmem:[%s5058 + $0x1f0] sm:$0xff]
    %v5122 = vld [vmem:[%s5058 + $0x1f8] sm:$0xff]
    %5123 = vmatpush.msra.mxu0 %v5119
    %5124 = vmatpush.msra.mxu0 %v5115
    %5125 = vmatpush.msra.mxu0 %v5111
    %5126 = vmatpush.msra.mxu0 %v5107
    %5127 = vmatpush.msra.mxu0 %v5103
    %5128 = vmatpush.msra.mxu0 %v5099
    %5129 = vmatpush.msra.mxu0 %v5095
    %5130 = vmatpush.msra.mxu0 %v5091
    %5131 = vmatpush.msra.mxu0 %v5087
    %5132 = vmatpush.msra.mxu0 %v5083
    %5133 = vmatpush.msra.mxu0 %v5079
    %5134 = vmatpush.msra.mxu0 %v5075
    %5135 = vmatpush.msra.mxu0 %v5071
    %5136 = vmatpush.msra.mxu0 %v5067
    %5137 = vmatpush.msra.mxu0 %v5063
    %5138 = vmatpush.msra.mxu0 %v5059
    %5139 = vmatmul.f32.gmra.mxu0 %v5057
    %v5140 = vpop.f32.mrf.mxu0
    %v5141 = vadd.f32 0.0, %v5140
    %5142 = vdwg.mxu0
    %5143 = vmatpush.msra.mxu0 %v5120
    %5144 = vmatpush.msra.mxu0 %v5116
    %5145 = vmatpush.msra.mxu0 %v5112
    %5146 = vmatpush.msra.mxu0 %v5108
    %5147 = vmatpush.msra.mxu0 %v5104
    %5148 = vmatpush.msra.mxu0 %v5100
    %5149 = vmatpush.msra.mxu0 %v5096
    %5150 = vmatpush.msra.mxu0 %v5092
    %5151 = vmatpush.msra.mxu0 %v5088
    %5152 = vmatpush.msra.mxu0 %v5084
    %5153 = vmatpush.msra.mxu0 %v5080
    %5154 = vmatpush.msra.mxu0 %v5076
    %5155 = vmatpush.msra.mxu0 %v5072
    %5156 = vmatpush.msra.mxu0 %v5068
    %5157 = vmatpush.msra.mxu0 %v5064
    %5158 = vmatpush.msra.mxu0 %v5060
    %5159 = vmatmul.f32.gmra.mxu0 %v5057
    %v5160 = vpop.f32.mrf.mxu0
    %v5161 = vadd.f32 0.0, %v5160
    %5162 = vdwg.mxu0
    %5163 = vmatpush.msra.mxu0 %v5121
    %5164 = vmatpush.msra.mxu0 %v5117
    %5165 = vmatpush.msra.mxu0 %v5113
    %5166 = vmatpush.msra.mxu0 %v5109
    %5167 = vmatpush.msra.mxu0 %v5105
    %5168 = vmatpush.msra.mxu0 %v5101
    %5169 = vmatpush.msra.mxu0 %v5097
    %5170 = vmatpush.msra.mxu0 %v5093
    %5171 = vmatpush.msra.mxu0 %v5089
    %5172 = vmatpush.msra.mxu0 %v5085
    %5173 = vmatpush.msra.mxu0 %v5081
    %5174 = vmatpush.msra.mxu0 %v5077
    %5175 = vmatpush.msra.mxu0 %v5073
    %5176 = vmatpush.msra.mxu0 %v5069
    %5177 = vmatpush.msra.mxu0 %v5065
    %5178 = vmatpush.msra.mxu0 %v5061
    %5179 = vmatmul.f32.gmra.mxu0 %v5057
    %v5180 = vpop.f32.mrf.mxu0
    %v5181 = vadd.f32 0.0, %v5180
    %5182 = vdwg.mxu0
    %5183 = vmatpush.msra.mxu0 %v5122
    %5184 = vmatpush.msra.mxu0 %v5118
    %5185 = vmatpush.msra.mxu0 %v5114
    %5186 = vmatpush.msra.mxu0 %v5110
    %5187 = vmatpush.msra.mxu0 %v5106
    %5188 = vmatpush.msra.mxu0 %v5102
    %5189 = vmatpush.msra.mxu0 %v5098
    %5190 = vmatpush.msra.mxu0 %v5094
    %5191 = vmatpush.msra.mxu0 %v5090
    %5192 = vmatpush.msra.mxu0 %v5086
    %5193 = vmatpush.msra.mxu0 %v5082
    %5194 = vmatpush.msra.mxu0 %v5078
    %5195 = vmatpush.msra.mxu0 %v5074
    %5196 = vmatpush.msra.mxu0 %v5070
    %5197 = vmatpush.msra.mxu0 %v5066
    %5198 = vmatpush.msra.mxu0 %v5062
    %5199 = vmatmul.f32.gmra.mxu0 %v5057
    %v5200 = vpop.f32.mrf.mxu0
    %v5201 = vadd.f32 0.0, %v5200
    %5202 = vdwg.mxu0
    %v5203 = vadd.f32 %v5053, %v5141
    %v5204 = vadd.f32 %v5054, %v5161
    %v5205 = vadd.f32 %v5055, %v5181
    %v5206 = vadd.f32 %v5056, %v5201
    %v5207 = vld [vmem:[#allocation7 + $0xe] sm:$0x3]
    %s5208 = scalar_lea.vmem [#allocation8], 3584
    %v5209 = vld [vmem:[%s5208] sm:$0xff]
    %v5210 = vld [vmem:[%s5208 + $0x8] sm:$0xff]
    %v5211 = vld [vmem:[%s5208 + $0x10] sm:$0xff]
    %v5212 = vld [vmem:[%s5208 + $0x18] sm:$0xff]
    %v5213 = vld [vmem:[%s5208 + $0x20] sm:$0xff]
    %v5214 = vld [vmem:[%s5208 + $0x28] sm:$0xff]
    %v5215 = vld [vmem:[%s5208 + $0x30] sm:$0xff]
    %v5216 = vld [vmem:[%s5208 + $0x38] sm:$0xff]
    %v5217 = vld [vmem:[%s5208 + $0x40] sm:$0xff]
    %v5218 = vld [vmem:[%s5208 + $0x48] sm:$0xff]
    %v5219 = vld [vmem:[%s5208 + $0x50] sm:$0xff]
    %v5220 = vld [vmem:[%s5208 + $0x58] sm:$0xff]
    %v5221 = vld [vmem:[%s5208 + $0x60] sm:$0xff]
    %v5222 = vld [vmem:[%s5208 + $0x68] sm:$0xff]
    %v5223 = vld [vmem:[%s5208 + $0x70] sm:$0xff]
    %v5224 = vld [vmem:[%s5208 + $0x78] sm:$0xff]
    %v5225 = vld [vmem:[%s5208 + $0x80] sm:$0xff]
    %v5226 = vld [vmem:[%s5208 + $0x88] sm:$0xff]
    %v5227 = vld [vmem:[%s5208 + $0x90] sm:$0xff]
    %v5228 = vld [vmem:[%s5208 + $0x98] sm:$0xff]
    %v5229 = vld [vmem:[%s5208 + $0xa0] sm:$0xff]
    %v5230 = vld [vmem:[%s5208 + $0xa8] sm:$0xff]
    %v5231 = vld [vmem:[%s5208 + $0xb0] sm:$0xff]
    %v5232 = vld [vmem:[%s5208 + $0xb8] sm:$0xff]
    %v5233 = vld [vmem:[%s5208 + $0xc0] sm:$0xff]
    %v5234 = vld [vmem:[%s5208 + $0xc8] sm:$0xff]
    %v5235 = vld [vmem:[%s5208 + $0xd0] sm:$0xff]
    %v5236 = vld [vmem:[%s5208 + $0xd8] sm:$0xff]
    %v5237 = vld [vmem:[%s5208 + $0xe0] sm:$0xff]
    %v5238 = vld [vmem:[%s5208 + $0xe8] sm:$0xff]
    %v5239 = vld [vmem:[%s5208 + $0xf0] sm:$0xff]
    %v5240 = vld [vmem:[%s5208 + $0xf8] sm:$0xff]
    %v5241 = vld [vmem:[%s5208 + $0x100] sm:$0xff]
    %v5242 = vld [vmem:[%s5208 + $0x108] sm:$0xff]
    %v5243 = vld [vmem:[%s5208 + $0x110] sm:$0xff]
    %v5244 = vld [vmem:[%s5208 + $0x118] sm:$0xff]
    %v5245 = vld [vmem:[%s5208 + $0x120] sm:$0xff]
    %v5246 = vld [vmem:[%s5208 + $0x128] sm:$0xff]
    %v5247 = vld [vmem:[%s5208 + $0x130] sm:$0xff]
    %v5248 = vld [vmem:[%s5208 + $0x138] sm:$0xff]
    %v5249 = vld [vmem:[%s5208 + $0x140] sm:$0xff]
    %v5250 = vld [vmem:[%s5208 + $0x148] sm:$0xff]
    %v5251 = vld [vmem:[%s5208 + $0x150] sm:$0xff]
    %v5252 = vld [vmem:[%s5208 + $0x158] sm:$0xff]
    %v5253 = vld [vmem:[%s5208 + $0x160] sm:$0xff]
    %v5254 = vld [vmem:[%s5208 + $0x168] sm:$0xff]
    %v5255 = vld [vmem:[%s5208 + $0x170] sm:$0xff]
    %v5256 = vld [vmem:[%s5208 + $0x178] sm:$0xff]
    %v5257 = vld [vmem:[%s5208 + $0x180] sm:$0xff]
    %v5258 = vld [vmem:[%s5208 + $0x188] sm:$0xff]
    %v5259 = vld [vmem:[%s5208 + $0x190] sm:$0xff]
    %v5260 = vld [vmem:[%s5208 + $0x198] sm:$0xff]
    %v5261 = vld [vmem:[%s5208 + $0x1a0] sm:$0xff]
    %v5262 = vld [vmem:[%s5208 + $0x1a8] sm:$0xff]
    %v5263 = vld [vmem:[%s5208 + $0x1b0] sm:$0xff]
    %v5264 = vld [vmem:[%s5208 + $0x1b8] sm:$0xff]
    %v5265 = vld [vmem:[%s5208 + $0x1c0] sm:$0xff]
    %v5266 = vld [vmem:[%s5208 + $0x1c8] sm:$0xff]
    %v5267 = vld [vmem:[%s5208 + $0x1d0] sm:$0xff]
    %v5268 = vld [vmem:[%s5208 + $0x1d8] sm:$0xff]
    %v5269 = vld [vmem:[%s5208 + $0x1e0] sm:$0xff]
    %v5270 = vld [vmem:[%s5208 + $0x1e8] sm:$0xff]
    %v5271 = vld [vmem:[%s5208 + $0x1f0] sm:$0xff]
    %v5272 = vld [vmem:[%s5208 + $0x1f8] sm:$0xff]
    %5273 = vmatpush.msra.mxu0 %v5269
    %5274 = vmatpush.msra.mxu0 %v5265
    %5275 = vmatpush.msra.mxu0 %v5261
    %5276 = vmatpush.msra.mxu0 %v5257
    %5277 = vmatpush.msra.mxu0 %v5253
    %5278 = vmatpush.msra.mxu0 %v5249
    %5279 = vmatpush.msra.mxu0 %v5245
    %5280 = vmatpush.msra.mxu0 %v5241
    %5281 = vmatpush.msra.mxu0 %v5237
    %5282 = vmatpush.msra.mxu0 %v5233
    %5283 = vmatpush.msra.mxu0 %v5229
    %5284 = vmatpush.msra.mxu0 %v5225
    %5285 = vmatpush.msra.mxu0 %v5221
    %5286 = vmatpush.msra.mxu0 %v5217
    %5287 = vmatpush.msra.mxu0 %v5213
    %5288 = vmatpush.msra.mxu0 %v5209
    %5289 = vmatmul.f32.gmra.mxu0 %v5207
    %v5290 = vpop.f32.mrf.mxu0
    %v5291 = vadd.f32 0.0, %v5290
    %5292 = vdwg.mxu0
    %5293 = vmatpush.msra.mxu0 %v5270
    %5294 = vmatpush.msra.mxu0 %v5266
    %5295 = vmatpush.msra.mxu0 %v5262
    %5296 = vmatpush.msra.mxu0 %v5258
    %5297 = vmatpush.msra.mxu0 %v5254
    %5298 = vmatpush.msra.mxu0 %v5250
    %5299 = vmatpush.msra.mxu0 %v5246
    %5300 = vmatpush.msra.mxu0 %v5242
    %5301 = vmatpush.msra.mxu0 %v5238
    %5302 = vmatpush.msra.mxu0 %v5234
    %5303 = vmatpush.msra.mxu0 %v5230
    %5304 = vmatpush.msra.mxu0 %v5226
    %5305 = vmatpush.msra.mxu0 %v5222
    %5306 = vmatpush.msra.mxu0 %v5218
    %5307 = vmatpush.msra.mxu0 %v5214
    %5308 = vmatpush.msra.mxu0 %v5210
    %5309 = vmatmul.f32.gmra.mxu0 %v5207
    %v5310 = vpop.f32.mrf.mxu0
    %v5311 = vadd.f32 0.0, %v5310
    %5312 = vdwg.mxu0
    %5313 = vmatpush.msra.mxu0 %v5271
    %5314 = vmatpush.msra.mxu0 %v5267
    %5315 = vmatpush.msra.mxu0 %v5263
    %5316 = vmatpush.msra.mxu0 %v5259
    %5317 = vmatpush.msra.mxu0 %v5255
    %5318 = vmatpush.msra.mxu0 %v5251
    %5319 = vmatpush.msra.mxu0 %v5247
    %5320 = vmatpush.msra.mxu0 %v5243
    %5321 = vmatpush.msra.mxu0 %v5239
    %5322 = vmatpush.msra.mxu0 %v5235
    %5323 = vmatpush.msra.mxu0 %v5231
    %5324 = vmatpush.msra.mxu0 %v5227
    %5325 = vmatpush.msra.mxu0 %v5223
    %5326 = vmatpush.msra.mxu0 %v5219
    %5327 = vmatpush.msra.mxu0 %v5215
    %5328 = vmatpush.msra.mxu0 %v5211
    %5329 = vmatmul.f32.gmra.mxu0 %v5207
    %v5330 = vpop.f32.mrf.mxu0
    %v5331 = vadd.f32 0.0, %v5330
    %5332 = vdwg.mxu0
    %5333 = vmatpush.msra.mxu0 %v5272
    %5334 = vmatpush.msra.mxu0 %v5268
    %5335 = vmatpush.msra.mxu0 %v5264
    %5336 = vmatpush.msra.mxu0 %v5260
    %5337 = vmatpush.msra.mxu0 %v5256
    %5338 = vmatpush.msra.mxu0 %v5252
    %5339 = vmatpush.msra.mxu0 %v5248
    %5340 = vmatpush.msra.mxu0 %v5244
    %5341 = vmatpush.msra.mxu0 %v5240
    %5342 = vmatpush.msra.mxu0 %v5236
    %5343 = vmatpush.msra.mxu0 %v5232
    %5344 = vmatpush.msra.mxu0 %v5228
    %5345 = vmatpush.msra.mxu0 %v5224
    %5346 = vmatpush.msra.mxu0 %v5220
    %5347 = vmatpush.msra.mxu0 %v5216
    %5348 = vmatpush.msra.mxu0 %v5212
    %5349 = vmatmul.f32.gmra.mxu0 %v5207
    %v5350 = vpop.f32.mrf.mxu0
    %v5351 = vadd.f32 0.0, %v5350
    %5352 = vdwg.mxu0
    %v5353 = vadd.f32 %v5203, %v5291
    %v5354 = vadd.f32 %v5204, %v5311
    %v5355 = vadd.f32 %v5205, %v5331
    %v5356 = vadd.f32 %v5206, %v5351
    %v5357 = vld [vmem:[#allocation7 + $0x10] sm:$0x3]
    %s5358 = scalar_lea.vmem [#allocation8], 4096
    %v5359 = vld [vmem:[%s5358] sm:$0xff]
    %v5360 = vld [vmem:[%s5358 + $0x8] sm:$0xff]
    %v5361 = vld [vmem:[%s5358 + $0x10] sm:$0xff]
    %v5362 = vld [vmem:[%s5358 + $0x18] sm:$0xff]
    %v5363 = vld [vmem:[%s5358 + $0x20] sm:$0xff]
    %v5364 = vld [vmem:[%s5358 + $0x28] sm:$0xff]
    %v5365 = vld [vmem:[%s5358 + $0x30] sm:$0xff]
    %v5366 = vld [vmem:[%s5358 + $0x38] sm:$0xff]
    %v5367 = vld [vmem:[%s5358 + $0x40] sm:$0xff]
    %v5368 = vld [vmem:[%s5358 + $0x48] sm:$0xff]
    %v5369 = vld [vmem:[%s5358 + $0x50] sm:$0xff]
    %v5370 = vld [vmem:[%s5358 + $0x58] sm:$0xff]
    %v5371 = vld [vmem:[%s5358 + $0x60] sm:$0xff]
    %v5372 = vld [vmem:[%s5358 + $0x68] sm:$0xff]
    %v5373 = vld [vmem:[%s5358 + $0x70] sm:$0xff]
    %v5374 = vld [vmem:[%s5358 + $0x78] sm:$0xff]
    %v5375 = vld [vmem:[%s5358 + $0x80] sm:$0xff]
    %v5376 = vld [vmem:[%s5358 + $0x88] sm:$0xff]
    %v5377 = vld [vmem:[%s5358 + $0x90] sm:$0xff]
    %v5378 = vld [vmem:[%s5358 + $0x98] sm:$0xff]
    %v5379 = vld [vmem:[%s5358 + $0xa0] sm:$0xff]
    %v5380 = vld [vmem:[%s5358 + $0xa8] sm:$0xff]
    %v5381 = vld [vmem:[%s5358 + $0xb0] sm:$0xff]
    %v5382 = vld [vmem:[%s5358 + $0xb8] sm:$0xff]
    %v5383 = vld [vmem:[%s5358 + $0xc0] sm:$0xff]
    %v5384 = vld [vmem:[%s5358 + $0xc8] sm:$0xff]
    %v5385 = vld [vmem:[%s5358 + $0xd0] sm:$0xff]
    %v5386 = vld [vmem:[%s5358 + $0xd8] sm:$0xff]
    %v5387 = vld [vmem:[%s5358 + $0xe0] sm:$0xff]
    %v5388 = vld [vmem:[%s5358 + $0xe8] sm:$0xff]
    %v5389 = vld [vmem:[%s5358 + $0xf0] sm:$0xff]
    %v5390 = vld [vmem:[%s5358 + $0xf8] sm:$0xff]
    %v5391 = vld [vmem:[%s5358 + $0x100] sm:$0xff]
    %v5392 = vld [vmem:[%s5358 + $0x108] sm:$0xff]
    %v5393 = vld [vmem:[%s5358 + $0x110] sm:$0xff]
    %v5394 = vld [vmem:[%s5358 + $0x118] sm:$0xff]
    %v5395 = vld [vmem:[%s5358 + $0x120] sm:$0xff]
    %v5396 = vld [vmem:[%s5358 + $0x128] sm:$0xff]
    %v5397 = vld [vmem:[%s5358 + $0x130] sm:$0xff]
    %v5398 = vld [vmem:[%s5358 + $0x138] sm:$0xff]
    %v5399 = vld [vmem:[%s5358 + $0x140] sm:$0xff]
    %v5400 = vld [vmem:[%s5358 + $0x148] sm:$0xff]
    %v5401 = vld [vmem:[%s5358 + $0x150] sm:$0xff]
    %v5402 = vld [vmem:[%s5358 + $0x158] sm:$0xff]
    %v5403 = vld [vmem:[%s5358 + $0x160] sm:$0xff]
    %v5404 = vld [vmem:[%s5358 + $0x168] sm:$0xff]
    %v5405 = vld [vmem:[%s5358 + $0x170] sm:$0xff]
    %v5406 = vld [vmem:[%s5358 + $0x178] sm:$0xff]
    %v5407 = vld [vmem:[%s5358 + $0x180] sm:$0xff]
    %v5408 = vld [vmem:[%s5358 + $0x188] sm:$0xff]
    %v5409 = vld [vmem:[%s5358 + $0x190] sm:$0xff]
    %v5410 = vld [vmem:[%s5358 + $0x198] sm:$0xff]
    %v5411 = vld [vmem:[%s5358 + $0x1a0] sm:$0xff]
    %v5412 = vld [vmem:[%s5358 + $0x1a8] sm:$0xff]
    %v5413 = vld [vmem:[%s5358 + $0x1b0] sm:$0xff]
    %v5414 = vld [vmem:[%s5358 + $0x1b8] sm:$0xff]
    %v5415 = vld [vmem:[%s5358 + $0x1c0] sm:$0xff]
    %v5416 = vld [vmem:[%s5358 + $0x1c8] sm:$0xff]
    %v5417 = vld [vmem:[%s5358 + $0x1d0] sm:$0xff]
    %v5418 = vld [vmem:[%s5358 + $0x1d8] sm:$0xff]
    %v5419 = vld [vmem:[%s5358 + $0x1e0] sm:$0xff]
    %v5420 = vld [vmem:[%s5358 + $0x1e8] sm:$0xff]
    %v5421 = vld [vmem:[%s5358 + $0x1f0] sm:$0xff]
    %v5422 = vld [vmem:[%s5358 + $0x1f8] sm:$0xff]
    %5423 = vmatpush.msra.mxu0 %v5419
    %5424 = vmatpush.msra.mxu0 %v5415
    %5425 = vmatpush.msra.mxu0 %v5411
    %5426 = vmatpush.msra.mxu0 %v5407
    %5427 = vmatpush.msra.mxu0 %v5403
    %5428 = vmatpush.msra.mxu0 %v5399
    %5429 = vmatpush.msra.mxu0 %v5395
    %5430 = vmatpush.msra.mxu0 %v5391
    %5431 = vmatpush.msra.mxu0 %v5387
    %5432 = vmatpush.msra.mxu0 %v5383
    %5433 = vmatpush.msra.mxu0 %v5379
    %5434 = vmatpush.msra.mxu0 %v5375
    %5435 = vmatpush.msra.mxu0 %v5371
    %5436 = vmatpush.msra.mxu0 %v5367
    %5437 = vmatpush.msra.mxu0 %v5363
    %5438 = vmatpush.msra.mxu0 %v5359
    %5439 = vmatmul.f32.gmra.mxu0 %v5357
    %v5440 = vpop.f32.mrf.mxu0
    %v5441 = vadd.f32 0.0, %v5440
    %5442 = vdwg.mxu0
    %5443 = vmatpush.msra.mxu0 %v5420
    %5444 = vmatpush.msra.mxu0 %v5416
    %5445 = vmatpush.msra.mxu0 %v5412
    %5446 = vmatpush.msra.mxu0 %v5408
    %5447 = vmatpush.msra.mxu0 %v5404
    %5448 = vmatpush.msra.mxu0 %v5400
    %5449 = vmatpush.msra.mxu0 %v5396
    %5450 = vmatpush.msra.mxu0 %v5392
    %5451 = vmatpush.msra.mxu0 %v5388
    %5452 = vmatpush.msra.mxu0 %v5384
    %5453 = vmatpush.msra.mxu0 %v5380
    %5454 = vmatpush.msra.mxu0 %v5376
    %5455 = vmatpush.msra.mxu0 %v5372
    %5456 = vmatpush.msra.mxu0 %v5368
    %5457 = vmatpush.msra.mxu0 %v5364
    %5458 = vmatpush.msra.mxu0 %v5360
    %5459 = vmatmul.f32.gmra.mxu0 %v5357
    %v5460 = vpop.f32.mrf.mxu0
    %v5461 = vadd.f32 0.0, %v5460
    %5462 = vdwg.mxu0
    %5463 = vmatpush.msra.mxu0 %v5421
    %5464 = vmatpush.msra.mxu0 %v5417
    %5465 = vmatpush.msra.mxu0 %v5413
    %5466 = vmatpush.msra.mxu0 %v5409
    %5467 = vmatpush.msra.mxu0 %v5405
    %5468 = vmatpush.msra.mxu0 %v5401
    %5469 = vmatpush.msra.mxu0 %v5397
    %5470 = vmatpush.msra.mxu0 %v5393
    %5471 = vmatpush.msra.mxu0 %v5389
    %5472 = vmatpush.msra.mxu0 %v5385
    %5473 = vmatpush.msra.mxu0 %v5381
    %5474 = vmatpush.msra.mxu0 %v5377
    %5475 = vmatpush.msra.mxu0 %v5373
    %5476 = vmatpush.msra.mxu0 %v5369
    %5477 = vmatpush.msra.mxu0 %v5365
    %5478 = vmatpush.msra.mxu0 %v5361
    %5479 = vmatmul.f32.gmra.mxu0 %v5357
    %v5480 = vpop.f32.mrf.mxu0
    %v5481 = vadd.f32 0.0, %v5480
    %5482 = vdwg.mxu0
    %5483 = vmatpush.msra.mxu0 %v5422
    %5484 = vmatpush.msra.mxu0 %v5418
    %5485 = vmatpush.msra.mxu0 %v5414
    %5486 = vmatpush.msra.mxu0 %v5410
    %5487 = vmatpush.msra.mxu0 %v5406
    %5488 = vmatpush.msra.mxu0 %v5402
    %5489 = vmatpush.msra.mxu0 %v5398
    %5490 = vmatpush.msra.mxu0 %v5394
    %5491 = vmatpush.msra.mxu0 %v5390
    %5492 = vmatpush.msra.mxu0 %v5386
    %5493 = vmatpush.msra.mxu0 %v5382
    %5494 = vmatpush.msra.mxu0 %v5378
    %5495 = vmatpush.msra.mxu0 %v5374
    %5496 = vmatpush.msra.mxu0 %v5370
    %5497 = vmatpush.msra.mxu0 %v5366
    %5498 = vmatpush.msra.mxu0 %v5362
    %5499 = vmatmul.f32.gmra.mxu0 %v5357
    %v5500 = vpop.f32.mrf.mxu0
    %v5501 = vadd.f32 0.0, %v5500
    %5502 = vdwg.mxu0
    %v5503 = vadd.f32 %v5353, %v5441
    %v5504 = vadd.f32 %v5354, %v5461
    %v5505 = vadd.f32 %v5355, %v5481
    %v5506 = vadd.f32 %v5356, %v5501
    %v5507 = vld [vmem:[#allocation7 + $0x12] sm:$0x3]
    %s5508 = scalar_lea.vmem [#allocation8], 4608
    %v5509 = vld [vmem:[%s5508] sm:$0xff]
    %v5510 = vld [vmem:[%s5508 + $0x8] sm:$0xff]
    %v5511 = vld [vmem:[%s5508 + $0x10] sm:$0xff]
    %v5512 = vld [vmem:[%s5508 + $0x18] sm:$0xff]
    %v5513 = vld [vmem:[%s5508 + $0x20] sm:$0xff]
    %v5514 = vld [vmem:[%s5508 + $0x28] sm:$0xff]
    %v5515 = vld [vmem:[%s5508 + $0x30] sm:$0xff]
    %v5516 = vld [vmem:[%s5508 + $0x38] sm:$0xff]
    %v5517 = vld [vmem:[%s5508 + $0x40] sm:$0xff]
    %v5518 = vld [vmem:[%s5508 + $0x48] sm:$0xff]
    %v5519 = vld [vmem:[%s5508 + $0x50] sm:$0xff]
    %v5520 = vld [vmem:[%s5508 + $0x58] sm:$0xff]
    %v5521 = vld [vmem:[%s5508 + $0x60] sm:$0xff]
    %v5522 = vld [vmem:[%s5508 + $0x68] sm:$0xff]
    %v5523 = vld [vmem:[%s5508 + $0x70] sm:$0xff]
    %v5524 = vld [vmem:[%s5508 + $0x78] sm:$0xff]
    %v5525 = vld [vmem:[%s5508 + $0x80] sm:$0xff]
    %v5526 = vld [vmem:[%s5508 + $0x88] sm:$0xff]
    %v5527 = vld [vmem:[%s5508 + $0x90] sm:$0xff]
    %v5528 = vld [vmem:[%s5508 + $0x98] sm:$0xff]
    %v5529 = vld [vmem:[%s5508 + $0xa0] sm:$0xff]
    %v5530 = vld [vmem:[%s5508 + $0xa8] sm:$0xff]
    %v5531 = vld [vmem:[%s5508 + $0xb0] sm:$0xff]
    %v5532 = vld [vmem:[%s5508 + $0xb8] sm:$0xff]
    %v5533 = vld [vmem:[%s5508 + $0xc0] sm:$0xff]
    %v5534 = vld [vmem:[%s5508 + $0xc8] sm:$0xff]
    %v5535 = vld [vmem:[%s5508 + $0xd0] sm:$0xff]
    %v5536 = vld [vmem:[%s5508 + $0xd8] sm:$0xff]
    %v5537 = vld [vmem:[%s5508 + $0xe0] sm:$0xff]
    %v5538 = vld [vmem:[%s5508 + $0xe8] sm:$0xff]
    %v5539 = vld [vmem:[%s5508 + $0xf0] sm:$0xff]
    %v5540 = vld [vmem:[%s5508 + $0xf8] sm:$0xff]
    %v5541 = vld [vmem:[%s5508 + $0x100] sm:$0xff]
    %v5542 = vld [vmem:[%s5508 + $0x108] sm:$0xff]
    %v5543 = vld [vmem:[%s5508 + $0x110] sm:$0xff]
    %v5544 = vld [vmem:[%s5508 + $0x118] sm:$0xff]
    %v5545 = vld [vmem:[%s5508 + $0x120] sm:$0xff]
    %v5546 = vld [vmem:[%s5508 + $0x128] sm:$0xff]
    %v5547 = vld [vmem:[%s5508 + $0x130] sm:$0xff]
    %v5548 = vld [vmem:[%s5508 + $0x138] sm:$0xff]
    %v5549 = vld [vmem:[%s5508 + $0x140] sm:$0xff]
    %v5550 = vld [vmem:[%s5508 + $0x148] sm:$0xff]
    %v5551 = vld [vmem:[%s5508 + $0x150] sm:$0xff]
    %v5552 = vld [vmem:[%s5508 + $0x158] sm:$0xff]
    %v5553 = vld [vmem:[%s5508 + $0x160] sm:$0xff]
    %v5554 = vld [vmem:[%s5508 + $0x168] sm:$0xff]
    %v5555 = vld [vmem:[%s5508 + $0x170] sm:$0xff]
    %v5556 = vld [vmem:[%s5508 + $0x178] sm:$0xff]
    %v5557 = vld [vmem:[%s5508 + $0x180] sm:$0xff]
    %v5558 = vld [vmem:[%s5508 + $0x188] sm:$0xff]
    %v5559 = vld [vmem:[%s5508 + $0x190] sm:$0xff]
    %v5560 = vld [vmem:[%s5508 + $0x198] sm:$0xff]
    %v5561 = vld [vmem:[%s5508 + $0x1a0] sm:$0xff]
    %v5562 = vld [vmem:[%s5508 + $0x1a8] sm:$0xff]
    %v5563 = vld [vmem:[%s5508 + $0x1b0] sm:$0xff]
    %v5564 = vld [vmem:[%s5508 + $0x1b8] sm:$0xff]
    %v5565 = vld [vmem:[%s5508 + $0x1c0] sm:$0xff]
    %v5566 = vld [vmem:[%s5508 + $0x1c8] sm:$0xff]
    %v5567 = vld [vmem:[%s5508 + $0x1d0] sm:$0xff]
    %v5568 = vld [vmem:[%s5508 + $0x1d8] sm:$0xff]
    %v5569 = vld [vmem:[%s5508 + $0x1e0] sm:$0xff]
    %v5570 = vld [vmem:[%s5508 + $0x1e8] sm:$0xff]
    %v5571 = vld [vmem:[%s5508 + $0x1f0] sm:$0xff]
    %v5572 = vld [vmem:[%s5508 + $0x1f8] sm:$0xff]
    %5573 = vmatpush.msra.mxu0 %v5569
    %5574 = vmatpush.msra.mxu0 %v5565
    %5575 = vmatpush.msra.mxu0 %v5561
    %5576 = vmatpush.msra.mxu0 %v5557
    %5577 = vmatpush.msra.mxu0 %v5553
    %5578 = vmatpush.msra.mxu0 %v5549
    %5579 = vmatpush.msra.mxu0 %v5545
    %5580 = vmatpush.msra.mxu0 %v5541
    %5581 = vmatpush.msra.mxu0 %v5537
    %5582 = vmatpush.msra.mxu0 %v5533
    %5583 = vmatpush.msra.mxu0 %v5529
    %5584 = vmatpush.msra.mxu0 %v5525
    %5585 = vmatpush.msra.mxu0 %v5521
    %5586 = vmatpush.msra.mxu0 %v5517
    %5587 = vmatpush.msra.mxu0 %v5513
    %5588 = vmatpush.msra.mxu0 %v5509
    %5589 = vmatmul.f32.gmra.mxu0 %v5507
    %v5590 = vpop.f32.mrf.mxu0
    %v5591 = vadd.f32 0.0, %v5590
    %5592 = vdwg.mxu0
    %5593 = vmatpush.msra.mxu0 %v5570
    %5594 = vmatpush.msra.mxu0 %v5566
    %5595 = vmatpush.msra.mxu0 %v5562
    %5596 = vmatpush.msra.mxu0 %v5558
    %5597 = vmatpush.msra.mxu0 %v5554
    %5598 = vmatpush.msra.mxu0 %v5550
    %5599 = vmatpush.msra.mxu0 %v5546
    %5600 = vmatpush.msra.mxu0 %v5542
    %5601 = vmatpush.msra.mxu0 %v5538
    %5602 = vmatpush.msra.mxu0 %v5534
    %5603 = vmatpush.msra.mxu0 %v5530
    %5604 = vmatpush.msra.mxu0 %v5526
    %5605 = vmatpush.msra.mxu0 %v5522
    %5606 = vmatpush.msra.mxu0 %v5518
    %5607 = vmatpush.msra.mxu0 %v5514
    %5608 = vmatpush.msra.mxu0 %v5510
    %5609 = vmatmul.f32.gmra.mxu0 %v5507
    %v5610 = vpop.f32.mrf.mxu0
    %v5611 = vadd.f32 0.0, %v5610
    %5612 = vdwg.mxu0
    %5613 = vmatpush.msra.mxu0 %v5571
    %5614 = vmatpush.msra.mxu0 %v5567
    %5615 = vmatpush.msra.mxu0 %v5563
    %5616 = vmatpush.msra.mxu0 %v5559
    %5617 = vmatpush.msra.mxu0 %v5555
    %5618 = vmatpush.msra.mxu0 %v5551
    %5619 = vmatpush.msra.mxu0 %v5547
    %5620 = vmatpush.msra.mxu0 %v5543
    %5621 = vmatpush.msra.mxu0 %v5539
    %5622 = vmatpush.msra.mxu0 %v5535
    %5623 = vmatpush.msra.mxu0 %v5531
    %5624 = vmatpush.msra.mxu0 %v5527
    %5625 = vmatpush.msra.mxu0 %v5523
    %5626 = vmatpush.msra.mxu0 %v5519
    %5627 = vmatpush.msra.mxu0 %v5515
    %5628 = vmatpush.msra.mxu0 %v5511
    %5629 = vmatmul.f32.gmra.mxu0 %v5507
    %v5630 = vpop.f32.mrf.mxu0
    %v5631 = vadd.f32 0.0, %v5630
    %5632 = vdwg.mxu0
    %5633 = vmatpush.msra.mxu0 %v5572
    %5634 = vmatpush.msra.mxu0 %v5568
    %5635 = vmatpush.msra.mxu0 %v5564
    %5636 = vmatpush.msra.mxu0 %v5560
    %5637 = vmatpush.msra.mxu0 %v5556
    %5638 = vmatpush.msra.mxu0 %v5552
    %5639 = vmatpush.msra.mxu0 %v5548
    %5640 = vmatpush.msra.mxu0 %v5544
    %5641 = vmatpush.msra.mxu0 %v5540
    %5642 = vmatpush.msra.mxu0 %v5536
    %5643 = vmatpush.msra.mxu0 %v5532
    %5644 = vmatpush.msra.mxu0 %v5528
    %5645 = vmatpush.msra.mxu0 %v5524
    %5646 = vmatpush.msra.mxu0 %v5520
    %5647 = vmatpush.msra.mxu0 %v5516
    %5648 = vmatpush.msra.mxu0 %v5512
    %5649 = vmatmul.f32.gmra.mxu0 %v5507
    %v5650 = vpop.f32.mrf.mxu0
    %v5651 = vadd.f32 0.0, %v5650
    %5652 = vdwg.mxu0
    %v5653 = vadd.f32 %v5503, %v5591
    %v5654 = vadd.f32 %v5504, %v5611
    %v5655 = vadd.f32 %v5505, %v5631
    %v5656 = vadd.f32 %v5506, %v5651
    %v5657 = vld [vmem:[#allocation7 + $0x14] sm:$0x3]
    %s5658 = scalar_lea.vmem [#allocation8], 5120
    %v5659 = vld [vmem:[%s5658] sm:$0xff]
    %v5660 = vld [vmem:[%s5658 + $0x8] sm:$0xff]
    %v5661 = vld [vmem:[%s5658 + $0x10] sm:$0xff]
    %v5662 = vld [vmem:[%s5658 + $0x18] sm:$0xff]
    %v5663 = vld [vmem:[%s5658 + $0x20] sm:$0xff]
    %v5664 = vld [vmem:[%s5658 + $0x28] sm:$0xff]
    %v5665 = vld [vmem:[%s5658 + $0x30] sm:$0xff]
    %v5666 = vld [vmem:[%s5658 + $0x38] sm:$0xff]
    %v5667 = vld [vmem:[%s5658 + $0x40] sm:$0xff]
    %v5668 = vld [vmem:[%s5658 + $0x48] sm:$0xff]
    %v5669 = vld [vmem:[%s5658 + $0x50] sm:$0xff]
    %v5670 = vld [vmem:[%s5658 + $0x58] sm:$0xff]
    %v5671 = vld [vmem:[%s5658 + $0x60] sm:$0xff]
    %v5672 = vld [vmem:[%s5658 + $0x68] sm:$0xff]
    %v5673 = vld [vmem:[%s5658 + $0x70] sm:$0xff]
    %v5674 = vld [vmem:[%s5658 + $0x78] sm:$0xff]
    %v5675 = vld [vmem:[%s5658 + $0x80] sm:$0xff]
    %v5676 = vld [vmem:[%s5658 + $0x88] sm:$0xff]
    %v5677 = vld [vmem:[%s5658 + $0x90] sm:$0xff]
    %v5678 = vld [vmem:[%s5658 + $0x98] sm:$0xff]
    %v5679 = vld [vmem:[%s5658 + $0xa0] sm:$0xff]
    %v5680 = vld [vmem:[%s5658 + $0xa8] sm:$0xff]
    %v5681 = vld [vmem:[%s5658 + $0xb0] sm:$0xff]
    %v5682 = vld [vmem:[%s5658 + $0xb8] sm:$0xff]
    %v5683 = vld [vmem:[%s5658 + $0xc0] sm:$0xff]
    %v5684 = vld [vmem:[%s5658 + $0xc8] sm:$0xff]
    %v5685 = vld [vmem:[%s5658 + $0xd0] sm:$0xff]
    %v5686 = vld [vmem:[%s5658 + $0xd8] sm:$0xff]
    %v5687 = vld [vmem:[%s5658 + $0xe0] sm:$0xff]
    %v5688 = vld [vmem:[%s5658 + $0xe8] sm:$0xff]
    %v5689 = vld [vmem:[%s5658 + $0xf0] sm:$0xff]
    %v5690 = vld [vmem:[%s5658 + $0xf8] sm:$0xff]
    %v5691 = vld [vmem:[%s5658 + $0x100] sm:$0xff]
    %v5692 = vld [vmem:[%s5658 + $0x108] sm:$0xff]
    %v5693 = vld [vmem:[%s5658 + $0x110] sm:$0xff]
    %v5694 = vld [vmem:[%s5658 + $0x118] sm:$0xff]
    %v5695 = vld [vmem:[%s5658 + $0x120] sm:$0xff]
    %v5696 = vld [vmem:[%s5658 + $0x128] sm:$0xff]
    %v5697 = vld [vmem:[%s5658 + $0x130] sm:$0xff]
    %v5698 = vld [vmem:[%s5658 + $0x138] sm:$0xff]
    %v5699 = vld [vmem:[%s5658 + $0x140] sm:$0xff]
    %v5700 = vld [vmem:[%s5658 + $0x148] sm:$0xff]
    %v5701 = vld [vmem:[%s5658 + $0x150] sm:$0xff]
    %v5702 = vld [vmem:[%s5658 + $0x158] sm:$0xff]
    %v5703 = vld [vmem:[%s5658 + $0x160] sm:$0xff]
    %v5704 = vld [vmem:[%s5658 + $0x168] sm:$0xff]
    %v5705 = vld [vmem:[%s5658 + $0x170] sm:$0xff]
    %v5706 = vld [vmem:[%s5658 + $0x178] sm:$0xff]
    %v5707 = vld [vmem:[%s5658 + $0x180] sm:$0xff]
    %v5708 = vld [vmem:[%s5658 + $0x188] sm:$0xff]
    %v5709 = vld [vmem:[%s5658 + $0x190] sm:$0xff]
    %v5710 = vld [vmem:[%s5658 + $0x198] sm:$0xff]
    %v5711 = vld [vmem:[%s5658 + $0x1a0] sm:$0xff]
    %v5712 = vld [vmem:[%s5658 + $0x1a8] sm:$0xff]
    %v5713 = vld [vmem:[%s5658 + $0x1b0] sm:$0xff]
    %v5714 = vld [vmem:[%s5658 + $0x1b8] sm:$0xff]
    %v5715 = vld [vmem:[%s5658 + $0x1c0] sm:$0xff]
    %v5716 = vld [vmem:[%s5658 + $0x1c8] sm:$0xff]
    %v5717 = vld [vmem:[%s5658 + $0x1d0] sm:$0xff]
    %v5718 = vld [vmem:[%s5658 + $0x1d8] sm:$0xff]
    %v5719 = vld [vmem:[%s5658 + $0x1e0] sm:$0xff]
    %v5720 = vld [vmem:[%s5658 + $0x1e8] sm:$0xff]
    %v5721 = vld [vmem:[%s5658 + $0x1f0] sm:$0xff]
    %v5722 = vld [vmem:[%s5658 + $0x1f8] sm:$0xff]
    %5723 = vmatpush.msra.mxu0 %v5719
    %5724 = vmatpush.msra.mxu0 %v5715
    %5725 = vmatpush.msra.mxu0 %v5711
    %5726 = vmatpush.msra.mxu0 %v5707
    %5727 = vmatpush.msra.mxu0 %v5703
    %5728 = vmatpush.msra.mxu0 %v5699
    %5729 = vmatpush.msra.mxu0 %v5695
    %5730 = vmatpush.msra.mxu0 %v5691
    %5731 = vmatpush.msra.mxu0 %v5687
    %5732 = vmatpush.msra.mxu0 %v5683
    %5733 = vmatpush.msra.mxu0 %v5679
    %5734 = vmatpush.msra.mxu0 %v5675
    %5735 = vmatpush.msra.mxu0 %v5671
    %5736 = vmatpush.msra.mxu0 %v5667
    %5737 = vmatpush.msra.mxu0 %v5663
    %5738 = vmatpush.msra.mxu0 %v5659
    %5739 = vmatmul.f32.gmra.mxu0 %v5657
    %v5740 = vpop.f32.mrf.mxu0
    %v5741 = vadd.f32 0.0, %v5740
    %5742 = vdwg.mxu0
    %5743 = vmatpush.msra.mxu0 %v5720
    %5744 = vmatpush.msra.mxu0 %v5716
    %5745 = vmatpush.msra.mxu0 %v5712
    %5746 = vmatpush.msra.mxu0 %v5708
    %5747 = vmatpush.msra.mxu0 %v5704
    %5748 = vmatpush.msra.mxu0 %v5700
    %5749 = vmatpush.msra.mxu0 %v5696
    %5750 = vmatpush.msra.mxu0 %v5692
    %5751 = vmatpush.msra.mxu0 %v5688
    %5752 = vmatpush.msra.mxu0 %v5684
    %5753 = vmatpush.msra.mxu0 %v5680
    %5754 = vmatpush.msra.mxu0 %v5676
    %5755 = vmatpush.msra.mxu0 %v5672
    %5756 = vmatpush.msra.mxu0 %v5668
    %5757 = vmatpush.msra.mxu0 %v5664
    %5758 = vmatpush.msra.mxu0 %v5660
    %5759 = vmatmul.f32.gmra.mxu0 %v5657
    %v5760 = vpop.f32.mrf.mxu0
    %v5761 = vadd.f32 0.0, %v5760
    %5762 = vdwg.mxu0
    %5763 = vmatpush.msra.mxu0 %v5721
    %5764 = vmatpush.msra.mxu0 %v5717
    %5765 = vmatpush.msra.mxu0 %v5713
    %5766 = vmatpush.msra.mxu0 %v5709
    %5767 = vmatpush.msra.mxu0 %v5705
    %5768 = vmatpush.msra.mxu0 %v5701
    %5769 = vmatpush.msra.mxu0 %v5697
    %5770 = vmatpush.msra.mxu0 %v5693
    %5771 = vmatpush.msra.mxu0 %v5689
    %5772 = vmatpush.msra.mxu0 %v5685
    %5773 = vmatpush.msra.mxu0 %v5681
    %5774 = vmatpush.msra.mxu0 %v5677
    %5775 = vmatpush.msra.mxu0 %v5673
    %5776 = vmatpush.msra.mxu0 %v5669
    %5777 = vmatpush.msra.mxu0 %v5665
    %5778 = vmatpush.msra.mxu0 %v5661
    %5779 = vmatmul.f32.gmra.mxu0 %v5657
    %v5780 = vpop.f32.mrf.mxu0
    %v5781 = vadd.f32 0.0, %v5780
    %5782 = vdwg.mxu0
    %5783 = vmatpush.msra.mxu0 %v5722
    %5784 = vmatpush.msra.mxu0 %v5718
    %5785 = vmatpush.msra.mxu0 %v5714
    %5786 = vmatpush.msra.mxu0 %v5710
    %5787 = vmatpush.msra.mxu0 %v5706
    %5788 = vmatpush.msra.mxu0 %v5702
    %5789 = vmatpush.msra.mxu0 %v5698
    %5790 = vmatpush.msra.mxu0 %v5694
    %5791 = vmatpush.msra.mxu0 %v5690
    %5792 = vmatpush.msra.mxu0 %v5686
    %5793 = vmatpush.msra.mxu0 %v5682
    %5794 = vmatpush.msra.mxu0 %v5678
    %5795 = vmatpush.msra.mxu0 %v5674
    %5796 = vmatpush.msra.mxu0 %v5670
    %5797 = vmatpush.msra.mxu0 %v5666
    %5798 = vmatpush.msra.mxu0 %v5662
    %5799 = vmatmul.f32.gmra.mxu0 %v5657
    %v5800 = vpop.f32.mrf.mxu0
    %v5801 = vadd.f32 0.0, %v5800
    %5802 = vdwg.mxu0
    %v5803 = vadd.f32 %v5653, %v5741
    %v5804 = vadd.f32 %v5654, %v5761
    %v5805 = vadd.f32 %v5655, %v5781
    %v5806 = vadd.f32 %v5656, %v5801
    %v5807 = vld [vmem:[#allocation7 + $0x16] sm:$0x3]
    %s5808 = scalar_lea.vmem [#allocation8], 5632
    %v5809 = vld [vmem:[%s5808] sm:$0xff]
    %v5810 = vld [vmem:[%s5808 + $0x8] sm:$0xff]
    %v5811 = vld [vmem:[%s5808 + $0x10] sm:$0xff]
    %v5812 = vld [vmem:[%s5808 + $0x18] sm:$0xff]
    %v5813 = vld [vmem:[%s5808 + $0x20] sm:$0xff]
    %v5814 = vld [vmem:[%s5808 + $0x28] sm:$0xff]
    %v5815 = vld [vmem:[%s5808 + $0x30] sm:$0xff]
    %v5816 = vld [vmem:[%s5808 + $0x38] sm:$0xff]
    %v5817 = vld [vmem:[%s5808 + $0x40] sm:$0xff]
    %v5818 = vld [vmem:[%s5808 + $0x48] sm:$0xff]
    %v5819 = vld [vmem:[%s5808 + $0x50] sm:$0xff]
    %v5820 = vld [vmem:[%s5808 + $0x58] sm:$0xff]
    %v5821 = vld [vmem:[%s5808 + $0x60] sm:$0xff]
    %v5822 = vld [vmem:[%s5808 + $0x68] sm:$0xff]
    %v5823 = vld [vmem:[%s5808 + $0x70] sm:$0xff]
    %v5824 = vld [vmem:[%s5808 + $0x78] sm:$0xff]
    %v5825 = vld [vmem:[%s5808 + $0x80] sm:$0xff]
    %v5826 = vld [vmem:[%s5808 + $0x88] sm:$0xff]
    %v5827 = vld [vmem:[%s5808 + $0x90] sm:$0xff]
    %v5828 = vld [vmem:[%s5808 + $0x98] sm:$0xff]
    %v5829 = vld [vmem:[%s5808 + $0xa0] sm:$0xff]
    %v5830 = vld [vmem:[%s5808 + $0xa8] sm:$0xff]
    %v5831 = vld [vmem:[%s5808 + $0xb0] sm:$0xff]
    %v5832 = vld [vmem:[%s5808 + $0xb8] sm:$0xff]
    %v5833 = vld [vmem:[%s5808 + $0xc0] sm:$0xff]
    %v5834 = vld [vmem:[%s5808 + $0xc8] sm:$0xff]
    %v5835 = vld [vmem:[%s5808 + $0xd0] sm:$0xff]
    %v5836 = vld [vmem:[%s5808 + $0xd8] sm:$0xff]
    %v5837 = vld [vmem:[%s5808 + $0xe0] sm:$0xff]
    %v5838 = vld [vmem:[%s5808 + $0xe8] sm:$0xff]
    %v5839 = vld [vmem:[%s5808 + $0xf0] sm:$0xff]
    %v5840 = vld [vmem:[%s5808 + $0xf8] sm:$0xff]
    %v5841 = vld [vmem:[%s5808 + $0x100] sm:$0xff]
    %v5842 = vld [vmem:[%s5808 + $0x108] sm:$0xff]
    %v5843 = vld [vmem:[%s5808 + $0x110] sm:$0xff]
    %v5844 = vld [vmem:[%s5808 + $0x118] sm:$0xff]
    %v5845 = vld [vmem:[%s5808 + $0x120] sm:$0xff]
    %v5846 = vld [vmem:[%s5808 + $0x128] sm:$0xff]
    %v5847 = vld [vmem:[%s5808 + $0x130] sm:$0xff]
    %v5848 = vld [vmem:[%s5808 + $0x138] sm:$0xff]
    %v5849 = vld [vmem:[%s5808 + $0x140] sm:$0xff]
    %v5850 = vld [vmem:[%s5808 + $0x148] sm:$0xff]
    %v5851 = vld [vmem:[%s5808 + $0x150] sm:$0xff]
    %v5852 = vld [vmem:[%s5808 + $0x158] sm:$0xff]
    %v5853 = vld [vmem:[%s5808 + $0x160] sm:$0xff]
    %v5854 = vld [vmem:[%s5808 + $0x168] sm:$0xff]
    %v5855 = vld [vmem:[%s5808 + $0x170] sm:$0xff]
    %v5856 = vld [vmem:[%s5808 + $0x178] sm:$0xff]
    %v5857 = vld [vmem:[%s5808 + $0x180] sm:$0xff]
    %v5858 = vld [vmem:[%s5808 + $0x188] sm:$0xff]
    %v5859 = vld [vmem:[%s5808 + $0x190] sm:$0xff]
    %v5860 = vld [vmem:[%s5808 + $0x198] sm:$0xff]
    %v5861 = vld [vmem:[%s5808 + $0x1a0] sm:$0xff]
    %v5862 = vld [vmem:[%s5808 + $0x1a8] sm:$0xff]
    %v5863 = vld [vmem:[%s5808 + $0x1b0] sm:$0xff]
    %v5864 = vld [vmem:[%s5808 + $0x1b8] sm:$0xff]
    %v5865 = vld [vmem:[%s5808 + $0x1c0] sm:$0xff]
    %v5866 = vld [vmem:[%s5808 + $0x1c8] sm:$0xff]
    %v5867 = vld [vmem:[%s5808 + $0x1d0] sm:$0xff]
    %v5868 = vld [vmem:[%s5808 + $0x1d8] sm:$0xff]
    %v5869 = vld [vmem:[%s5808 + $0x1e0] sm:$0xff]
    %v5870 = vld [vmem:[%s5808 + $0x1e8] sm:$0xff]
    %v5871 = vld [vmem:[%s5808 + $0x1f0] sm:$0xff]
    %v5872 = vld [vmem:[%s5808 + $0x1f8] sm:$0xff]
    %5873 = vmatpush.msra.mxu0 %v5869
    %5874 = vmatpush.msra.mxu0 %v5865
    %5875 = vmatpush.msra.mxu0 %v5861
    %5876 = vmatpush.msra.mxu0 %v5857
    %5877 = vmatpush.msra.mxu0 %v5853
    %5878 = vmatpush.msra.mxu0 %v5849
    %5879 = vmatpush.msra.mxu0 %v5845
    %5880 = vmatpush.msra.mxu0 %v5841
    %5881 = vmatpush.msra.mxu0 %v5837
    %5882 = vmatpush.msra.mxu0 %v5833
    %5883 = vmatpush.msra.mxu0 %v5829
    %5884 = vmatpush.msra.mxu0 %v5825
    %5885 = vmatpush.msra.mxu0 %v5821
    %5886 = vmatpush.msra.mxu0 %v5817
    %5887 = vmatpush.msra.mxu0 %v5813
    %5888 = vmatpush.msra.mxu0 %v5809
    %5889 = vmatmul.f32.gmra.mxu0 %v5807
    %v5890 = vpop.f32.mrf.mxu0
    %v5891 = vadd.f32 0.0, %v5890
    %5892 = vdwg.mxu0
    %5893 = vmatpush.msra.mxu0 %v5870
    %5894 = vmatpush.msra.mxu0 %v5866
    %5895 = vmatpush.msra.mxu0 %v5862
    %5896 = vmatpush.msra.mxu0 %v5858
    %5897 = vmatpush.msra.mxu0 %v5854
    %5898 = vmatpush.msra.mxu0 %v5850
    %5899 = vmatpush.msra.mxu0 %v5846
    %5900 = vmatpush.msra.mxu0 %v5842
    %5901 = vmatpush.msra.mxu0 %v5838
    %5902 = vmatpush.msra.mxu0 %v5834
    %5903 = vmatpush.msra.mxu0 %v5830
    %5904 = vmatpush.msra.mxu0 %v5826
    %5905 = vmatpush.msra.mxu0 %v5822
    %5906 = vmatpush.msra.mxu0 %v5818
    %5907 = vmatpush.msra.mxu0 %v5814
    %5908 = vmatpush.msra.mxu0 %v5810
    %5909 = vmatmul.f32.gmra.mxu0 %v5807
    %v5910 = vpop.f32.mrf.mxu0
    %v5911 = vadd.f32 0.0, %v5910
    %5912 = vdwg.mxu0
    %5913 = vmatpush.msra.mxu0 %v5871
    %5914 = vmatpush.msra.mxu0 %v5867
    %5915 = vmatpush.msra.mxu0 %v5863
    %5916 = vmatpush.msra.mxu0 %v5859
    %5917 = vmatpush.msra.mxu0 %v5855
    %5918 = vmatpush.msra.mxu0 %v5851
    %5919 = vmatpush.msra.mxu0 %v5847
    %5920 = vmatpush.msra.mxu0 %v5843
    %5921 = vmatpush.msra.mxu0 %v5839
    %5922 = vmatpush.msra.mxu0 %v5835
    %5923 = vmatpush.msra.mxu0 %v5831
    %5924 = vmatpush.msra.mxu0 %v5827
    %5925 = vmatpush.msra.mxu0 %v5823
    %5926 = vmatpush.msra.mxu0 %v5819
    %5927 = vmatpush.msra.mxu0 %v5815
    %5928 = vmatpush.msra.mxu0 %v5811
    %5929 = vmatmul.f32.gmra.mxu0 %v5807
    %v5930 = vpop.f32.mrf.mxu0
    %v5931 = vadd.f32 0.0, %v5930
    %5932 = vdwg.mxu0
    %5933 = vmatpush.msra.mxu0 %v5872
    %5934 = vmatpush.msra.mxu0 %v5868
    %5935 = vmatpush.msra.mxu0 %v5864
    %5936 = vmatpush.msra.mxu0 %v5860
    %5937 = vmatpush.msra.mxu0 %v5856
    %5938 = vmatpush.msra.mxu0 %v5852
    %5939 = vmatpush.msra.mxu0 %v5848
    %5940 = vmatpush.msra.mxu0 %v5844
    %5941 = vmatpush.msra.mxu0 %v5840
    %5942 = vmatpush.msra.mxu0 %v5836
    %5943 = vmatpush.msra.mxu0 %v5832
    %5944 = vmatpush.msra.mxu0 %v5828
    %5945 = vmatpush.msra.mxu0 %v5824
    %5946 = vmatpush.msra.mxu0 %v5820
    %5947 = vmatpush.msra.mxu0 %v5816
    %5948 = vmatpush.msra.mxu0 %v5812
    %5949 = vmatmul.f32.gmra.mxu0 %v5807
    %v5950 = vpop.f32.mrf.mxu0
    %v5951 = vadd.f32 0.0, %v5950
    %5952 = vdwg.mxu0
    %v5953 = vadd.f32 %v5803, %v5891
    %v5954 = vadd.f32 %v5804, %v5911
    %v5955 = vadd.f32 %v5805, %v5931
    %v5956 = vadd.f32 %v5806, %v5951
    %v5957 = vld [vmem:[#allocation7 + $0x18] sm:$0x3]
    %s5958 = scalar_lea.vmem [#allocation8], 6144
    %v5959 = vld [vmem:[%s5958] sm:$0xff]
    %v5960 = vld [vmem:[%s5958 + $0x8] sm:$0xff]
    %v5961 = vld [vmem:[%s5958 + $0x10] sm:$0xff]
    %v5962 = vld [vmem:[%s5958 + $0x18] sm:$0xff]
    %v5963 = vld [vmem:[%s5958 + $0x20] sm:$0xff]
    %v5964 = vld [vmem:[%s5958 + $0x28] sm:$0xff]
    %v5965 = vld [vmem:[%s5958 + $0x30] sm:$0xff]
    %v5966 = vld [vmem:[%s5958 + $0x38] sm:$0xff]
    %v5967 = vld [vmem:[%s5958 + $0x40] sm:$0xff]
    %v5968 = vld [vmem:[%s5958 + $0x48] sm:$0xff]
    %v5969 = vld [vmem:[%s5958 + $0x50] sm:$0xff]
    %v5970 = vld [vmem:[%s5958 + $0x58] sm:$0xff]
    %v5971 = vld [vmem:[%s5958 + $0x60] sm:$0xff]
    %v5972 = vld [vmem:[%s5958 + $0x68] sm:$0xff]
    %v5973 = vld [vmem:[%s5958 + $0x70] sm:$0xff]
    %v5974 = vld [vmem:[%s5958 + $0x78] sm:$0xff]
    %v5975 = vld [vmem:[%s5958 + $0x80] sm:$0xff]
    %v5976 = vld [vmem:[%s5958 + $0x88] sm:$0xff]
    %v5977 = vld [vmem:[%s5958 + $0x90] sm:$0xff]
    %v5978 = vld [vmem:[%s5958 + $0x98] sm:$0xff]
    %v5979 = vld [vmem:[%s5958 + $0xa0] sm:$0xff]
    %v5980 = vld [vmem:[%s5958 + $0xa8] sm:$0xff]
    %v5981 = vld [vmem:[%s5958 + $0xb0] sm:$0xff]
    %v5982 = vld [vmem:[%s5958 + $0xb8] sm:$0xff]
    %v5983 = vld [vmem:[%s5958 + $0xc0] sm:$0xff]
    %v5984 = vld [vmem:[%s5958 + $0xc8] sm:$0xff]
    %v5985 = vld [vmem:[%s5958 + $0xd0] sm:$0xff]
    %v5986 = vld [vmem:[%s5958 + $0xd8] sm:$0xff]
    %v5987 = vld [vmem:[%s5958 + $0xe0] sm:$0xff]
    %v5988 = vld [vmem:[%s5958 + $0xe8] sm:$0xff]
    %v5989 = vld [vmem:[%s5958 + $0xf0] sm:$0xff]
    %v5990 = vld [vmem:[%s5958 + $0xf8] sm:$0xff]
    %v5991 = vld [vmem:[%s5958 + $0x100] sm:$0xff]
    %v5992 = vld [vmem:[%s5958 + $0x108] sm:$0xff]
    %v5993 = vld [vmem:[%s5958 + $0x110] sm:$0xff]
    %v5994 = vld [vmem:[%s5958 + $0x118] sm:$0xff]
    %v5995 = vld [vmem:[%s5958 + $0x120] sm:$0xff]
    %v5996 = vld [vmem:[%s5958 + $0x128] sm:$0xff]
    %v5997 = vld [vmem:[%s5958 + $0x130] sm:$0xff]
    %v5998 = vld [vmem:[%s5958 + $0x138] sm:$0xff]
    %v5999 = vld [vmem:[%s5958 + $0x140] sm:$0xff]
    %v6000 = vld [vmem:[%s5958 + $0x148] sm:$0xff]
    %v6001 = vld [vmem:[%s5958 + $0x150] sm:$0xff]
    %v6002 = vld [vmem:[%s5958 + $0x158] sm:$0xff]
    %v6003 = vld [vmem:[%s5958 + $0x160] sm:$0xff]
    %v6004 = vld [vmem:[%s5958 + $0x168] sm:$0xff]
    %v6005 = vld [vmem:[%s5958 + $0x170] sm:$0xff]
    %v6006 = vld [vmem:[%s5958 + $0x178] sm:$0xff]
    %v6007 = vld [vmem:[%s5958 + $0x180] sm:$0xff]
    %v6008 = vld [vmem:[%s5958 + $0x188] sm:$0xff]
    %v6009 = vld [vmem:[%s5958 + $0x190] sm:$0xff]
    %v6010 = vld [vmem:[%s5958 + $0x198] sm:$0xff]
    %v6011 = vld [vmem:[%s5958 + $0x1a0] sm:$0xff]
    %v6012 = vld [vmem:[%s5958 + $0x1a8] sm:$0xff]
    %v6013 = vld [vmem:[%s5958 + $0x1b0] sm:$0xff]
    %v6014 = vld [vmem:[%s5958 + $0x1b8] sm:$0xff]
    %v6015 = vld [vmem:[%s5958 + $0x1c0] sm:$0xff]
    %v6016 = vld [vmem:[%s5958 + $0x1c8] sm:$0xff]
    %v6017 = vld [vmem:[%s5958 + $0x1d0] sm:$0xff]
    %v6018 = vld [vmem:[%s5958 + $0x1d8] sm:$0xff]
    %v6019 = vld [vmem:[%s5958 + $0x1e0] sm:$0xff]
    %v6020 = vld [vmem:[%s5958 + $0x1e8] sm:$0xff]
    %v6021 = vld [vmem:[%s5958 + $0x1f0] sm:$0xff]
    %v6022 = vld [vmem:[%s5958 + $0x1f8] sm:$0xff]
    %6023 = vmatpush.msra.mxu0 %v6019
    %6024 = vmatpush.msra.mxu0 %v6015
    %6025 = vmatpush.msra.mxu0 %v6011
    %6026 = vmatpush.msra.mxu0 %v6007
    %6027 = vmatpush.msra.mxu0 %v6003
    %6028 = vmatpush.msra.mxu0 %v5999
    %6029 = vmatpush.msra.mxu0 %v5995
    %6030 = vmatpush.msra.mxu0 %v5991
    %6031 = vmatpush.msra.mxu0 %v5987
    %6032 = vmatpush.msra.mxu0 %v5983
    %6033 = vmatpush.msra.mxu0 %v5979
    %6034 = vmatpush.msra.mxu0 %v5975
    %6035 = vmatpush.msra.mxu0 %v5971
    %6036 = vmatpush.msra.mxu0 %v5967
    %6037 = vmatpush.msra.mxu0 %v5963
    %6038 = vmatpush.msra.mxu0 %v5959
    %6039 = vmatmul.f32.gmra.mxu0 %v5957
    %v6040 = vpop.f32.mrf.mxu0
    %v6041 = vadd.f32 0.0, %v6040
    %6042 = vdwg.mxu0
    %6043 = vmatpush.msra.mxu0 %v6020
    %6044 = vmatpush.msra.mxu0 %v6016
    %6045 = vmatpush.msra.mxu0 %v6012
    %6046 = vmatpush.msra.mxu0 %v6008
    %6047 = vmatpush.msra.mxu0 %v6004
    %6048 = vmatpush.msra.mxu0 %v6000
    %6049 = vmatpush.msra.mxu0 %v5996
    %6050 = vmatpush.msra.mxu0 %v5992
    %6051 = vmatpush.msra.mxu0 %v5988
    %6052 = vmatpush.msra.mxu0 %v5984
    %6053 = vmatpush.msra.mxu0 %v5980
    %6054 = vmatpush.msra.mxu0 %v5976
    %6055 = vmatpush.msra.mxu0 %v5972
    %6056 = vmatpush.msra.mxu0 %v5968
    %6057 = vmatpush.msra.mxu0 %v5964
    %6058 = vmatpush.msra.mxu0 %v5960
    %6059 = vmatmul.f32.gmra.mxu0 %v5957
    %v6060 = vpop.f32.mrf.mxu0
    %v6061 = vadd.f32 0.0, %v6060
    %6062 = vdwg.mxu0
    %6063 = vmatpush.msra.mxu0 %v6021
    %6064 = vmatpush.msra.mxu0 %v6017
    %6065 = vmatpush.msra.mxu0 %v6013
    %6066 = vmatpush.msra.mxu0 %v6009
    %6067 = vmatpush.msra.mxu0 %v6005
    %6068 = vmatpush.msra.mxu0 %v6001
    %6069 = vmatpush.msra.mxu0 %v5997
    %6070 = vmatpush.msra.mxu0 %v5993
    %6071 = vmatpush.msra.mxu0 %v5989
    %6072 = vmatpush.msra.mxu0 %v5985
    %6073 = vmatpush.msra.mxu0 %v5981
    %6074 = vmatpush.msra.mxu0 %v5977
    %6075 = vmatpush.msra.mxu0 %v5973
    %6076 = vmatpush.msra.mxu0 %v5969
    %6077 = vmatpush.msra.mxu0 %v5965
    %6078 = vmatpush.msra.mxu0 %v5961
    %6079 = vmatmul.f32.gmra.mxu0 %v5957
    %v6080 = vpop.f32.mrf.mxu0
    %v6081 = vadd.f32 0.0, %v6080
    %6082 = vdwg.mxu0
    %6083 = vmatpush.msra.mxu0 %v6022
    %6084 = vmatpush.msra.mxu0 %v6018
    %6085 = vmatpush.msra.mxu0 %v6014
    %6086 = vmatpush.msra.mxu0 %v6010
    %6087 = vmatpush.msra.mxu0 %v6006
    %6088 = vmatpush.msra.mxu0 %v6002
    %6089 = vmatpush.msra.mxu0 %v5998
    %6090 = vmatpush.msra.mxu0 %v5994
    %6091 = vmatpush.msra.mxu0 %v5990
    %6092 = vmatpush.msra.mxu0 %v5986
    %6093 = vmatpush.msra.mxu0 %v5982
    %6094 = vmatpush.msra.mxu0 %v5978
    %6095 = vmatpush.msra.mxu0 %v5974
    %6096 = vmatpush.msra.mxu0 %v5970
    %6097 = vmatpush.msra.mxu0 %v5966
    %6098 = vmatpush.msra.mxu0 %v5962
    %6099 = vmatmul.f32.gmra.mxu0 %v5957
    %v6100 = vpop.f32.mrf.mxu0
    %v6101 = vadd.f32 0.0, %v6100
    %6102 = vdwg.mxu0
    %v6103 = vadd.f32 %v5953, %v6041
    %v6104 = vadd.f32 %v5954, %v6061
    %v6105 = vadd.f32 %v5955, %v6081
    %v6106 = vadd.f32 %v5956, %v6101
    %v6107 = vld [vmem:[#allocation7 + $0x1a] sm:$0x3]
    %s6108 = scalar_lea.vmem [#allocation8], 6656
    %v6109 = vld [vmem:[%s6108] sm:$0xff]
    %v6110 = vld [vmem:[%s6108 + $0x8] sm:$0xff]
    %v6111 = vld [vmem:[%s6108 + $0x10] sm:$0xff]
    %v6112 = vld [vmem:[%s6108 + $0x18] sm:$0xff]
    %v6113 = vld [vmem:[%s6108 + $0x20] sm:$0xff]
    %v6114 = vld [vmem:[%s6108 + $0x28] sm:$0xff]
    %v6115 = vld [vmem:[%s6108 + $0x30] sm:$0xff]
    %v6116 = vld [vmem:[%s6108 + $0x38] sm:$0xff]
    %v6117 = vld [vmem:[%s6108 + $0x40] sm:$0xff]
    %v6118 = vld [vmem:[%s6108 + $0x48] sm:$0xff]
    %v6119 = vld [vmem:[%s6108 + $0x50] sm:$0xff]
    %v6120 = vld [vmem:[%s6108 + $0x58] sm:$0xff]
    %v6121 = vld [vmem:[%s6108 + $0x60] sm:$0xff]
    %v6122 = vld [vmem:[%s6108 + $0x68] sm:$0xff]
    %v6123 = vld [vmem:[%s6108 + $0x70] sm:$0xff]
    %v6124 = vld [vmem:[%s6108 + $0x78] sm:$0xff]
    %v6125 = vld [vmem:[%s6108 + $0x80] sm:$0xff]
    %v6126 = vld [vmem:[%s6108 + $0x88] sm:$0xff]
    %v6127 = vld [vmem:[%s6108 + $0x90] sm:$0xff]
    %v6128 = vld [vmem:[%s6108 + $0x98] sm:$0xff]
    %v6129 = vld [vmem:[%s6108 + $0xa0] sm:$0xff]
    %v6130 = vld [vmem:[%s6108 + $0xa8] sm:$0xff]
    %v6131 = vld [vmem:[%s6108 + $0xb0] sm:$0xff]
    %v6132 = vld [vmem:[%s6108 + $0xb8] sm:$0xff]
    %v6133 = vld [vmem:[%s6108 + $0xc0] sm:$0xff]
    %v6134 = vld [vmem:[%s6108 + $0xc8] sm:$0xff]
    %v6135 = vld [vmem:[%s6108 + $0xd0] sm:$0xff]
    %v6136 = vld [vmem:[%s6108 + $0xd8] sm:$0xff]
    %v6137 = vld [vmem:[%s6108 + $0xe0] sm:$0xff]
    %v6138 = vld [vmem:[%s6108 + $0xe8] sm:$0xff]
    %v6139 = vld [vmem:[%s6108 + $0xf0] sm:$0xff]
    %v6140 = vld [vmem:[%s6108 + $0xf8] sm:$0xff]
    %v6141 = vld [vmem:[%s6108 + $0x100] sm:$0xff]
    %v6142 = vld [vmem:[%s6108 + $0x108] sm:$0xff]
    %v6143 = vld [vmem:[%s6108 + $0x110] sm:$0xff]
    %v6144 = vld [vmem:[%s6108 + $0x118] sm:$0xff]
    %v6145 = vld [vmem:[%s6108 + $0x120] sm:$0xff]
    %v6146 = vld [vmem:[%s6108 + $0x128] sm:$0xff]
    %v6147 = vld [vmem:[%s6108 + $0x130] sm:$0xff]
    %v6148 = vld [vmem:[%s6108 + $0x138] sm:$0xff]
    %v6149 = vld [vmem:[%s6108 + $0x140] sm:$0xff]
    %v6150 = vld [vmem:[%s6108 + $0x148] sm:$0xff]
    %v6151 = vld [vmem:[%s6108 + $0x150] sm:$0xff]
    %v6152 = vld [vmem:[%s6108 + $0x158] sm:$0xff]
    %v6153 = vld [vmem:[%s6108 + $0x160] sm:$0xff]
    %v6154 = vld [vmem:[%s6108 + $0x168] sm:$0xff]
    %v6155 = vld [vmem:[%s6108 + $0x170] sm:$0xff]
    %v6156 = vld [vmem:[%s6108 + $0x178] sm:$0xff]
    %v6157 = vld [vmem:[%s6108 + $0x180] sm:$0xff]
    %v6158 = vld [vmem:[%s6108 + $0x188] sm:$0xff]
    %v6159 = vld [vmem:[%s6108 + $0x190] sm:$0xff]
    %v6160 = vld [vmem:[%s6108 + $0x198] sm:$0xff]
    %v6161 = vld [vmem:[%s6108 + $0x1a0] sm:$0xff]
    %v6162 = vld [vmem:[%s6108 + $0x1a8] sm:$0xff]
    %v6163 = vld [vmem:[%s6108 + $0x1b0] sm:$0xff]
    %v6164 = vld [vmem:[%s6108 + $0x1b8] sm:$0xff]
    %v6165 = vld [vmem:[%s6108 + $0x1c0] sm:$0xff]
    %v6166 = vld [vmem:[%s6108 + $0x1c8] sm:$0xff]
    %v6167 = vld [vmem:[%s6108 + $0x1d0] sm:$0xff]
    %v6168 = vld [vmem:[%s6108 + $0x1d8] sm:$0xff]
    %v6169 = vld [vmem:[%s6108 + $0x1e0] sm:$0xff]
    %v6170 = vld [vmem:[%s6108 + $0x1e8] sm:$0xff]
    %v6171 = vld [vmem:[%s6108 + $0x1f0] sm:$0xff]
    %v6172 = vld [vmem:[%s6108 + $0x1f8] sm:$0xff]
    %6173 = vmatpush.msra.mxu0 %v6169
    %6174 = vmatpush.msra.mxu0 %v6165
    %6175 = vmatpush.msra.mxu0 %v6161
    %6176 = vmatpush.msra.mxu0 %v6157
    %6177 = vmatpush.msra.mxu0 %v6153
    %6178 = vmatpush.msra.mxu0 %v6149
    %6179 = vmatpush.msra.mxu0 %v6145
    %6180 = vmatpush.msra.mxu0 %v6141
    %6181 = vmatpush.msra.mxu0 %v6137
    %6182 = vmatpush.msra.mxu0 %v6133
    %6183 = vmatpush.msra.mxu0 %v6129
    %6184 = vmatpush.msra.mxu0 %v6125
    %6185 = vmatpush.msra.mxu0 %v6121
    %6186 = vmatpush.msra.mxu0 %v6117
    %6187 = vmatpush.msra.mxu0 %v6113
    %6188 = vmatpush.msra.mxu0 %v6109
    %6189 = vmatmul.f32.gmra.mxu0 %v6107
    %v6190 = vpop.f32.mrf.mxu0
    %v6191 = vadd.f32 0.0, %v6190
    %6192 = vdwg.mxu0
    %6193 = vmatpush.msra.mxu0 %v6170
    %6194 = vmatpush.msra.mxu0 %v6166
    %6195 = vmatpush.msra.mxu0 %v6162
    %6196 = vmatpush.msra.mxu0 %v6158
    %6197 = vmatpush.msra.mxu0 %v6154
    %6198 = vmatpush.msra.mxu0 %v6150
    %6199 = vmatpush.msra.mxu0 %v6146
    %6200 = vmatpush.msra.mxu0 %v6142
    %6201 = vmatpush.msra.mxu0 %v6138
    %6202 = vmatpush.msra.mxu0 %v6134
    %6203 = vmatpush.msra.mxu0 %v6130
    %6204 = vmatpush.msra.mxu0 %v6126
    %6205 = vmatpush.msra.mxu0 %v6122
    %6206 = vmatpush.msra.mxu0 %v6118
    %6207 = vmatpush.msra.mxu0 %v6114
    %6208 = vmatpush.msra.mxu0 %v6110
    %6209 = vmatmul.f32.gmra.mxu0 %v6107
    %v6210 = vpop.f32.mrf.mxu0
    %v6211 = vadd.f32 0.0, %v6210
    %6212 = vdwg.mxu0
    %6213 = vmatpush.msra.mxu0 %v6171
    %6214 = vmatpush.msra.mxu0 %v6167
    %6215 = vmatpush.msra.mxu0 %v6163
    %6216 = vmatpush.msra.mxu0 %v6159
    %6217 = vmatpush.msra.mxu0 %v6155
    %6218 = vmatpush.msra.mxu0 %v6151
    %6219 = vmatpush.msra.mxu0 %v6147
    %6220 = vmatpush.msra.mxu0 %v6143
    %6221 = vmatpush.msra.mxu0 %v6139
    %6222 = vmatpush.msra.mxu0 %v6135
    %6223 = vmatpush.msra.mxu0 %v6131
    %6224 = vmatpush.msra.mxu0 %v6127
    %6225 = vmatpush.msra.mxu0 %v6123
    %6226 = vmatpush.msra.mxu0 %v6119
    %6227 = vmatpush.msra.mxu0 %v6115
    %6228 = vmatpush.msra.mxu0 %v6111
    %6229 = vmatmul.f32.gmra.mxu0 %v6107
    %v6230 = vpop.f32.mrf.mxu0
    %v6231 = vadd.f32 0.0, %v6230
    %6232 = vdwg.mxu0
    %6233 = vmatpush.msra.mxu0 %v6172
    %6234 = vmatpush.msra.mxu0 %v6168
    %6235 = vmatpush.msra.mxu0 %v6164
    %6236 = vmatpush.msra.mxu0 %v6160
    %6237 = vmatpush.msra.mxu0 %v6156
    %6238 = vmatpush.msra.mxu0 %v6152
    %6239 = vmatpush.msra.mxu0 %v6148
    %6240 = vmatpush.msra.mxu0 %v6144
    %6241 = vmatpush.msra.mxu0 %v6140
    %6242 = vmatpush.msra.mxu0 %v6136
    %6243 = vmatpush.msra.mxu0 %v6132
    %6244 = vmatpush.msra.mxu0 %v6128
    %6245 = vmatpush.msra.mxu0 %v6124
    %6246 = vmatpush.msra.mxu0 %v6120
    %6247 = vmatpush.msra.mxu0 %v6116
    %6248 = vmatpush.msra.mxu0 %v6112
    %6249 = vmatmul.f32.gmra.mxu0 %v6107
    %v6250 = vpop.f32.mrf.mxu0
    %v6251 = vadd.f32 0.0, %v6250
    %6252 = vdwg.mxu0
    %v6253 = vadd.f32 %v6103, %v6191
    %v6254 = vadd.f32 %v6104, %v6211
    %v6255 = vadd.f32 %v6105, %v6231
    %v6256 = vadd.f32 %v6106, %v6251
    %v6257 = vld [vmem:[#allocation7 + $0x1c] sm:$0x3]
    %s6258 = scalar_lea.vmem [#allocation8], 7168
    %v6259 = vld [vmem:[%s6258] sm:$0xff]
    %v6260 = vld [vmem:[%s6258 + $0x8] sm:$0xff]
    %v6261 = vld [vmem:[%s6258 + $0x10] sm:$0xff]
    %v6262 = vld [vmem:[%s6258 + $0x18] sm:$0xff]
    %v6263 = vld [vmem:[%s6258 + $0x20] sm:$0xff]
    %v6264 = vld [vmem:[%s6258 + $0x28] sm:$0xff]
    %v6265 = vld [vmem:[%s6258 + $0x30] sm:$0xff]
    %v6266 = vld [vmem:[%s6258 + $0x38] sm:$0xff]
    %v6267 = vld [vmem:[%s6258 + $0x40] sm:$0xff]
    %v6268 = vld [vmem:[%s6258 + $0x48] sm:$0xff]
    %v6269 = vld [vmem:[%s6258 + $0x50] sm:$0xff]
    %v6270 = vld [vmem:[%s6258 + $0x58] sm:$0xff]
    %v6271 = vld [vmem:[%s6258 + $0x60] sm:$0xff]
    %v6272 = vld [vmem:[%s6258 + $0x68] sm:$0xff]
    %v6273 = vld [vmem:[%s6258 + $0x70] sm:$0xff]
    %v6274 = vld [vmem:[%s6258 + $0x78] sm:$0xff]
    %v6275 = vld [vmem:[%s6258 + $0x80] sm:$0xff]
    %v6276 = vld [vmem:[%s6258 + $0x88] sm:$0xff]
    %v6277 = vld [vmem:[%s6258 + $0x90] sm:$0xff]
    %v6278 = vld [vmem:[%s6258 + $0x98] sm:$0xff]
    %v6279 = vld [vmem:[%s6258 + $0xa0] sm:$0xff]
    %v6280 = vld [vmem:[%s6258 + $0xa8] sm:$0xff]
    %v6281 = vld [vmem:[%s6258 + $0xb0] sm:$0xff]
    %v6282 = vld [vmem:[%s6258 + $0xb8] sm:$0xff]
    %v6283 = vld [vmem:[%s6258 + $0xc0] sm:$0xff]
    %v6284 = vld [vmem:[%s6258 + $0xc8] sm:$0xff]
    %v6285 = vld [vmem:[%s6258 + $0xd0] sm:$0xff]
    %v6286 = vld [vmem:[%s6258 + $0xd8] sm:$0xff]
    %v6287 = vld [vmem:[%s6258 + $0xe0] sm:$0xff]
    %v6288 = vld [vmem:[%s6258 + $0xe8] sm:$0xff]
    %v6289 = vld [vmem:[%s6258 + $0xf0] sm:$0xff]
    %v6290 = vld [vmem:[%s6258 + $0xf8] sm:$0xff]
    %v6291 = vld [vmem:[%s6258 + $0x100] sm:$0xff]
    %v6292 = vld [vmem:[%s6258 + $0x108] sm:$0xff]
    %v6293 = vld [vmem:[%s6258 + $0x110] sm:$0xff]
    %v6294 = vld [vmem:[%s6258 + $0x118] sm:$0xff]
    %v6295 = vld [vmem:[%s6258 + $0x120] sm:$0xff]
    %v6296 = vld [vmem:[%s6258 + $0x128] sm:$0xff]
    %v6297 = vld [vmem:[%s6258 + $0x130] sm:$0xff]
    %v6298 = vld [vmem:[%s6258 + $0x138] sm:$0xff]
    %v6299 = vld [vmem:[%s6258 + $0x140] sm:$0xff]
    %v6300 = vld [vmem:[%s6258 + $0x148] sm:$0xff]
    %v6301 = vld [vmem:[%s6258 + $0x150] sm:$0xff]
    %v6302 = vld [vmem:[%s6258 + $0x158] sm:$0xff]
    %v6303 = vld [vmem:[%s6258 + $0x160] sm:$0xff]
    %v6304 = vld [vmem:[%s6258 + $0x168] sm:$0xff]
    %v6305 = vld [vmem:[%s6258 + $0x170] sm:$0xff]
    %v6306 = vld [vmem:[%s6258 + $0x178] sm:$0xff]
    %v6307 = vld [vmem:[%s6258 + $0x180] sm:$0xff]
    %v6308 = vld [vmem:[%s6258 + $0x188] sm:$0xff]
    %v6309 = vld [vmem:[%s6258 + $0x190] sm:$0xff]
    %v6310 = vld [vmem:[%s6258 + $0x198] sm:$0xff]
    %v6311 = vld [vmem:[%s6258 + $0x1a0] sm:$0xff]
    %v6312 = vld [vmem:[%s6258 + $0x1a8] sm:$0xff]
    %v6313 = vld [vmem:[%s6258 + $0x1b0] sm:$0xff]
    %v6314 = vld [vmem:[%s6258 + $0x1b8] sm:$0xff]
    %v6315 = vld [vmem:[%s6258 + $0x1c0] sm:$0xff]
    %v6316 = vld [vmem:[%s6258 + $0x1c8] sm:$0xff]
    %v6317 = vld [vmem:[%s6258 + $0x1d0] sm:$0xff]
    %v6318 = vld [vmem:[%s6258 + $0x1d8] sm:$0xff]
    %v6319 = vld [vmem:[%s6258 + $0x1e0] sm:$0xff]
    %v6320 = vld [vmem:[%s6258 + $0x1e8] sm:$0xff]
    %v6321 = vld [vmem:[%s6258 + $0x1f0] sm:$0xff]
    %v6322 = vld [vmem:[%s6258 + $0x1f8] sm:$0xff]
    %6323 = vmatpush.msra.mxu0 %v6319
    %6324 = vmatpush.msra.mxu0 %v6315
    %6325 = vmatpush.msra.mxu0 %v6311
    %6326 = vmatpush.msra.mxu0 %v6307
    %6327 = vmatpush.msra.mxu0 %v6303
    %6328 = vmatpush.msra.mxu0 %v6299
    %6329 = vmatpush.msra.mxu0 %v6295
    %6330 = vmatpush.msra.mxu0 %v6291
    %6331 = vmatpush.msra.mxu0 %v6287
    %6332 = vmatpush.msra.mxu0 %v6283
    %6333 = vmatpush.msra.mxu0 %v6279
    %6334 = vmatpush.msra.mxu0 %v6275
    %6335 = vmatpush.msra.mxu0 %v6271
    %6336 = vmatpush.msra.mxu0 %v6267
    %6337 = vmatpush.msra.mxu0 %v6263
    %6338 = vmatpush.msra.mxu0 %v6259
    %6339 = vmatmul.f32.gmra.mxu0 %v6257
    %v6340 = vpop.f32.mrf.mxu0
    %v6341 = vadd.f32 0.0, %v6340
    %6342 = vdwg.mxu0
    %6343 = vmatpush.msra.mxu0 %v6320
    %6344 = vmatpush.msra.mxu0 %v6316
    %6345 = vmatpush.msra.mxu0 %v6312
    %6346 = vmatpush.msra.mxu0 %v6308
    %6347 = vmatpush.msra.mxu0 %v6304
    %6348 = vmatpush.msra.mxu0 %v6300
    %6349 = vmatpush.msra.mxu0 %v6296
    %6350 = vmatpush.msra.mxu0 %v6292
    %6351 = vmatpush.msra.mxu0 %v6288
    %6352 = vmatpush.msra.mxu0 %v6284
    %6353 = vmatpush.msra.mxu0 %v6280
    %6354 = vmatpush.msra.mxu0 %v6276
    %6355 = vmatpush.msra.mxu0 %v6272
    %6356 = vmatpush.msra.mxu0 %v6268
    %6357 = vmatpush.msra.mxu0 %v6264
    %6358 = vmatpush.msra.mxu0 %v6260
    %6359 = vmatmul.f32.gmra.mxu0 %v6257
    %v6360 = vpop.f32.mrf.mxu0
    %v6361 = vadd.f32 0.0, %v6360
    %6362 = vdwg.mxu0
    %6363 = vmatpush.msra.mxu0 %v6321
    %6364 = vmatpush.msra.mxu0 %v6317
    %6365 = vmatpush.msra.mxu0 %v6313
    %6366 = vmatpush.msra.mxu0 %v6309
    %6367 = vmatpush.msra.mxu0 %v6305
    %6368 = vmatpush.msra.mxu0 %v6301
    %6369 = vmatpush.msra.mxu0 %v6297
    %6370 = vmatpush.msra.mxu0 %v6293
    %6371 = vmatpush.msra.mxu0 %v6289
    %6372 = vmatpush.msra.mxu0 %v6285
    %6373 = vmatpush.msra.mxu0 %v6281
    %6374 = vmatpush.msra.mxu0 %v6277
    %6375 = vmatpush.msra.mxu0 %v6273
    %6376 = vmatpush.msra.mxu0 %v6269
    %6377 = vmatpush.msra.mxu0 %v6265
    %6378 = vmatpush.msra.mxu0 %v6261
    %6379 = vmatmul.f32.gmra.mxu0 %v6257
    %v6380 = vpop.f32.mrf.mxu0
    %v6381 = vadd.f32 0.0, %v6380
    %6382 = vdwg.mxu0
    %6383 = vmatpush.msra.mxu0 %v6322
    %6384 = vmatpush.msra.mxu0 %v6318
    %6385 = vmatpush.msra.mxu0 %v6314
    %6386 = vmatpush.msra.mxu0 %v6310
    %6387 = vmatpush.msra.mxu0 %v6306
    %6388 = vmatpush.msra.mxu0 %v6302
    %6389 = vmatpush.msra.mxu0 %v6298
    %6390 = vmatpush.msra.mxu0 %v6294
    %6391 = vmatpush.msra.mxu0 %v6290
    %6392 = vmatpush.msra.mxu0 %v6286
    %6393 = vmatpush.msra.mxu0 %v6282
    %6394 = vmatpush.msra.mxu0 %v6278
    %6395 = vmatpush.msra.mxu0 %v6274
    %6396 = vmatpush.msra.mxu0 %v6270
    %6397 = vmatpush.msra.mxu0 %v6266
    %6398 = vmatpush.msra.mxu0 %v6262
    %6399 = vmatmul.f32.gmra.mxu0 %v6257
    %v6400 = vpop.f32.mrf.mxu0
    %v6401 = vadd.f32 0.0, %v6400
    %6402 = vdwg.mxu0
    %v6403 = vadd.f32 %v6253, %v6341
    %v6404 = vadd.f32 %v6254, %v6361
    %v6405 = vadd.f32 %v6255, %v6381
    %v6406 = vadd.f32 %v6256, %v6401
    %v6407 = vld [vmem:[#allocation7 + $0x1e] sm:$0x3]
    %s6408 = scalar_lea.vmem [#allocation8], 7680
    %v6409 = vld [vmem:[%s6408] sm:$0xff]
    %v6410 = vld [vmem:[%s6408 + $0x8] sm:$0xff]
    %v6411 = vld [vmem:[%s6408 + $0x10] sm:$0xff]
    %v6412 = vld [vmem:[%s6408 + $0x18] sm:$0xff]
    %v6413 = vld [vmem:[%s6408 + $0x20] sm:$0xff]
    %v6414 = vld [vmem:[%s6408 + $0x28] sm:$0xff]
    %v6415 = vld [vmem:[%s6408 + $0x30] sm:$0xff]
    %v6416 = vld [vmem:[%s6408 + $0x38] sm:$0xff]
    %v6417 = vld [vmem:[%s6408 + $0x40] sm:$0xff]
    %v6418 = vld [vmem:[%s6408 + $0x48] sm:$0xff]
    %v6419 = vld [vmem:[%s6408 + $0x50] sm:$0xff]
    %v6420 = vld [vmem:[%s6408 + $0x58] sm:$0xff]
    %v6421 = vld [vmem:[%s6408 + $0x60] sm:$0xff]
    %v6422 = vld [vmem:[%s6408 + $0x68] sm:$0xff]
    %v6423 = vld [vmem:[%s6408 + $0x70] sm:$0xff]
    %v6424 = vld [vmem:[%s6408 + $0x78] sm:$0xff]
    %v6425 = vld [vmem:[%s6408 + $0x80] sm:$0xff]
    %v6426 = vld [vmem:[%s6408 + $0x88] sm:$0xff]
    %v6427 = vld [vmem:[%s6408 + $0x90] sm:$0xff]
    %v6428 = vld [vmem:[%s6408 + $0x98] sm:$0xff]
    %v6429 = vld [vmem:[%s6408 + $0xa0] sm:$0xff]
    %v6430 = vld [vmem:[%s6408 + $0xa8] sm:$0xff]
    %v6431 = vld [vmem:[%s6408 + $0xb0] sm:$0xff]
    %v6432 = vld [vmem:[%s6408 + $0xb8] sm:$0xff]
    %v6433 = vld [vmem:[%s6408 + $0xc0] sm:$0xff]
    %v6434 = vld [vmem:[%s6408 + $0xc8] sm:$0xff]
    %v6435 = vld [vmem:[%s6408 + $0xd0] sm:$0xff]
    %v6436 = vld [vmem:[%s6408 + $0xd8] sm:$0xff]
    %v6437 = vld [vmem:[%s6408 + $0xe0] sm:$0xff]
    %v6438 = vld [vmem:[%s6408 + $0xe8] sm:$0xff]
    %v6439 = vld [vmem:[%s6408 + $0xf0] sm:$0xff]
    %v6440 = vld [vmem:[%s6408 + $0xf8] sm:$0xff]
    %v6441 = vld [vmem:[%s6408 + $0x100] sm:$0xff]
    %v6442 = vld [vmem:[%s6408 + $0x108] sm:$0xff]
    %v6443 = vld [vmem:[%s6408 + $0x110] sm:$0xff]
    %v6444 = vld [vmem:[%s6408 + $0x118] sm:$0xff]
    %v6445 = vld [vmem:[%s6408 + $0x120] sm:$0xff]
    %v6446 = vld [vmem:[%s6408 + $0x128] sm:$0xff]
    %v6447 = vld [vmem:[%s6408 + $0x130] sm:$0xff]
    %v6448 = vld [vmem:[%s6408 + $0x138] sm:$0xff]
    %v6449 = vld [vmem:[%s6408 + $0x140] sm:$0xff]
    %v6450 = vld [vmem:[%s6408 + $0x148] sm:$0xff]
    %v6451 = vld [vmem:[%s6408 + $0x150] sm:$0xff]
    %v6452 = vld [vmem:[%s6408 + $0x158] sm:$0xff]
    %v6453 = vld [vmem:[%s6408 + $0x160] sm:$0xff]
    %v6454 = vld [vmem:[%s6408 + $0x168] sm:$0xff]
    %v6455 = vld [vmem:[%s6408 + $0x170] sm:$0xff]
    %v6456 = vld [vmem:[%s6408 + $0x178] sm:$0xff]
    %v6457 = vld [vmem:[%s6408 + $0x180] sm:$0xff]
    %v6458 = vld [vmem:[%s6408 + $0x188] sm:$0xff]
    %v6459 = vld [vmem:[%s6408 + $0x190] sm:$0xff]
    %v6460 = vld [vmem:[%s6408 + $0x198] sm:$0xff]
    %v6461 = vld [vmem:[%s6408 + $0x1a0] sm:$0xff]
    %v6462 = vld [vmem:[%s6408 + $0x1a8] sm:$0xff]
    %v6463 = vld [vmem:[%s6408 + $0x1b0] sm:$0xff]
    %v6464 = vld [vmem:[%s6408 + $0x1b8] sm:$0xff]
    %v6465 = vld [vmem:[%s6408 + $0x1c0] sm:$0xff]
    %v6466 = vld [vmem:[%s6408 + $0x1c8] sm:$0xff]
    %v6467 = vld [vmem:[%s6408 + $0x1d0] sm:$0xff]
    %v6468 = vld [vmem:[%s6408 + $0x1d8] sm:$0xff]
    %v6469 = vld [vmem:[%s6408 + $0x1e0] sm:$0xff]
    %v6470 = vld [vmem:[%s6408 + $0x1e8] sm:$0xff]
    %v6471 = vld [vmem:[%s6408 + $0x1f0] sm:$0xff]
    %v6472 = vld [vmem:[%s6408 + $0x1f8] sm:$0xff]
    %6473 = vmatpush.msra.mxu0 %v6469
    %6474 = vmatpush.msra.mxu0 %v6465
    %6475 = vmatpush.msra.mxu0 %v6461
    %6476 = vmatpush.msra.mxu0 %v6457
    %6477 = vmatpush.msra.mxu0 %v6453
    %6478 = vmatpush.msra.mxu0 %v6449
    %6479 = vmatpush.msra.mxu0 %v6445
    %6480 = vmatpush.msra.mxu0 %v6441
    %6481 = vmatpush.msra.mxu0 %v6437
    %6482 = vmatpush.msra.mxu0 %v6433
    %6483 = vmatpush.msra.mxu0 %v6429
    %6484 = vmatpush.msra.mxu0 %v6425
    %6485 = vmatpush.msra.mxu0 %v6421
    %6486 = vmatpush.msra.mxu0 %v6417
    %6487 = vmatpush.msra.mxu0 %v6413
    %6488 = vmatpush.msra.mxu0 %v6409
    %6489 = vmatmul.f32.gmra.mxu0 %v6407
    %v6490 = vpop.f32.mrf.mxu0
    %v6491 = vadd.f32 0.0, %v6490
    %6492 = vdwg.mxu0
    %6493 = vmatpush.msra.mxu0 %v6470
    %6494 = vmatpush.msra.mxu0 %v6466
    %6495 = vmatpush.msra.mxu0 %v6462
    %6496 = vmatpush.msra.mxu0 %v6458
    %6497 = vmatpush.msra.mxu0 %v6454
    %6498 = vmatpush.msra.mxu0 %v6450
    %6499 = vmatpush.msra.mxu0 %v6446
    %6500 = vmatpush.msra.mxu0 %v6442
    %6501 = vmatpush.msra.mxu0 %v6438
    %6502 = vmatpush.msra.mxu0 %v6434
    %6503 = vmatpush.msra.mxu0 %v6430
    %6504 = vmatpush.msra.mxu0 %v6426
    %6505 = vmatpush.msra.mxu0 %v6422
    %6506 = vmatpush.msra.mxu0 %v6418
    %6507 = vmatpush.msra.mxu0 %v6414
    %6508 = vmatpush.msra.mxu0 %v6410
    %6509 = vmatmul.f32.gmra.mxu0 %v6407
    %v6510 = vpop.f32.mrf.mxu0
    %v6511 = vadd.f32 0.0, %v6510
    %6512 = vdwg.mxu0
    %6513 = vmatpush.msra.mxu0 %v6471
    %6514 = vmatpush.msra.mxu0 %v6467
    %6515 = vmatpush.msra.mxu0 %v6463
    %6516 = vmatpush.msra.mxu0 %v6459
    %6517 = vmatpush.msra.mxu0 %v6455
    %6518 = vmatpush.msra.mxu0 %v6451
    %6519 = vmatpush.msra.mxu0 %v6447
    %6520 = vmatpush.msra.mxu0 %v6443
    %6521 = vmatpush.msra.mxu0 %v6439
    %6522 = vmatpush.msra.mxu0 %v6435
    %6523 = vmatpush.msra.mxu0 %v6431
    %6524 = vmatpush.msra.mxu0 %v6427
    %6525 = vmatpush.msra.mxu0 %v6423
    %6526 = vmatpush.msra.mxu0 %v6419
    %6527 = vmatpush.msra.mxu0 %v6415
    %6528 = vmatpush.msra.mxu0 %v6411
    %6529 = vmatmul.f32.gmra.mxu0 %v6407
    %v6530 = vpop.f32.mrf.mxu0
    %v6531 = vadd.f32 0.0, %v6530
    %6532 = vdwg.mxu0
    %6533 = vmatpush.msra.mxu0 %v6472
    %6534 = vmatpush.msra.mxu0 %v6468
    %6535 = vmatpush.msra.mxu0 %v6464
    %6536 = vmatpush.msra.mxu0 %v6460
    %6537 = vmatpush.msra.mxu0 %v6456
    %6538 = vmatpush.msra.mxu0 %v6452
    %6539 = vmatpush.msra.mxu0 %v6448
    %6540 = vmatpush.msra.mxu0 %v6444
    %6541 = vmatpush.msra.mxu0 %v6440
    %6542 = vmatpush.msra.mxu0 %v6436
    %6543 = vmatpush.msra.mxu0 %v6432
    %6544 = vmatpush.msra.mxu0 %v6428
    %6545 = vmatpush.msra.mxu0 %v6424
    %6546 = vmatpush.msra.mxu0 %v6420
    %6547 = vmatpush.msra.mxu0 %v6416
    %6548 = vmatpush.msra.mxu0 %v6412
    %6549 = vmatmul.f32.gmra.mxu0 %v6407
    %v6550 = vpop.f32.mrf.mxu0
    %v6551 = vadd.f32 0.0, %v6550
    %6552 = vdwg.mxu0
    %v6553 = vadd.f32 %v6403, %v6491
    %v6554 = vadd.f32 %v6404, %v6511
    %v6555 = vadd.f32 %v6405, %v6531
    %v6556 = vadd.f32 %v6406, %v6551
    %v6557 = vld [vmem:[#allocation21] sm:$0xf]
    %v6559 = vperm.slane %v6557, 0
    %v6560 = vperm.slane %v6557, 1
    %v6561 = vperm.slane %v6557, 2
    %v6562 = vperm.slane %v6557, 3
    %v6567 = vadd.f32 %v6553, %v6559
    %v6568 = vadd.f32 %v6554, %v6560
    %v6569 = vadd.f32 %v6555, %v6561
    %v6570 = vadd.f32 %v6556, %v6562
    %v6571 = vmul.f32 %v6567, 0.01
    %v6572 = vmul.f32 %v6568, 0.01
    %v6573 = vmul.f32 %v6569, 0.01
    %v6574 = vmul.f32 %v6570, 0.01
    %v6575 = vmax.f32 %v6567, %v6571
    %v6576 = vmax.f32 %v6568, %v6572
    %v6577 = vmax.f32 %v6569, %v6573
    %v6578 = vmax.f32 %v6570, %v6574
    %v6579 = vld [vmem:[%s9] sm:$0xff]
    %v6580 = vld [vmem:[%s9 + $0x8] sm:$0xff]
    %v6581 = vld [vmem:[%s9 + $0x10] sm:$0xff]
    %v6582 = vld [vmem:[%s9 + $0x18] sm:$0xff]
    %v6583 = vld [vmem:[%s9 + $0x20] sm:$0xff]
    %v6584 = vld [vmem:[%s9 + $0x28] sm:$0xff]
    %v6585 = vld [vmem:[%s9 + $0x30] sm:$0xff]
    %v6586 = vld [vmem:[%s9 + $0x38] sm:$0xff]
    %v6587 = vld [vmem:[%s9 + $0x40] sm:$0xff]
    %v6588 = vld [vmem:[%s9 + $0x48] sm:$0xff]
    %v6589 = vld [vmem:[%s9 + $0x50] sm:$0xff]
    %v6590 = vld [vmem:[%s9 + $0x58] sm:$0xff]
    %v6591 = vld [vmem:[%s9 + $0x60] sm:$0xff]
    %v6592 = vld [vmem:[%s9 + $0x68] sm:$0xff]
    %v6593 = vld [vmem:[%s9 + $0x70] sm:$0xff]
    %v6594 = vld [vmem:[%s9 + $0x78] sm:$0xff]
    %v6595 = vld [vmem:[%s9 + $0x80] sm:$0xff]
    %v6596 = vld [vmem:[%s9 + $0x88] sm:$0xff]
    %v6597 = vld [vmem:[%s9 + $0x90] sm:$0xff]
    %v6598 = vld [vmem:[%s9 + $0x98] sm:$0xff]
    %v6599 = vld [vmem:[%s9 + $0xa0] sm:$0xff]
    %v6600 = vld [vmem:[%s9 + $0xa8] sm:$0xff]
    %v6601 = vld [vmem:[%s9 + $0xb0] sm:$0xff]
    %v6602 = vld [vmem:[%s9 + $0xb8] sm:$0xff]
    %v6603 = vld [vmem:[%s9 + $0xc0] sm:$0xff]
    %v6604 = vld [vmem:[%s9 + $0xc8] sm:$0xff]
    %v6605 = vld [vmem:[%s9 + $0xd0] sm:$0xff]
    %v6606 = vld [vmem:[%s9 + $0xd8] sm:$0xff]
    %v6607 = vld [vmem:[%s9 + $0xe0] sm:$0xff]
    %v6608 = vld [vmem:[%s9 + $0xe8] sm:$0xff]
    %v6609 = vld [vmem:[%s9 + $0xf0] sm:$0xff]
    %v6610 = vld [vmem:[%s9 + $0xf8] sm:$0xff]
    %v6611 = vld [vmem:[%s9 + $0x100] sm:$0xff]
    %v6612 = vld [vmem:[%s9 + $0x108] sm:$0xff]
    %v6613 = vld [vmem:[%s9 + $0x110] sm:$0xff]
    %v6614 = vld [vmem:[%s9 + $0x118] sm:$0xff]
    %v6615 = vld [vmem:[%s9 + $0x120] sm:$0xff]
    %v6616 = vld [vmem:[%s9 + $0x128] sm:$0xff]
    %v6617 = vld [vmem:[%s9 + $0x130] sm:$0xff]
    %v6618 = vld [vmem:[%s9 + $0x138] sm:$0xff]
    %v6619 = vld [vmem:[%s9 + $0x140] sm:$0xff]
    %v6620 = vld [vmem:[%s9 + $0x148] sm:$0xff]
    %v6621 = vld [vmem:[%s9 + $0x150] sm:$0xff]
    %v6622 = vld [vmem:[%s9 + $0x158] sm:$0xff]
    %v6623 = vld [vmem:[%s9 + $0x160] sm:$0xff]
    %v6624 = vld [vmem:[%s9 + $0x168] sm:$0xff]
    %v6625 = vld [vmem:[%s9 + $0x170] sm:$0xff]
    %v6626 = vld [vmem:[%s9 + $0x178] sm:$0xff]
    %v6627 = vld [vmem:[%s9 + $0x180] sm:$0xff]
    %v6628 = vld [vmem:[%s9 + $0x188] sm:$0xff]
    %v6629 = vld [vmem:[%s9 + $0x190] sm:$0xff]
    %v6630 = vld [vmem:[%s9 + $0x198] sm:$0xff]
    %v6631 = vld [vmem:[%s9 + $0x1a0] sm:$0xff]
    %v6632 = vld [vmem:[%s9 + $0x1a8] sm:$0xff]
    %v6633 = vld [vmem:[%s9 + $0x1b0] sm:$0xff]
    %v6634 = vld [vmem:[%s9 + $0x1b8] sm:$0xff]
    %v6635 = vld [vmem:[%s9 + $0x1c0] sm:$0xff]
    %v6636 = vld [vmem:[%s9 + $0x1c8] sm:$0xff]
    %v6637 = vld [vmem:[%s9 + $0x1d0] sm:$0xff]
    %v6638 = vld [vmem:[%s9 + $0x1d8] sm:$0xff]
    %v6639 = vld [vmem:[%s9 + $0x1e0] sm:$0xff]
    %v6640 = vld [vmem:[%s9 + $0x1e8] sm:$0xff]
    %v6641 = vld [vmem:[%s9 + $0x1f0] sm:$0xff]
    %v6642 = vld [vmem:[%s9 + $0x1f8] sm:$0xff]
    %v6643 = vld [vmem:[#allocation22] sm:$0x1]
    %v6645 = vperm.slane %v6643, 0
    %6647 = vmatpush.msra.mxu0 %v6594
    %6648 = vmatpush.msra.mxu0 %v6593
    %6649 = vmatpush.msra.mxu0 %v6592
    %6650 = vmatpush.msra.mxu0 %v6591
    %6651 = vmatpush.msra.mxu0 %v6590
    %6652 = vmatpush.msra.mxu0 %v6589
    %6653 = vmatpush.msra.mxu0 %v6588
    %6654 = vmatpush.msra.mxu0 %v6587
    %6655 = vmatpush.msra.mxu0 %v6586
    %6656 = vmatpush.msra.mxu0 %v6585
    %6657 = vmatpush.msra.mxu0 %v6584
    %6658 = vmatpush.msra.mxu0 %v6583
    %6659 = vmatpush.msra.mxu0 %v6582
    %6660 = vmatpush.msra.mxu0 %v6581
    %6661 = vmatpush.msra.mxu0 %v6580
    %6662 = vmatpush.msra.mxu0 %v6579
    %6663 = vmatmul.f32.gmra.mxu0 %v6575
    %v6664 = vpop.f32.mrf.mxu0
    %v6665 = vadd.f32 %v6645, %v6664
    %6666 = vdwg.mxu0
    %6667 = vmatpush.msra.mxu0 %v6610
    %6668 = vmatpush.msra.mxu0 %v6609
    %6669 = vmatpush.msra.mxu0 %v6608
    %6670 = vmatpush.msra.mxu0 %v6607
    %6671 = vmatpush.msra.mxu0 %v6606
    %6672 = vmatpush.msra.mxu0 %v6605
    %6673 = vmatpush.msra.mxu0 %v6604
    %6674 = vmatpush.msra.mxu0 %v6603
    %6675 = vmatpush.msra.mxu0 %v6602
    %6676 = vmatpush.msra.mxu0 %v6601
    %6677 = vmatpush.msra.mxu0 %v6600
    %6678 = vmatpush.msra.mxu0 %v6599
    %6679 = vmatpush.msra.mxu0 %v6598
    %6680 = vmatpush.msra.mxu0 %v6597
    %6681 = vmatpush.msra.mxu0 %v6596
    %6682 = vmatpush.msra.mxu0 %v6595
    %6683 = vmatmul.f32.gmra.mxu0 %v6576
    %v6684 = vpop.f32.mrf.mxu0
    %v6685 = vadd.f32 %v6665, %v6684
    %6686 = vdwg.mxu0
    %6687 = vmatpush.msra.mxu0 %v6626
    %6688 = vmatpush.msra.mxu0 %v6625
    %6689 = vmatpush.msra.mxu0 %v6624
    %6690 = vmatpush.msra.mxu0 %v6623
    %6691 = vmatpush.msra.mxu0 %v6622
    %6692 = vmatpush.msra.mxu0 %v6621
    %6693 = vmatpush.msra.mxu0 %v6620
    %6694 = vmatpush.msra.mxu0 %v6619
    %6695 = vmatpush.msra.mxu0 %v6618
    %6696 = vmatpush.msra.mxu0 %v6617
    %6697 = vmatpush.msra.mxu0 %v6616
    %6698 = vmatpush.msra.mxu0 %v6615
    %6699 = vmatpush.msra.mxu0 %v6614
    %6700 = vmatpush.msra.mxu0 %v6613
    %6701 = vmatpush.msra.mxu0 %v6612
    %6702 = vmatpush.msra.mxu0 %v6611
    %6703 = vmatmul.f32.gmra.mxu0 %v6577
    %v6704 = vpop.f32.mrf.mxu0
    %v6705 = vadd.f32 %v6685, %v6704
    %6706 = vdwg.mxu0
    %6707 = vmatpush.msra.mxu0 %v6642
    %6708 = vmatpush.msra.mxu0 %v6641
    %6709 = vmatpush.msra.mxu0 %v6640
    %6710 = vmatpush.msra.mxu0 %v6639
    %6711 = vmatpush.msra.mxu0 %v6638
    %6712 = vmatpush.msra.mxu0 %v6637
    %6713 = vmatpush.msra.mxu0 %v6636
    %6714 = vmatpush.msra.mxu0 %v6635
    %6715 = vmatpush.msra.mxu0 %v6634
    %6716 = vmatpush.msra.mxu0 %v6633
    %6717 = vmatpush.msra.mxu0 %v6632
    %6718 = vmatpush.msra.mxu0 %v6631
    %6719 = vmatpush.msra.mxu0 %v6630
    %6720 = vmatpush.msra.mxu0 %v6629
    %6721 = vmatpush.msra.mxu0 %v6628
    %6722 = vmatpush.msra.mxu0 %v6627
    %6723 = vmatmul.f32.gmra.mxu0 %v6578
    %v6724 = vpop.f32.mrf.mxu0
    %v6725 = vadd.f32 %v6705, %v6724
    %6726 = vdwg.mxu0
    %vm6727 = vcmask 74752
    %6728 = vst.msk [vmem:[#allocation24] sm:$0x3] %vm6727, %v6725
    // Predicated region
    $region99: #{model_forward.1} parent=1 // pred_check
      _
    $region100: #{model_forward.1} parent=1 // pred_check_branch
      %6730 = sbr.rel (0) target = $region102
    $region101: #{model_forward.1} parent=1 // pred_region
      %6732 = vsyncadd [#allocation12], 0
      %s6734 = sshll.u32 [#allocation24], 4
      %s6735 = int_to_ptr.vmem [resolvable:$true] %s6734
      %s6736 = sshll.u32 %s11, 4
      %s6737 = int_to_ptr.hbm [resolvable:$true] %s6736
      %6739 = dma.vmem_to_hbm [thread:$0]  %s6735, 32, %s6737, [#allocation12]
    $region102: #{model_forward.1} parent=1 // pred_fallthru
      _
    // Predicated region
    $region103: #{model_forward.1} parent=1 // pred_check
      _
    $region104: #{model_forward.1} parent=1 // pred_check_branch
      %6741 = sbr.rel (0) target = $region106
    $region105: #{model_forward.1} parent=1 // pred_region
      %6743 = dma.done [#allocation12], 32
    $region106: #{model_forward.1} parent=1 // pred_fallthru
      _
    %6744 = vsyncpa [#allocation11], 1
    %6745 = vsyncpa [#allocation14], 1
    %6746 = vsyncpa [#allocation17], 1
    %6747 = vsyncpa [#allocation20], 1
    %6748 = vsyncpa [#allocation23], 1
    %6749 = vsyncpa [#allocation12], 1
  %6750 = vsyncmov [#allocation9]
  %s6751 = vpop.sfrf %6750
  %p6752 = scmp.eq.s32.totalorder %s6751, 0
  %p6753 = pneg %p6752
  %6755 = shalt.err (%p6753)

</llo_original>
